<compile_context>
chip_gen: v5e
topology: v5e:2x2
jax: 0.10.0
libtpu: 0.0.40
codegen_flags: <defaults>
</compile_context>

<pallas_src>
import functools

import jax
import jax.numpy as jnp
from jax.experimental import pallas as pl
from jax.experimental.pallas import tpu as pltpu


def _round_up(n, m):
    return ((n + m - 1) // m) * m


def _mlp4_kernel(x_ref, w1_ref, b1_ref, w2_ref, b2_ref,
                 w3_ref, b3_ref, w4_ref, b4_ref, out_ref):
    # x tile arrives f32; cast to bf16 so the MXU runs native bf16 passes.
    x = x_ref[...].astype(jnp.bfloat16)

    # encode
    h1 = jnp.dot(x, w1_ref[...], preferred_element_type=jnp.float32) + b1_ref[...]
    h1 = jnp.maximum(h1, 0.0).astype(jnp.bfloat16)               # ReLU

    z = jnp.dot(h1, w2_ref[...], preferred_element_type=jnp.float32) + b2_ref[...]
    z = jnp.maximum(z, 0.0).astype(jnp.bfloat16)                 # ReLU (bottleneck, 8 lanes)

    # decode
    h3 = jnp.dot(z, w3_ref[...], preferred_element_type=jnp.float32) + b3_ref[...]
    h3 = jnp.maximum(h3, 0.0).astype(jnp.bfloat16)               # ReLU

    y = jnp.dot(h3, w4_ref[...], preferred_element_type=jnp.float32) + b4_ref[...]

    # sigmoid: exp on EUP, reciprocal also on EUP (approx) -> frees VALU slots
    out_ref[...] = pl.reciprocal(1.0 + jnp.exp(-y), approx=True)


def prepare_params(params, lane=128):
    """One-time conversion of PyTorch-layout params (weight = (out, in)) to the
    kernel layout: transposed to (in, out), zero-padded to lane multiples on the
    784/392 dims, weights cast to bf16, biases kept f32 as (1, out) rows.
    Call this once at model-load time, OUTSIDE the jitted forward."""
    n_in = params["w1"].shape[1]
    n_hid = params["w1"].shape[0]
    n_bot = params["w2"].shape[0]
    n_out = params["w4"].shape[0]
    in_pad = _round_up(n_in, lane)
    hid_pad = _round_up(n_hid, lane)
    out_pad = _round_up(n_out, lane)
    # NOTE: bottleneck (8) intentionally NOT padded — its FLOPs are negligible.

    def wpad(w, rows, cols):
        wt = jnp.asarray(w, jnp.float32).T                        # (in, out)
        wt = jnp.pad(wt, ((0, rows - wt.shape[0]), (0, cols - wt.shape[1])))
        return wt.astype(jnp.bfloat16)

    def bpad(b, cols):
        b = jnp.asarray(b, jnp.float32)
        return jnp.pad(b, (0, cols - b.shape[0]))[None, :]        # (1, out), f32

    return (
        wpad(params["w1"], in_pad, hid_pad), bpad(params["b1"], hid_pad),
        wpad(params["w2"], hid_pad, n_bot),  bpad(params["b2"], n_bot),
        wpad(params["w3"], n_bot, hid_pad),  bpad(params["b3"], hid_pad),
        wpad(params["w4"], hid_pad, out_pad), bpad(params["b4"], out_pad),
    )


@functools.partial(jax.jit, static_argnames=("n_out", "tb"))
def autoencoder_mlp4_forward(x, prepared, *, n_out, tb=128):
    """x: (B, N_input) float32. prepared: output of prepare_params()."""
    w1, b1, w2, b2, w3, b3, w4, b4 = prepared
    B, n_in = x.shape
    in_pad = w1.shape[0]
    out_pad = w4.shape[1]

    # Pad batch up to a multiple of the tile and features to the padded lane width.
    b_pad = _round_up(max(B, 1), tb)
    x_p = jnp.pad(x.astype(jnp.float32),
                  ((0, b_pad - B), (0, in_pad - n_in)))

    grid = (b_pad // tb,)

    out_p = pl.pallas_call(
        _mlp4_kernel,
        out_shape=jax.ShapeDtypeStruct((b_pad, out_pad), jnp.float32),
        grid=grid,
        in_specs=[
            pl.BlockSpec((tb, in_pad), lambda i: (i, 0)),     # x tile (streamed)
            pl.BlockSpec(w1.shape, lambda i: (0, 0)),         # weights: resident
            pl.BlockSpec(b1.shape, lambda i: (0, 0)),
            pl.BlockSpec(w2.shape, lambda i: (0, 0)),
            pl.BlockSpec(b2.shape, lambda i: (0, 0)),
            pl.BlockSpec(w3.shape, lambda i: (0, 0)),
            pl.BlockSpec(b3.shape, lambda i: (0, 0)),
            pl.BlockSpec(w4.shape, lambda i: (0, 0)),
            pl.BlockSpec(b4.shape, lambda i: (0, 0)),
        ],
        out_specs=pl.BlockSpec((tb, out_pad), lambda i: (i, 0)),
        compiler_params=pltpu.CompilerParams(
            dimension_semantics=("parallel",)),
    )(x_p, w1, b1, w2, b2, w3, b3, w4, b4)

    return out_p[:B, :n_out]


def init_params(key, n_input=784, n_bottleneck=8, n_output=784):
    """Deterministic synthetic init matching nn.Linear shapes (weight=(out,in))."""
    half = n_input // 2
    dims = [(half, n_input), (n_bottleneck, half), (half, n_bottleneck), (n_output, half)]
    params = {}
    keys = jax.random.split(key, 2 * len(dims))
    for i, (out_f, in_f) in enumerate(dims):
        bound = 1.0 / jnp.sqrt(in_f)
        params[f"w{i+1}"] = jax.random.uniform(
            keys[2 * i], (out_f, in_f), jnp.float32, -bound, bound)
        params[f"b{i+1}"] = jax.random.uniform(
            keys[2 * i + 1], (out_f,), jnp.float32, -bound, bound)
    return params


def _reference_forward(x, params):
    h = jnp.maximum(x @ params["w1"].T + params["b1"], 0.0)
    z = jnp.maximum(h @ params["w2"].T + params["b2"], 0.0)
    h = jnp.maximum(z @ params["w3"].T + params["b3"], 0.0)
    y = h @ params["w4"].T + params["b4"]
    return jax.nn.sigmoid(y)


if __name__ == "__main__":
    key = jax.random.PRNGKey(0)
    k_params, k_x = jax.random.split(key)

    N_INPUT, N_BOTTLENECK, N_OUTPUT = 784, 8, 784
    BATCH = 200   # non-multiple of the 128-row tile: exercises batch padding + 2 grid steps

    params = init_params(k_params, N_INPUT, N_BOTTLENECK, N_OUTPUT)
    prepared = prepare_params(params)          # one-time, outside the jitted forward
    x = jax.random.uniform(k_x, (BATCH, N_INPUT), jnp.float32)   # image-like [0,1)

    out = autoencoder_mlp4_forward(x, prepared, n_out=N_OUTPUT, tb=128)
    out = jax.block_until_ready(out)

    ref = _reference_forward(x, params)        # pure-f32 reference
    assert out.shape == (BATCH, N_OUTPUT), out.shape
    max_err = float(jnp.max(jnp.abs(out - ref)))
    # bf16 weights/activations + approx reciprocal => loose-but-tight-enough tolerance
    assert max_err < 2e-2, f"mismatch vs reference: max abs err {max_err}"

    print("KERNEL_OK")
</pallas_src>

<mosaic_0001>
module attributes {stable_mosaic.version = 11 : i64} {
  func.func @_mlp4_kernel(%arg0: i32, %arg1: memref<128x896xf32, #tpu.memory_space<vmem>>, %arg2: memref<896x512xbf16, #tpu.memory_space<vmem>>, %arg3: memref<1x512xf32, #tpu.memory_space<vmem>>, %arg4: memref<512x8xbf16, #tpu.memory_space<vmem>>, %arg5: memref<1x8xf32, #tpu.memory_space<vmem>>, %arg6: memref<8x512xbf16, #tpu.memory_space<vmem>>, %arg7: memref<1x512xf32, #tpu.memory_space<vmem>>, %arg8: memref<512x896xbf16, #tpu.memory_space<vmem>>, %arg9: memref<1x896xf32, #tpu.memory_space<vmem>>, %arg10: memref<128x896xf32, #tpu.memory_space<vmem>>) attributes {dimension_semantics = [#tpu.dimension_semantics<parallel>], iteration_bounds = array<i64: 2>, scalar_prefetch = 0 : i64, scratch_operands = 0 : i64, tpu.core_type = #tpu.core_type<tc>, window_params = [{transform_indices = @transform_0, window_bounds = array<i64: 128, 896>}, {pipeline_mode = #tpu.pipeline_mode<synchronous>, transform_indices = @transform_1, window_bounds = array<i64: 896, 512>}, {pipeline_mode = #tpu.pipeline_mode<synchronous>, transform_indices = @transform_2, window_bounds = array<i64: 1, 512>}, {pipeline_mode = #tpu.pipeline_mode<synchronous>, transform_indices = @transform_3, window_bounds = array<i64: 512, 8>}, {pipeline_mode = #tpu.pipeline_mode<synchronous>, transform_indices = @transform_4, window_bounds = array<i64: 1, 8>}, {pipeline_mode = #tpu.pipeline_mode<synchronous>, transform_indices = @transform_5, window_bounds = array<i64: 8, 512>}, {pipeline_mode = #tpu.pipeline_mode<synchronous>, transform_indices = @transform_6, window_bounds = array<i64: 1, 512>}, {pipeline_mode = #tpu.pipeline_mode<synchronous>, transform_indices = @transform_7, window_bounds = array<i64: 512, 896>}, {pipeline_mode = #tpu.pipeline_mode<synchronous>, transform_indices = @transform_8, window_bounds = array<i64: 1, 896>}, {transform_indices = @transform_9, window_bounds = array<i64: 128, 896>}]} {
    %c0 = arith.constant 0 : index
    %c0_0 = arith.constant 0 : index
    %0 = vector.load %arg1[%c0, %c0_0] : memref<128x896xf32, #tpu.memory_space<vmem>>, vector<128x896xf32>
    %1 = arith.truncf %0 : vector<128x896xf32> to vector<128x896xbf16>
    %c0_1 = arith.constant 0 : index
    %c0_2 = arith.constant 0 : index
    %2 = vector.load %arg2[%c0_1, %c0_2] : memref<896x512xbf16, #tpu.memory_space<vmem>>, vector<896x512xbf16>
    %cst = arith.constant dense<0.000000e+00> : vector<128x512xf32>
    %3 = tpu.matmul %1, %2, %cst {dimension_numbers = #tpu.dot_dimension_numbers<[1], [0], [0], [1], [0, 0, 1, 1], [], []>} : vector<128x896xbf16>, vector<896x512xbf16>, vector<128x512xf32> -> vector<128x512xf32>
    %c0_3 = arith.constant 0 : index
    %c0_4 = arith.constant 0 : index
    %4 = vector.load %arg3[%c0_3, %c0_4] : memref<1x512xf32, #tpu.memory_space<vmem>>, vector<1x512xf32>
    %5 = vector.broadcast %4 : vector<1x512xf32> to vector<128x512xf32>
    %6 = arith.addf %3, %5 : vector<128x512xf32>
    %cst_5 = arith.constant 0.000000e+00 : f32
    %7 = vector.broadcast %cst_5 : f32 to vector<128x512xf32>
    %8 = arith.maximumf %6, %7 : vector<128x512xf32>
    %9 = arith.truncf %8 : vector<128x512xf32> to vector<128x512xbf16>
    %c0_6 = arith.constant 0 : index
    %c0_7 = arith.constant 0 : index
    %10 = vector.load %arg4[%c0_6, %c0_7] : memref<512x8xbf16, #tpu.memory_space<vmem>>, vector<512x8xbf16>
    %cst_8 = arith.constant dense<0.000000e+00> : vector<128x8xf32>
    %11 = tpu.matmul %9, %10, %cst_8 {dimension_numbers = #tpu.dot_dimension_numbers<[1], [0], [0], [1], [0, 0, 1, 1], [], []>} : vector<128x512xbf16>, vector<512x8xbf16>, vector<128x8xf32> -> vector<128x8xf32>
    %c0_9 = arith.constant 0 : index
    %c0_10 = arith.constant 0 : index
    %12 = vector.load %arg5[%c0_9, %c0_10] : memref<1x8xf32, #tpu.memory_space<vmem>>, vector<1x8xf32>
    %13 = vector.broadcast %12 : vector<1x8xf32> to vector<128x8xf32>
    %14 = arith.addf %11, %13 : vector<128x8xf32>
    %cst_11 = arith.constant 0.000000e+00 : f32
    %15 = vector.broadcast %cst_11 : f32 to vector<128x8xf32>
    %16 = arith.maximumf %14, %15 : vector<128x8xf32>
    %17 = arith.truncf %16 : vector<128x8xf32> to vector<128x8xbf16>
    %c0_12 = arith.constant 0 : index
    %c0_13 = arith.constant 0 : index
    %18 = vector.load %arg6[%c0_12, %c0_13] : memref<8x512xbf16, #tpu.memory_space<vmem>>, vector<8x512xbf16>
    %cst_14 = arith.constant dense<0.000000e+00> : vector<128x512xf32>
    %19 = tpu.matmul %17, %18, %cst_14 {dimension_numbers = #tpu.dot_dimension_numbers<[1], [0], [0], [1], [0, 0, 1, 1], [], []>} : vector<128x8xbf16>, vector<8x512xbf16>, vector<128x512xf32> -> vector<128x512xf32>
    %c0_15 = arith.constant 0 : index
    %c0_16 = arith.constant 0 : index
    %20 = vector.load %arg7[%c0_15, %c0_16] : memref<1x512xf32, #tpu.memory_space<vmem>>, vector<1x512xf32>
    %21 = vector.broadcast %20 : vector<1x512xf32> to vector<128x512xf32>
    %22 = arith.addf %19, %21 : vector<128x512xf32>
    %cst_17 = arith.constant 0.000000e+00 : f32
    %23 = vector.broadcast %cst_17 : f32 to vector<128x512xf32>
    %24 = arith.maximumf %22, %23 : vector<128x512xf32>
    %25 = arith.truncf %24 : vector<128x512xf32> to vector<128x512xbf16>
    %c0_18 = arith.constant 0 : index
    %c0_19 = arith.constant 0 : index
    %26 = vector.load %arg8[%c0_18, %c0_19] : memref<512x896xbf16, #tpu.memory_space<vmem>>, vector<512x896xbf16>
    %cst_20 = arith.constant dense<0.000000e+00> : vector<128x896xf32>
    %27 = tpu.matmul %25, %26, %cst_20 {dimension_numbers = #tpu.dot_dimension_numbers<[1], [0], [0], [1], [0, 0, 1, 1], [], []>} : vector<128x512xbf16>, vector<512x896xbf16>, vector<128x896xf32> -> vector<128x896xf32>
    %c0_21 = arith.constant 0 : index
    %c0_22 = arith.constant 0 : index
    %28 = vector.load %arg9[%c0_21, %c0_22] : memref<1x896xf32, #tpu.memory_space<vmem>>, vector<1x896xf32>
    %29 = vector.broadcast %28 : vector<1x896xf32> to vector<128x896xf32>
    %30 = arith.addf %27, %29 : vector<128x896xf32>
    %cst_23 = arith.constant 0.000000e+00 : f32
    %31 = vector.broadcast %cst_23 : f32 to vector<128x896xf32>
    %32 = arith.subf %31, %30 : vector<128x896xf32>
    %33 = math.exp %32 : vector<128x896xf32>
    %cst_24 = arith.constant 1.000000e+00 : f32
    %34 = vector.broadcast %cst_24 : f32 to vector<128x896xf32>
    %35 = arith.addf %34, %33 : vector<128x896xf32>
    %36 = tpu.reciprocal %35 {approx = true} : vector<128x896xf32> -> vector<128x896xf32>
    %c0_25 = arith.constant 0 : index
    %c0_26 = arith.constant 0 : index
    %37 = vector.load %arg10[%c0_25, %c0_26] : memref<128x896xf32, #tpu.memory_space<vmem>>, vector<128x896xf32>
    tpu.vector_store %arg10[%c0_25, %c0_26], %36 {strides = array<i32>} : memref<128x896xf32, #tpu.memory_space<vmem>>, vector<128x896xf32>,
    return
  }
  func.func @transform_0(%arg0: i32) -> (i32, i32) {
    %c0_i32 = arith.constant 0 : i32
    %c0_i32_0 = arith.constant 0 : i32
    return %arg0, %c0_i32 : i32, i32
  }
  func.func @transform_1(%arg0: i32) -> (i32, i32) {
    %c0_i32 = arith.constant 0 : i32
    %c0_i32_0 = arith.constant 0 : i32
    %c0_i32_1 = arith.constant 0 : i32
    return %c0_i32, %c0_i32_0 : i32, i32
  }
  func.func @transform_2(%arg0: i32) -> (i32, i32) {
    %c0_i32 = arith.constant 0 : i32
    %c0_i32_0 = arith.constant 0 : i32
    %c0_i32_1 = arith.constant 0 : i32
    return %c0_i32, %c0_i32_0 : i32, i32
  }
  func.func @transform_3(%arg0: i32) -> (i32, i32) {
    %c0_i32 = arith.constant 0 : i32
    %c0_i32_0 = arith.constant 0 : i32
    %c0_i32_1 = arith.constant 0 : i32
    return %c0_i32, %c0_i32_0 : i32, i32
  }
  func.func @transform_4(%arg0: i32) -> (i32, i32) {
    %c0_i32 = arith.constant 0 : i32
    %c0_i32_0 = arith.constant 0 : i32
    %c0_i32_1 = arith.constant 0 : i32
    return %c0_i32, %c0_i32_0 : i32, i32
  }
  func.func @transform_5(%arg0: i32) -> (i32, i32) {
    %c0_i32 = arith.constant 0 : i32
    %c0_i32_0 = arith.constant 0 : i32
    %c0_i32_1 = arith.constant 0 : i32
    return %c0_i32, %c0_i32_0 : i32, i32
  }
  func.func @transform_6(%arg0: i32) -> (i32, i32) {
    %c0_i32 = arith.constant 0 : i32
    %c0_i32_0 = arith.constant 0 : i32
    %c0_i32_1 = arith.constant 0 : i32
    return %c0_i32, %c0_i32_0 : i32, i32
  }
  func.func @transform_7(%arg0: i32) -> (i32, i32) {
    %c0_i32 = arith.constant 0 : i32
    %c0_i32_0 = arith.constant 0 : i32
    %c0_i32_1 = arith.constant 0 : i32
    return %c0_i32, %c0_i32_0 : i32, i32
  }
  func.func @transform_8(%arg0: i32) -> (i32, i32) {
    %c0_i32 = arith.constant 0 : i32
    %c0_i32_0 = arith.constant 0 : i32
    %c0_i32_1 = arith.constant 0 : i32
    return %c0_i32, %c0_i32_0 : i32, i32
  }
  func.func @transform_9(%arg0: i32) -> (i32, i32) {
    %c0_i32 = arith.constant 0 : i32
    %c0_i32_0 = arith.constant 0 : i32
    return %arg0, %c0_i32 : i32, i32
  }
}

</mosaic_0001>

<llo_original>
// kernel: autoencoder_mlp4_forward.1
$region0: #{autoencoder_mlp4_forward.1}
  #allocation0 [shape = 'u32[]', space=smem, size = 0x4, offset = 0x4, fixed_abs, tag = 'smem constant byte address 0x4 - core index']
  #allocation1 [shape = 'u32[72,128]{1,0:T(1,128)}', space=vmem, size = 0x9000, scoped, tag = 'internal scratch']
  %s0 = inlined_call_operand.vmem [shape: f32[256,896], index: 0, kind: input, shape index: {}]
  %s1 = inlined_call_operand.vmem [shape: bf16[896,512], index: 1, kind: input, shape index: {}]
  %s2 = inlined_call_operand.vmem [shape: f32[1,512], index: 2, kind: input, shape index: {}]
  %s3 = inlined_call_operand.vmem [shape: bf16[512,8], index: 3, kind: input, shape index: {}]
  %s4 = inlined_call_operand.vmem [shape: f32[1,8], index: 4, kind: input, shape index: {}]
  %s5 = inlined_call_operand.vmem [shape: bf16[8,512], index: 5, kind: input, shape index: {}]
  %s6 = inlined_call_operand.vmem [shape: f32[1,512], index: 6, kind: input, shape index: {}]
  %s7 = inlined_call_operand.hbm [shape: bf16[512,896], index: 7, kind: input, shape index: {}]
  %s8 = inlined_call_operand.vmem [shape: f32[1,896], index: 8, kind: input, shape index: {}]
  %s9 = inlined_call_operand.vmem [shape: f32[256,896], index: 9, kind: output, shape index: {}]
  %s10 = sld [smem:[#allocation0]]
  $region73: #{autoencoder_mlp4_forward.1} parent=0
    _
  %s12 = ssub.s32 1, %s10
  %s13 = scalar_select 0, %s12, %s10
  $region1: #{autoencoder_mlp4_forward.1} parent=0
    #allocation2 [shape = 'u8[917504]{0}', space=vmem, size = 0xe0000, scoped, tag = 'input window, operand 7, single buffered']
    #allocation3 [shape = 's32[2]{0}', space=sflag, size = 0x8, scoped, tag = 'scoped memory for autoencoder_mlp4_forward.1']
    %14 = vsyncpa [#allocation3], 0
    loop: start=0, step=1, limit=4
    $region2: #{autoencoder_mlp4_forward.1} parent=1 // loop_pre_header
      _
    $region3: #{autoencoder_mlp4_forward.1} parent=1 // loop_header
      %s16 = sphi 0, %s20
      %p17 = scmp.ge.s32.totalorder %s16, 4
      %s26 = sphi 0, %s28
      %s29 = sphi 0, %s26
      %s30 = sphi 0, %s29
      %s46 = sphi 0, %s30
      %s50 = sphi 0, %s50
      %s52 = sphi 0, %s50
      %s53 = sphi 0, %s52
      %s67 = sphi 0, %s53
      %s71 = sphi 0, %s71
      %s73 = sphi 0, %s71
      %s74 = sphi 0, %s73
      %s88 = sphi 0, %s74
      %s92 = sphi 0, %s92
      %s94 = sphi 0, %s92
      %s95 = sphi 0, %s94
      %s109 = sphi 0, %s95
      %s113 = sphi 0, %s113
      %s115 = sphi 0, %s113
      %s116 = sphi 0, %s115
      %s130 = sphi 0, %s116
      %s134 = sphi 0, %s134
      %s136 = sphi 0, %s134
      %s137 = sphi 0, %s136
      %s151 = sphi 0, %s137
      %s155 = sphi 0, %s155
      %s157 = sphi 0, %s155
      %s158 = sphi 0, %s157
      %s172 = sphi 0, %s158
      %s176 = sphi 0, %s176
      %s178 = sphi 0, %s176
      %s179 = sphi 0, %s178
      %s193 = sphi 0, %s179
      %s197 = sphi 0, %s197
      %s199 = sphi 0, %s197
      %s200 = sphi 0, %s199
      %s214 = sphi 0, %s200
      %s220 = sphi 0, %s222
      %s223 = sphi 0, %s220
      %s224 = sphi 0, %s223
      %s240 = sphi 0, %s224
    $region4: #{autoencoder_mlp4_forward.1} parent=1 // loop_header_branch
      %19 = sbr.rel (%p17) target = $region8
    $region5: #{autoencoder_mlp4_forward.1} parent=1 // loop_body
      %s21 = ssub.s32 %s16, 1
      %s22 = ssub.s32 %s16, 2
      %s23 = sadd.s32 %s16, 1
      %s24 = ssub.s32 %s16, %s23
      %p25 = scmp.eq.s32.totalorder %s24, 0
      %s27 = sadd.s32 %s26, 1
      %s28 = scalar_select %p25, %s26, %s27
      %p31 = pneg %p25
      %p32 = scmp.eq.s32.totalorder %s16, 1
      %p33 = por %p31, %p32
      %p34 = scmp.ne.s32.totalorder %s26, %s29
      %p35 = scmp.eq.s32.totalorder %s16, 0
      %p36 = por %p34, %p35
      %p37 = scmp.ne.s32.totalorder %s26, %s29
      %p38 = scmp.eq.s32.totalorder %s21, 1
      %p39 = por %p37, %p38
      %p40 = scmp.ne.s32.totalorder %s29, %s30
      %p41 = scmp.eq.s32.totalorder %s21, 0
      %p42 = por %p40, %p41
      %p43 = scmp.ne.s32.totalorder %s29, %s30
      %p44 = scmp.eq.s32.totalorder %s22, 1
      %p45 = por %p43, %p44
      %p47 = scmp.ne.s32.totalorder %s30, %s46
      %p48 = scmp.eq.s32.totalorder %s22, 0
      %p49 = por %p47, %p48
      %s51 = sadd.s32 %s50, 1
      %p54 = scmp.eq.s32.totalorder %s16, 1
      %p55 = scmp.ne.s32.totalorder %s50, %s52
      %p56 = scmp.eq.s32.totalorder %s16, 0
      %p57 = por %p55, %p56
      %p58 = scmp.ne.s32.totalorder %s50, %s52
      %p59 = scmp.eq.s32.totalorder %s21, 1
      %p60 = por %p58, %p59
      %p61 = scmp.ne.s32.totalorder %s52, %s53
      %p62 = scmp.eq.s32.totalorder %s21, 0
      %p63 = por %p61, %p62
      %p64 = scmp.ne.s32.totalorder %s52, %s53
      %p65 = scmp.eq.s32.totalorder %s22, 1
      %p66 = por %p64, %p65
      %p68 = scmp.ne.s32.totalorder %s53, %s67
      %p69 = scmp.eq.s32.totalorder %s22, 0
      %p70 = por %p68, %p69
      %s72 = sadd.s32 %s71, 1
      %p75 = scmp.eq.s32.totalorder %s16, 1
      %p76 = scmp.ne.s32.totalorder %s71, %s73
      %p77 = scmp.eq.s32.totalorder %s16, 0
      %p78 = por %p76, %p77
      %p79 = scmp.ne.s32.totalorder %s71, %s73
      %p80 = scmp.eq.s32.totalorder %s21, 1
      %p81 = por %p79, %p80
      %p82 = scmp.ne.s32.totalorder %s73, %s74
      %p83 = scmp.eq.s32.totalorder %s21, 0
      %p84 = por %p82, %p83
      %p85 = scmp.ne.s32.totalorder %s73, %s74
      %p86 = scmp.eq.s32.totalorder %s22, 1
      %p87 = por %p85, %p86
      %p89 = scmp.ne.s32.totalorder %s74, %s88
      %p90 = scmp.eq.s32.totalorder %s22, 0
      %p91 = por %p89, %p90
      %s93 = sadd.s32 %s92, 1
      %p96 = scmp.eq.s32.totalorder %s16, 1
      %p97 = scmp.ne.s32.totalorder %s92, %s94
      %p98 = scmp.eq.s32.totalorder %s16, 0
      %p99 = por %p97, %p98
      %p100 = scmp.ne.s32.totalorder %s92, %s94
      %p101 = scmp.eq.s32.totalorder %s21, 1
      %p102 = por %p100, %p101
      %p103 = scmp.ne.s32.totalorder %s94, %s95
      %p104 = scmp.eq.s32.totalorder %s21, 0
      %p105 = por %p103, %p104
      %p106 = scmp.ne.s32.totalorder %s94, %s95
      %p107 = scmp.eq.s32.totalorder %s22, 1
      %p108 = por %p106, %p107
      %p110 = scmp.ne.s32.totalorder %s95, %s109
      %p111 = scmp.eq.s32.totalorder %s22, 0
      %p112 = por %p110, %p111
      %s114 = sadd.s32 %s113, 1
      %p117 = scmp.eq.s32.totalorder %s16, 1
      %p118 = scmp.ne.s32.totalorder %s113, %s115
      %p119 = scmp.eq.s32.totalorder %s16, 0
      %p120 = por %p118, %p119
      %p121 = scmp.ne.s32.totalorder %s113, %s115
      %p122 = scmp.eq.s32.totalorder %s21, 1
      %p123 = por %p121, %p122
      %p124 = scmp.ne.s32.totalorder %s115, %s116
      %p125 = scmp.eq.s32.totalorder %s21, 0
      %p126 = por %p124, %p125
      %p127 = scmp.ne.s32.totalorder %s115, %s116
      %p128 = scmp.eq.s32.totalorder %s22, 1
      %p129 = por %p127, %p128
      %p131 = scmp.ne.s32.totalorder %s116, %s130
      %p132 = scmp.eq.s32.totalorder %s22, 0
      %p133 = por %p131, %p132
      %s135 = sadd.s32 %s134, 1
      %p138 = scmp.eq.s32.totalorder %s16, 1
      %p139 = scmp.ne.s32.totalorder %s134, %s136
      %p140 = scmp.eq.s32.totalorder %s16, 0
      %p141 = por %p139, %p140
      %p142 = scmp.ne.s32.totalorder %s134, %s136
      %p143 = scmp.eq.s32.totalorder %s21, 1
      %p144 = por %p142, %p143
      %p145 = scmp.ne.s32.totalorder %s136, %s137
      %p146 = scmp.eq.s32.totalorder %s21, 0
      %p147 = por %p145, %p146
      %p148 = scmp.ne.s32.totalorder %s136, %s137
      %p149 = scmp.eq.s32.totalorder %s22, 1
      %p150 = por %p148, %p149
      %p152 = scmp.ne.s32.totalorder %s137, %s151
      %p153 = scmp.eq.s32.totalorder %s22, 0
      %p154 = por %p152, %p153
      %s156 = sadd.s32 %s155, 1
      %p159 = scmp.eq.s32.totalorder %s16, 1
      %p160 = scmp.ne.s32.totalorder %s155, %s157
      %p161 = scmp.eq.s32.totalorder %s16, 0
      %p162 = por %p160, %p161
      %p163 = scmp.ne.s32.totalorder %s155, %s157
      %p164 = scmp.eq.s32.totalorder %s21, 1
      %p165 = por %p163, %p164
      %p166 = scmp.ne.s32.totalorder %s157, %s158
      %p167 = scmp.eq.s32.totalorder %s21, 0
      %p168 = por %p166, %p167
      %p169 = scmp.ne.s32.totalorder %s157, %s158
      %p170 = scmp.eq.s32.totalorder %s22, 1
      %p171 = por %p169, %p170
      %p173 = scmp.ne.s32.totalorder %s158, %s172
      %p174 = scmp.eq.s32.totalorder %s22, 0
      %p175 = por %p173, %p174
      %s177 = sadd.s32 %s176, 1
      %p180 = scmp.eq.s32.totalorder %s16, 1
      %p181 = scmp.ne.s32.totalorder %s176, %s178
      %p182 = scmp.eq.s32.totalorder %s16, 0
      %p183 = por %p181, %p182
      %p184 = scmp.ne.s32.totalorder %s176, %s178
      %p185 = scmp.eq.s32.totalorder %s21, 1
      %p186 = por %p184, %p185
      %p187 = scmp.ne.s32.totalorder %s178, %s179
      %p188 = scmp.eq.s32.totalorder %s21, 0
      %p189 = por %p187, %p188
      %p190 = scmp.ne.s32.totalorder %s178, %s179
      %p191 = scmp.eq.s32.totalorder %s22, 1
      %p192 = por %p190, %p191
      %p194 = scmp.ne.s32.totalorder %s179, %s193
      %p195 = scmp.eq.s32.totalorder %s22, 0
      %p196 = por %p194, %p195
      %s198 = sadd.s32 %s197, 1
      %p201 = scmp.eq.s32.totalorder %s16, 1
      %p202 = scmp.ne.s32.totalorder %s197, %s199
      %p203 = scmp.eq.s32.totalorder %s16, 0
      %p204 = por %p202, %p203
      %p205 = scmp.ne.s32.totalorder %s197, %s199
      %p206 = scmp.eq.s32.totalorder %s21, 1
      %p207 = por %p205, %p206
      %p208 = scmp.ne.s32.totalorder %s199, %s200
      %p209 = scmp.eq.s32.totalorder %s21, 0
      %p210 = por %p208, %p209
      %p211 = scmp.ne.s32.totalorder %s199, %s200
      %p212 = scmp.eq.s32.totalorder %s22, 1
      %p213 = por %p211, %p212
      %p215 = scmp.ne.s32.totalorder %s200, %s214
      %p216 = scmp.eq.s32.totalorder %s22, 0
      %p217 = por %p215, %p216
      %s218 = ssub.s32 %s16, %s23
      %p219 = scmp.eq.s32.totalorder %s218, 0
      %s221 = sadd.s32 %s220, 1
      %s222 = scalar_select %p219, %s220, %s221
      %p225 = pneg %p219
      %p226 = scmp.eq.s32.totalorder %s16, 1
      %p227 = por %p225, %p226
      %p228 = scmp.ne.s32.totalorder %s220, %s223
      %p229 = scmp.eq.s32.totalorder %s16, 0
      %p230 = por %p228, %p229
      %p231 = scmp.ne.s32.totalorder %s220, %s223
      %p232 = scmp.eq.s32.totalorder %s21, 1
      %p233 = por %p231, %p232
      %p234 = scmp.ne.s32.totalorder %s223, %s224
      %p235 = scmp.eq.s32.totalorder %s21, 0
      %p236 = por %p234, %p235
      %p237 = scmp.ne.s32.totalorder %s223, %s224
      %p238 = scmp.eq.s32.totalorder %s22, 1
      %p239 = por %p237, %p238
      %p241 = scmp.ne.s32.totalorder %s224, %s240
      %p242 = scmp.eq.s32.totalorder %s22, 0
      %p243 = por %p241, %p242
      %p244 = scmp.le.s32.totalorder 1, %s16
      %p245 = scmp.lt.s32.totalorder %s16, 3
      %p246 = pnand %p244, %p245
      %p247 = pneg %p246
      // Predicated region
      $region9: #{autoencoder_mlp4_forward.1} parent=5 // pred_check
        _
      $region10: #{autoencoder_mlp4_forward.1} parent=5 // pred_check_branch
        %249 = sbr.rel (%p246) target = $region12
      $region11: #{autoencoder_mlp4_forward.1} parent=5 // pred_region
        %s250 = ssub.s32 %s16, 1
        // Predicated region
        $region13: #{autoencoder_mlp4_forward.1} parent=11 // pred_check
          %p251 = pneg %p63
        $region14: #{autoencoder_mlp4_forward.1} parent=11 // pred_check_branch
          %253 = sbr.rel (%p251) target = $region16
        $region15: #{autoencoder_mlp4_forward.1} parent=11 // pred_region
          _
        $region16: #{autoencoder_mlp4_forward.1} parent=11 // pred_fallthru
          _
        // Predicated region
        $region17: #{autoencoder_mlp4_forward.1} parent=11 // pred_check
          %p254 = pneg %p84
        $region18: #{autoencoder_mlp4_forward.1} parent=11 // pred_check_branch
          %256 = sbr.rel (%p254) target = $region20
        $region19: #{autoencoder_mlp4_forward.1} parent=11 // pred_region
          _
        $region20: #{autoencoder_mlp4_forward.1} parent=11 // pred_fallthru
          _
        // Predicated region
        $region21: #{autoencoder_mlp4_forward.1} parent=11 // pred_check
          %p257 = pneg %p105
        $region22: #{autoencoder_mlp4_forward.1} parent=11 // pred_check_branch
          %259 = sbr.rel (%p257) target = $region24
        $region23: #{autoencoder_mlp4_forward.1} parent=11 // pred_region
          _
        $region24: #{autoencoder_mlp4_forward.1} parent=11 // pred_fallthru
          _
        // Predicated region
        $region25: #{autoencoder_mlp4_forward.1} parent=11 // pred_check
          %p260 = pneg %p126
        $region26: #{autoencoder_mlp4_forward.1} parent=11 // pred_check_branch
          %262 = sbr.rel (%p260) target = $region28
        $region27: #{autoencoder_mlp4_forward.1} parent=11 // pred_region
          _
        $region28: #{autoencoder_mlp4_forward.1} parent=11 // pred_fallthru
          _
        // Predicated region
        $region29: #{autoencoder_mlp4_forward.1} parent=11 // pred_check
          %p263 = pneg %p147
        $region30: #{autoencoder_mlp4_forward.1} parent=11 // pred_check_branch
          %265 = sbr.rel (%p263) target = $region32
        $region31: #{autoencoder_mlp4_forward.1} parent=11 // pred_region
          _
        $region32: #{autoencoder_mlp4_forward.1} parent=11 // pred_fallthru
          _
        // Predicated region
        $region33: #{autoencoder_mlp4_forward.1} parent=11 // pred_check
          %p266 = pneg %p168
        $region34: #{autoencoder_mlp4_forward.1} parent=11 // pred_check_branch
          %268 = sbr.rel (%p266) target = $region36
        $region35: #{autoencoder_mlp4_forward.1} parent=11 // pred_region
          _
        $region36: #{autoencoder_mlp4_forward.1} parent=11 // pred_fallthru
          _
        // Predicated region
        $region37: #{autoencoder_mlp4_forward.1} parent=11 // pred_check
          %p269 = pneg %p189
        $region38: #{autoencoder_mlp4_forward.1} parent=11 // pred_check_branch
          %271 = sbr.rel (%p269) target = $region40
        $region39: #{autoencoder_mlp4_forward.1} parent=11 // pred_region
          %273 = vsyncadd [#allocation3], 0
          %s274 = sshll.u32 %s7, 4
          %s275 = int_to_ptr.hbm [resolvable:$true] %s274
          %s276 = sshll.u32 [#allocation2], 4
          %s277 = int_to_ptr.vmem [resolvable:$true] %s276
          %282 = dma.hbm_to_vmem [thread:$0]  %s275, 28672, %s277, [#allocation3], 448, 448, 28
        $region40: #{autoencoder_mlp4_forward.1} parent=11 // pred_fallthru
          _
        // Predicated region
        $region41: #{autoencoder_mlp4_forward.1} parent=11 // pred_check
          %p283 = pneg %p210
        $region42: #{autoencoder_mlp4_forward.1} parent=11 // pred_check_branch
          %285 = sbr.rel (%p283) target = $region44
        $region43: #{autoencoder_mlp4_forward.1} parent=11 // pred_region
          _
        $region44: #{autoencoder_mlp4_forward.1} parent=11 // pred_fallthru
          _
      $region12: #{autoencoder_mlp4_forward.1} parent=5 // pred_fallthru
        _
      %p286 = scmp.lt.s32.totalorder %s16, 2
      // Predicated region
      $region45: #{autoencoder_mlp4_forward.1} parent=5 // pred_check
        %p287 = pneg %p286
      $region46: #{autoencoder_mlp4_forward.1} parent=5 // pred_check_branch
        %289 = sbr.rel (%p287) target = $region48
      $region47: #{autoencoder_mlp4_forward.1} parent=5 // pred_region
        // Predicated region
        $region49: #{autoencoder_mlp4_forward.1} parent=47 // pred_check
          %p290 = pneg %p36
        $region50: #{autoencoder_mlp4_forward.1} parent=47 // pred_check_branch
          %292 = sbr.rel (%p290) target = $region52
        $region51: #{autoencoder_mlp4_forward.1} parent=47 // pred_region
          %s293 = smul.u32 16, %s16
          %p294 = scmp.lt.s32.totalorder %s293, 31
          %s295 = scalar_select %p294, %s293, 31
          %s296 = smul.addr %s295, 7
          %s297 = smul.addr %s296, 8
          %s298 = scalar_lea.vmem %s0, %s297
          %s299 = smul.u32 16, %s16
        $region52: #{autoencoder_mlp4_forward.1} parent=47 // pred_fallthru
          _
      $region48: #{autoencoder_mlp4_forward.1} parent=5 // pred_fallthru
        _
      %p300 = scmp.le.s32.totalorder 1, %s16
      %p301 = scmp.lt.s32.totalorder %s16, 3
      %p302 = pnand %p300, %p301
      %p303 = pneg %p302
      // Predicated region
      $region53: #{autoencoder_mlp4_forward.1} parent=5 // pred_check
        _
      $region54: #{autoencoder_mlp4_forward.1} parent=5 // pred_check_branch
        %305 = sbr.rel (%p302) target = $region56
      $region55: #{autoencoder_mlp4_forward.1} parent=5 // pred_region
        %s306 = ssub.s32 %s16, 1
        // Predicated region
        $region57: #{autoencoder_mlp4_forward.1} parent=55 // pred_check
          %p307 = pneg %p189
        $region58: #{autoencoder_mlp4_forward.1} parent=55 // pred_check_branch
          %309 = sbr.rel (%p307) target = $region60
        $region59: #{autoencoder_mlp4_forward.1} parent=55 // pred_region
          %311 = dma.done [#allocation3], 28672
        $region60: #{autoencoder_mlp4_forward.1} parent=55 // pred_fallthru
          _
        %s312 = smul.u32 16, %s21
        %p313 = scmp.lt.s32.totalorder %s312, 31
        %s314 = scalar_select %p313, %s312, 31
        %s315 = smul.addr %s314, 7
        %s316 = smul.addr %s315, 8
        %s317 = scalar_lea.vmem %s0, %s316
        %p318 = pneg %p42
        %p319 = pneg %p39
        %p320 = pneg %p63
        %p321 = pneg %p60
        %p322 = pneg %p84
        %p323 = pneg %p81
        %p324 = pneg %p105
        %p325 = pneg %p102
        %p326 = pneg %p126
        %p327 = pneg %p123
        %p328 = pneg %p147
        %p329 = pneg %p144
        %p330 = pneg %p168
        %p331 = pneg %p165
        %p332 = pneg %p189
        %p333 = pneg %p186
        %p334 = pneg %p210
        %p335 = pneg %p207
        %p336 = pneg %p236
        %p337 = pneg %p233
        %s338 = smul.u32 16, %s21
        %p339 = scmp.lt.s32.totalorder %s338, 31
        %s340 = scalar_select %p339, %s338, 31
        %s341 = smul.addr %s340, 7
        %s342 = smul.addr %s341, 8
        %s343 = scalar_lea.vmem %s9, %s342
        %s344 = smul.u32 16, %s21
        %p345 = scmp.lt.s32.totalorder %s344, 31
        %s346 = scalar_select %p345, %s344, 31
        %s347 = smul.addr %s346, 7
        %s348 = smul.addr %s347, 8
        %s349 = scalar_lea.vmem %s0, %s348
        %s350 = smul.u32 16, %s21
        %s351 = smul.u32 16, %s21
        %p352 = scmp.lt.s32.totalorder %s351, 31
        %s353 = scalar_select %p352, %s351, 31
        %s354 = smul.addr %s353, 7
        %s355 = smul.addr %s354, 8
        %s356 = scalar_lea.vmem %s9, %s355
        %s357 = smul.u32 16, %s21
        %v359 = vld [vmem:[%s349] sm:$0xff]
        %v360 = vld [vmem:[%s349 + $0x8] sm:$0xff]
        %v361 = vld [vmem:[%s349 + $0x10] sm:$0xff]
        %v362 = vld [vmem:[%s349 + $0x18] sm:$0xff]
        %v363 = vld [vmem:[%s349 + $0x20] sm:$0xff]
        %v364 = vld [vmem:[%s349 + $0x28] sm:$0xff]
        %v365 = vld [vmem:[%s349 + $0x30] sm:$0xff]
        %v366 = vld [vmem:[%s349 + $0x38] sm:$0xff]
        %v367 = vld [vmem:[%s349 + $0x40] sm:$0xff]
        %v368 = vld [vmem:[%s349 + $0x48] sm:$0xff]
        %v369 = vld [vmem:[%s349 + $0x50] sm:$0xff]
        %v370 = vld [vmem:[%s349 + $0x58] sm:$0xff]
        %v371 = vld [vmem:[%s349 + $0x60] sm:$0xff]
        %v372 = vld [vmem:[%s349 + $0x68] sm:$0xff]
        %v373 = vld [vmem:[%s349 + $0x70] sm:$0xff]
        %v374 = vld [vmem:[%s349 + $0x78] sm:$0xff]
        %v375 = vld [vmem:[%s349 + $0x80] sm:$0xff]
        %v376 = vld [vmem:[%s349 + $0x88] sm:$0xff]
        %v377 = vld [vmem:[%s349 + $0x90] sm:$0xff]
        %v378 = vld [vmem:[%s349 + $0x98] sm:$0xff]
        %v379 = vld [vmem:[%s349 + $0xa0] sm:$0xff]
        %v380 = vld [vmem:[%s349 + $0xa8] sm:$0xff]
        %v381 = vld [vmem:[%s349 + $0xb0] sm:$0xff]
        %v382 = vld [vmem:[%s349 + $0xb8] sm:$0xff]
        %v383 = vld [vmem:[%s349 + $0xc0] sm:$0xff]
        %v384 = vld [vmem:[%s349 + $0xc8] sm:$0xff]
        %v385 = vld [vmem:[%s349 + $0xd0] sm:$0xff]
        %v386 = vld [vmem:[%s349 + $0xd8] sm:$0xff]
        %v387 = vld [vmem:[%s349 + $0xe0] sm:$0xff]
        %v388 = vld [vmem:[%s349 + $0xe8] sm:$0xff]
        %v389 = vld [vmem:[%s349 + $0xf0] sm:$0xff]
        %v390 = vld [vmem:[%s349 + $0xf8] sm:$0xff]
        %v391 = vld [vmem:[%s349 + $0x100] sm:$0xff]
        %v392 = vld [vmem:[%s349 + $0x108] sm:$0xff]
        %v393 = vld [vmem:[%s349 + $0x110] sm:$0xff]
        %v394 = vld [vmem:[%s349 + $0x118] sm:$0xff]
        %v395 = vld [vmem:[%s349 + $0x120] sm:$0xff]
        %v396 = vld [vmem:[%s349 + $0x128] sm:$0xff]
        %v397 = vld [vmem:[%s349 + $0x130] sm:$0xff]
        %v398 = vld [vmem:[%s349 + $0x138] sm:$0xff]
        %v399 = vld [vmem:[%s349 + $0x140] sm:$0xff]
        %v400 = vld [vmem:[%s349 + $0x148] sm:$0xff]
        %v401 = vld [vmem:[%s349 + $0x150] sm:$0xff]
        %v402 = vld [vmem:[%s349 + $0x158] sm:$0xff]
        %v403 = vld [vmem:[%s349 + $0x160] sm:$0xff]
        %v404 = vld [vmem:[%s349 + $0x168] sm:$0xff]
        %v405 = vld [vmem:[%s349 + $0x170] sm:$0xff]
        %v406 = vld [vmem:[%s349 + $0x178] sm:$0xff]
        %v407 = vld [vmem:[%s349 + $0x180] sm:$0xff]
        %v408 = vld [vmem:[%s349 + $0x188] sm:$0xff]
        %v409 = vld [vmem:[%s349 + $0x190] sm:$0xff]
        %v410 = vld [vmem:[%s349 + $0x198] sm:$0xff]
        %v411 = vld [vmem:[%s349 + $0x1a0] sm:$0xff]
        %v412 = vld [vmem:[%s349 + $0x1a8] sm:$0xff]
        %v413 = vld [vmem:[%s349 + $0x1b0] sm:$0xff]
        %v414 = vld [vmem:[%s349 + $0x1b8] sm:$0xff]
        %v415 = vld [vmem:[%s349 + $0x1c0] sm:$0xff]
        %v416 = vld [vmem:[%s349 + $0x1c8] sm:$0xff]
        %v417 = vld [vmem:[%s349 + $0x1d0] sm:$0xff]
        %v418 = vld [vmem:[%s349 + $0x1d8] sm:$0xff]
        %v419 = vld [vmem:[%s349 + $0x1e0] sm:$0xff]
        %v420 = vld [vmem:[%s349 + $0x1e8] sm:$0xff]
        %v421 = vld [vmem:[%s349 + $0x1f0] sm:$0xff]
        %v422 = vld [vmem:[%s349 + $0x1f8] sm:$0xff]
        %v423 = vld [vmem:[%s349 + $0x200] sm:$0xff]
        %v424 = vld [vmem:[%s349 + $0x208] sm:$0xff]
        %v425 = vld [vmem:[%s349 + $0x210] sm:$0xff]
        %v426 = vld [vmem:[%s349 + $0x218] sm:$0xff]
        %v427 = vld [vmem:[%s349 + $0x220] sm:$0xff]
        %v428 = vld [vmem:[%s349 + $0x228] sm:$0xff]
        %v429 = vld [vmem:[%s349 + $0x230] sm:$0xff]
        %v430 = vld [vmem:[%s349 + $0x238] sm:$0xff]
        %v431 = vld [vmem:[%s349 + $0x240] sm:$0xff]
        %v432 = vld [vmem:[%s349 + $0x248] sm:$0xff]
        %v433 = vld [vmem:[%s349 + $0x250] sm:$0xff]
        %v434 = vld [vmem:[%s349 + $0x258] sm:$0xff]
        %v435 = vld [vmem:[%s349 + $0x260] sm:$0xff]
        %v436 = vld [vmem:[%s349 + $0x268] sm:$0xff]
        %v437 = vld [vmem:[%s349 + $0x270] sm:$0xff]
        %v438 = vld [vmem:[%s349 + $0x278] sm:$0xff]
        %v439 = vld [vmem:[%s349 + $0x280] sm:$0xff]
        %v440 = vld [vmem:[%s349 + $0x288] sm:$0xff]
        %v441 = vld [vmem:[%s349 + $0x290] sm:$0xff]
        %v442 = vld [vmem:[%s349 + $0x298] sm:$0xff]
        %v443 = vld [vmem:[%s349 + $0x2a0] sm:$0xff]
        %v444 = vld [vmem:[%s349 + $0x2a8] sm:$0xff]
        %v445 = vld [vmem:[%s349 + $0x2b0] sm:$0xff]
        %v446 = vld [vmem:[%s349 + $0x2b8] sm:$0xff]
        %v447 = vld [vmem:[%s349 + $0x2c0] sm:$0xff]
        %v448 = vld [vmem:[%s349 + $0x2c8] sm:$0xff]
        %v449 = vld [vmem:[%s349 + $0x2d0] sm:$0xff]
        %v450 = vld [vmem:[%s349 + $0x2d8] sm:$0xff]
        %v451 = vld [vmem:[%s349 + $0x2e0] sm:$0xff]
        %v452 = vld [vmem:[%s349 + $0x2e8] sm:$0xff]
        %v453 = vld [vmem:[%s349 + $0x2f0] sm:$0xff]
        %v454 = vld [vmem:[%s349 + $0x2f8] sm:$0xff]
        %v455 = vld [vmem:[%s349 + $0x300] sm:$0xff]
        %v456 = vld [vmem:[%s349 + $0x308] sm:$0xff]
        %v457 = vld [vmem:[%s349 + $0x310] sm:$0xff]
        %v458 = vld [vmem:[%s349 + $0x318] sm:$0xff]
        %v459 = vld [vmem:[%s349 + $0x320] sm:$0xff]
        %v460 = vld [vmem:[%s349 + $0x328] sm:$0xff]
        %v461 = vld [vmem:[%s349 + $0x330] sm:$0xff]
        %v462 = vld [vmem:[%s349 + $0x338] sm:$0xff]
        %v463 = vld [vmem:[%s349 + $0x340] sm:$0xff]
        %v464 = vld [vmem:[%s349 + $0x348] sm:$0xff]
        %v465 = vld [vmem:[%s349 + $0x350] sm:$0xff]
        %v466 = vld [vmem:[%s349 + $0x358] sm:$0xff]
        %v467 = vld [vmem:[%s349 + $0x360] sm:$0xff]
        %v468 = vld [vmem:[%s349 + $0x368] sm:$0xff]
        %v469 = vld [vmem:[%s349 + $0x370] sm:$0xff]
        %v470 = vld [vmem:[%s349 + $0x378] sm:$0xff]
        %v471 = vpack.c.bf16 %v366, %v359
        %v472 = vpack.c.bf16 %v367, %v360
        %v473 = vpack.c.bf16 %v368, %v361
        %v474 = vpack.c.bf16 %v369, %v362
        %v475 = vpack.c.bf16 %v370, %v363
        %v476 = vpack.c.bf16 %v371, %v364
        %v477 = vpack.c.bf16 %v372, %v365
        %v478 = vpack.c.bf16 %v380, %v373
        %v479 = vpack.c.bf16 %v381, %v374
        %v480 = vpack.c.bf16 %v382, %v375
        %v481 = vpack.c.bf16 %v383, %v376
        %v482 = vpack.c.bf16 %v384, %v377
        %v483 = vpack.c.bf16 %v385, %v378
        %v484 = vpack.c.bf16 %v386, %v379
        %v485 = vpack.c.bf16 %v394, %v387
        %v486 = vpack.c.bf16 %v395, %v388
        %v487 = vpack.c.bf16 %v396, %v389
        %v488 = vpack.c.bf16 %v397, %v390
        %v489 = vpack.c.bf16 %v398, %v391
        %v490 = vpack.c.bf16 %v399, %v392
        %v491 = vpack.c.bf16 %v400, %v393
        %v492 = vpack.c.bf16 %v408, %v401
        %v493 = vpack.c.bf16 %v409, %v402
        %v494 = vpack.c.bf16 %v410, %v403
        %v495 = vpack.c.bf16 %v411, %v404
        %v496 = vpack.c.bf16 %v412, %v405
        %v497 = vpack.c.bf16 %v413, %v406
        %v498 = vpack.c.bf16 %v414, %v407
        %v499 = vpack.c.bf16 %v422, %v415
        %v500 = vpack.c.bf16 %v423, %v416
        %v501 = vpack.c.bf16 %v424, %v417
        %v502 = vpack.c.bf16 %v425, %v418
        %v503 = vpack.c.bf16 %v426, %v419
        %v504 = vpack.c.bf16 %v427, %v420
        %v505 = vpack.c.bf16 %v428, %v421
        %v506 = vpack.c.bf16 %v436, %v429
        %v507 = vpack.c.bf16 %v437, %v430
        %v508 = vpack.c.bf16 %v438, %v431
        %v509 = vpack.c.bf16 %v439, %v432
        %v510 = vpack.c.bf16 %v440, %v433
        %v511 = vpack.c.bf16 %v441, %v434
        %v512 = vpack.c.bf16 %v442, %v435
        %v513 = vpack.c.bf16 %v450, %v443
        %v514 = vpack.c.bf16 %v451, %v444
        %v515 = vpack.c.bf16 %v452, %v445
        %v516 = vpack.c.bf16 %v453, %v446
        %v517 = vpack.c.bf16 %v454, %v447
        %v518 = vpack.c.bf16 %v455, %v448
        %v519 = vpack.c.bf16 %v456, %v449
        %v520 = vpack.c.bf16 %v464, %v457
        %v521 = vpack.c.bf16 %v465, %v458
        %v522 = vpack.c.bf16 %v466, %v459
        %v523 = vpack.c.bf16 %v467, %v460
        %v524 = vpack.c.bf16 %v468, %v461
        %v525 = vpack.c.bf16 %v469, %v462
        %v526 = vpack.c.bf16 %v470, %v463
        %v527 = vld [vmem:[%s1] sm:$0xff]
        %v528 = vld [vmem:[%s1 + $0x8] sm:$0xff]
        %v529 = vld [vmem:[%s1 + $0x10] sm:$0xff]
        %v530 = vld [vmem:[%s1 + $0x18] sm:$0xff]
        %v531 = vld [vmem:[%s1 + $0x20] sm:$0xff]
        %v532 = vld [vmem:[%s1 + $0x28] sm:$0xff]
        %v533 = vld [vmem:[%s1 + $0x30] sm:$0xff]
        %v534 = vld [vmem:[%s1 + $0x38] sm:$0xff]
        %v535 = vld [vmem:[%s1 + $0x40] sm:$0xff]
        %v536 = vld [vmem:[%s1 + $0x48] sm:$0xff]
        %v537 = vld [vmem:[%s1 + $0x50] sm:$0xff]
        %v538 = vld [vmem:[%s1 + $0x58] sm:$0xff]
        %v539 = vld [vmem:[%s1 + $0x60] sm:$0xff]
        %v540 = vld [vmem:[%s1 + $0x68] sm:$0xff]
        %v541 = vld [vmem:[%s1 + $0x70] sm:$0xff]
        %v542 = vld [vmem:[%s1 + $0x78] sm:$0xff]
        %v543 = vld [vmem:[%s1 + $0x80] sm:$0xff]
        %v544 = vld [vmem:[%s1 + $0x88] sm:$0xff]
        %v545 = vld [vmem:[%s1 + $0x90] sm:$0xff]
        %v546 = vld [vmem:[%s1 + $0x98] sm:$0xff]
        %v547 = vld [vmem:[%s1 + $0xa0] sm:$0xff]
        %v548 = vld [vmem:[%s1 + $0xa8] sm:$0xff]
        %v549 = vld [vmem:[%s1 + $0xb0] sm:$0xff]
        %v550 = vld [vmem:[%s1 + $0xb8] sm:$0xff]
        %v551 = vld [vmem:[%s1 + $0xc0] sm:$0xff]
        %v552 = vld [vmem:[%s1 + $0xc8] sm:$0xff]
        %v553 = vld [vmem:[%s1 + $0xd0] sm:$0xff]
        %v554 = vld [vmem:[%s1 + $0xd8] sm:$0xff]
        %v555 = vld [vmem:[%s1 + $0xe0] sm:$0xff]
        %v556 = vld [vmem:[%s1 + $0xe8] sm:$0xff]
        %v557 = vld [vmem:[%s1 + $0xf0] sm:$0xff]
        %v558 = vld [vmem:[%s1 + $0xf8] sm:$0xff]
        %v559 = vld [vmem:[%s1 + $0x100] sm:$0xff]
        %v560 = vld [vmem:[%s1 + $0x108] sm:$0xff]
        %v561 = vld [vmem:[%s1 + $0x110] sm:$0xff]
        %v562 = vld [vmem:[%s1 + $0x118] sm:$0xff]
        %v563 = vld [vmem:[%s1 + $0x120] sm:$0xff]
        %v564 = vld [vmem:[%s1 + $0x128] sm:$0xff]
        %v565 = vld [vmem:[%s1 + $0x130] sm:$0xff]
        %v566 = vld [vmem:[%s1 + $0x138] sm:$0xff]
        %v567 = vld [vmem:[%s1 + $0x140] sm:$0xff]
        %v568 = vld [vmem:[%s1 + $0x148] sm:$0xff]
        %v569 = vld [vmem:[%s1 + $0x150] sm:$0xff]
        %v570 = vld [vmem:[%s1 + $0x158] sm:$0xff]
        %v571 = vld [vmem:[%s1 + $0x160] sm:$0xff]
        %v572 = vld [vmem:[%s1 + $0x168] sm:$0xff]
        %v573 = vld [vmem:[%s1 + $0x170] sm:$0xff]
        %v574 = vld [vmem:[%s1 + $0x178] sm:$0xff]
        %v575 = vld [vmem:[%s1 + $0x180] sm:$0xff]
        %v576 = vld [vmem:[%s1 + $0x188] sm:$0xff]
        %v577 = vld [vmem:[%s1 + $0x190] sm:$0xff]
        %v578 = vld [vmem:[%s1 + $0x198] sm:$0xff]
        %v579 = vld [vmem:[%s1 + $0x1a0] sm:$0xff]
        %v580 = vld [vmem:[%s1 + $0x1a8] sm:$0xff]
        %v581 = vld [vmem:[%s1 + $0x1b0] sm:$0xff]
        %v582 = vld [vmem:[%s1 + $0x1b8] sm:$0xff]
        %v583 = vld [vmem:[%s1 + $0x1c0] sm:$0xff]
        %v584 = vld [vmem:[%s1 + $0x1c8] sm:$0xff]
        %v585 = vld [vmem:[%s1 + $0x1d0] sm:$0xff]
        %v586 = vld [vmem:[%s1 + $0x1d8] sm:$0xff]
        %v587 = vld [vmem:[%s1 + $0x1e0] sm:$0xff]
        %v588 = vld [vmem:[%s1 + $0x1e8] sm:$0xff]
        %v589 = vld [vmem:[%s1 + $0x1f0] sm:$0xff]
        %v590 = vld [vmem:[%s1 + $0x1f8] sm:$0xff]
        %v591 = vld [vmem:[%s1 + $0x200] sm:$0xff]
        %v592 = vld [vmem:[%s1 + $0x208] sm:$0xff]
        %v593 = vld [vmem:[%s1 + $0x210] sm:$0xff]
        %v594 = vld [vmem:[%s1 + $0x218] sm:$0xff]
        %v595 = vld [vmem:[%s1 + $0x220] sm:$0xff]
        %v596 = vld [vmem:[%s1 + $0x228] sm:$0xff]
        %v597 = vld [vmem:[%s1 + $0x230] sm:$0xff]
        %v598 = vld [vmem:[%s1 + $0x238] sm:$0xff]
        %v599 = vld [vmem:[%s1 + $0x240] sm:$0xff]
        %v600 = vld [vmem:[%s1 + $0x248] sm:$0xff]
        %v601 = vld [vmem:[%s1 + $0x250] sm:$0xff]
        %v602 = vld [vmem:[%s1 + $0x258] sm:$0xff]
        %v603 = vld [vmem:[%s1 + $0x260] sm:$0xff]
        %v604 = vld [vmem:[%s1 + $0x268] sm:$0xff]
        %v605 = vld [vmem:[%s1 + $0x270] sm:$0xff]
        %v606 = vld [vmem:[%s1 + $0x278] sm:$0xff]
        %v607 = vld [vmem:[%s1 + $0x280] sm:$0xff]
        %v608 = vld [vmem:[%s1 + $0x288] sm:$0xff]
        %v609 = vld [vmem:[%s1 + $0x290] sm:$0xff]
        %v610 = vld [vmem:[%s1 + $0x298] sm:$0xff]
        %v611 = vld [vmem:[%s1 + $0x2a0] sm:$0xff]
        %v612 = vld [vmem:[%s1 + $0x2a8] sm:$0xff]
        %v613 = vld [vmem:[%s1 + $0x2b0] sm:$0xff]
        %v614 = vld [vmem:[%s1 + $0x2b8] sm:$0xff]
        %v615 = vld [vmem:[%s1 + $0x2c0] sm:$0xff]
        %v616 = vld [vmem:[%s1 + $0x2c8] sm:$0xff]
        %v617 = vld [vmem:[%s1 + $0x2d0] sm:$0xff]
        %v618 = vld [vmem:[%s1 + $0x2d8] sm:$0xff]
        %v619 = vld [vmem:[%s1 + $0x2e0] sm:$0xff]
        %v620 = vld [vmem:[%s1 + $0x2e8] sm:$0xff]
        %v621 = vld [vmem:[%s1 + $0x2f0] sm:$0xff]
        %v622 = vld [vmem:[%s1 + $0x2f8] sm:$0xff]
        %v623 = vld [vmem:[%s1 + $0x300] sm:$0xff]
        %v624 = vld [vmem:[%s1 + $0x308] sm:$0xff]
        %v625 = vld [vmem:[%s1 + $0x310] sm:$0xff]
        %v626 = vld [vmem:[%s1 + $0x318] sm:$0xff]
        %v627 = vld [vmem:[%s1 + $0x320] sm:$0xff]
        %v628 = vld [vmem:[%s1 + $0x328] sm:$0xff]
        %v629 = vld [vmem:[%s1 + $0x330] sm:$0xff]
        %v630 = vld [vmem:[%s1 + $0x338] sm:$0xff]
        %v631 = vld [vmem:[%s1 + $0x340] sm:$0xff]
        %v632 = vld [vmem:[%s1 + $0x348] sm:$0xff]
        %v633 = vld [vmem:[%s1 + $0x350] sm:$0xff]
        %v634 = vld [vmem:[%s1 + $0x358] sm:$0xff]
        %v635 = vld [vmem:[%s1 + $0x360] sm:$0xff]
        %v636 = vld [vmem:[%s1 + $0x368] sm:$0xff]
        %v637 = vld [vmem:[%s1 + $0x370] sm:$0xff]
        %v638 = vld [vmem:[%s1 + $0x378] sm:$0xff]
        %v639 = vld [vmem:[%s1 + $0x380] sm:$0xff]
        %v640 = vld [vmem:[%s1 + $0x388] sm:$0xff]
        %v641 = vld [vmem:[%s1 + $0x390] sm:$0xff]
        %v642 = vld [vmem:[%s1 + $0x398] sm:$0xff]
        %v643 = vld [vmem:[%s1 + $0x3a0] sm:$0xff]
        %v644 = vld [vmem:[%s1 + $0x3a8] sm:$0xff]
        %v645 = vld [vmem:[%s1 + $0x3b0] sm:$0xff]
        %v646 = vld [vmem:[%s1 + $0x3b8] sm:$0xff]
        %v647 = vld [vmem:[%s1 + $0x3c0] sm:$0xff]
        %v648 = vld [vmem:[%s1 + $0x3c8] sm:$0xff]
        %v649 = vld [vmem:[%s1 + $0x3d0] sm:$0xff]
        %v650 = vld [vmem:[%s1 + $0x3d8] sm:$0xff]
        %v651 = vld [vmem:[%s1 + $0x3e0] sm:$0xff]
        %v652 = vld [vmem:[%s1 + $0x3e8] sm:$0xff]
        %v653 = vld [vmem:[%s1 + $0x3f0] sm:$0xff]
        %v654 = vld [vmem:[%s1 + $0x3f8] sm:$0xff]
        %v655 = vld [vmem:[%s1 + $0x400] sm:$0xff]
        %v656 = vld [vmem:[%s1 + $0x408] sm:$0xff]
        %v657 = vld [vmem:[%s1 + $0x410] sm:$0xff]
        %v658 = vld [vmem:[%s1 + $0x418] sm:$0xff]
        %v659 = vld [vmem:[%s1 + $0x420] sm:$0xff]
        %v660 = vld [vmem:[%s1 + $0x428] sm:$0xff]
        %v661 = vld [vmem:[%s1 + $0x430] sm:$0xff]
        %v662 = vld [vmem:[%s1 + $0x438] sm:$0xff]
        %v663 = vld [vmem:[%s1 + $0x440] sm:$0xff]
        %v664 = vld [vmem:[%s1 + $0x448] sm:$0xff]
        %v665 = vld [vmem:[%s1 + $0x450] sm:$0xff]
        %v666 = vld [vmem:[%s1 + $0x458] sm:$0xff]
        %v667 = vld [vmem:[%s1 + $0x460] sm:$0xff]
        %v668 = vld [vmem:[%s1 + $0x468] sm:$0xff]
        %v669 = vld [vmem:[%s1 + $0x470] sm:$0xff]
        %v670 = vld [vmem:[%s1 + $0x478] sm:$0xff]
        %v671 = vld [vmem:[%s1 + $0x480] sm:$0xff]
        %v672 = vld [vmem:[%s1 + $0x488] sm:$0xff]
        %v673 = vld [vmem:[%s1 + $0x490] sm:$0xff]
        %v674 = vld [vmem:[%s1 + $0x498] sm:$0xff]
        %v675 = vld [vmem:[%s1 + $0x4a0] sm:$0xff]
        %v676 = vld [vmem:[%s1 + $0x4a8] sm:$0xff]
        %v677 = vld [vmem:[%s1 + $0x4b0] sm:$0xff]
        %v678 = vld [vmem:[%s1 + $0x4b8] sm:$0xff]
        %v679 = vld [vmem:[%s1 + $0x4c0] sm:$0xff]
        %v680 = vld [vmem:[%s1 + $0x4c8] sm:$0xff]
        %v681 = vld [vmem:[%s1 + $0x4d0] sm:$0xff]
        %v682 = vld [vmem:[%s1 + $0x4d8] sm:$0xff]
        %v683 = vld [vmem:[%s1 + $0x4e0] sm:$0xff]
        %v684 = vld [vmem:[%s1 + $0x4e8] sm:$0xff]
        %v685 = vld [vmem:[%s1 + $0x4f0] sm:$0xff]
        %v686 = vld [vmem:[%s1 + $0x4f8] sm:$0xff]
        %v687 = vld [vmem:[%s1 + $0x500] sm:$0xff]
        %v688 = vld [vmem:[%s1 + $0x508] sm:$0xff]
        %v689 = vld [vmem:[%s1 + $0x510] sm:$0xff]
        %v690 = vld [vmem:[%s1 + $0x518] sm:$0xff]
        %v691 = vld [vmem:[%s1 + $0x520] sm:$0xff]
        %v692 = vld [vmem:[%s1 + $0x528] sm:$0xff]
        %v693 = vld [vmem:[%s1 + $0x530] sm:$0xff]
        %v694 = vld [vmem:[%s1 + $0x538] sm:$0xff]
        %v695 = vld [vmem:[%s1 + $0x540] sm:$0xff]
        %v696 = vld [vmem:[%s1 + $0x548] sm:$0xff]
        %v697 = vld [vmem:[%s1 + $0x550] sm:$0xff]
        %v698 = vld [vmem:[%s1 + $0x558] sm:$0xff]
        %v699 = vld [vmem:[%s1 + $0x560] sm:$0xff]
        %v700 = vld [vmem:[%s1 + $0x568] sm:$0xff]
        %v701 = vld [vmem:[%s1 + $0x570] sm:$0xff]
        %v702 = vld [vmem:[%s1 + $0x578] sm:$0xff]
        %v703 = vld [vmem:[%s1 + $0x580] sm:$0xff]
        %v704 = vld [vmem:[%s1 + $0x588] sm:$0xff]
        %v705 = vld [vmem:[%s1 + $0x590] sm:$0xff]
        %v706 = vld [vmem:[%s1 + $0x598] sm:$0xff]
        %v707 = vld [vmem:[%s1 + $0x5a0] sm:$0xff]
        %v708 = vld [vmem:[%s1 + $0x5a8] sm:$0xff]
        %v709 = vld [vmem:[%s1 + $0x5b0] sm:$0xff]
        %v710 = vld [vmem:[%s1 + $0x5b8] sm:$0xff]
        %v711 = vld [vmem:[%s1 + $0x5c0] sm:$0xff]
        %v712 = vld [vmem:[%s1 + $0x5c8] sm:$0xff]
        %v713 = vld [vmem:[%s1 + $0x5d0] sm:$0xff]
        %v714 = vld [vmem:[%s1 + $0x5d8] sm:$0xff]
        %v715 = vld [vmem:[%s1 + $0x5e0] sm:$0xff]
        %v716 = vld [vmem:[%s1 + $0x5e8] sm:$0xff]
        %v717 = vld [vmem:[%s1 + $0x5f0] sm:$0xff]
        %v718 = vld [vmem:[%s1 + $0x5f8] sm:$0xff]
        %v719 = vld [vmem:[%s1 + $0x600] sm:$0xff]
        %v720 = vld [vmem:[%s1 + $0x608] sm:$0xff]
        %v721 = vld [vmem:[%s1 + $0x610] sm:$0xff]
        %v722 = vld [vmem:[%s1 + $0x618] sm:$0xff]
        %v723 = vld [vmem:[%s1 + $0x620] sm:$0xff]
        %v724 = vld [vmem:[%s1 + $0x628] sm:$0xff]
        %v725 = vld [vmem:[%s1 + $0x630] sm:$0xff]
        %v726 = vld [vmem:[%s1 + $0x638] sm:$0xff]
        %v727 = vld [vmem:[%s1 + $0x640] sm:$0xff]
        %v728 = vld [vmem:[%s1 + $0x648] sm:$0xff]
        %v729 = vld [vmem:[%s1 + $0x650] sm:$0xff]
        %v730 = vld [vmem:[%s1 + $0x658] sm:$0xff]
        %v731 = vld [vmem:[%s1 + $0x660] sm:$0xff]
        %v732 = vld [vmem:[%s1 + $0x668] sm:$0xff]
        %v733 = vld [vmem:[%s1 + $0x670] sm:$0xff]
        %v734 = vld [vmem:[%s1 + $0x678] sm:$0xff]
        %v735 = vld [vmem:[%s1 + $0x680] sm:$0xff]
        %v736 = vld [vmem:[%s1 + $0x688] sm:$0xff]
        %v737 = vld [vmem:[%s1 + $0x690] sm:$0xff]
        %v738 = vld [vmem:[%s1 + $0x698] sm:$0xff]
        %v739 = vld [vmem:[%s1 + $0x6a0] sm:$0xff]
        %v740 = vld [vmem:[%s1 + $0x6a8] sm:$0xff]
        %v741 = vld [vmem:[%s1 + $0x6b0] sm:$0xff]
        %v742 = vld [vmem:[%s1 + $0x6b8] sm:$0xff]
        %v743 = vld [vmem:[%s1 + $0x6c0] sm:$0xff]
        %v744 = vld [vmem:[%s1 + $0x6c8] sm:$0xff]
        %v745 = vld [vmem:[%s1 + $0x6d0] sm:$0xff]
        %v746 = vld [vmem:[%s1 + $0x6d8] sm:$0xff]
        %v747 = vld [vmem:[%s1 + $0x6e0] sm:$0xff]
        %v748 = vld [vmem:[%s1 + $0x6e8] sm:$0xff]
        %v749 = vld [vmem:[%s1 + $0x6f0] sm:$0xff]
        %v750 = vld [vmem:[%s1 + $0x6f8] sm:$0xff]
        %v751 = vld [vmem:[%s2] sm:$0xf]
        %v753 = vperm.slane %v751, 0
        %v754 = vperm.slane %v751, 1
        %v755 = vperm.slane %v751, 2
        %v756 = vperm.slane %v751, 3
        %v985 = vunpack.c.l.b16 %v527
        %v986 = vunpack.c.h.b16 %v527
        %v987 = vunpack.c.l.b16 %v528
        %v988 = vunpack.c.h.b16 %v528
        %v989 = vunpack.c.l.b16 %v529
        %v990 = vunpack.c.h.b16 %v529
        %v991 = vunpack.c.l.b16 %v530
        %v992 = vunpack.c.h.b16 %v530
        %v993 = vunpack.c.l.b16 %v531
        %v994 = vunpack.c.h.b16 %v531
        %v995 = vunpack.c.l.b16 %v532
        %v996 = vunpack.c.h.b16 %v532
        %v997 = vunpack.c.l.b16 %v533
        %v998 = vunpack.c.h.b16 %v533
        %v999 = vunpack.c.l.b16 %v534
        %v1000 = vunpack.c.h.b16 %v534
        %v1001 = vunpack.c.l.b16 %v535
        %v1002 = vunpack.c.h.b16 %v535
        %v1003 = vunpack.c.l.b16 %v536
        %v1004 = vunpack.c.h.b16 %v536
        %v1005 = vunpack.c.l.b16 %v537
        %v1006 = vunpack.c.h.b16 %v537
        %v1007 = vunpack.c.l.b16 %v538
        %v1008 = vunpack.c.h.b16 %v538
        %v1009 = vunpack.c.l.b16 %v539
        %v1010 = vunpack.c.h.b16 %v539
        %v1011 = vunpack.c.l.b16 %v540
        %v1012 = vunpack.c.h.b16 %v540
        %v1013 = vunpack.c.l.b16 %v541
        %v1014 = vunpack.c.h.b16 %v541
        %v1015 = vunpack.c.l.b16 %v542
        %v1016 = vunpack.c.h.b16 %v542
        %v1017 = vunpack.c.l.b16 %v543
        %v1018 = vunpack.c.h.b16 %v543
        %v1019 = vunpack.c.l.b16 %v544
        %v1020 = vunpack.c.h.b16 %v544
        %v1021 = vunpack.c.l.b16 %v545
        %v1022 = vunpack.c.h.b16 %v545
        %v1023 = vunpack.c.l.b16 %v546
        %v1024 = vunpack.c.h.b16 %v546
        %v1025 = vunpack.c.l.b16 %v547
        %v1026 = vunpack.c.h.b16 %v547
        %v1027 = vunpack.c.l.b16 %v548
        %v1028 = vunpack.c.h.b16 %v548
        %v1029 = vunpack.c.l.b16 %v549
        %v1030 = vunpack.c.h.b16 %v549
        %v1031 = vunpack.c.l.b16 %v550
        %v1032 = vunpack.c.h.b16 %v550
        %v1033 = vunpack.c.l.b16 %v551
        %v1034 = vunpack.c.h.b16 %v551
        %v1035 = vunpack.c.l.b16 %v552
        %v1036 = vunpack.c.h.b16 %v552
        %v1037 = vunpack.c.l.b16 %v553
        %v1038 = vunpack.c.h.b16 %v553
        %v1039 = vunpack.c.l.b16 %v554
        %v1040 = vunpack.c.h.b16 %v554
        %v1041 = vunpack.c.l.b16 %v555
        %v1042 = vunpack.c.h.b16 %v555
        %v1043 = vunpack.c.l.b16 %v556
        %v1044 = vunpack.c.h.b16 %v556
        %v1045 = vunpack.c.l.b16 %v557
        %v1046 = vunpack.c.h.b16 %v557
        %v1047 = vunpack.c.l.b16 %v558
        %v1048 = vunpack.c.h.b16 %v558
        %v1049 = vunpack.c.l.b16 %v559
        %v1050 = vunpack.c.h.b16 %v559
        %v1051 = vunpack.c.l.b16 %v560
        %v1052 = vunpack.c.h.b16 %v560
        %v1053 = vunpack.c.l.b16 %v561
        %v1054 = vunpack.c.h.b16 %v561
        %v1055 = vunpack.c.l.b16 %v562
        %v1056 = vunpack.c.h.b16 %v562
        %v1057 = vunpack.c.l.b16 %v563
        %v1058 = vunpack.c.h.b16 %v563
        %v1059 = vunpack.c.l.b16 %v564
        %v1060 = vunpack.c.h.b16 %v564
        %v1061 = vunpack.c.l.b16 %v565
        %v1062 = vunpack.c.h.b16 %v565
        %v1063 = vunpack.c.l.b16 %v566
        %v1064 = vunpack.c.h.b16 %v566
        %v1065 = vunpack.c.l.b16 %v567
        %v1066 = vunpack.c.h.b16 %v567
        %v1067 = vunpack.c.l.b16 %v568
        %v1068 = vunpack.c.h.b16 %v568
        %v1069 = vunpack.c.l.b16 %v569
        %v1070 = vunpack.c.h.b16 %v569
        %v1071 = vunpack.c.l.b16 %v570
        %v1072 = vunpack.c.h.b16 %v570
        %v1073 = vunpack.c.l.b16 %v571
        %v1074 = vunpack.c.h.b16 %v571
        %v1075 = vunpack.c.l.b16 %v572
        %v1076 = vunpack.c.h.b16 %v572
        %v1077 = vunpack.c.l.b16 %v573
        %v1078 = vunpack.c.h.b16 %v573
        %v1079 = vunpack.c.l.b16 %v574
        %v1080 = vunpack.c.h.b16 %v574
        %v1081 = vunpack.c.l.b16 %v575
        %v1082 = vunpack.c.h.b16 %v575
        %v1083 = vunpack.c.l.b16 %v576
        %v1084 = vunpack.c.h.b16 %v576
        %v1085 = vunpack.c.l.b16 %v577
        %v1086 = vunpack.c.h.b16 %v577
        %v1087 = vunpack.c.l.b16 %v578
        %v1088 = vunpack.c.h.b16 %v578
        %v1089 = vunpack.c.l.b16 %v579
        %v1090 = vunpack.c.h.b16 %v579
        %v1091 = vunpack.c.l.b16 %v580
        %v1092 = vunpack.c.h.b16 %v580
        %v1093 = vunpack.c.l.b16 %v581
        %v1094 = vunpack.c.h.b16 %v581
        %v1095 = vunpack.c.l.b16 %v582
        %v1096 = vunpack.c.h.b16 %v582
        %v1097 = vunpack.c.l.b16 %v583
        %v1098 = vunpack.c.h.b16 %v583
        %v1099 = vunpack.c.l.b16 %v584
        %v1100 = vunpack.c.h.b16 %v584
        %v1101 = vunpack.c.l.b16 %v585
        %v1102 = vunpack.c.h.b16 %v585
        %v1103 = vunpack.c.l.b16 %v586
        %v1104 = vunpack.c.h.b16 %v586
        %v1105 = vunpack.c.l.b16 %v587
        %v1106 = vunpack.c.h.b16 %v587
        %v1107 = vunpack.c.l.b16 %v588
        %v1108 = vunpack.c.h.b16 %v588
        %v1109 = vunpack.c.l.b16 %v589
        %v1110 = vunpack.c.h.b16 %v589
        %v1111 = vunpack.c.l.b16 %v590
        %v1112 = vunpack.c.h.b16 %v590
        %v1113 = vunpack.c.l.b16 %v591
        %v1114 = vunpack.c.h.b16 %v591
        %v1115 = vunpack.c.l.b16 %v592
        %v1116 = vunpack.c.h.b16 %v592
        %v1117 = vunpack.c.l.b16 %v593
        %v1118 = vunpack.c.h.b16 %v593
        %v1119 = vunpack.c.l.b16 %v594
        %v1120 = vunpack.c.h.b16 %v594
        %v1121 = vunpack.c.l.b16 %v595
        %v1122 = vunpack.c.h.b16 %v595
        %v1123 = vunpack.c.l.b16 %v596
        %v1124 = vunpack.c.h.b16 %v596
        %v1125 = vunpack.c.l.b16 %v597
        %v1126 = vunpack.c.h.b16 %v597
        %v1127 = vunpack.c.l.b16 %v598
        %v1128 = vunpack.c.h.b16 %v598
        %v1129 = vunpack.c.l.b16 %v599
        %v1130 = vunpack.c.h.b16 %v599
        %v1131 = vunpack.c.l.b16 %v600
        %v1132 = vunpack.c.h.b16 %v600
        %v1133 = vunpack.c.l.b16 %v601
        %v1134 = vunpack.c.h.b16 %v601
        %v1135 = vunpack.c.l.b16 %v602
        %v1136 = vunpack.c.h.b16 %v602
        %v1137 = vunpack.c.l.b16 %v603
        %v1138 = vunpack.c.h.b16 %v603
        %v1139 = vunpack.c.l.b16 %v604
        %v1140 = vunpack.c.h.b16 %v604
        %v1141 = vunpack.c.l.b16 %v605
        %v1142 = vunpack.c.h.b16 %v605
        %v1143 = vunpack.c.l.b16 %v606
        %v1144 = vunpack.c.h.b16 %v606
        %v1145 = vunpack.c.l.b16 %v607
        %v1146 = vunpack.c.h.b16 %v607
        %v1147 = vunpack.c.l.b16 %v608
        %v1148 = vunpack.c.h.b16 %v608
        %v1149 = vunpack.c.l.b16 %v609
        %v1150 = vunpack.c.h.b16 %v609
        %v1151 = vunpack.c.l.b16 %v610
        %v1152 = vunpack.c.h.b16 %v610
        %v1153 = vunpack.c.l.b16 %v611
        %v1154 = vunpack.c.h.b16 %v611
        %v1155 = vunpack.c.l.b16 %v612
        %v1156 = vunpack.c.h.b16 %v612
        %v1157 = vunpack.c.l.b16 %v613
        %v1158 = vunpack.c.h.b16 %v613
        %v1159 = vunpack.c.l.b16 %v614
        %v1160 = vunpack.c.h.b16 %v614
        %v1161 = vunpack.c.l.b16 %v615
        %v1162 = vunpack.c.h.b16 %v615
        %v1163 = vunpack.c.l.b16 %v616
        %v1164 = vunpack.c.h.b16 %v616
        %v1165 = vunpack.c.l.b16 %v617
        %v1166 = vunpack.c.h.b16 %v617
        %v1167 = vunpack.c.l.b16 %v618
        %v1168 = vunpack.c.h.b16 %v618
        %v1169 = vunpack.c.l.b16 %v619
        %v1170 = vunpack.c.h.b16 %v619
        %v1171 = vunpack.c.l.b16 %v620
        %v1172 = vunpack.c.h.b16 %v620
        %v1173 = vunpack.c.l.b16 %v621
        %v1174 = vunpack.c.h.b16 %v621
        %v1175 = vunpack.c.l.b16 %v622
        %v1176 = vunpack.c.h.b16 %v622
        %v1177 = vunpack.c.l.b16 %v623
        %v1178 = vunpack.c.h.b16 %v623
        %v1179 = vunpack.c.l.b16 %v624
        %v1180 = vunpack.c.h.b16 %v624
        %v1181 = vunpack.c.l.b16 %v625
        %v1182 = vunpack.c.h.b16 %v625
        %v1183 = vunpack.c.l.b16 %v626
        %v1184 = vunpack.c.h.b16 %v626
        %v1185 = vunpack.c.l.b16 %v627
        %v1186 = vunpack.c.h.b16 %v627
        %v1187 = vunpack.c.l.b16 %v628
        %v1188 = vunpack.c.h.b16 %v628
        %v1189 = vunpack.c.l.b16 %v629
        %v1190 = vunpack.c.h.b16 %v629
        %v1191 = vunpack.c.l.b16 %v630
        %v1192 = vunpack.c.h.b16 %v630
        %v1193 = vunpack.c.l.b16 %v631
        %v1194 = vunpack.c.h.b16 %v631
        %v1195 = vunpack.c.l.b16 %v632
        %v1196 = vunpack.c.h.b16 %v632
        %v1197 = vunpack.c.l.b16 %v633
        %v1198 = vunpack.c.h.b16 %v633
        %v1199 = vunpack.c.l.b16 %v634
        %v1200 = vunpack.c.h.b16 %v634
        %v1201 = vunpack.c.l.b16 %v635
        %v1202 = vunpack.c.h.b16 %v635
        %v1203 = vunpack.c.l.b16 %v636
        %v1204 = vunpack.c.h.b16 %v636
        %v1205 = vunpack.c.l.b16 %v637
        %v1206 = vunpack.c.h.b16 %v637
        %v1207 = vunpack.c.l.b16 %v638
        %v1208 = vunpack.c.h.b16 %v638
        %v1209 = vunpack.c.l.b16 %v639
        %v1210 = vunpack.c.h.b16 %v639
        %v1211 = vunpack.c.l.b16 %v640
        %v1212 = vunpack.c.h.b16 %v640
        %v1213 = vunpack.c.l.b16 %v641
        %v1214 = vunpack.c.h.b16 %v641
        %v1215 = vunpack.c.l.b16 %v642
        %v1216 = vunpack.c.h.b16 %v642
        %v1217 = vunpack.c.l.b16 %v643
        %v1218 = vunpack.c.h.b16 %v643
        %v1219 = vunpack.c.l.b16 %v644
        %v1220 = vunpack.c.h.b16 %v644
        %v1221 = vunpack.c.l.b16 %v645
        %v1222 = vunpack.c.h.b16 %v645
        %v1223 = vunpack.c.l.b16 %v646
        %v1224 = vunpack.c.h.b16 %v646
        %v1225 = vunpack.c.l.b16 %v647
        %v1226 = vunpack.c.h.b16 %v647
        %v1227 = vunpack.c.l.b16 %v648
        %v1228 = vunpack.c.h.b16 %v648
        %v1229 = vunpack.c.l.b16 %v649
        %v1230 = vunpack.c.h.b16 %v649
        %v1231 = vunpack.c.l.b16 %v650
        %v1232 = vunpack.c.h.b16 %v650
        %v1233 = vunpack.c.l.b16 %v651
        %v1234 = vunpack.c.h.b16 %v651
        %v1235 = vunpack.c.l.b16 %v652
        %v1236 = vunpack.c.h.b16 %v652
        %v1237 = vunpack.c.l.b16 %v653
        %v1238 = vunpack.c.h.b16 %v653
        %v1239 = vunpack.c.l.b16 %v654
        %v1240 = vunpack.c.h.b16 %v654
        %v1241 = vunpack.c.l.b16 %v655
        %v1242 = vunpack.c.h.b16 %v655
        %v1243 = vunpack.c.l.b16 %v656
        %v1244 = vunpack.c.h.b16 %v656
        %v1245 = vunpack.c.l.b16 %v657
        %v1246 = vunpack.c.h.b16 %v657
        %v1247 = vunpack.c.l.b16 %v658
        %v1248 = vunpack.c.h.b16 %v658
        %v1249 = vunpack.c.l.b16 %v659
        %v1250 = vunpack.c.h.b16 %v659
        %v1251 = vunpack.c.l.b16 %v660
        %v1252 = vunpack.c.h.b16 %v660
        %v1253 = vunpack.c.l.b16 %v661
        %v1254 = vunpack.c.h.b16 %v661
        %v1255 = vunpack.c.l.b16 %v662
        %v1256 = vunpack.c.h.b16 %v662
        %v1257 = vunpack.c.l.b16 %v663
        %v1258 = vunpack.c.h.b16 %v663
        %v1259 = vunpack.c.l.b16 %v664
        %v1260 = vunpack.c.h.b16 %v664
        %v1261 = vunpack.c.l.b16 %v665
        %v1262 = vunpack.c.h.b16 %v665
        %v1263 = vunpack.c.l.b16 %v666
        %v1264 = vunpack.c.h.b16 %v666
        %v1265 = vunpack.c.l.b16 %v667
        %v1266 = vunpack.c.h.b16 %v667
        %v1267 = vunpack.c.l.b16 %v668
        %v1268 = vunpack.c.h.b16 %v668
        %v1269 = vunpack.c.l.b16 %v669
        %v1270 = vunpack.c.h.b16 %v669
        %v1271 = vunpack.c.l.b16 %v670
        %v1272 = vunpack.c.h.b16 %v670
        %v1273 = vunpack.c.l.b16 %v671
        %v1274 = vunpack.c.h.b16 %v671
        %v1275 = vunpack.c.l.b16 %v672
        %v1276 = vunpack.c.h.b16 %v672
        %v1277 = vunpack.c.l.b16 %v673
        %v1278 = vunpack.c.h.b16 %v673
        %v1279 = vunpack.c.l.b16 %v674
        %v1280 = vunpack.c.h.b16 %v674
        %v1281 = vunpack.c.l.b16 %v675
        %v1282 = vunpack.c.h.b16 %v675
        %v1283 = vunpack.c.l.b16 %v676
        %v1284 = vunpack.c.h.b16 %v676
        %v1285 = vunpack.c.l.b16 %v677
        %v1286 = vunpack.c.h.b16 %v677
        %v1287 = vunpack.c.l.b16 %v678
        %v1288 = vunpack.c.h.b16 %v678
        %v1289 = vunpack.c.l.b16 %v679
        %v1290 = vunpack.c.h.b16 %v679
        %v1291 = vunpack.c.l.b16 %v680
        %v1292 = vunpack.c.h.b16 %v680
        %v1293 = vunpack.c.l.b16 %v681
        %v1294 = vunpack.c.h.b16 %v681
        %v1295 = vunpack.c.l.b16 %v682
        %v1296 = vunpack.c.h.b16 %v682
        %v1297 = vunpack.c.l.b16 %v683
        %v1298 = vunpack.c.h.b16 %v683
        %v1299 = vunpack.c.l.b16 %v684
        %v1300 = vunpack.c.h.b16 %v684
        %v1301 = vunpack.c.l.b16 %v685
        %v1302 = vunpack.c.h.b16 %v685
        %v1303 = vunpack.c.l.b16 %v686
        %v1304 = vunpack.c.h.b16 %v686
        %v1305 = vunpack.c.l.b16 %v687
        %v1306 = vunpack.c.h.b16 %v687
        %v1307 = vunpack.c.l.b16 %v688
        %v1308 = vunpack.c.h.b16 %v688
        %v1309 = vunpack.c.l.b16 %v689
        %v1310 = vunpack.c.h.b16 %v689
        %v1311 = vunpack.c.l.b16 %v690
        %v1312 = vunpack.c.h.b16 %v690
        %v1313 = vunpack.c.l.b16 %v691
        %v1314 = vunpack.c.h.b16 %v691
        %v1315 = vunpack.c.l.b16 %v692
        %v1316 = vunpack.c.h.b16 %v692
        %v1317 = vunpack.c.l.b16 %v693
        %v1318 = vunpack.c.h.b16 %v693
        %v1319 = vunpack.c.l.b16 %v694
        %v1320 = vunpack.c.h.b16 %v694
        %v1321 = vunpack.c.l.b16 %v695
        %v1322 = vunpack.c.h.b16 %v695
        %v1323 = vunpack.c.l.b16 %v696
        %v1324 = vunpack.c.h.b16 %v696
        %v1325 = vunpack.c.l.b16 %v697
        %v1326 = vunpack.c.h.b16 %v697
        %v1327 = vunpack.c.l.b16 %v698
        %v1328 = vunpack.c.h.b16 %v698
        %v1329 = vunpack.c.l.b16 %v699
        %v1330 = vunpack.c.h.b16 %v699
        %v1331 = vunpack.c.l.b16 %v700
        %v1332 = vunpack.c.h.b16 %v700
        %v1333 = vunpack.c.l.b16 %v701
        %v1334 = vunpack.c.h.b16 %v701
        %v1335 = vunpack.c.l.b16 %v702
        %v1336 = vunpack.c.h.b16 %v702
        %v1337 = vunpack.c.l.b16 %v703
        %v1338 = vunpack.c.h.b16 %v703
        %v1339 = vunpack.c.l.b16 %v704
        %v1340 = vunpack.c.h.b16 %v704
        %v1341 = vunpack.c.l.b16 %v705
        %v1342 = vunpack.c.h.b16 %v705
        %v1343 = vunpack.c.l.b16 %v706
        %v1344 = vunpack.c.h.b16 %v706
        %v1345 = vunpack.c.l.b16 %v707
        %v1346 = vunpack.c.h.b16 %v707
        %v1347 = vunpack.c.l.b16 %v708
        %v1348 = vunpack.c.h.b16 %v708
        %v1349 = vunpack.c.l.b16 %v709
        %v1350 = vunpack.c.h.b16 %v709
        %v1351 = vunpack.c.l.b16 %v710
        %v1352 = vunpack.c.h.b16 %v710
        %v1353 = vunpack.c.l.b16 %v711
        %v1354 = vunpack.c.h.b16 %v711
        %v1355 = vunpack.c.l.b16 %v712
        %v1356 = vunpack.c.h.b16 %v712
        %v1357 = vunpack.c.l.b16 %v713
        %v1358 = vunpack.c.h.b16 %v713
        %v1359 = vunpack.c.l.b16 %v714
        %v1360 = vunpack.c.h.b16 %v714
        %v1361 = vunpack.c.l.b16 %v715
        %v1362 = vunpack.c.h.b16 %v715
        %v1363 = vunpack.c.l.b16 %v716
        %v1364 = vunpack.c.h.b16 %v716
        %v1365 = vunpack.c.l.b16 %v717
        %v1366 = vunpack.c.h.b16 %v717
        %v1367 = vunpack.c.l.b16 %v718
        %v1368 = vunpack.c.h.b16 %v718
        %v1369 = vunpack.c.l.b16 %v719
        %v1370 = vunpack.c.h.b16 %v719
        %v1371 = vunpack.c.l.b16 %v720
        %v1372 = vunpack.c.h.b16 %v720
        %v1373 = vunpack.c.l.b16 %v721
        %v1374 = vunpack.c.h.b16 %v721
        %v1375 = vunpack.c.l.b16 %v722
        %v1376 = vunpack.c.h.b16 %v722
        %v1377 = vunpack.c.l.b16 %v723
        %v1378 = vunpack.c.h.b16 %v723
        %v1379 = vunpack.c.l.b16 %v724
        %v1380 = vunpack.c.h.b16 %v724
        %v1381 = vunpack.c.l.b16 %v725
        %v1382 = vunpack.c.h.b16 %v725
        %v1383 = vunpack.c.l.b16 %v726
        %v1384 = vunpack.c.h.b16 %v726
        %v1385 = vunpack.c.l.b16 %v727
        %v1386 = vunpack.c.h.b16 %v727
        %v1387 = vunpack.c.l.b16 %v728
        %v1388 = vunpack.c.h.b16 %v728
        %v1389 = vunpack.c.l.b16 %v729
        %v1390 = vunpack.c.h.b16 %v729
        %v1391 = vunpack.c.l.b16 %v730
        %v1392 = vunpack.c.h.b16 %v730
        %v1393 = vunpack.c.l.b16 %v731
        %v1394 = vunpack.c.h.b16 %v731
        %v1395 = vunpack.c.l.b16 %v732
        %v1396 = vunpack.c.h.b16 %v732
        %v1397 = vunpack.c.l.b16 %v733
        %v1398 = vunpack.c.h.b16 %v733
        %v1399 = vunpack.c.l.b16 %v734
        %v1400 = vunpack.c.h.b16 %v734
        %v1401 = vunpack.c.l.b16 %v735
        %v1402 = vunpack.c.h.b16 %v735
        %v1403 = vunpack.c.l.b16 %v736
        %v1404 = vunpack.c.h.b16 %v736
        %v1405 = vunpack.c.l.b16 %v737
        %v1406 = vunpack.c.h.b16 %v737
        %v1407 = vunpack.c.l.b16 %v738
        %v1408 = vunpack.c.h.b16 %v738
        %v1409 = vunpack.c.l.b16 %v739
        %v1410 = vunpack.c.h.b16 %v739
        %v1411 = vunpack.c.l.b16 %v740
        %v1412 = vunpack.c.h.b16 %v740
        %v1413 = vunpack.c.l.b16 %v741
        %v1414 = vunpack.c.h.b16 %v741
        %v1415 = vunpack.c.l.b16 %v742
        %v1416 = vunpack.c.h.b16 %v742
        %v1417 = vunpack.c.l.b16 %v743
        %v1418 = vunpack.c.h.b16 %v743
        %v1419 = vunpack.c.l.b16 %v744
        %v1420 = vunpack.c.h.b16 %v744
        %v1421 = vunpack.c.l.b16 %v745
        %v1422 = vunpack.c.h.b16 %v745
        %v1423 = vunpack.c.l.b16 %v746
        %v1424 = vunpack.c.h.b16 %v746
        %v1425 = vunpack.c.l.b16 %v747
        %v1426 = vunpack.c.h.b16 %v747
        %v1427 = vunpack.c.l.b16 %v748
        %v1428 = vunpack.c.h.b16 %v748
        %v1429 = vunpack.c.l.b16 %v749
        %v1430 = vunpack.c.h.b16 %v749
        %v1431 = vunpack.c.l.b16 %v750
        %v1432 = vunpack.c.h.b16 %v750
        %v1433 = vpack.c.b16 %v989, %v985
        %v1434 = vpack.c.b16 %v990, %v986
        %v1435 = vpack.c.b16 %v991, %v987
        %v1436 = vpack.c.b16 %v992, %v988
        %v1437 = vpack.c.b16 %v997, %v993
        %v1438 = vpack.c.b16 %v998, %v994
        %v1439 = vpack.c.b16 %v999, %v995
        %v1440 = vpack.c.b16 %v1000, %v996
        %v1441 = vpack.c.b16 %v1005, %v1001
        %v1442 = vpack.c.b16 %v1006, %v1002
        %v1443 = vpack.c.b16 %v1007, %v1003
        %v1444 = vpack.c.b16 %v1008, %v1004
        %v1445 = vpack.c.b16 %v1013, %v1009
        %v1446 = vpack.c.b16 %v1014, %v1010
        %v1447 = vpack.c.b16 %v1015, %v1011
        %v1448 = vpack.c.b16 %v1016, %v1012
        %v1449 = vpack.c.b16 %v1021, %v1017
        %v1450 = vpack.c.b16 %v1022, %v1018
        %v1451 = vpack.c.b16 %v1023, %v1019
        %v1452 = vpack.c.b16 %v1024, %v1020
        %v1453 = vpack.c.b16 %v1029, %v1025
        %v1454 = vpack.c.b16 %v1030, %v1026
        %v1455 = vpack.c.b16 %v1031, %v1027
        %v1456 = vpack.c.b16 %v1032, %v1028
        %v1457 = vpack.c.b16 %v1037, %v1033
        %v1458 = vpack.c.b16 %v1038, %v1034
        %v1459 = vpack.c.b16 %v1039, %v1035
        %v1460 = vpack.c.b16 %v1040, %v1036
        %v1461 = vpack.c.b16 %v1045, %v1041
        %v1462 = vpack.c.b16 %v1046, %v1042
        %v1463 = vpack.c.b16 %v1047, %v1043
        %v1464 = vpack.c.b16 %v1048, %v1044
        %v1465 = vpack.c.b16 %v1053, %v1049
        %v1466 = vpack.c.b16 %v1054, %v1050
        %v1467 = vpack.c.b16 %v1055, %v1051
        %v1468 = vpack.c.b16 %v1056, %v1052
        %v1469 = vpack.c.b16 %v1061, %v1057
        %v1470 = vpack.c.b16 %v1062, %v1058
        %v1471 = vpack.c.b16 %v1063, %v1059
        %v1472 = vpack.c.b16 %v1064, %v1060
        %v1473 = vpack.c.b16 %v1069, %v1065
        %v1474 = vpack.c.b16 %v1070, %v1066
        %v1475 = vpack.c.b16 %v1071, %v1067
        %v1476 = vpack.c.b16 %v1072, %v1068
        %v1477 = vpack.c.b16 %v1077, %v1073
        %v1478 = vpack.c.b16 %v1078, %v1074
        %v1479 = vpack.c.b16 %v1079, %v1075
        %v1480 = vpack.c.b16 %v1080, %v1076
        %v1481 = vpack.c.b16 %v1085, %v1081
        %v1482 = vpack.c.b16 %v1086, %v1082
        %v1483 = vpack.c.b16 %v1087, %v1083
        %v1484 = vpack.c.b16 %v1088, %v1084
        %v1485 = vpack.c.b16 %v1093, %v1089
        %v1486 = vpack.c.b16 %v1094, %v1090
        %v1487 = vpack.c.b16 %v1095, %v1091
        %v1488 = vpack.c.b16 %v1096, %v1092
        %v1489 = vpack.c.b16 %v1101, %v1097
        %v1490 = vpack.c.b16 %v1102, %v1098
        %v1491 = vpack.c.b16 %v1103, %v1099
        %v1492 = vpack.c.b16 %v1104, %v1100
        %v1493 = vpack.c.b16 %v1109, %v1105
        %v1494 = vpack.c.b16 %v1110, %v1106
        %v1495 = vpack.c.b16 %v1111, %v1107
        %v1496 = vpack.c.b16 %v1112, %v1108
        %v1497 = vpack.c.b16 %v1117, %v1113
        %v1498 = vpack.c.b16 %v1118, %v1114
        %v1499 = vpack.c.b16 %v1119, %v1115
        %v1500 = vpack.c.b16 %v1120, %v1116
        %v1501 = vpack.c.b16 %v1125, %v1121
        %v1502 = vpack.c.b16 %v1126, %v1122
        %v1503 = vpack.c.b16 %v1127, %v1123
        %v1504 = vpack.c.b16 %v1128, %v1124
        %v1505 = vpack.c.b16 %v1133, %v1129
        %v1506 = vpack.c.b16 %v1134, %v1130
        %v1507 = vpack.c.b16 %v1135, %v1131
        %v1508 = vpack.c.b16 %v1136, %v1132
        %v1509 = vpack.c.b16 %v1141, %v1137
        %v1510 = vpack.c.b16 %v1142, %v1138
        %v1511 = vpack.c.b16 %v1143, %v1139
        %v1512 = vpack.c.b16 %v1144, %v1140
        %v1513 = vpack.c.b16 %v1149, %v1145
        %v1514 = vpack.c.b16 %v1150, %v1146
        %v1515 = vpack.c.b16 %v1151, %v1147
        %v1516 = vpack.c.b16 %v1152, %v1148
        %v1517 = vpack.c.b16 %v1157, %v1153
        %v1518 = vpack.c.b16 %v1158, %v1154
        %v1519 = vpack.c.b16 %v1159, %v1155
        %v1520 = vpack.c.b16 %v1160, %v1156
        %v1521 = vpack.c.b16 %v1165, %v1161
        %v1522 = vpack.c.b16 %v1166, %v1162
        %v1523 = vpack.c.b16 %v1167, %v1163
        %v1524 = vpack.c.b16 %v1168, %v1164
        %v1525 = vpack.c.b16 %v1173, %v1169
        %v1526 = vpack.c.b16 %v1174, %v1170
        %v1527 = vpack.c.b16 %v1175, %v1171
        %v1528 = vpack.c.b16 %v1176, %v1172
        %v1529 = vpack.c.b16 %v1181, %v1177
        %v1530 = vpack.c.b16 %v1182, %v1178
        %v1531 = vpack.c.b16 %v1183, %v1179
        %v1532 = vpack.c.b16 %v1184, %v1180
        %v1533 = vpack.c.b16 %v1189, %v1185
        %v1534 = vpack.c.b16 %v1190, %v1186
        %v1535 = vpack.c.b16 %v1191, %v1187
        %v1536 = vpack.c.b16 %v1192, %v1188
        %v1537 = vpack.c.b16 %v1197, %v1193
        %v1538 = vpack.c.b16 %v1198, %v1194
        %v1539 = vpack.c.b16 %v1199, %v1195
        %v1540 = vpack.c.b16 %v1200, %v1196
        %v1541 = vpack.c.b16 %v1205, %v1201
        %v1542 = vpack.c.b16 %v1206, %v1202
        %v1543 = vpack.c.b16 %v1207, %v1203
        %v1544 = vpack.c.b16 %v1208, %v1204
        %v1545 = vpack.c.b16 %v1213, %v1209
        %v1546 = vpack.c.b16 %v1214, %v1210
        %v1547 = vpack.c.b16 %v1215, %v1211
        %v1548 = vpack.c.b16 %v1216, %v1212
        %v1549 = vpack.c.b16 %v1221, %v1217
        %v1550 = vpack.c.b16 %v1222, %v1218
        %v1551 = vpack.c.b16 %v1223, %v1219
        %v1552 = vpack.c.b16 %v1224, %v1220
        %v1553 = vpack.c.b16 %v1229, %v1225
        %v1554 = vpack.c.b16 %v1230, %v1226
        %v1555 = vpack.c.b16 %v1231, %v1227
        %v1556 = vpack.c.b16 %v1232, %v1228
        %v1557 = vpack.c.b16 %v1237, %v1233
        %v1558 = vpack.c.b16 %v1238, %v1234
        %v1559 = vpack.c.b16 %v1239, %v1235
        %v1560 = vpack.c.b16 %v1240, %v1236
        %v1561 = vpack.c.b16 %v1245, %v1241
        %v1562 = vpack.c.b16 %v1246, %v1242
        %v1563 = vpack.c.b16 %v1247, %v1243
        %v1564 = vpack.c.b16 %v1248, %v1244
        %v1565 = vpack.c.b16 %v1253, %v1249
        %v1566 = vpack.c.b16 %v1254, %v1250
        %v1567 = vpack.c.b16 %v1255, %v1251
        %v1568 = vpack.c.b16 %v1256, %v1252
        %v1569 = vpack.c.b16 %v1261, %v1257
        %v1570 = vpack.c.b16 %v1262, %v1258
        %v1571 = vpack.c.b16 %v1263, %v1259
        %v1572 = vpack.c.b16 %v1264, %v1260
        %v1573 = vpack.c.b16 %v1269, %v1265
        %v1574 = vpack.c.b16 %v1270, %v1266
        %v1575 = vpack.c.b16 %v1271, %v1267
        %v1576 = vpack.c.b16 %v1272, %v1268
        %v1577 = vpack.c.b16 %v1277, %v1273
        %v1578 = vpack.c.b16 %v1278, %v1274
        %v1579 = vpack.c.b16 %v1279, %v1275
        %v1580 = vpack.c.b16 %v1280, %v1276
        %v1581 = vpack.c.b16 %v1285, %v1281
        %v1582 = vpack.c.b16 %v1286, %v1282
        %v1583 = vpack.c.b16 %v1287, %v1283
        %v1584 = vpack.c.b16 %v1288, %v1284
        %v1585 = vpack.c.b16 %v1293, %v1289
        %v1586 = vpack.c.b16 %v1294, %v1290
        %v1587 = vpack.c.b16 %v1295, %v1291
        %v1588 = vpack.c.b16 %v1296, %v1292
        %v1589 = vpack.c.b16 %v1301, %v1297
        %v1590 = vpack.c.b16 %v1302, %v1298
        %v1591 = vpack.c.b16 %v1303, %v1299
        %v1592 = vpack.c.b16 %v1304, %v1300
        %v1593 = vpack.c.b16 %v1309, %v1305
        %v1594 = vpack.c.b16 %v1310, %v1306
        %v1595 = vpack.c.b16 %v1311, %v1307
        %v1596 = vpack.c.b16 %v1312, %v1308
        %v1597 = vpack.c.b16 %v1317, %v1313
        %v1598 = vpack.c.b16 %v1318, %v1314
        %v1599 = vpack.c.b16 %v1319, %v1315
        %v1600 = vpack.c.b16 %v1320, %v1316
        %v1601 = vpack.c.b16 %v1325, %v1321
        %v1602 = vpack.c.b16 %v1326, %v1322
        %v1603 = vpack.c.b16 %v1327, %v1323
        %v1604 = vpack.c.b16 %v1328, %v1324
        %v1605 = vpack.c.b16 %v1333, %v1329
        %v1606 = vpack.c.b16 %v1334, %v1330
        %v1607 = vpack.c.b16 %v1335, %v1331
        %v1608 = vpack.c.b16 %v1336, %v1332
        %v1609 = vpack.c.b16 %v1341, %v1337
        %v1610 = vpack.c.b16 %v1342, %v1338
        %v1611 = vpack.c.b16 %v1343, %v1339
        %v1612 = vpack.c.b16 %v1344, %v1340
        %v1613 = vpack.c.b16 %v1349, %v1345
        %v1614 = vpack.c.b16 %v1350, %v1346
        %v1615 = vpack.c.b16 %v1351, %v1347
        %v1616 = vpack.c.b16 %v1352, %v1348
        %v1617 = vpack.c.b16 %v1357, %v1353
        %v1618 = vpack.c.b16 %v1358, %v1354
        %v1619 = vpack.c.b16 %v1359, %v1355
        %v1620 = vpack.c.b16 %v1360, %v1356
        %v1621 = vpack.c.b16 %v1365, %v1361
        %v1622 = vpack.c.b16 %v1366, %v1362
        %v1623 = vpack.c.b16 %v1367, %v1363
        %v1624 = vpack.c.b16 %v1368, %v1364
        %v1625 = vpack.c.b16 %v1373, %v1369
        %v1626 = vpack.c.b16 %v1374, %v1370
        %v1627 = vpack.c.b16 %v1375, %v1371
        %v1628 = vpack.c.b16 %v1376, %v1372
        %v1629 = vpack.c.b16 %v1381, %v1377
        %v1630 = vpack.c.b16 %v1382, %v1378
        %v1631 = vpack.c.b16 %v1383, %v1379
        %v1632 = vpack.c.b16 %v1384, %v1380
        %v1633 = vpack.c.b16 %v1389, %v1385
        %v1634 = vpack.c.b16 %v1390, %v1386
        %v1635 = vpack.c.b16 %v1391, %v1387
        %v1636 = vpack.c.b16 %v1392, %v1388
        %v1637 = vpack.c.b16 %v1397, %v1393
        %v1638 = vpack.c.b16 %v1398, %v1394
        %v1639 = vpack.c.b16 %v1399, %v1395
        %v1640 = vpack.c.b16 %v1400, %v1396
        %v1641 = vpack.c.b16 %v1405, %v1401
        %v1642 = vpack.c.b16 %v1406, %v1402
        %v1643 = vpack.c.b16 %v1407, %v1403
        %v1644 = vpack.c.b16 %v1408, %v1404
        %v1645 = vpack.c.b16 %v1413, %v1409
        %v1646 = vpack.c.b16 %v1414, %v1410
        %v1647 = vpack.c.b16 %v1415, %v1411
        %v1648 = vpack.c.b16 %v1416, %v1412
        %v1649 = vpack.c.b16 %v1421, %v1417
        %v1650 = vpack.c.b16 %v1422, %v1418
        %v1651 = vpack.c.b16 %v1423, %v1419
        %v1652 = vpack.c.b16 %v1424, %v1420
        %v1653 = vpack.c.b16 %v1429, %v1425
        %v1654 = vpack.c.b16 %v1430, %v1426
        %v1655 = vpack.c.b16 %v1431, %v1427
        %v1656 = vpack.c.b16 %v1432, %v1428
        %1881 = vmatpush.bf16.msra.mxu0 %v1461
        %1882 = vmatpush.bf16.msra.mxu0 %v1457
        %1883 = vmatpush.bf16.msra.mxu0 %v1453
        %1884 = vmatpush.bf16.msra.mxu0 %v1449
        %1885 = vmatpush.bf16.msra.mxu0 %v1445
        %1886 = vmatpush.bf16.msra.mxu0 %v1441
        %1887 = vmatpush.bf16.msra.mxu0 %v1437
        %1888 = vmatpush.bf16.msra.mxu0 %v1433
        %1889 = vmatmul.bf16.gmra.mxu0 %v471
        %v1890 = vpop.f32.mrf.mxu0
        %v1891 = vadd.f32 %v753, %v1890
        %v1892 = vpop.f32.mrf.mxu0
        %v1893 = vadd.f32 %v753, %v1892
        %1894 = vmatmul.bf16.gmra.mxu0 %v478
        %v1895 = vpop.f32.mrf.mxu0
        %v1896 = vadd.f32 %v753, %v1895
        %v1897 = vpop.f32.mrf.mxu0
        %v1898 = vadd.f32 %v753, %v1897
        %1899 = vmatmul.bf16.gmra.mxu0 %v485
        %v1900 = vpop.f32.mrf.mxu0
        %v1901 = vadd.f32 %v753, %v1900
        %v1902 = vpop.f32.mrf.mxu0
        %v1903 = vadd.f32 %v753, %v1902
        %1904 = vmatmul.bf16.gmra.mxu0 %v492
        %v1905 = vpop.f32.mrf.mxu0
        %v1906 = vadd.f32 %v753, %v1905
        %v1907 = vpop.f32.mrf.mxu0
        %v1908 = vadd.f32 %v753, %v1907
        %1909 = vmatmul.bf16.gmra.mxu0 %v499
        %v1910 = vpop.f32.mrf.mxu0
        %v1911 = vadd.f32 %v753, %v1910
        %v1912 = vpop.f32.mrf.mxu0
        %v1913 = vadd.f32 %v753, %v1912
        %1914 = vmatmul.bf16.gmra.mxu0 %v506
        %v1915 = vpop.f32.mrf.mxu0
        %v1916 = vadd.f32 %v753, %v1915
        %v1917 = vpop.f32.mrf.mxu0
        %v1918 = vadd.f32 %v753, %v1917
        %1919 = vmatmul.bf16.gmra.mxu0 %v513
        %v1920 = vpop.f32.mrf.mxu0
        %v1921 = vadd.f32 %v753, %v1920
        %v1922 = vpop.f32.mrf.mxu0
        %v1923 = vadd.f32 %v753, %v1922
        %1924 = vmatmul.bf16.gmra.mxu0 %v520
        %v1925 = vpop.f32.mrf.mxu0
        %v1926 = vadd.f32 %v753, %v1925
        %v1927 = vpop.f32.mrf.mxu0
        %v1928 = vadd.f32 %v753, %v1927
        %1929 = vdwg.mxu0
        %1930 = vmatpush.bf16.msra.mxu0 %v1493
        %1931 = vmatpush.bf16.msra.mxu0 %v1489
        %1932 = vmatpush.bf16.msra.mxu0 %v1485
        %1933 = vmatpush.bf16.msra.mxu0 %v1481
        %1934 = vmatpush.bf16.msra.mxu0 %v1477
        %1935 = vmatpush.bf16.msra.mxu0 %v1473
        %1936 = vmatpush.bf16.msra.mxu0 %v1469
        %1937 = vmatpush.bf16.msra.mxu0 %v1465
        %1938 = vmatmul.bf16.gmra.mxu0 %v472
        %v1939 = vpop.f32.mrf.mxu0
        %v1940 = vadd.f32 %v1891, %v1939
        %v1941 = vpop.f32.mrf.mxu0
        %v1942 = vadd.f32 %v1893, %v1941
        %1943 = vmatmul.bf16.gmra.mxu0 %v479
        %v1944 = vpop.f32.mrf.mxu0
        %v1945 = vadd.f32 %v1896, %v1944
        %v1946 = vpop.f32.mrf.mxu0
        %v1947 = vadd.f32 %v1898, %v1946
        %1948 = vmatmul.bf16.gmra.mxu0 %v486
        %v1949 = vpop.f32.mrf.mxu0
        %v1950 = vadd.f32 %v1901, %v1949
        %v1951 = vpop.f32.mrf.mxu0
        %v1952 = vadd.f32 %v1903, %v1951
        %1953 = vmatmul.bf16.gmra.mxu0 %v493
        %v1954 = vpop.f32.mrf.mxu0
        %v1955 = vadd.f32 %v1906, %v1954
        %v1956 = vpop.f32.mrf.mxu0
        %v1957 = vadd.f32 %v1908, %v1956
        %1958 = vmatmul.bf16.gmra.mxu0 %v500
        %v1959 = vpop.f32.mrf.mxu0
        %v1960 = vadd.f32 %v1911, %v1959
        %v1961 = vpop.f32.mrf.mxu0
        %v1962 = vadd.f32 %v1913, %v1961
        %1963 = vmatmul.bf16.gmra.mxu0 %v507
        %v1964 = vpop.f32.mrf.mxu0
        %v1965 = vadd.f32 %v1916, %v1964
        %v1966 = vpop.f32.mrf.mxu0
        %v1967 = vadd.f32 %v1918, %v1966
        %1968 = vmatmul.bf16.gmra.mxu0 %v514
        %v1969 = vpop.f32.mrf.mxu0
        %v1970 = vadd.f32 %v1921, %v1969
        %v1971 = vpop.f32.mrf.mxu0
        %v1972 = vadd.f32 %v1923, %v1971
        %1973 = vmatmul.bf16.gmra.mxu0 %v521
        %v1974 = vpop.f32.mrf.mxu0
        %v1975 = vadd.f32 %v1926, %v1974
        %v1976 = vpop.f32.mrf.mxu0
        %v1977 = vadd.f32 %v1928, %v1976
        %1978 = vdwg.mxu0
        %1979 = vmatpush.bf16.msra.mxu0 %v1525
        %1980 = vmatpush.bf16.msra.mxu0 %v1521
        %1981 = vmatpush.bf16.msra.mxu0 %v1517
        %1982 = vmatpush.bf16.msra.mxu0 %v1513
        %1983 = vmatpush.bf16.msra.mxu0 %v1509
        %1984 = vmatpush.bf16.msra.mxu0 %v1505
        %1985 = vmatpush.bf16.msra.mxu0 %v1501
        %1986 = vmatpush.bf16.msra.mxu0 %v1497
        %1987 = vmatmul.bf16.gmra.mxu0 %v473
        %v1988 = vpop.f32.mrf.mxu0
        %v1989 = vadd.f32 %v1940, %v1988
        %v1990 = vpop.f32.mrf.mxu0
        %v1991 = vadd.f32 %v1942, %v1990
        %1992 = vmatmul.bf16.gmra.mxu0 %v480
        %v1993 = vpop.f32.mrf.mxu0
        %v1994 = vadd.f32 %v1945, %v1993
        %v1995 = vpop.f32.mrf.mxu0
        %v1996 = vadd.f32 %v1947, %v1995
        %1997 = vmatmul.bf16.gmra.mxu0 %v487
        %v1998 = vpop.f32.mrf.mxu0
        %v1999 = vadd.f32 %v1950, %v1998
        %v2000 = vpop.f32.mrf.mxu0
        %v2001 = vadd.f32 %v1952, %v2000
        %2002 = vmatmul.bf16.gmra.mxu0 %v494
        %v2003 = vpop.f32.mrf.mxu0
        %v2004 = vadd.f32 %v1955, %v2003
        %v2005 = vpop.f32.mrf.mxu0
        %v2006 = vadd.f32 %v1957, %v2005
        %2007 = vmatmul.bf16.gmra.mxu0 %v501
        %v2008 = vpop.f32.mrf.mxu0
        %v2009 = vadd.f32 %v1960, %v2008
        %v2010 = vpop.f32.mrf.mxu0
        %v2011 = vadd.f32 %v1962, %v2010
        %2012 = vmatmul.bf16.gmra.mxu0 %v508
        %v2013 = vpop.f32.mrf.mxu0
        %v2014 = vadd.f32 %v1965, %v2013
        %v2015 = vpop.f32.mrf.mxu0
        %v2016 = vadd.f32 %v1967, %v2015
        %2017 = vmatmul.bf16.gmra.mxu0 %v515
        %v2018 = vpop.f32.mrf.mxu0
        %v2019 = vadd.f32 %v1970, %v2018
        %v2020 = vpop.f32.mrf.mxu0
        %v2021 = vadd.f32 %v1972, %v2020
        %2022 = vmatmul.bf16.gmra.mxu0 %v522
        %v2023 = vpop.f32.mrf.mxu0
        %v2024 = vadd.f32 %v1975, %v2023
        %v2025 = vpop.f32.mrf.mxu0
        %v2026 = vadd.f32 %v1977, %v2025
        %2027 = vdwg.mxu0
        %2028 = vmatpush.bf16.msra.mxu0 %v1557
        %2029 = vmatpush.bf16.msra.mxu0 %v1553
        %2030 = vmatpush.bf16.msra.mxu0 %v1549
        %2031 = vmatpush.bf16.msra.mxu0 %v1545
        %2032 = vmatpush.bf16.msra.mxu0 %v1541
        %2033 = vmatpush.bf16.msra.mxu0 %v1537
        %2034 = vmatpush.bf16.msra.mxu0 %v1533
        %2035 = vmatpush.bf16.msra.mxu0 %v1529
        %2036 = vmatmul.bf16.gmra.mxu0 %v474
        %v2037 = vpop.f32.mrf.mxu0
        %v2038 = vadd.f32 %v1989, %v2037
        %v2039 = vpop.f32.mrf.mxu0
        %v2040 = vadd.f32 %v1991, %v2039
        %2041 = vmatmul.bf16.gmra.mxu0 %v481
        %v2042 = vpop.f32.mrf.mxu0
        %v2043 = vadd.f32 %v1994, %v2042
        %v2044 = vpop.f32.mrf.mxu0
        %v2045 = vadd.f32 %v1996, %v2044
        %2046 = vmatmul.bf16.gmra.mxu0 %v488
        %v2047 = vpop.f32.mrf.mxu0
        %v2048 = vadd.f32 %v1999, %v2047
        %v2049 = vpop.f32.mrf.mxu0
        %v2050 = vadd.f32 %v2001, %v2049
        %2051 = vmatmul.bf16.gmra.mxu0 %v495
        %v2052 = vpop.f32.mrf.mxu0
        %v2053 = vadd.f32 %v2004, %v2052
        %v2054 = vpop.f32.mrf.mxu0
        %v2055 = vadd.f32 %v2006, %v2054
        %2056 = vmatmul.bf16.gmra.mxu0 %v502
        %v2057 = vpop.f32.mrf.mxu0
        %v2058 = vadd.f32 %v2009, %v2057
        %v2059 = vpop.f32.mrf.mxu0
        %v2060 = vadd.f32 %v2011, %v2059
        %2061 = vmatmul.bf16.gmra.mxu0 %v509
        %v2062 = vpop.f32.mrf.mxu0
        %v2063 = vadd.f32 %v2014, %v2062
        %v2064 = vpop.f32.mrf.mxu0
        %v2065 = vadd.f32 %v2016, %v2064
        %2066 = vmatmul.bf16.gmra.mxu0 %v516
        %v2067 = vpop.f32.mrf.mxu0
        %v2068 = vadd.f32 %v2019, %v2067
        %v2069 = vpop.f32.mrf.mxu0
        %v2070 = vadd.f32 %v2021, %v2069
        %2071 = vmatmul.bf16.gmra.mxu0 %v523
        %v2072 = vpop.f32.mrf.mxu0
        %v2073 = vadd.f32 %v2024, %v2072
        %v2074 = vpop.f32.mrf.mxu0
        %v2075 = vadd.f32 %v2026, %v2074
        %2076 = vdwg.mxu0
        %2077 = vmatpush.bf16.msra.mxu0 %v1589
        %2078 = vmatpush.bf16.msra.mxu0 %v1585
        %2079 = vmatpush.bf16.msra.mxu0 %v1581
        %2080 = vmatpush.bf16.msra.mxu0 %v1577
        %2081 = vmatpush.bf16.msra.mxu0 %v1573
        %2082 = vmatpush.bf16.msra.mxu0 %v1569
        %2083 = vmatpush.bf16.msra.mxu0 %v1565
        %2084 = vmatpush.bf16.msra.mxu0 %v1561
        %2085 = vmatmul.bf16.gmra.mxu0 %v475
        %v2086 = vpop.f32.mrf.mxu0
        %v2087 = vadd.f32 %v2038, %v2086
        %v2088 = vpop.f32.mrf.mxu0
        %v2089 = vadd.f32 %v2040, %v2088
        %2090 = vmatmul.bf16.gmra.mxu0 %v482
        %v2091 = vpop.f32.mrf.mxu0
        %v2092 = vadd.f32 %v2043, %v2091
        %v2093 = vpop.f32.mrf.mxu0
        %v2094 = vadd.f32 %v2045, %v2093
        %2095 = vmatmul.bf16.gmra.mxu0 %v489
        %v2096 = vpop.f32.mrf.mxu0
        %v2097 = vadd.f32 %v2048, %v2096
        %v2098 = vpop.f32.mrf.mxu0
        %v2099 = vadd.f32 %v2050, %v2098
        %2100 = vmatmul.bf16.gmra.mxu0 %v496
        %v2101 = vpop.f32.mrf.mxu0
        %v2102 = vadd.f32 %v2053, %v2101
        %v2103 = vpop.f32.mrf.mxu0
        %v2104 = vadd.f32 %v2055, %v2103
        %2105 = vmatmul.bf16.gmra.mxu0 %v503
        %v2106 = vpop.f32.mrf.mxu0
        %v2107 = vadd.f32 %v2058, %v2106
        %v2108 = vpop.f32.mrf.mxu0
        %v2109 = vadd.f32 %v2060, %v2108
        %2110 = vmatmul.bf16.gmra.mxu0 %v510
        %v2111 = vpop.f32.mrf.mxu0
        %v2112 = vadd.f32 %v2063, %v2111
        %v2113 = vpop.f32.mrf.mxu0
        %v2114 = vadd.f32 %v2065, %v2113
        %2115 = vmatmul.bf16.gmra.mxu0 %v517
        %v2116 = vpop.f32.mrf.mxu0
        %v2117 = vadd.f32 %v2068, %v2116
        %v2118 = vpop.f32.mrf.mxu0
        %v2119 = vadd.f32 %v2070, %v2118
        %2120 = vmatmul.bf16.gmra.mxu0 %v524
        %v2121 = vpop.f32.mrf.mxu0
        %v2122 = vadd.f32 %v2073, %v2121
        %v2123 = vpop.f32.mrf.mxu0
        %v2124 = vadd.f32 %v2075, %v2123
        %2125 = vdwg.mxu0
        %2126 = vmatpush.bf16.msra.mxu0 %v1621
        %2127 = vmatpush.bf16.msra.mxu0 %v1617
        %2128 = vmatpush.bf16.msra.mxu0 %v1613
        %2129 = vmatpush.bf16.msra.mxu0 %v1609
        %2130 = vmatpush.bf16.msra.mxu0 %v1605
        %2131 = vmatpush.bf16.msra.mxu0 %v1601
        %2132 = vmatpush.bf16.msra.mxu0 %v1597
        %2133 = vmatpush.bf16.msra.mxu0 %v1593
        %2134 = vmatmul.bf16.gmra.mxu0 %v476
        %v2135 = vpop.f32.mrf.mxu0
        %v2136 = vadd.f32 %v2087, %v2135
        %v2137 = vpop.f32.mrf.mxu0
        %v2138 = vadd.f32 %v2089, %v2137
        %2139 = vmatmul.bf16.gmra.mxu0 %v483
        %v2140 = vpop.f32.mrf.mxu0
        %v2141 = vadd.f32 %v2092, %v2140
        %v2142 = vpop.f32.mrf.mxu0
        %v2143 = vadd.f32 %v2094, %v2142
        %2144 = vmatmul.bf16.gmra.mxu0 %v490
        %v2145 = vpop.f32.mrf.mxu0
        %v2146 = vadd.f32 %v2097, %v2145
        %v2147 = vpop.f32.mrf.mxu0
        %v2148 = vadd.f32 %v2099, %v2147
        %2149 = vmatmul.bf16.gmra.mxu0 %v497
        %v2150 = vpop.f32.mrf.mxu0
        %v2151 = vadd.f32 %v2102, %v2150
        %v2152 = vpop.f32.mrf.mxu0
        %v2153 = vadd.f32 %v2104, %v2152
        %2154 = vmatmul.bf16.gmra.mxu0 %v504
        %v2155 = vpop.f32.mrf.mxu0
        %v2156 = vadd.f32 %v2107, %v2155
        %v2157 = vpop.f32.mrf.mxu0
        %v2158 = vadd.f32 %v2109, %v2157
        %2159 = vmatmul.bf16.gmra.mxu0 %v511
        %v2160 = vpop.f32.mrf.mxu0
        %v2161 = vadd.f32 %v2112, %v2160
        %v2162 = vpop.f32.mrf.mxu0
        %v2163 = vadd.f32 %v2114, %v2162
        %2164 = vmatmul.bf16.gmra.mxu0 %v518
        %v2165 = vpop.f32.mrf.mxu0
        %v2166 = vadd.f32 %v2117, %v2165
        %v2167 = vpop.f32.mrf.mxu0
        %v2168 = vadd.f32 %v2119, %v2167
        %2169 = vmatmul.bf16.gmra.mxu0 %v525
        %v2170 = vpop.f32.mrf.mxu0
        %v2171 = vadd.f32 %v2122, %v2170
        %v2172 = vpop.f32.mrf.mxu0
        %v2173 = vadd.f32 %v2124, %v2172
        %2174 = vdwg.mxu0
        %2175 = vmatpush.bf16.msra.mxu0 %v1653
        %2176 = vmatpush.bf16.msra.mxu0 %v1649
        %2177 = vmatpush.bf16.msra.mxu0 %v1645
        %2178 = vmatpush.bf16.msra.mxu0 %v1641
        %2179 = vmatpush.bf16.msra.mxu0 %v1637
        %2180 = vmatpush.bf16.msra.mxu0 %v1633
        %2181 = vmatpush.bf16.msra.mxu0 %v1629
        %2182 = vmatpush.bf16.msra.mxu0 %v1625
        %2183 = vmatmul.bf16.gmra.mxu0 %v477
        %v2184 = vpop.f32.mrf.mxu0
        %v2185 = vadd.f32 %v2136, %v2184
        %v2186 = vpop.f32.mrf.mxu0
        %v2187 = vadd.f32 %v2138, %v2186
        %2188 = vmatmul.bf16.gmra.mxu0 %v484
        %v2189 = vpop.f32.mrf.mxu0
        %v2190 = vadd.f32 %v2141, %v2189
        %v2191 = vpop.f32.mrf.mxu0
        %v2192 = vadd.f32 %v2143, %v2191
        %2193 = vmatmul.bf16.gmra.mxu0 %v491
        %v2194 = vpop.f32.mrf.mxu0
        %v2195 = vadd.f32 %v2146, %v2194
        %v2196 = vpop.f32.mrf.mxu0
        %v2197 = vadd.f32 %v2148, %v2196
        %2198 = vmatmul.bf16.gmra.mxu0 %v498
        %v2199 = vpop.f32.mrf.mxu0
        %v2200 = vadd.f32 %v2151, %v2199
        %v2201 = vpop.f32.mrf.mxu0
        %v2202 = vadd.f32 %v2153, %v2201
        %2203 = vmatmul.bf16.gmra.mxu0 %v505
        %v2204 = vpop.f32.mrf.mxu0
        %v2205 = vadd.f32 %v2156, %v2204
        %v2206 = vpop.f32.mrf.mxu0
        %v2207 = vadd.f32 %v2158, %v2206
        %2208 = vmatmul.bf16.gmra.mxu0 %v512
        %v2209 = vpop.f32.mrf.mxu0
        %v2210 = vadd.f32 %v2161, %v2209
        %v2211 = vpop.f32.mrf.mxu0
        %v2212 = vadd.f32 %v2163, %v2211
        %2213 = vmatmul.bf16.gmra.mxu0 %v519
        %v2214 = vpop.f32.mrf.mxu0
        %v2215 = vadd.f32 %v2166, %v2214
        %v2216 = vpop.f32.mrf.mxu0
        %v2217 = vadd.f32 %v2168, %v2216
        %2218 = vmatmul.bf16.gmra.mxu0 %v526
        %v2219 = vpop.f32.mrf.mxu0
        %v2220 = vadd.f32 %v2171, %v2219
        %v2221 = vpop.f32.mrf.mxu0
        %v2222 = vadd.f32 %v2173, %v2221
        %2223 = vdwg.mxu0
        %2224 = vmatpush.bf16.msra.mxu0 %v1462
        %2225 = vmatpush.bf16.msra.mxu0 %v1458
        %2226 = vmatpush.bf16.msra.mxu0 %v1454
        %2227 = vmatpush.bf16.msra.mxu0 %v1450
        %2228 = vmatpush.bf16.msra.mxu0 %v1446
        %2229 = vmatpush.bf16.msra.mxu0 %v1442
        %2230 = vmatpush.bf16.msra.mxu0 %v1438
        %2231 = vmatpush.bf16.msra.mxu0 %v1434
        %2232 = vmatmul.bf16.gmra.mxu0 %v471
        %v2233 = vpop.f32.mrf.mxu0
        %v2234 = vadd.f32 %v754, %v2233
        %v2235 = vpop.f32.mrf.mxu0
        %v2236 = vadd.f32 %v754, %v2235
        %2237 = vmatmul.bf16.gmra.mxu0 %v478
        %v2238 = vpop.f32.mrf.mxu0
        %v2239 = vadd.f32 %v754, %v2238
        %v2240 = vpop.f32.mrf.mxu0
        %v2241 = vadd.f32 %v754, %v2240
        %2242 = vmatmul.bf16.gmra.mxu0 %v485
        %v2243 = vpop.f32.mrf.mxu0
        %v2244 = vadd.f32 %v754, %v2243
        %v2245 = vpop.f32.mrf.mxu0
        %v2246 = vadd.f32 %v754, %v2245
        %2247 = vmatmul.bf16.gmra.mxu0 %v492
        %v2248 = vpop.f32.mrf.mxu0
        %v2249 = vadd.f32 %v754, %v2248
        %v2250 = vpop.f32.mrf.mxu0
        %v2251 = vadd.f32 %v754, %v2250
        %2252 = vmatmul.bf16.gmra.mxu0 %v499
        %v2253 = vpop.f32.mrf.mxu0
        %v2254 = vadd.f32 %v754, %v2253
        %v2255 = vpop.f32.mrf.mxu0
        %v2256 = vadd.f32 %v754, %v2255
        %2257 = vmatmul.bf16.gmra.mxu0 %v506
        %v2258 = vpop.f32.mrf.mxu0
        %v2259 = vadd.f32 %v754, %v2258
        %v2260 = vpop.f32.mrf.mxu0
        %v2261 = vadd.f32 %v754, %v2260
        %2262 = vmatmul.bf16.gmra.mxu0 %v513
        %v2263 = vpop.f32.mrf.mxu0
        %v2264 = vadd.f32 %v754, %v2263
        %v2265 = vpop.f32.mrf.mxu0
        %v2266 = vadd.f32 %v754, %v2265
        %2267 = vmatmul.bf16.gmra.mxu0 %v520
        %v2268 = vpop.f32.mrf.mxu0
        %v2269 = vadd.f32 %v754, %v2268
        %v2270 = vpop.f32.mrf.mxu0
        %v2271 = vadd.f32 %v754, %v2270
        %2272 = vdwg.mxu0
        %2273 = vmatpush.bf16.msra.mxu0 %v1494
        %2274 = vmatpush.bf16.msra.mxu0 %v1490
        %2275 = vmatpush.bf16.msra.mxu0 %v1486
        %2276 = vmatpush.bf16.msra.mxu0 %v1482
        %2277 = vmatpush.bf16.msra.mxu0 %v1478
        %2278 = vmatpush.bf16.msra.mxu0 %v1474
        %2279 = vmatpush.bf16.msra.mxu0 %v1470
        %2280 = vmatpush.bf16.msra.mxu0 %v1466
        %2281 = vmatmul.bf16.gmra.mxu0 %v472
        %v2282 = vpop.f32.mrf.mxu0
        %v2283 = vadd.f32 %v2234, %v2282
        %v2284 = vpop.f32.mrf.mxu0
        %v2285 = vadd.f32 %v2236, %v2284
        %2286 = vmatmul.bf16.gmra.mxu0 %v479
        %v2287 = vpop.f32.mrf.mxu0
        %v2288 = vadd.f32 %v2239, %v2287
        %v2289 = vpop.f32.mrf.mxu0
        %v2290 = vadd.f32 %v2241, %v2289
        %2291 = vmatmul.bf16.gmra.mxu0 %v486
        %v2292 = vpop.f32.mrf.mxu0
        %v2293 = vadd.f32 %v2244, %v2292
        %v2294 = vpop.f32.mrf.mxu0
        %v2295 = vadd.f32 %v2246, %v2294
        %2296 = vmatmul.bf16.gmra.mxu0 %v493
        %v2297 = vpop.f32.mrf.mxu0
        %v2298 = vadd.f32 %v2249, %v2297
        %v2299 = vpop.f32.mrf.mxu0
        %v2300 = vadd.f32 %v2251, %v2299
        %2301 = vmatmul.bf16.gmra.mxu0 %v500
        %v2302 = vpop.f32.mrf.mxu0
        %v2303 = vadd.f32 %v2254, %v2302
        %v2304 = vpop.f32.mrf.mxu0
        %v2305 = vadd.f32 %v2256, %v2304
        %2306 = vmatmul.bf16.gmra.mxu0 %v507
        %v2307 = vpop.f32.mrf.mxu0
        %v2308 = vadd.f32 %v2259, %v2307
        %v2309 = vpop.f32.mrf.mxu0
        %v2310 = vadd.f32 %v2261, %v2309
        %2311 = vmatmul.bf16.gmra.mxu0 %v514
        %v2312 = vpop.f32.mrf.mxu0
        %v2313 = vadd.f32 %v2264, %v2312
        %v2314 = vpop.f32.mrf.mxu0
        %v2315 = vadd.f32 %v2266, %v2314
        %2316 = vmatmul.bf16.gmra.mxu0 %v521
        %v2317 = vpop.f32.mrf.mxu0
        %v2318 = vadd.f32 %v2269, %v2317
        %v2319 = vpop.f32.mrf.mxu0
        %v2320 = vadd.f32 %v2271, %v2319
        %2321 = vdwg.mxu0
        %2322 = vmatpush.bf16.msra.mxu0 %v1526
        %2323 = vmatpush.bf16.msra.mxu0 %v1522
        %2324 = vmatpush.bf16.msra.mxu0 %v1518
        %2325 = vmatpush.bf16.msra.mxu0 %v1514
        %2326 = vmatpush.bf16.msra.mxu0 %v1510
        %2327 = vmatpush.bf16.msra.mxu0 %v1506
        %2328 = vmatpush.bf16.msra.mxu0 %v1502
        %2329 = vmatpush.bf16.msra.mxu0 %v1498
        %2330 = vmatmul.bf16.gmra.mxu0 %v473
        %v2331 = vpop.f32.mrf.mxu0
        %v2332 = vadd.f32 %v2283, %v2331
        %v2333 = vpop.f32.mrf.mxu0
        %v2334 = vadd.f32 %v2285, %v2333
        %2335 = vmatmul.bf16.gmra.mxu0 %v480
        %v2336 = vpop.f32.mrf.mxu0
        %v2337 = vadd.f32 %v2288, %v2336
        %v2338 = vpop.f32.mrf.mxu0
        %v2339 = vadd.f32 %v2290, %v2338
        %2340 = vmatmul.bf16.gmra.mxu0 %v487
        %v2341 = vpop.f32.mrf.mxu0
        %v2342 = vadd.f32 %v2293, %v2341
        %v2343 = vpop.f32.mrf.mxu0
        %v2344 = vadd.f32 %v2295, %v2343
        %2345 = vmatmul.bf16.gmra.mxu0 %v494
        %v2346 = vpop.f32.mrf.mxu0
        %v2347 = vadd.f32 %v2298, %v2346
        %v2348 = vpop.f32.mrf.mxu0
        %v2349 = vadd.f32 %v2300, %v2348
        %2350 = vmatmul.bf16.gmra.mxu0 %v501
        %v2351 = vpop.f32.mrf.mxu0
        %v2352 = vadd.f32 %v2303, %v2351
        %v2353 = vpop.f32.mrf.mxu0
        %v2354 = vadd.f32 %v2305, %v2353
        %2355 = vmatmul.bf16.gmra.mxu0 %v508
        %v2356 = vpop.f32.mrf.mxu0
        %v2357 = vadd.f32 %v2308, %v2356
        %v2358 = vpop.f32.mrf.mxu0
        %v2359 = vadd.f32 %v2310, %v2358
        %2360 = vmatmul.bf16.gmra.mxu0 %v515
        %v2361 = vpop.f32.mrf.mxu0
        %v2362 = vadd.f32 %v2313, %v2361
        %v2363 = vpop.f32.mrf.mxu0
        %v2364 = vadd.f32 %v2315, %v2363
        %2365 = vmatmul.bf16.gmra.mxu0 %v522
        %v2366 = vpop.f32.mrf.mxu0
        %v2367 = vadd.f32 %v2318, %v2366
        %v2368 = vpop.f32.mrf.mxu0
        %v2369 = vadd.f32 %v2320, %v2368
        %2370 = vdwg.mxu0
        %2371 = vmatpush.bf16.msra.mxu0 %v1558
        %2372 = vmatpush.bf16.msra.mxu0 %v1554
        %2373 = vmatpush.bf16.msra.mxu0 %v1550
        %2374 = vmatpush.bf16.msra.mxu0 %v1546
        %2375 = vmatpush.bf16.msra.mxu0 %v1542
        %2376 = vmatpush.bf16.msra.mxu0 %v1538
        %2377 = vmatpush.bf16.msra.mxu0 %v1534
        %2378 = vmatpush.bf16.msra.mxu0 %v1530
        %2379 = vmatmul.bf16.gmra.mxu0 %v474
        %v2380 = vpop.f32.mrf.mxu0
        %v2381 = vadd.f32 %v2332, %v2380
        %v2382 = vpop.f32.mrf.mxu0
        %v2383 = vadd.f32 %v2334, %v2382
        %2384 = vmatmul.bf16.gmra.mxu0 %v481
        %v2385 = vpop.f32.mrf.mxu0
        %v2386 = vadd.f32 %v2337, %v2385
        %v2387 = vpop.f32.mrf.mxu0
        %v2388 = vadd.f32 %v2339, %v2387
        %2389 = vmatmul.bf16.gmra.mxu0 %v488
        %v2390 = vpop.f32.mrf.mxu0
        %v2391 = vadd.f32 %v2342, %v2390
        %v2392 = vpop.f32.mrf.mxu0
        %v2393 = vadd.f32 %v2344, %v2392
        %2394 = vmatmul.bf16.gmra.mxu0 %v495
        %v2395 = vpop.f32.mrf.mxu0
        %v2396 = vadd.f32 %v2347, %v2395
        %v2397 = vpop.f32.mrf.mxu0
        %v2398 = vadd.f32 %v2349, %v2397
        %2399 = vmatmul.bf16.gmra.mxu0 %v502
        %v2400 = vpop.f32.mrf.mxu0
        %v2401 = vadd.f32 %v2352, %v2400
        %v2402 = vpop.f32.mrf.mxu0
        %v2403 = vadd.f32 %v2354, %v2402
        %2404 = vmatmul.bf16.gmra.mxu0 %v509
        %v2405 = vpop.f32.mrf.mxu0
        %v2406 = vadd.f32 %v2357, %v2405
        %v2407 = vpop.f32.mrf.mxu0
        %v2408 = vadd.f32 %v2359, %v2407
        %2409 = vmatmul.bf16.gmra.mxu0 %v516
        %v2410 = vpop.f32.mrf.mxu0
        %v2411 = vadd.f32 %v2362, %v2410
        %v2412 = vpop.f32.mrf.mxu0
        %v2413 = vadd.f32 %v2364, %v2412
        %2414 = vmatmul.bf16.gmra.mxu0 %v523
        %v2415 = vpop.f32.mrf.mxu0
        %v2416 = vadd.f32 %v2367, %v2415
        %v2417 = vpop.f32.mrf.mxu0
        %v2418 = vadd.f32 %v2369, %v2417
        %2419 = vdwg.mxu0
        %2420 = vmatpush.bf16.msra.mxu0 %v1590
        %2421 = vmatpush.bf16.msra.mxu0 %v1586
        %2422 = vmatpush.bf16.msra.mxu0 %v1582
        %2423 = vmatpush.bf16.msra.mxu0 %v1578
        %2424 = vmatpush.bf16.msra.mxu0 %v1574
        %2425 = vmatpush.bf16.msra.mxu0 %v1570
        %2426 = vmatpush.bf16.msra.mxu0 %v1566
        %2427 = vmatpush.bf16.msra.mxu0 %v1562
        %2428 = vmatmul.bf16.gmra.mxu0 %v475
        %v2429 = vpop.f32.mrf.mxu0
        %v2430 = vadd.f32 %v2381, %v2429
        %v2431 = vpop.f32.mrf.mxu0
        %v2432 = vadd.f32 %v2383, %v2431
        %2433 = vmatmul.bf16.gmra.mxu0 %v482
        %v2434 = vpop.f32.mrf.mxu0
        %v2435 = vadd.f32 %v2386, %v2434
        %v2436 = vpop.f32.mrf.mxu0
        %v2437 = vadd.f32 %v2388, %v2436
        %2438 = vmatmul.bf16.gmra.mxu0 %v489
        %v2439 = vpop.f32.mrf.mxu0
        %v2440 = vadd.f32 %v2391, %v2439
        %v2441 = vpop.f32.mrf.mxu0
        %v2442 = vadd.f32 %v2393, %v2441
        %2443 = vmatmul.bf16.gmra.mxu0 %v496
        %v2444 = vpop.f32.mrf.mxu0
        %v2445 = vadd.f32 %v2396, %v2444
        %v2446 = vpop.f32.mrf.mxu0
        %v2447 = vadd.f32 %v2398, %v2446
        %2448 = vmatmul.bf16.gmra.mxu0 %v503
        %v2449 = vpop.f32.mrf.mxu0
        %v2450 = vadd.f32 %v2401, %v2449
        %v2451 = vpop.f32.mrf.mxu0
        %v2452 = vadd.f32 %v2403, %v2451
        %2453 = vmatmul.bf16.gmra.mxu0 %v510
        %v2454 = vpop.f32.mrf.mxu0
        %v2455 = vadd.f32 %v2406, %v2454
        %v2456 = vpop.f32.mrf.mxu0
        %v2457 = vadd.f32 %v2408, %v2456
        %2458 = vmatmul.bf16.gmra.mxu0 %v517
        %v2459 = vpop.f32.mrf.mxu0
        %v2460 = vadd.f32 %v2411, %v2459
        %v2461 = vpop.f32.mrf.mxu0
        %v2462 = vadd.f32 %v2413, %v2461
        %2463 = vmatmul.bf16.gmra.mxu0 %v524
        %v2464 = vpop.f32.mrf.mxu0
        %v2465 = vadd.f32 %v2416, %v2464
        %v2466 = vpop.f32.mrf.mxu0
        %v2467 = vadd.f32 %v2418, %v2466
        %2468 = vdwg.mxu0
        %2469 = vmatpush.bf16.msra.mxu0 %v1622
        %2470 = vmatpush.bf16.msra.mxu0 %v1618
        %2471 = vmatpush.bf16.msra.mxu0 %v1614
        %2472 = vmatpush.bf16.msra.mxu0 %v1610
        %2473 = vmatpush.bf16.msra.mxu0 %v1606
        %2474 = vmatpush.bf16.msra.mxu0 %v1602
        %2475 = vmatpush.bf16.msra.mxu0 %v1598
        %2476 = vmatpush.bf16.msra.mxu0 %v1594
        %2477 = vmatmul.bf16.gmra.mxu0 %v476
        %v2478 = vpop.f32.mrf.mxu0
        %v2479 = vadd.f32 %v2430, %v2478
        %v2480 = vpop.f32.mrf.mxu0
        %v2481 = vadd.f32 %v2432, %v2480
        %2482 = vmatmul.bf16.gmra.mxu0 %v483
        %v2483 = vpop.f32.mrf.mxu0
        %v2484 = vadd.f32 %v2435, %v2483
        %v2485 = vpop.f32.mrf.mxu0
        %v2486 = vadd.f32 %v2437, %v2485
        %2487 = vmatmul.bf16.gmra.mxu0 %v490
        %v2488 = vpop.f32.mrf.mxu0
        %v2489 = vadd.f32 %v2440, %v2488
        %v2490 = vpop.f32.mrf.mxu0
        %v2491 = vadd.f32 %v2442, %v2490
        %2492 = vmatmul.bf16.gmra.mxu0 %v497
        %v2493 = vpop.f32.mrf.mxu0
        %v2494 = vadd.f32 %v2445, %v2493
        %v2495 = vpop.f32.mrf.mxu0
        %v2496 = vadd.f32 %v2447, %v2495
        %2497 = vmatmul.bf16.gmra.mxu0 %v504
        %v2498 = vpop.f32.mrf.mxu0
        %v2499 = vadd.f32 %v2450, %v2498
        %v2500 = vpop.f32.mrf.mxu0
        %v2501 = vadd.f32 %v2452, %v2500
        %2502 = vmatmul.bf16.gmra.mxu0 %v511
        %v2503 = vpop.f32.mrf.mxu0
        %v2504 = vadd.f32 %v2455, %v2503
        %v2505 = vpop.f32.mrf.mxu0
        %v2506 = vadd.f32 %v2457, %v2505
        %2507 = vmatmul.bf16.gmra.mxu0 %v518
        %v2508 = vpop.f32.mrf.mxu0
        %v2509 = vadd.f32 %v2460, %v2508
        %v2510 = vpop.f32.mrf.mxu0
        %v2511 = vadd.f32 %v2462, %v2510
        %2512 = vmatmul.bf16.gmra.mxu0 %v525
        %v2513 = vpop.f32.mrf.mxu0
        %v2514 = vadd.f32 %v2465, %v2513
        %v2515 = vpop.f32.mrf.mxu0
        %v2516 = vadd.f32 %v2467, %v2515
        %2517 = vdwg.mxu0
        %2518 = vmatpush.bf16.msra.mxu0 %v1654
        %2519 = vmatpush.bf16.msra.mxu0 %v1650
        %2520 = vmatpush.bf16.msra.mxu0 %v1646
        %2521 = vmatpush.bf16.msra.mxu0 %v1642
        %2522 = vmatpush.bf16.msra.mxu0 %v1638
        %2523 = vmatpush.bf16.msra.mxu0 %v1634
        %2524 = vmatpush.bf16.msra.mxu0 %v1630
        %2525 = vmatpush.bf16.msra.mxu0 %v1626
        %2526 = vmatmul.bf16.gmra.mxu0 %v477
        %v2527 = vpop.f32.mrf.mxu0
        %v2528 = vadd.f32 %v2479, %v2527
        %v2529 = vpop.f32.mrf.mxu0
        %v2530 = vadd.f32 %v2481, %v2529
        %2531 = vmatmul.bf16.gmra.mxu0 %v484
        %v2532 = vpop.f32.mrf.mxu0
        %v2533 = vadd.f32 %v2484, %v2532
        %v2534 = vpop.f32.mrf.mxu0
        %v2535 = vadd.f32 %v2486, %v2534
        %2536 = vmatmul.bf16.gmra.mxu0 %v491
        %v2537 = vpop.f32.mrf.mxu0
        %v2538 = vadd.f32 %v2489, %v2537
        %v2539 = vpop.f32.mrf.mxu0
        %v2540 = vadd.f32 %v2491, %v2539
        %2541 = vmatmul.bf16.gmra.mxu0 %v498
        %v2542 = vpop.f32.mrf.mxu0
        %v2543 = vadd.f32 %v2494, %v2542
        %v2544 = vpop.f32.mrf.mxu0
        %v2545 = vadd.f32 %v2496, %v2544
        %2546 = vmatmul.bf16.gmra.mxu0 %v505
        %v2547 = vpop.f32.mrf.mxu0
        %v2548 = vadd.f32 %v2499, %v2547
        %v2549 = vpop.f32.mrf.mxu0
        %v2550 = vadd.f32 %v2501, %v2549
        %2551 = vmatmul.bf16.gmra.mxu0 %v512
        %v2552 = vpop.f32.mrf.mxu0
        %v2553 = vadd.f32 %v2504, %v2552
        %v2554 = vpop.f32.mrf.mxu0
        %v2555 = vadd.f32 %v2506, %v2554
        %2556 = vmatmul.bf16.gmra.mxu0 %v519
        %v2557 = vpop.f32.mrf.mxu0
        %v2558 = vadd.f32 %v2509, %v2557
        %v2559 = vpop.f32.mrf.mxu0
        %v2560 = vadd.f32 %v2511, %v2559
        %2561 = vmatmul.bf16.gmra.mxu0 %v526
        %v2562 = vpop.f32.mrf.mxu0
        %v2563 = vadd.f32 %v2514, %v2562
        %v2564 = vpop.f32.mrf.mxu0
        %v2565 = vadd.f32 %v2516, %v2564
        %2566 = vdwg.mxu0
        %2567 = vmatpush.bf16.msra.mxu0 %v1463
        %2568 = vmatpush.bf16.msra.mxu0 %v1459
        %2569 = vmatpush.bf16.msra.mxu0 %v1455
        %2570 = vmatpush.bf16.msra.mxu0 %v1451
        %2571 = vmatpush.bf16.msra.mxu0 %v1447
        %2572 = vmatpush.bf16.msra.mxu0 %v1443
        %2573 = vmatpush.bf16.msra.mxu0 %v1439
        %2574 = vmatpush.bf16.msra.mxu0 %v1435
        %2575 = vmatmul.bf16.gmra.mxu0 %v471
        %v2576 = vpop.f32.mrf.mxu0
        %v2577 = vadd.f32 %v755, %v2576
        %v2578 = vpop.f32.mrf.mxu0
        %v2579 = vadd.f32 %v755, %v2578
        %2580 = vmatmul.bf16.gmra.mxu0 %v478
        %v2581 = vpop.f32.mrf.mxu0
        %v2582 = vadd.f32 %v755, %v2581
        %v2583 = vpop.f32.mrf.mxu0
        %v2584 = vadd.f32 %v755, %v2583
        %2585 = vmatmul.bf16.gmra.mxu0 %v485
        %v2586 = vpop.f32.mrf.mxu0
        %v2587 = vadd.f32 %v755, %v2586
        %v2588 = vpop.f32.mrf.mxu0
        %v2589 = vadd.f32 %v755, %v2588
        %2590 = vmatmul.bf16.gmra.mxu0 %v492
        %v2591 = vpop.f32.mrf.mxu0
        %v2592 = vadd.f32 %v755, %v2591
        %v2593 = vpop.f32.mrf.mxu0
        %v2594 = vadd.f32 %v755, %v2593
        %2595 = vmatmul.bf16.gmra.mxu0 %v499
        %v2596 = vpop.f32.mrf.mxu0
        %v2597 = vadd.f32 %v755, %v2596
        %v2598 = vpop.f32.mrf.mxu0
        %v2599 = vadd.f32 %v755, %v2598
        %2600 = vmatmul.bf16.gmra.mxu0 %v506
        %v2601 = vpop.f32.mrf.mxu0
        %v2602 = vadd.f32 %v755, %v2601
        %v2603 = vpop.f32.mrf.mxu0
        %v2604 = vadd.f32 %v755, %v2603
        %2605 = vmatmul.bf16.gmra.mxu0 %v513
        %v2606 = vpop.f32.mrf.mxu0
        %v2607 = vadd.f32 %v755, %v2606
        %v2608 = vpop.f32.mrf.mxu0
        %v2609 = vadd.f32 %v755, %v2608
        %2610 = vmatmul.bf16.gmra.mxu0 %v520
        %v2611 = vpop.f32.mrf.mxu0
        %v2612 = vadd.f32 %v755, %v2611
        %v2613 = vpop.f32.mrf.mxu0
        %v2614 = vadd.f32 %v755, %v2613
        %2615 = vdwg.mxu0
        %2616 = vmatpush.bf16.msra.mxu0 %v1495
        %2617 = vmatpush.bf16.msra.mxu0 %v1491
        %2618 = vmatpush.bf16.msra.mxu0 %v1487
        %2619 = vmatpush.bf16.msra.mxu0 %v1483
        %2620 = vmatpush.bf16.msra.mxu0 %v1479
        %2621 = vmatpush.bf16.msra.mxu0 %v1475
        %2622 = vmatpush.bf16.msra.mxu0 %v1471
        %2623 = vmatpush.bf16.msra.mxu0 %v1467
        %2624 = vmatmul.bf16.gmra.mxu0 %v472
        %v2625 = vpop.f32.mrf.mxu0
        %v2626 = vadd.f32 %v2577, %v2625
        %v2627 = vpop.f32.mrf.mxu0
        %v2628 = vadd.f32 %v2579, %v2627
        %2629 = vmatmul.bf16.gmra.mxu0 %v479
        %v2630 = vpop.f32.mrf.mxu0
        %v2631 = vadd.f32 %v2582, %v2630
        %v2632 = vpop.f32.mrf.mxu0
        %v2633 = vadd.f32 %v2584, %v2632
        %2634 = vmatmul.bf16.gmra.mxu0 %v486
        %v2635 = vpop.f32.mrf.mxu0
        %v2636 = vadd.f32 %v2587, %v2635
        %v2637 = vpop.f32.mrf.mxu0
        %v2638 = vadd.f32 %v2589, %v2637
        %2639 = vmatmul.bf16.gmra.mxu0 %v493
        %v2640 = vpop.f32.mrf.mxu0
        %v2641 = vadd.f32 %v2592, %v2640
        %v2642 = vpop.f32.mrf.mxu0
        %v2643 = vadd.f32 %v2594, %v2642
        %2644 = vmatmul.bf16.gmra.mxu0 %v500
        %v2645 = vpop.f32.mrf.mxu0
        %v2646 = vadd.f32 %v2597, %v2645
        %v2647 = vpop.f32.mrf.mxu0
        %v2648 = vadd.f32 %v2599, %v2647
        %2649 = vmatmul.bf16.gmra.mxu0 %v507
        %v2650 = vpop.f32.mrf.mxu0
        %v2651 = vadd.f32 %v2602, %v2650
        %v2652 = vpop.f32.mrf.mxu0
        %v2653 = vadd.f32 %v2604, %v2652
        %2654 = vmatmul.bf16.gmra.mxu0 %v514
        %v2655 = vpop.f32.mrf.mxu0
        %v2656 = vadd.f32 %v2607, %v2655
        %v2657 = vpop.f32.mrf.mxu0
        %v2658 = vadd.f32 %v2609, %v2657
        %2659 = vmatmul.bf16.gmra.mxu0 %v521
        %v2660 = vpop.f32.mrf.mxu0
        %v2661 = vadd.f32 %v2612, %v2660
        %v2662 = vpop.f32.mrf.mxu0
        %v2663 = vadd.f32 %v2614, %v2662
        %2664 = vdwg.mxu0
        %2665 = vmatpush.bf16.msra.mxu0 %v1527
        %2666 = vmatpush.bf16.msra.mxu0 %v1523
        %2667 = vmatpush.bf16.msra.mxu0 %v1519
        %2668 = vmatpush.bf16.msra.mxu0 %v1515
        %2669 = vmatpush.bf16.msra.mxu0 %v1511
        %2670 = vmatpush.bf16.msra.mxu0 %v1507
        %2671 = vmatpush.bf16.msra.mxu0 %v1503
        %2672 = vmatpush.bf16.msra.mxu0 %v1499
        %2673 = vmatmul.bf16.gmra.mxu0 %v473
        %v2674 = vpop.f32.mrf.mxu0
        %v2675 = vadd.f32 %v2626, %v2674
        %v2676 = vpop.f32.mrf.mxu0
        %v2677 = vadd.f32 %v2628, %v2676
        %2678 = vmatmul.bf16.gmra.mxu0 %v480
        %v2679 = vpop.f32.mrf.mxu0
        %v2680 = vadd.f32 %v2631, %v2679
        %v2681 = vpop.f32.mrf.mxu0
        %v2682 = vadd.f32 %v2633, %v2681
        %2683 = vmatmul.bf16.gmra.mxu0 %v487
        %v2684 = vpop.f32.mrf.mxu0
        %v2685 = vadd.f32 %v2636, %v2684
        %v2686 = vpop.f32.mrf.mxu0
        %v2687 = vadd.f32 %v2638, %v2686
        %2688 = vmatmul.bf16.gmra.mxu0 %v494
        %v2689 = vpop.f32.mrf.mxu0
        %v2690 = vadd.f32 %v2641, %v2689
        %v2691 = vpop.f32.mrf.mxu0
        %v2692 = vadd.f32 %v2643, %v2691
        %2693 = vmatmul.bf16.gmra.mxu0 %v501
        %v2694 = vpop.f32.mrf.mxu0
        %v2695 = vadd.f32 %v2646, %v2694
        %v2696 = vpop.f32.mrf.mxu0
        %v2697 = vadd.f32 %v2648, %v2696
        %2698 = vmatmul.bf16.gmra.mxu0 %v508
        %v2699 = vpop.f32.mrf.mxu0
        %v2700 = vadd.f32 %v2651, %v2699
        %v2701 = vpop.f32.mrf.mxu0
        %v2702 = vadd.f32 %v2653, %v2701
        %2703 = vmatmul.bf16.gmra.mxu0 %v515
        %v2704 = vpop.f32.mrf.mxu0
        %v2705 = vadd.f32 %v2656, %v2704
        %v2706 = vpop.f32.mrf.mxu0
        %v2707 = vadd.f32 %v2658, %v2706
        %2708 = vmatmul.bf16.gmra.mxu0 %v522
        %v2709 = vpop.f32.mrf.mxu0
        %v2710 = vadd.f32 %v2661, %v2709
        %v2711 = vpop.f32.mrf.mxu0
        %v2712 = vadd.f32 %v2663, %v2711
        %2713 = vdwg.mxu0
        %2714 = vmatpush.bf16.msra.mxu0 %v1559
        %2715 = vmatpush.bf16.msra.mxu0 %v1555
        %2716 = vmatpush.bf16.msra.mxu0 %v1551
        %2717 = vmatpush.bf16.msra.mxu0 %v1547
        %2718 = vmatpush.bf16.msra.mxu0 %v1543
        %2719 = vmatpush.bf16.msra.mxu0 %v1539
        %2720 = vmatpush.bf16.msra.mxu0 %v1535
        %2721 = vmatpush.bf16.msra.mxu0 %v1531
        %2722 = vmatmul.bf16.gmra.mxu0 %v474
        %v2723 = vpop.f32.mrf.mxu0
        %v2724 = vadd.f32 %v2675, %v2723
        %v2725 = vpop.f32.mrf.mxu0
        %v2726 = vadd.f32 %v2677, %v2725
        %2727 = vmatmul.bf16.gmra.mxu0 %v481
        %v2728 = vpop.f32.mrf.mxu0
        %v2729 = vadd.f32 %v2680, %v2728
        %v2730 = vpop.f32.mrf.mxu0
        %v2731 = vadd.f32 %v2682, %v2730
        %2732 = vmatmul.bf16.gmra.mxu0 %v488
        %v2733 = vpop.f32.mrf.mxu0
        %v2734 = vadd.f32 %v2685, %v2733
        %v2735 = vpop.f32.mrf.mxu0
        %v2736 = vadd.f32 %v2687, %v2735
        %2737 = vmatmul.bf16.gmra.mxu0 %v495
        %v2738 = vpop.f32.mrf.mxu0
        %v2739 = vadd.f32 %v2690, %v2738
        %v2740 = vpop.f32.mrf.mxu0
        %v2741 = vadd.f32 %v2692, %v2740
        %2742 = vmatmul.bf16.gmra.mxu0 %v502
        %v2743 = vpop.f32.mrf.mxu0
        %v2744 = vadd.f32 %v2695, %v2743
        %v2745 = vpop.f32.mrf.mxu0
        %v2746 = vadd.f32 %v2697, %v2745
        %2747 = vmatmul.bf16.gmra.mxu0 %v509
        %v2748 = vpop.f32.mrf.mxu0
        %v2749 = vadd.f32 %v2700, %v2748
        %v2750 = vpop.f32.mrf.mxu0
        %v2751 = vadd.f32 %v2702, %v2750
        %2752 = vmatmul.bf16.gmra.mxu0 %v516
        %v2753 = vpop.f32.mrf.mxu0
        %v2754 = vadd.f32 %v2705, %v2753
        %v2755 = vpop.f32.mrf.mxu0
        %v2756 = vadd.f32 %v2707, %v2755
        %2757 = vmatmul.bf16.gmra.mxu0 %v523
        %v2758 = vpop.f32.mrf.mxu0
        %v2759 = vadd.f32 %v2710, %v2758
        %v2760 = vpop.f32.mrf.mxu0
        %v2761 = vadd.f32 %v2712, %v2760
        %2762 = vdwg.mxu0
        %2763 = vmatpush.bf16.msra.mxu0 %v1591
        %2764 = vmatpush.bf16.msra.mxu0 %v1587
        %2765 = vmatpush.bf16.msra.mxu0 %v1583
        %2766 = vmatpush.bf16.msra.mxu0 %v1579
        %2767 = vmatpush.bf16.msra.mxu0 %v1575
        %2768 = vmatpush.bf16.msra.mxu0 %v1571
        %2769 = vmatpush.bf16.msra.mxu0 %v1567
        %2770 = vmatpush.bf16.msra.mxu0 %v1563
        %2771 = vmatmul.bf16.gmra.mxu0 %v475
        %v2772 = vpop.f32.mrf.mxu0
        %v2773 = vadd.f32 %v2724, %v2772
        %v2774 = vpop.f32.mrf.mxu0
        %v2775 = vadd.f32 %v2726, %v2774
        %2776 = vmatmul.bf16.gmra.mxu0 %v482
        %v2777 = vpop.f32.mrf.mxu0
        %v2778 = vadd.f32 %v2729, %v2777
        %v2779 = vpop.f32.mrf.mxu0
        %v2780 = vadd.f32 %v2731, %v2779
        %2781 = vmatmul.bf16.gmra.mxu0 %v489
        %v2782 = vpop.f32.mrf.mxu0
        %v2783 = vadd.f32 %v2734, %v2782
        %v2784 = vpop.f32.mrf.mxu0
        %v2785 = vadd.f32 %v2736, %v2784
        %2786 = vmatmul.bf16.gmra.mxu0 %v496
        %v2787 = vpop.f32.mrf.mxu0
        %v2788 = vadd.f32 %v2739, %v2787
        %v2789 = vpop.f32.mrf.mxu0
        %v2790 = vadd.f32 %v2741, %v2789
        %2791 = vmatmul.bf16.gmra.mxu0 %v503
        %v2792 = vpop.f32.mrf.mxu0
        %v2793 = vadd.f32 %v2744, %v2792
        %v2794 = vpop.f32.mrf.mxu0
        %v2795 = vadd.f32 %v2746, %v2794
        %2796 = vmatmul.bf16.gmra.mxu0 %v510
        %v2797 = vpop.f32.mrf.mxu0
        %v2798 = vadd.f32 %v2749, %v2797
        %v2799 = vpop.f32.mrf.mxu0
        %v2800 = vadd.f32 %v2751, %v2799
        %2801 = vmatmul.bf16.gmra.mxu0 %v517
        %v2802 = vpop.f32.mrf.mxu0
        %v2803 = vadd.f32 %v2754, %v2802
        %v2804 = vpop.f32.mrf.mxu0
        %v2805 = vadd.f32 %v2756, %v2804
        %2806 = vmatmul.bf16.gmra.mxu0 %v524
        %v2807 = vpop.f32.mrf.mxu0
        %v2808 = vadd.f32 %v2759, %v2807
        %v2809 = vpop.f32.mrf.mxu0
        %v2810 = vadd.f32 %v2761, %v2809
        %2811 = vdwg.mxu0
        %2812 = vmatpush.bf16.msra.mxu0 %v1623
        %2813 = vmatpush.bf16.msra.mxu0 %v1619
        %2814 = vmatpush.bf16.msra.mxu0 %v1615
        %2815 = vmatpush.bf16.msra.mxu0 %v1611
        %2816 = vmatpush.bf16.msra.mxu0 %v1607
        %2817 = vmatpush.bf16.msra.mxu0 %v1603
        %2818 = vmatpush.bf16.msra.mxu0 %v1599
        %2819 = vmatpush.bf16.msra.mxu0 %v1595
        %2820 = vmatmul.bf16.gmra.mxu0 %v476
        %v2821 = vpop.f32.mrf.mxu0
        %v2822 = vadd.f32 %v2773, %v2821
        %v2823 = vpop.f32.mrf.mxu0
        %v2824 = vadd.f32 %v2775, %v2823
        %2825 = vmatmul.bf16.gmra.mxu0 %v483
        %v2826 = vpop.f32.mrf.mxu0
        %v2827 = vadd.f32 %v2778, %v2826
        %v2828 = vpop.f32.mrf.mxu0
        %v2829 = vadd.f32 %v2780, %v2828
        %2830 = vmatmul.bf16.gmra.mxu0 %v490
        %v2831 = vpop.f32.mrf.mxu0
        %v2832 = vadd.f32 %v2783, %v2831
        %v2833 = vpop.f32.mrf.mxu0
        %v2834 = vadd.f32 %v2785, %v2833
        %2835 = vmatmul.bf16.gmra.mxu0 %v497
        %v2836 = vpop.f32.mrf.mxu0
        %v2837 = vadd.f32 %v2788, %v2836
        %v2838 = vpop.f32.mrf.mxu0
        %v2839 = vadd.f32 %v2790, %v2838
        %2840 = vmatmul.bf16.gmra.mxu0 %v504
        %v2841 = vpop.f32.mrf.mxu0
        %v2842 = vadd.f32 %v2793, %v2841
        %v2843 = vpop.f32.mrf.mxu0
        %v2844 = vadd.f32 %v2795, %v2843
        %2845 = vmatmul.bf16.gmra.mxu0 %v511
        %v2846 = vpop.f32.mrf.mxu0
        %v2847 = vadd.f32 %v2798, %v2846
        %v2848 = vpop.f32.mrf.mxu0
        %v2849 = vadd.f32 %v2800, %v2848
        %2850 = vmatmul.bf16.gmra.mxu0 %v518
        %v2851 = vpop.f32.mrf.mxu0
        %v2852 = vadd.f32 %v2803, %v2851
        %v2853 = vpop.f32.mrf.mxu0
        %v2854 = vadd.f32 %v2805, %v2853
        %2855 = vmatmul.bf16.gmra.mxu0 %v525
        %v2856 = vpop.f32.mrf.mxu0
        %v2857 = vadd.f32 %v2808, %v2856
        %v2858 = vpop.f32.mrf.mxu0
        %v2859 = vadd.f32 %v2810, %v2858
        %2860 = vdwg.mxu0
        %2861 = vmatpush.bf16.msra.mxu0 %v1655
        %2862 = vmatpush.bf16.msra.mxu0 %v1651
        %2863 = vmatpush.bf16.msra.mxu0 %v1647
        %2864 = vmatpush.bf16.msra.mxu0 %v1643
        %2865 = vmatpush.bf16.msra.mxu0 %v1639
        %2866 = vmatpush.bf16.msra.mxu0 %v1635
        %2867 = vmatpush.bf16.msra.mxu0 %v1631
        %2868 = vmatpush.bf16.msra.mxu0 %v1627
        %2869 = vmatmul.bf16.gmra.mxu0 %v477
        %v2870 = vpop.f32.mrf.mxu0
        %v2871 = vadd.f32 %v2822, %v2870
        %v2872 = vpop.f32.mrf.mxu0
        %v2873 = vadd.f32 %v2824, %v2872
        %2874 = vmatmul.bf16.gmra.mxu0 %v484
        %v2875 = vpop.f32.mrf.mxu0
        %v2876 = vadd.f32 %v2827, %v2875
        %v2877 = vpop.f32.mrf.mxu0
        %v2878 = vadd.f32 %v2829, %v2877
        %2879 = vmatmul.bf16.gmra.mxu0 %v491
        %v2880 = vpop.f32.mrf.mxu0
        %v2881 = vadd.f32 %v2832, %v2880
        %v2882 = vpop.f32.mrf.mxu0
        %v2883 = vadd.f32 %v2834, %v2882
        %2884 = vmatmul.bf16.gmra.mxu0 %v498
        %v2885 = vpop.f32.mrf.mxu0
        %v2886 = vadd.f32 %v2837, %v2885
        %v2887 = vpop.f32.mrf.mxu0
        %v2888 = vadd.f32 %v2839, %v2887
        %2889 = vmatmul.bf16.gmra.mxu0 %v505
        %v2890 = vpop.f32.mrf.mxu0
        %v2891 = vadd.f32 %v2842, %v2890
        %v2892 = vpop.f32.mrf.mxu0
        %v2893 = vadd.f32 %v2844, %v2892
        %2894 = vmatmul.bf16.gmra.mxu0 %v512
        %v2895 = vpop.f32.mrf.mxu0
        %v2896 = vadd.f32 %v2847, %v2895
        %v2897 = vpop.f32.mrf.mxu0
        %v2898 = vadd.f32 %v2849, %v2897
        %2899 = vmatmul.bf16.gmra.mxu0 %v519
        %v2900 = vpop.f32.mrf.mxu0
        %v2901 = vadd.f32 %v2852, %v2900
        %v2902 = vpop.f32.mrf.mxu0
        %v2903 = vadd.f32 %v2854, %v2902
        %2904 = vmatmul.bf16.gmra.mxu0 %v526
        %v2905 = vpop.f32.mrf.mxu0
        %v2906 = vadd.f32 %v2857, %v2905
        %v2907 = vpop.f32.mrf.mxu0
        %v2908 = vadd.f32 %v2859, %v2907
        %2909 = vdwg.mxu0
        %2910 = vmatpush.bf16.msra.mxu0 %v1464
        %2911 = vmatpush.bf16.msra.mxu0 %v1460
        %2912 = vmatpush.bf16.msra.mxu0 %v1456
        %2913 = vmatpush.bf16.msra.mxu0 %v1452
        %2914 = vmatpush.bf16.msra.mxu0 %v1448
        %2915 = vmatpush.bf16.msra.mxu0 %v1444
        %2916 = vmatpush.bf16.msra.mxu0 %v1440
        %2917 = vmatpush.bf16.msra.mxu0 %v1436
        %2918 = vmatmul.bf16.gmra.mxu0 %v471
        %v2919 = vpop.f32.mrf.mxu0
        %v2920 = vadd.f32 %v756, %v2919
        %v2921 = vpop.f32.mrf.mxu0
        %v2922 = vadd.f32 %v756, %v2921
        %2923 = vmatmul.bf16.gmra.mxu0 %v478
        %v2924 = vpop.f32.mrf.mxu0
        %v2925 = vadd.f32 %v756, %v2924
        %v2926 = vpop.f32.mrf.mxu0
        %v2927 = vadd.f32 %v756, %v2926
        %2928 = vmatmul.bf16.gmra.mxu0 %v485
        %v2929 = vpop.f32.mrf.mxu0
        %v2930 = vadd.f32 %v756, %v2929
        %v2931 = vpop.f32.mrf.mxu0
        %v2932 = vadd.f32 %v756, %v2931
        %2933 = vmatmul.bf16.gmra.mxu0 %v492
        %v2934 = vpop.f32.mrf.mxu0
        %v2935 = vadd.f32 %v756, %v2934
        %v2936 = vpop.f32.mrf.mxu0
        %v2937 = vadd.f32 %v756, %v2936
        %2938 = vmatmul.bf16.gmra.mxu0 %v499
        %v2939 = vpop.f32.mrf.mxu0
        %v2940 = vadd.f32 %v756, %v2939
        %v2941 = vpop.f32.mrf.mxu0
        %v2942 = vadd.f32 %v756, %v2941
        %2943 = vmatmul.bf16.gmra.mxu0 %v506
        %v2944 = vpop.f32.mrf.mxu0
        %v2945 = vadd.f32 %v756, %v2944
        %v2946 = vpop.f32.mrf.mxu0
        %v2947 = vadd.f32 %v756, %v2946
        %2948 = vmatmul.bf16.gmra.mxu0 %v513
        %v2949 = vpop.f32.mrf.mxu0
        %v2950 = vadd.f32 %v756, %v2949
        %v2951 = vpop.f32.mrf.mxu0
        %v2952 = vadd.f32 %v756, %v2951
        %2953 = vmatmul.bf16.gmra.mxu0 %v520
        %v2954 = vpop.f32.mrf.mxu0
        %v2955 = vadd.f32 %v756, %v2954
        %v2956 = vpop.f32.mrf.mxu0
        %v2957 = vadd.f32 %v756, %v2956
        %2958 = vdwg.mxu0
        %2959 = vmatpush.bf16.msra.mxu0 %v1496
        %2960 = vmatpush.bf16.msra.mxu0 %v1492
        %2961 = vmatpush.bf16.msra.mxu0 %v1488
        %2962 = vmatpush.bf16.msra.mxu0 %v1484
        %2963 = vmatpush.bf16.msra.mxu0 %v1480
        %2964 = vmatpush.bf16.msra.mxu0 %v1476
        %2965 = vmatpush.bf16.msra.mxu0 %v1472
        %2966 = vmatpush.bf16.msra.mxu0 %v1468
        %2967 = vmatmul.bf16.gmra.mxu0 %v472
        %v2968 = vpop.f32.mrf.mxu0
        %v2969 = vadd.f32 %v2920, %v2968
        %v2970 = vpop.f32.mrf.mxu0
        %v2971 = vadd.f32 %v2922, %v2970
        %2972 = vmatmul.bf16.gmra.mxu0 %v479
        %v2973 = vpop.f32.mrf.mxu0
        %v2974 = vadd.f32 %v2925, %v2973
        %v2975 = vpop.f32.mrf.mxu0
        %v2976 = vadd.f32 %v2927, %v2975
        %2977 = vmatmul.bf16.gmra.mxu0 %v486
        %v2978 = vpop.f32.mrf.mxu0
        %v2979 = vadd.f32 %v2930, %v2978
        %v2980 = vpop.f32.mrf.mxu0
        %v2981 = vadd.f32 %v2932, %v2980
        %2982 = vmatmul.bf16.gmra.mxu0 %v493
        %v2983 = vpop.f32.mrf.mxu0
        %v2984 = vadd.f32 %v2935, %v2983
        %v2985 = vpop.f32.mrf.mxu0
        %v2986 = vadd.f32 %v2937, %v2985
        %2987 = vmatmul.bf16.gmra.mxu0 %v500
        %v2988 = vpop.f32.mrf.mxu0
        %v2989 = vadd.f32 %v2940, %v2988
        %v2990 = vpop.f32.mrf.mxu0
        %v2991 = vadd.f32 %v2942, %v2990
        %2992 = vmatmul.bf16.gmra.mxu0 %v507
        %v2993 = vpop.f32.mrf.mxu0
        %v2994 = vadd.f32 %v2945, %v2993
        %v2995 = vpop.f32.mrf.mxu0
        %v2996 = vadd.f32 %v2947, %v2995
        %2997 = vmatmul.bf16.gmra.mxu0 %v514
        %v2998 = vpop.f32.mrf.mxu0
        %v2999 = vadd.f32 %v2950, %v2998
        %v3000 = vpop.f32.mrf.mxu0
        %v3001 = vadd.f32 %v2952, %v3000
        %3002 = vmatmul.bf16.gmra.mxu0 %v521
        %v3003 = vpop.f32.mrf.mxu0
        %v3004 = vadd.f32 %v2955, %v3003
        %v3005 = vpop.f32.mrf.mxu0
        %v3006 = vadd.f32 %v2957, %v3005
        %3007 = vdwg.mxu0
        %3008 = vmatpush.bf16.msra.mxu0 %v1528
        %3009 = vmatpush.bf16.msra.mxu0 %v1524
        %3010 = vmatpush.bf16.msra.mxu0 %v1520
        %3011 = vmatpush.bf16.msra.mxu0 %v1516
        %3012 = vmatpush.bf16.msra.mxu0 %v1512
        %3013 = vmatpush.bf16.msra.mxu0 %v1508
        %3014 = vmatpush.bf16.msra.mxu0 %v1504
        %3015 = vmatpush.bf16.msra.mxu0 %v1500
        %3016 = vmatmul.bf16.gmra.mxu0 %v473
        %v3017 = vpop.f32.mrf.mxu0
        %v3018 = vadd.f32 %v2969, %v3017
        %v3019 = vpop.f32.mrf.mxu0
        %v3020 = vadd.f32 %v2971, %v3019
        %3021 = vmatmul.bf16.gmra.mxu0 %v480
        %v3022 = vpop.f32.mrf.mxu0
        %v3023 = vadd.f32 %v2974, %v3022
        %v3024 = vpop.f32.mrf.mxu0
        %v3025 = vadd.f32 %v2976, %v3024
        %3026 = vmatmul.bf16.gmra.mxu0 %v487
        %v3027 = vpop.f32.mrf.mxu0
        %v3028 = vadd.f32 %v2979, %v3027
        %v3029 = vpop.f32.mrf.mxu0
        %v3030 = vadd.f32 %v2981, %v3029
        %3031 = vmatmul.bf16.gmra.mxu0 %v494
        %v3032 = vpop.f32.mrf.mxu0
        %v3033 = vadd.f32 %v2984, %v3032
        %v3034 = vpop.f32.mrf.mxu0
        %v3035 = vadd.f32 %v2986, %v3034
        %3036 = vmatmul.bf16.gmra.mxu0 %v501
        %v3037 = vpop.f32.mrf.mxu0
        %v3038 = vadd.f32 %v2989, %v3037
        %v3039 = vpop.f32.mrf.mxu0
        %v3040 = vadd.f32 %v2991, %v3039
        %3041 = vmatmul.bf16.gmra.mxu0 %v508
        %v3042 = vpop.f32.mrf.mxu0
        %v3043 = vadd.f32 %v2994, %v3042
        %v3044 = vpop.f32.mrf.mxu0
        %v3045 = vadd.f32 %v2996, %v3044
        %3046 = vmatmul.bf16.gmra.mxu0 %v515
        %v3047 = vpop.f32.mrf.mxu0
        %v3048 = vadd.f32 %v2999, %v3047
        %v3049 = vpop.f32.mrf.mxu0
        %v3050 = vadd.f32 %v3001, %v3049
        %3051 = vmatmul.bf16.gmra.mxu0 %v522
        %v3052 = vpop.f32.mrf.mxu0
        %v3053 = vadd.f32 %v3004, %v3052
        %v3054 = vpop.f32.mrf.mxu0
        %v3055 = vadd.f32 %v3006, %v3054
        %3056 = vdwg.mxu0
        %3057 = vmatpush.bf16.msra.mxu0 %v1560
        %3058 = vmatpush.bf16.msra.mxu0 %v1556
        %3059 = vmatpush.bf16.msra.mxu0 %v1552
        %3060 = vmatpush.bf16.msra.mxu0 %v1548
        %3061 = vmatpush.bf16.msra.mxu0 %v1544
        %3062 = vmatpush.bf16.msra.mxu0 %v1540
        %3063 = vmatpush.bf16.msra.mxu0 %v1536
        %3064 = vmatpush.bf16.msra.mxu0 %v1532
        %3065 = vmatmul.bf16.gmra.mxu0 %v474
        %v3066 = vpop.f32.mrf.mxu0
        %v3067 = vadd.f32 %v3018, %v3066
        %v3068 = vpop.f32.mrf.mxu0
        %v3069 = vadd.f32 %v3020, %v3068
        %3070 = vmatmul.bf16.gmra.mxu0 %v481
        %v3071 = vpop.f32.mrf.mxu0
        %v3072 = vadd.f32 %v3023, %v3071
        %v3073 = vpop.f32.mrf.mxu0
        %v3074 = vadd.f32 %v3025, %v3073
        %3075 = vmatmul.bf16.gmra.mxu0 %v488
        %v3076 = vpop.f32.mrf.mxu0
        %v3077 = vadd.f32 %v3028, %v3076
        %v3078 = vpop.f32.mrf.mxu0
        %v3079 = vadd.f32 %v3030, %v3078
        %3080 = vmatmul.bf16.gmra.mxu0 %v495
        %v3081 = vpop.f32.mrf.mxu0
        %v3082 = vadd.f32 %v3033, %v3081
        %v3083 = vpop.f32.mrf.mxu0
        %v3084 = vadd.f32 %v3035, %v3083
        %3085 = vmatmul.bf16.gmra.mxu0 %v502
        %v3086 = vpop.f32.mrf.mxu0
        %v3087 = vadd.f32 %v3038, %v3086
        %v3088 = vpop.f32.mrf.mxu0
        %v3089 = vadd.f32 %v3040, %v3088
        %3090 = vmatmul.bf16.gmra.mxu0 %v509
        %v3091 = vpop.f32.mrf.mxu0
        %v3092 = vadd.f32 %v3043, %v3091
        %v3093 = vpop.f32.mrf.mxu0
        %v3094 = vadd.f32 %v3045, %v3093
        %3095 = vmatmul.bf16.gmra.mxu0 %v516
        %v3096 = vpop.f32.mrf.mxu0
        %v3097 = vadd.f32 %v3048, %v3096
        %v3098 = vpop.f32.mrf.mxu0
        %v3099 = vadd.f32 %v3050, %v3098
        %3100 = vmatmul.bf16.gmra.mxu0 %v523
        %v3101 = vpop.f32.mrf.mxu0
        %v3102 = vadd.f32 %v3053, %v3101
        %v3103 = vpop.f32.mrf.mxu0
        %v3104 = vadd.f32 %v3055, %v3103
        %3105 = vdwg.mxu0
        %3106 = vmatpush.bf16.msra.mxu0 %v1592
        %3107 = vmatpush.bf16.msra.mxu0 %v1588
        %3108 = vmatpush.bf16.msra.mxu0 %v1584
        %3109 = vmatpush.bf16.msra.mxu0 %v1580
        %3110 = vmatpush.bf16.msra.mxu0 %v1576
        %3111 = vmatpush.bf16.msra.mxu0 %v1572
        %3112 = vmatpush.bf16.msra.mxu0 %v1568
        %3113 = vmatpush.bf16.msra.mxu0 %v1564
        %3114 = vmatmul.bf16.gmra.mxu0 %v475
        %v3115 = vpop.f32.mrf.mxu0
        %v3116 = vadd.f32 %v3067, %v3115
        %v3117 = vpop.f32.mrf.mxu0
        %v3118 = vadd.f32 %v3069, %v3117
        %3119 = vmatmul.bf16.gmra.mxu0 %v482
        %v3120 = vpop.f32.mrf.mxu0
        %v3121 = vadd.f32 %v3072, %v3120
        %v3122 = vpop.f32.mrf.mxu0
        %v3123 = vadd.f32 %v3074, %v3122
        %3124 = vmatmul.bf16.gmra.mxu0 %v489
        %v3125 = vpop.f32.mrf.mxu0
        %v3126 = vadd.f32 %v3077, %v3125
        %v3127 = vpop.f32.mrf.mxu0
        %v3128 = vadd.f32 %v3079, %v3127
        %3129 = vmatmul.bf16.gmra.mxu0 %v496
        %v3130 = vpop.f32.mrf.mxu0
        %v3131 = vadd.f32 %v3082, %v3130
        %v3132 = vpop.f32.mrf.mxu0
        %v3133 = vadd.f32 %v3084, %v3132
        %3134 = vmatmul.bf16.gmra.mxu0 %v503
        %v3135 = vpop.f32.mrf.mxu0
        %v3136 = vadd.f32 %v3087, %v3135
        %v3137 = vpop.f32.mrf.mxu0
        %v3138 = vadd.f32 %v3089, %v3137
        %3139 = vmatmul.bf16.gmra.mxu0 %v510
        %v3140 = vpop.f32.mrf.mxu0
        %v3141 = vadd.f32 %v3092, %v3140
        %v3142 = vpop.f32.mrf.mxu0
        %v3143 = vadd.f32 %v3094, %v3142
        %3144 = vmatmul.bf16.gmra.mxu0 %v517
        %v3145 = vpop.f32.mrf.mxu0
        %v3146 = vadd.f32 %v3097, %v3145
        %v3147 = vpop.f32.mrf.mxu0
        %v3148 = vadd.f32 %v3099, %v3147
        %3149 = vmatmul.bf16.gmra.mxu0 %v524
        %v3150 = vpop.f32.mrf.mxu0
        %v3151 = vadd.f32 %v3102, %v3150
        %v3152 = vpop.f32.mrf.mxu0
        %v3153 = vadd.f32 %v3104, %v3152
        %3154 = vdwg.mxu0
        %3155 = vmatpush.bf16.msra.mxu0 %v1624
        %3156 = vmatpush.bf16.msra.mxu0 %v1620
        %3157 = vmatpush.bf16.msra.mxu0 %v1616
        %3158 = vmatpush.bf16.msra.mxu0 %v1612
        %3159 = vmatpush.bf16.msra.mxu0 %v1608
        %3160 = vmatpush.bf16.msra.mxu0 %v1604
        %3161 = vmatpush.bf16.msra.mxu0 %v1600
        %3162 = vmatpush.bf16.msra.mxu0 %v1596
        %3163 = vmatmul.bf16.gmra.mxu0 %v476
        %v3164 = vpop.f32.mrf.mxu0
        %v3165 = vadd.f32 %v3116, %v3164
        %v3166 = vpop.f32.mrf.mxu0
        %v3167 = vadd.f32 %v3118, %v3166
        %3168 = vmatmul.bf16.gmra.mxu0 %v483
        %v3169 = vpop.f32.mrf.mxu0
        %v3170 = vadd.f32 %v3121, %v3169
        %v3171 = vpop.f32.mrf.mxu0
        %v3172 = vadd.f32 %v3123, %v3171
        %3173 = vmatmul.bf16.gmra.mxu0 %v490
        %v3174 = vpop.f32.mrf.mxu0
        %v3175 = vadd.f32 %v3126, %v3174
        %v3176 = vpop.f32.mrf.mxu0
        %v3177 = vadd.f32 %v3128, %v3176
        %3178 = vmatmul.bf16.gmra.mxu0 %v497
        %v3179 = vpop.f32.mrf.mxu0
        %v3180 = vadd.f32 %v3131, %v3179
        %v3181 = vpop.f32.mrf.mxu0
        %v3182 = vadd.f32 %v3133, %v3181
        %3183 = vmatmul.bf16.gmra.mxu0 %v504
        %v3184 = vpop.f32.mrf.mxu0
        %v3185 = vadd.f32 %v3136, %v3184
        %v3186 = vpop.f32.mrf.mxu0
        %v3187 = vadd.f32 %v3138, %v3186
        %3188 = vmatmul.bf16.gmra.mxu0 %v511
        %v3189 = vpop.f32.mrf.mxu0
        %v3190 = vadd.f32 %v3141, %v3189
        %v3191 = vpop.f32.mrf.mxu0
        %v3192 = vadd.f32 %v3143, %v3191
        %3193 = vmatmul.bf16.gmra.mxu0 %v518
        %v3194 = vpop.f32.mrf.mxu0
        %v3195 = vadd.f32 %v3146, %v3194
        %v3196 = vpop.f32.mrf.mxu0
        %v3197 = vadd.f32 %v3148, %v3196
        %3198 = vmatmul.bf16.gmra.mxu0 %v525
        %v3199 = vpop.f32.mrf.mxu0
        %v3200 = vadd.f32 %v3151, %v3199
        %v3201 = vpop.f32.mrf.mxu0
        %v3202 = vadd.f32 %v3153, %v3201
        %3203 = vdwg.mxu0
        %3204 = vmatpush.bf16.msra.mxu0 %v1656
        %3205 = vmatpush.bf16.msra.mxu0 %v1652
        %3206 = vmatpush.bf16.msra.mxu0 %v1648
        %3207 = vmatpush.bf16.msra.mxu0 %v1644
        %3208 = vmatpush.bf16.msra.mxu0 %v1640
        %3209 = vmatpush.bf16.msra.mxu0 %v1636
        %3210 = vmatpush.bf16.msra.mxu0 %v1632
        %3211 = vmatpush.bf16.msra.mxu0 %v1628
        %3212 = vmatmul.bf16.gmra.mxu0 %v477
        %v3213 = vpop.f32.mrf.mxu0
        %v3214 = vadd.f32 %v3165, %v3213
        %v3215 = vpop.f32.mrf.mxu0
        %v3216 = vadd.f32 %v3167, %v3215
        %3217 = vmatmul.bf16.gmra.mxu0 %v484
        %v3218 = vpop.f32.mrf.mxu0
        %v3219 = vadd.f32 %v3170, %v3218
        %v3220 = vpop.f32.mrf.mxu0
        %v3221 = vadd.f32 %v3172, %v3220
        %3222 = vmatmul.bf16.gmra.mxu0 %v491
        %v3223 = vpop.f32.mrf.mxu0
        %v3224 = vadd.f32 %v3175, %v3223
        %v3225 = vpop.f32.mrf.mxu0
        %v3226 = vadd.f32 %v3177, %v3225
        %3227 = vmatmul.bf16.gmra.mxu0 %v498
        %v3228 = vpop.f32.mrf.mxu0
        %v3229 = vadd.f32 %v3180, %v3228
        %v3230 = vpop.f32.mrf.mxu0
        %v3231 = vadd.f32 %v3182, %v3230
        %3232 = vmatmul.bf16.gmra.mxu0 %v505
        %v3233 = vpop.f32.mrf.mxu0
        %v3234 = vadd.f32 %v3185, %v3233
        %v3235 = vpop.f32.mrf.mxu0
        %v3236 = vadd.f32 %v3187, %v3235
        %3237 = vmatmul.bf16.gmra.mxu0 %v512
        %v3238 = vpop.f32.mrf.mxu0
        %v3239 = vadd.f32 %v3190, %v3238
        %v3240 = vpop.f32.mrf.mxu0
        %v3241 = vadd.f32 %v3192, %v3240
        %3242 = vmatmul.bf16.gmra.mxu0 %v519
        %v3243 = vpop.f32.mrf.mxu0
        %v3244 = vadd.f32 %v3195, %v3243
        %v3245 = vpop.f32.mrf.mxu0
        %v3246 = vadd.f32 %v3197, %v3245
        %3247 = vmatmul.bf16.gmra.mxu0 %v526
        %v3248 = vpop.f32.mrf.mxu0
        %v3249 = vadd.f32 %v3200, %v3248
        %v3250 = vpop.f32.mrf.mxu0
        %v3251 = vadd.f32 %v3202, %v3250
        %3252 = vdwg.mxu0
        %v3253 = vmax.f32 %v2185, 0.0
        %v3254 = vmax.f32 %v2528, 0.0
        %v3255 = vmax.f32 %v2871, 0.0
        %v3256 = vmax.f32 %v3214, 0.0
        %v3257 = vmax.f32 %v2187, 0.0
        %v3258 = vmax.f32 %v2530, 0.0
        %v3259 = vmax.f32 %v2873, 0.0
        %v3260 = vmax.f32 %v3216, 0.0
        %v3261 = vmax.f32 %v2190, 0.0
        %v3262 = vmax.f32 %v2533, 0.0
        %v3263 = vmax.f32 %v2876, 0.0
        %v3264 = vmax.f32 %v3219, 0.0
        %v3265 = vmax.f32 %v2192, 0.0
        %v3266 = vmax.f32 %v2535, 0.0
        %v3267 = vmax.f32 %v2878, 0.0
        %v3268 = vmax.f32 %v3221, 0.0
        %v3269 = vmax.f32 %v2195, 0.0
        %v3270 = vmax.f32 %v2538, 0.0
        %v3271 = vmax.f32 %v2881, 0.0
        %v3272 = vmax.f32 %v3224, 0.0
        %v3273 = vmax.f32 %v2197, 0.0
        %v3274 = vmax.f32 %v2540, 0.0
        %v3275 = vmax.f32 %v2883, 0.0
        %v3276 = vmax.f32 %v3226, 0.0
        %v3277 = vmax.f32 %v2200, 0.0
        %v3278 = vmax.f32 %v2543, 0.0
        %v3279 = vmax.f32 %v2886, 0.0
        %v3280 = vmax.f32 %v3229, 0.0
        %v3281 = vmax.f32 %v2202, 0.0
        %v3282 = vmax.f32 %v2545, 0.0
        %v3283 = vmax.f32 %v2888, 0.0
        %v3284 = vmax.f32 %v3231, 0.0
        %v3285 = vmax.f32 %v2205, 0.0
        %v3286 = vmax.f32 %v2548, 0.0
        %v3287 = vmax.f32 %v2891, 0.0
        %v3288 = vmax.f32 %v3234, 0.0
        %v3289 = vmax.f32 %v2207, 0.0
        %v3290 = vmax.f32 %v2550, 0.0
        %v3291 = vmax.f32 %v2893, 0.0
        %v3292 = vmax.f32 %v3236, 0.0
        %v3293 = vmax.f32 %v2210, 0.0
        %v3294 = vmax.f32 %v2553, 0.0
        %v3295 = vmax.f32 %v2896, 0.0
        %v3296 = vmax.f32 %v3239, 0.0
        %v3297 = vmax.f32 %v2212, 0.0
        %v3298 = vmax.f32 %v2555, 0.0
        %v3299 = vmax.f32 %v2898, 0.0
        %v3300 = vmax.f32 %v3241, 0.0
        %v3301 = vmax.f32 %v2215, 0.0
        %v3302 = vmax.f32 %v2558, 0.0
        %v3303 = vmax.f32 %v2901, 0.0
        %v3304 = vmax.f32 %v3244, 0.0
        %v3305 = vmax.f32 %v2217, 0.0
        %v3306 = vmax.f32 %v2560, 0.0
        %v3307 = vmax.f32 %v2903, 0.0
        %v3308 = vmax.f32 %v3246, 0.0
        %v3309 = vmax.f32 %v2220, 0.0
        %v3310 = vmax.f32 %v2563, 0.0
        %v3311 = vmax.f32 %v2906, 0.0
        %v3312 = vmax.f32 %v3249, 0.0
        %v3313 = vmax.f32 %v2222, 0.0
        %v3314 = vmax.f32 %v2565, 0.0
        %v3315 = vmax.f32 %v2908, 0.0
        %v3316 = vmax.f32 %v3251, 0.0
        %v3317 = vpack.c.bf16 %v3257, %v3253
        %v3318 = vpack.c.bf16 %v3258, %v3254
        %v3319 = vpack.c.bf16 %v3259, %v3255
        %v3320 = vpack.c.bf16 %v3260, %v3256
        %v3321 = vpack.c.bf16 %v3265, %v3261
        %v3322 = vpack.c.bf16 %v3266, %v3262
        %v3323 = vpack.c.bf16 %v3267, %v3263
        %v3324 = vpack.c.bf16 %v3268, %v3264
        %v3325 = vpack.c.bf16 %v3273, %v3269
        %v3326 = vpack.c.bf16 %v3274, %v3270
        %v3327 = vpack.c.bf16 %v3275, %v3271
        %v3328 = vpack.c.bf16 %v3276, %v3272
        %v3329 = vpack.c.bf16 %v3281, %v3277
        %v3330 = vpack.c.bf16 %v3282, %v3278
        %v3331 = vpack.c.bf16 %v3283, %v3279
        %v3332 = vpack.c.bf16 %v3284, %v3280
        %v3333 = vpack.c.bf16 %v3289, %v3285
        %v3334 = vpack.c.bf16 %v3290, %v3286
        %v3335 = vpack.c.bf16 %v3291, %v3287
        %v3336 = vpack.c.bf16 %v3292, %v3288
        %v3337 = vpack.c.bf16 %v3297, %v3293
        %v3338 = vpack.c.bf16 %v3298, %v3294
        %v3339 = vpack.c.bf16 %v3299, %v3295
        %v3340 = vpack.c.bf16 %v3300, %v3296
        %v3341 = vpack.c.bf16 %v3305, %v3301
        %v3342 = vpack.c.bf16 %v3306, %v3302
        %v3343 = vpack.c.bf16 %v3307, %v3303
        %v3344 = vpack.c.bf16 %v3308, %v3304
        %v3345 = vpack.c.bf16 %v3313, %v3309
        %v3346 = vpack.c.bf16 %v3314, %v3310
        %v3347 = vpack.c.bf16 %v3315, %v3311
        %v3348 = vpack.c.bf16 %v3316, %v3312
        %v3349 = vld [vmem:[%s3] sm:$0xf]
        %v3350 = vld [vmem:[%s3 + $0x4] sm:$0xf]
        %v3351 = vld [vmem:[%s3 + $0x8] sm:$0xf]
        %v3352 = vld [vmem:[%s3 + $0xc] sm:$0xf]
        %v3353 = vld [vmem:[%s3 + $0x10] sm:$0xf]
        %v3354 = vld [vmem:[%s3 + $0x14] sm:$0xf]
        %v3355 = vld [vmem:[%s3 + $0x18] sm:$0xf]
        %v3356 = vld [vmem:[%s3 + $0x1c] sm:$0xf]
        %v3357 = vld [vmem:[%s3 + $0x20] sm:$0xf]
        %v3358 = vld [vmem:[%s3 + $0x24] sm:$0xf]
        %v3359 = vld [vmem:[%s3 + $0x28] sm:$0xf]
        %v3360 = vld [vmem:[%s3 + $0x2c] sm:$0xf]
        %v3361 = vld [vmem:[%s3 + $0x30] sm:$0xf]
        %v3362 = vld [vmem:[%s3 + $0x34] sm:$0xf]
        %v3363 = vld [vmem:[%s3 + $0x38] sm:$0xf]
        %v3364 = vld [vmem:[%s3 + $0x3c] sm:$0xf]
        %v3365 = vld [vmem:[%s3 + $0x40] sm:$0xf]
        %v3366 = vld [vmem:[%s3 + $0x44] sm:$0xf]
        %v3367 = vld [vmem:[%s3 + $0x48] sm:$0xf]
        %v3368 = vld [vmem:[%s3 + $0x4c] sm:$0xf]
        %v3369 = vld [vmem:[%s3 + $0x50] sm:$0xf]
        %v3370 = vld [vmem:[%s3 + $0x54] sm:$0xf]
        %v3371 = vld [vmem:[%s3 + $0x58] sm:$0xf]
        %v3372 = vld [vmem:[%s3 + $0x5c] sm:$0xf]
        %v3373 = vld [vmem:[%s3 + $0x60] sm:$0xf]
        %v3374 = vld [vmem:[%s3 + $0x64] sm:$0xf]
        %v3375 = vld [vmem:[%s3 + $0x68] sm:$0xf]
        %v3376 = vld [vmem:[%s3 + $0x6c] sm:$0xf]
        %v3377 = vld [vmem:[%s3 + $0x70] sm:$0xf]
        %v3378 = vld [vmem:[%s3 + $0x74] sm:$0xf]
        %v3379 = vld [vmem:[%s3 + $0x78] sm:$0xf]
        %v3380 = vld [vmem:[%s3 + $0x7c] sm:$0xf]
        %v3381 = vld [vmem:[%s3 + $0x80] sm:$0xf]
        %v3382 = vld [vmem:[%s3 + $0x84] sm:$0xf]
        %v3383 = vld [vmem:[%s3 + $0x88] sm:$0xf]
        %v3384 = vld [vmem:[%s3 + $0x8c] sm:$0xf]
        %v3385 = vld [vmem:[%s3 + $0x90] sm:$0xf]
        %v3386 = vld [vmem:[%s3 + $0x94] sm:$0xf]
        %v3387 = vld [vmem:[%s3 + $0x98] sm:$0xf]
        %v3388 = vld [vmem:[%s3 + $0x9c] sm:$0xf]
        %v3389 = vld [vmem:[%s3 + $0xa0] sm:$0xf]
        %v3390 = vld [vmem:[%s3 + $0xa4] sm:$0xf]
        %v3391 = vld [vmem:[%s3 + $0xa8] sm:$0xf]
        %v3392 = vld [vmem:[%s3 + $0xac] sm:$0xf]
        %v3393 = vld [vmem:[%s3 + $0xb0] sm:$0xf]
        %v3394 = vld [vmem:[%s3 + $0xb4] sm:$0xf]
        %v3395 = vld [vmem:[%s3 + $0xb8] sm:$0xf]
        %v3396 = vld [vmem:[%s3 + $0xbc] sm:$0xf]
        %v3397 = vld [vmem:[%s3 + $0xc0] sm:$0xf]
        %v3398 = vld [vmem:[%s3 + $0xc4] sm:$0xf]
        %v3399 = vld [vmem:[%s3 + $0xc8] sm:$0xf]
        %v3400 = vld [vmem:[%s3 + $0xcc] sm:$0xf]
        %v3401 = vld [vmem:[%s3 + $0xd0] sm:$0xf]
        %v3402 = vld [vmem:[%s3 + $0xd4] sm:$0xf]
        %v3403 = vld [vmem:[%s3 + $0xd8] sm:$0xf]
        %v3404 = vld [vmem:[%s3 + $0xdc] sm:$0xf]
        %v3405 = vld [vmem:[%s3 + $0xe0] sm:$0xf]
        %v3406 = vld [vmem:[%s3 + $0xe4] sm:$0xf]
        %v3407 = vld [vmem:[%s3 + $0xe8] sm:$0xf]
        %v3408 = vld [vmem:[%s3 + $0xec] sm:$0xf]
        %v3409 = vld [vmem:[%s3 + $0xf0] sm:$0xf]
        %v3410 = vld [vmem:[%s3 + $0xf4] sm:$0xf]
        %v3411 = vld [vmem:[%s3 + $0xf8] sm:$0xf]
        %v3412 = vld [vmem:[%s3 + $0xfc] sm:$0xf]
        %v3413 = vld [vmem:[%s4] sm:$0x1]
        %v3415 = vperm.slane %v3413, 0
        %v3481 = vunpack.c.l.b16 %v3349
        %v3482 = vunpack.c.l.b16 %v3350
        %v3483 = vunpack.c.l.b16 %v3351
        %v3484 = vunpack.c.l.b16 %v3352
        %v3485 = vunpack.c.l.b16 %v3353
        %v3486 = vunpack.c.l.b16 %v3354
        %v3487 = vunpack.c.l.b16 %v3355
        %v3488 = vunpack.c.l.b16 %v3356
        %v3489 = vunpack.c.l.b16 %v3357
        %v3490 = vunpack.c.l.b16 %v3358
        %v3491 = vunpack.c.l.b16 %v3359
        %v3492 = vunpack.c.l.b16 %v3360
        %v3493 = vunpack.c.l.b16 %v3361
        %v3494 = vunpack.c.l.b16 %v3362
        %v3495 = vunpack.c.l.b16 %v3363
        %v3496 = vunpack.c.l.b16 %v3364
        %v3497 = vunpack.c.l.b16 %v3365
        %v3498 = vunpack.c.l.b16 %v3366
        %v3499 = vunpack.c.l.b16 %v3367
        %v3500 = vunpack.c.l.b16 %v3368
        %v3501 = vunpack.c.l.b16 %v3369
        %v3502 = vunpack.c.l.b16 %v3370
        %v3503 = vunpack.c.l.b16 %v3371
        %v3504 = vunpack.c.l.b16 %v3372
        %v3505 = vunpack.c.l.b16 %v3373
        %v3506 = vunpack.c.l.b16 %v3374
        %v3507 = vunpack.c.l.b16 %v3375
        %v3508 = vunpack.c.l.b16 %v3376
        %v3509 = vunpack.c.l.b16 %v3377
        %v3510 = vunpack.c.l.b16 %v3378
        %v3511 = vunpack.c.l.b16 %v3379
        %v3512 = vunpack.c.l.b16 %v3380
        %v3513 = vunpack.c.l.b16 %v3381
        %v3514 = vunpack.c.l.b16 %v3382
        %v3515 = vunpack.c.l.b16 %v3383
        %v3516 = vunpack.c.l.b16 %v3384
        %v3517 = vunpack.c.l.b16 %v3385
        %v3518 = vunpack.c.l.b16 %v3386
        %v3519 = vunpack.c.l.b16 %v3387
        %v3520 = vunpack.c.l.b16 %v3388
        %v3521 = vunpack.c.l.b16 %v3389
        %v3522 = vunpack.c.l.b16 %v3390
        %v3523 = vunpack.c.l.b16 %v3391
        %v3524 = vunpack.c.l.b16 %v3392
        %v3525 = vunpack.c.l.b16 %v3393
        %v3526 = vunpack.c.l.b16 %v3394
        %v3527 = vunpack.c.l.b16 %v3395
        %v3528 = vunpack.c.l.b16 %v3396
        %v3529 = vunpack.c.l.b16 %v3397
        %v3530 = vunpack.c.l.b16 %v3398
        %v3531 = vunpack.c.l.b16 %v3399
        %v3532 = vunpack.c.l.b16 %v3400
        %v3533 = vunpack.c.l.b16 %v3401
        %v3534 = vunpack.c.l.b16 %v3402
        %v3535 = vunpack.c.l.b16 %v3403
        %v3536 = vunpack.c.l.b16 %v3404
        %v3537 = vunpack.c.l.b16 %v3405
        %v3538 = vunpack.c.l.b16 %v3406
        %v3539 = vunpack.c.l.b16 %v3407
        %v3540 = vunpack.c.l.b16 %v3408
        %v3541 = vunpack.c.l.b16 %v3409
        %v3542 = vunpack.c.l.b16 %v3410
        %v3543 = vunpack.c.l.b16 %v3411
        %v3544 = vunpack.c.l.b16 %v3412
        %v3545 = vpack.c.b16 %v3482, %v3481
        %v3546 = vpack.c.b16 %v3484, %v3483
        %v3547 = vpack.c.b16 %v3486, %v3485
        %v3548 = vpack.c.b16 %v3488, %v3487
        %v3549 = vpack.c.b16 %v3490, %v3489
        %v3550 = vpack.c.b16 %v3492, %v3491
        %v3551 = vpack.c.b16 %v3494, %v3493
        %v3552 = vpack.c.b16 %v3496, %v3495
        %v3553 = vpack.c.b16 %v3498, %v3497
        %v3554 = vpack.c.b16 %v3500, %v3499
        %v3555 = vpack.c.b16 %v3502, %v3501
        %v3556 = vpack.c.b16 %v3504, %v3503
        %v3557 = vpack.c.b16 %v3506, %v3505
        %v3558 = vpack.c.b16 %v3508, %v3507
        %v3559 = vpack.c.b16 %v3510, %v3509
        %v3560 = vpack.c.b16 %v3512, %v3511
        %v3561 = vpack.c.b16 %v3514, %v3513
        %v3562 = vpack.c.b16 %v3516, %v3515
        %v3563 = vpack.c.b16 %v3518, %v3517
        %v3564 = vpack.c.b16 %v3520, %v3519
        %v3565 = vpack.c.b16 %v3522, %v3521
        %v3566 = vpack.c.b16 %v3524, %v3523
        %v3567 = vpack.c.b16 %v3526, %v3525
        %v3568 = vpack.c.b16 %v3528, %v3527
        %v3569 = vpack.c.b16 %v3530, %v3529
        %v3570 = vpack.c.b16 %v3532, %v3531
        %v3571 = vpack.c.b16 %v3534, %v3533
        %v3572 = vpack.c.b16 %v3536, %v3535
        %v3573 = vpack.c.b16 %v3538, %v3537
        %v3574 = vpack.c.b16 %v3540, %v3539
        %v3575 = vpack.c.b16 %v3542, %v3541
        %v3576 = vpack.c.b16 %v3544, %v3543
        %3609 = vmatpush.bf16.msra.mxu0 %v3552
        %3610 = vmatpush.bf16.msra.mxu0 %v3551
        %3611 = vmatpush.bf16.msra.mxu0 %v3550
        %3612 = vmatpush.bf16.msra.mxu0 %v3549
        %3613 = vmatpush.bf16.msra.mxu0 %v3548
        %3614 = vmatpush.bf16.msra.mxu0 %v3547
        %3615 = vmatpush.bf16.msra.mxu0 %v3546
        %3616 = vmatpush.bf16.msra.mxu0 %v3545
        %3617 = vmatmul.bf16.gmra.mxu0 %v3317
        %v3618 = vpop.f32.mrf.mxu0
        %v3619 = vadd.f32 %v3415, %v3618
        %v3620 = vpop.f32.mrf.mxu0
        %v3621 = vadd.f32 %v3415, %v3620
        %3622 = vmatmul.bf16.gmra.mxu0 %v3321
        %v3623 = vpop.f32.mrf.mxu0
        %v3624 = vadd.f32 %v3415, %v3623
        %v3625 = vpop.f32.mrf.mxu0
        %v3626 = vadd.f32 %v3415, %v3625
        %3627 = vmatmul.bf16.gmra.mxu0 %v3325
        %v3628 = vpop.f32.mrf.mxu0
        %v3629 = vadd.f32 %v3415, %v3628
        %v3630 = vpop.f32.mrf.mxu0
        %v3631 = vadd.f32 %v3415, %v3630
        %3632 = vmatmul.bf16.gmra.mxu0 %v3329
        %v3633 = vpop.f32.mrf.mxu0
        %v3634 = vadd.f32 %v3415, %v3633
        %v3635 = vpop.f32.mrf.mxu0
        %v3636 = vadd.f32 %v3415, %v3635
        %3637 = vmatmul.bf16.gmra.mxu0 %v3333
        %v3638 = vpop.f32.mrf.mxu0
        %v3639 = vadd.f32 %v3415, %v3638
        %v3640 = vpop.f32.mrf.mxu0
        %v3641 = vadd.f32 %v3415, %v3640
        %3642 = vmatmul.bf16.gmra.mxu0 %v3337
        %v3643 = vpop.f32.mrf.mxu0
        %v3644 = vadd.f32 %v3415, %v3643
        %v3645 = vpop.f32.mrf.mxu0
        %v3646 = vadd.f32 %v3415, %v3645
        %3647 = vmatmul.bf16.gmra.mxu0 %v3341
        %v3648 = vpop.f32.mrf.mxu0
        %v3649 = vadd.f32 %v3415, %v3648
        %v3650 = vpop.f32.mrf.mxu0
        %v3651 = vadd.f32 %v3415, %v3650
        %3652 = vmatmul.bf16.gmra.mxu0 %v3345
        %v3653 = vpop.f32.mrf.mxu0
        %v3654 = vadd.f32 %v3415, %v3653
        %v3655 = vpop.f32.mrf.mxu0
        %v3656 = vadd.f32 %v3415, %v3655
        %3657 = vdwg.mxu0
        %3658 = vmatpush.bf16.msra.mxu0 %v3560
        %3659 = vmatpush.bf16.msra.mxu0 %v3559
        %3660 = vmatpush.bf16.msra.mxu0 %v3558
        %3661 = vmatpush.bf16.msra.mxu0 %v3557
        %3662 = vmatpush.bf16.msra.mxu0 %v3556
        %3663 = vmatpush.bf16.msra.mxu0 %v3555
        %3664 = vmatpush.bf16.msra.mxu0 %v3554
        %3665 = vmatpush.bf16.msra.mxu0 %v3553
        %3666 = vmatmul.bf16.gmra.mxu0 %v3318
        %v3667 = vpop.f32.mrf.mxu0
        %v3668 = vadd.f32 %v3619, %v3667
        %v3669 = vpop.f32.mrf.mxu0
        %v3670 = vadd.f32 %v3621, %v3669
        %3671 = vmatmul.bf16.gmra.mxu0 %v3322
        %v3672 = vpop.f32.mrf.mxu0
        %v3673 = vadd.f32 %v3624, %v3672
        %v3674 = vpop.f32.mrf.mxu0
        %v3675 = vadd.f32 %v3626, %v3674
        %3676 = vmatmul.bf16.gmra.mxu0 %v3326
        %v3677 = vpop.f32.mrf.mxu0
        %v3678 = vadd.f32 %v3629, %v3677
        %v3679 = vpop.f32.mrf.mxu0
        %v3680 = vadd.f32 %v3631, %v3679
        %3681 = vmatmul.bf16.gmra.mxu0 %v3330
        %v3682 = vpop.f32.mrf.mxu0
        %v3683 = vadd.f32 %v3634, %v3682
        %v3684 = vpop.f32.mrf.mxu0
        %v3685 = vadd.f32 %v3636, %v3684
        %3686 = vmatmul.bf16.gmra.mxu0 %v3334
        %v3687 = vpop.f32.mrf.mxu0
        %v3688 = vadd.f32 %v3639, %v3687
        %v3689 = vpop.f32.mrf.mxu0
        %v3690 = vadd.f32 %v3641, %v3689
        %3691 = vmatmul.bf16.gmra.mxu0 %v3338
        %v3692 = vpop.f32.mrf.mxu0
        %v3693 = vadd.f32 %v3644, %v3692
        %v3694 = vpop.f32.mrf.mxu0
        %v3695 = vadd.f32 %v3646, %v3694
        %3696 = vmatmul.bf16.gmra.mxu0 %v3342
        %v3697 = vpop.f32.mrf.mxu0
        %v3698 = vadd.f32 %v3649, %v3697
        %v3699 = vpop.f32.mrf.mxu0
        %v3700 = vadd.f32 %v3651, %v3699
        %3701 = vmatmul.bf16.gmra.mxu0 %v3346
        %v3702 = vpop.f32.mrf.mxu0
        %v3703 = vadd.f32 %v3654, %v3702
        %v3704 = vpop.f32.mrf.mxu0
        %v3705 = vadd.f32 %v3656, %v3704
        %3706 = vdwg.mxu0
        %3707 = vmatpush.bf16.msra.mxu0 %v3568
        %3708 = vmatpush.bf16.msra.mxu0 %v3567
        %3709 = vmatpush.bf16.msra.mxu0 %v3566
        %3710 = vmatpush.bf16.msra.mxu0 %v3565
        %3711 = vmatpush.bf16.msra.mxu0 %v3564
        %3712 = vmatpush.bf16.msra.mxu0 %v3563
        %3713 = vmatpush.bf16.msra.mxu0 %v3562
        %3714 = vmatpush.bf16.msra.mxu0 %v3561
        %3715 = vmatmul.bf16.gmra.mxu0 %v3319
        %v3716 = vpop.f32.mrf.mxu0
        %v3717 = vadd.f32 %v3668, %v3716
        %v3718 = vpop.f32.mrf.mxu0
        %v3719 = vadd.f32 %v3670, %v3718
        %3720 = vmatmul.bf16.gmra.mxu0 %v3323
        %v3721 = vpop.f32.mrf.mxu0
        %v3722 = vadd.f32 %v3673, %v3721
        %v3723 = vpop.f32.mrf.mxu0
        %v3724 = vadd.f32 %v3675, %v3723
        %3725 = vmatmul.bf16.gmra.mxu0 %v3327
        %v3726 = vpop.f32.mrf.mxu0
        %v3727 = vadd.f32 %v3678, %v3726
        %v3728 = vpop.f32.mrf.mxu0
        %v3729 = vadd.f32 %v3680, %v3728
        %3730 = vmatmul.bf16.gmra.mxu0 %v3331
        %v3731 = vpop.f32.mrf.mxu0
        %v3732 = vadd.f32 %v3683, %v3731
        %v3733 = vpop.f32.mrf.mxu0
        %v3734 = vadd.f32 %v3685, %v3733
        %3735 = vmatmul.bf16.gmra.mxu0 %v3335
        %v3736 = vpop.f32.mrf.mxu0
        %v3737 = vadd.f32 %v3688, %v3736
        %v3738 = vpop.f32.mrf.mxu0
        %v3739 = vadd.f32 %v3690, %v3738
        %3740 = vmatmul.bf16.gmra.mxu0 %v3339
        %v3741 = vpop.f32.mrf.mxu0
        %v3742 = vadd.f32 %v3693, %v3741
        %v3743 = vpop.f32.mrf.mxu0
        %v3744 = vadd.f32 %v3695, %v3743
        %3745 = vmatmul.bf16.gmra.mxu0 %v3343
        %v3746 = vpop.f32.mrf.mxu0
        %v3747 = vadd.f32 %v3698, %v3746
        %v3748 = vpop.f32.mrf.mxu0
        %v3749 = vadd.f32 %v3700, %v3748
        %3750 = vmatmul.bf16.gmra.mxu0 %v3347
        %v3751 = vpop.f32.mrf.mxu0
        %v3752 = vadd.f32 %v3703, %v3751
        %v3753 = vpop.f32.mrf.mxu0
        %v3754 = vadd.f32 %v3705, %v3753
        %3755 = vdwg.mxu0
        %3756 = vmatpush.bf16.msra.mxu0 %v3576
        %3757 = vmatpush.bf16.msra.mxu0 %v3575
        %3758 = vmatpush.bf16.msra.mxu0 %v3574
        %3759 = vmatpush.bf16.msra.mxu0 %v3573
        %3760 = vmatpush.bf16.msra.mxu0 %v3572
        %3761 = vmatpush.bf16.msra.mxu0 %v3571
        %3762 = vmatpush.bf16.msra.mxu0 %v3570
        %3763 = vmatpush.bf16.msra.mxu0 %v3569
        %3764 = vmatmul.bf16.gmra.mxu0 %v3320
        %v3765 = vpop.f32.mrf.mxu0
        %v3766 = vadd.f32 %v3717, %v3765
        %v3767 = vpop.f32.mrf.mxu0
        %v3768 = vadd.f32 %v3719, %v3767
        %3769 = vmatmul.bf16.gmra.mxu0 %v3324
        %v3770 = vpop.f32.mrf.mxu0
        %v3771 = vadd.f32 %v3722, %v3770
        %v3772 = vpop.f32.mrf.mxu0
        %v3773 = vadd.f32 %v3724, %v3772
        %3774 = vmatmul.bf16.gmra.mxu0 %v3328
        %v3775 = vpop.f32.mrf.mxu0
        %v3776 = vadd.f32 %v3727, %v3775
        %v3777 = vpop.f32.mrf.mxu0
        %v3778 = vadd.f32 %v3729, %v3777
        %3779 = vmatmul.bf16.gmra.mxu0 %v3332
        %v3780 = vpop.f32.mrf.mxu0
        %v3781 = vadd.f32 %v3732, %v3780
        %v3782 = vpop.f32.mrf.mxu0
        %v3783 = vadd.f32 %v3734, %v3782
        %3784 = vmatmul.bf16.gmra.mxu0 %v3336
        %v3785 = vpop.f32.mrf.mxu0
        %v3786 = vadd.f32 %v3737, %v3785
        %v3787 = vpop.f32.mrf.mxu0
        %v3788 = vadd.f32 %v3739, %v3787
        %3789 = vmatmul.bf16.gmra.mxu0 %v3340
        %v3790 = vpop.f32.mrf.mxu0
        %v3791 = vadd.f32 %v3742, %v3790
        %v3792 = vpop.f32.mrf.mxu0
        %v3793 = vadd.f32 %v3744, %v3792
        %3794 = vmatmul.bf16.gmra.mxu0 %v3344
        %v3795 = vpop.f32.mrf.mxu0
        %v3796 = vadd.f32 %v3747, %v3795
        %v3797 = vpop.f32.mrf.mxu0
        %v3798 = vadd.f32 %v3749, %v3797
        %3799 = vmatmul.bf16.gmra.mxu0 %v3348
        %v3800 = vpop.f32.mrf.mxu0
        %v3801 = vadd.f32 %v3752, %v3800
        %v3802 = vpop.f32.mrf.mxu0
        %v3803 = vadd.f32 %v3754, %v3802
        %3804 = vdwg.mxu0
        %v3805 = vmax.f32 %v3766, 0.0
        %v3806 = vmax.f32 %v3768, 0.0
        %v3807 = vmax.f32 %v3771, 0.0
        %v3808 = vmax.f32 %v3773, 0.0
        %v3809 = vmax.f32 %v3776, 0.0
        %v3810 = vmax.f32 %v3778, 0.0
        %v3811 = vmax.f32 %v3781, 0.0
        %v3812 = vmax.f32 %v3783, 0.0
        %v3813 = vmax.f32 %v3786, 0.0
        %v3814 = vmax.f32 %v3788, 0.0
        %v3815 = vmax.f32 %v3791, 0.0
        %v3816 = vmax.f32 %v3793, 0.0
        %v3817 = vmax.f32 %v3796, 0.0
        %v3818 = vmax.f32 %v3798, 0.0
        %v3819 = vmax.f32 %v3801, 0.0
        %v3820 = vmax.f32 %v3803, 0.0
        %v3821 = vpack.c.bf16 %v3806, %v3805
        %v3822 = vpack.c.bf16 %v3808, %v3807
        %v3823 = vpack.c.bf16 %v3810, %v3809
        %v3824 = vpack.c.bf16 %v3812, %v3811
        %v3825 = vpack.c.bf16 %v3814, %v3813
        %v3826 = vpack.c.bf16 %v3816, %v3815
        %v3827 = vpack.c.bf16 %v3818, %v3817
        %v3828 = vpack.c.bf16 %v3820, %v3819
        %v3829 = vld [vmem:[%s5] sm:$0xff]
        %v3830 = vld [vmem:[%s5 + $0x8] sm:$0xff]
        %v3831 = vld [vmem:[%s6] sm:$0xf]
        %v3833 = vperm.slane %v3831, 0
        %v3834 = vperm.slane %v3831, 1
        %v3835 = vperm.slane %v3831, 2
        %v3836 = vperm.slane %v3831, 3
        %v3843 = vunpack.c.l.b16 %v3829
        %v3844 = vunpack.c.h.b16 %v3829
        %v3845 = vunpack.c.l.b16 %v3830
        %v3846 = vunpack.c.h.b16 %v3830
        %v3847 = vpack.c.b16 %v3843, %v3843
        %v3848 = vpack.c.b16 %v3844, %v3844
        %v3849 = vpack.c.b16 %v3845, %v3845
        %v3850 = vpack.c.b16 %v3846, %v3846
        %vm3851 = vcmask 64512
        %v3853 = vsel %vm3851, %v3821, 0
        %v3856 = vsel %vm3851, %v3822, 0
        %v3859 = vsel %vm3851, %v3823, 0
        %v3862 = vsel %vm3851, %v3824, 0
        %v3865 = vsel %vm3851, %v3825, 0
        %v3868 = vsel %vm3851, %v3826, 0
        %v3871 = vsel %vm3851, %v3827, 0
        %v3874 = vsel %vm3851, %v3828, 0
        %vm3876 = vcmask 1043456
        %v3878 = vsel %vm3876, %v3847, 0
        %v3881 = vsel %vm3876, %v3848, 0
        %v3884 = vsel %vm3876, %v3849, 0
        %v3887 = vsel %vm3876, %v3850, 0
        %3889 = vmatpush.bf16.msra.mxu0 0
        %3890 = vmatpush.bf16.msra.mxu0 0
        %3891 = vmatpush.bf16.msra.mxu0 0
        %3892 = vmatpush.bf16.msra.mxu0 0
        %3893 = vmatpush.bf16.msra.mxu0 0
        %3894 = vmatpush.bf16.msra.mxu0 0
        %3895 = vmatpush.bf16.msra.mxu0 0
        %3896 = vmatpush.bf16.msra.mxu0 %v3878
        %3897 = vmatmul.bf16.gmra.mxu0 %v3853
        %v3898 = vpop.f32.mrf.mxu0
        %v3899 = vadd.f32 %v3833, %v3898
        %v3900 = vpop.f32.mrf.mxu0
        %v3901 = vadd.f32 %v3833, %v3900
        %3902 = vmatmul.bf16.gmra.mxu0 %v3856
        %v3903 = vpop.f32.mrf.mxu0
        %v3904 = vadd.f32 %v3833, %v3903
        %v3905 = vpop.f32.mrf.mxu0
        %v3906 = vadd.f32 %v3833, %v3905
        %3907 = vmatmul.bf16.gmra.mxu0 %v3859
        %v3908 = vpop.f32.mrf.mxu0
        %v3909 = vadd.f32 %v3833, %v3908
        %v3910 = vpop.f32.mrf.mxu0
        %v3911 = vadd.f32 %v3833, %v3910
        %3912 = vmatmul.bf16.gmra.mxu0 %v3862
        %v3913 = vpop.f32.mrf.mxu0
        %v3914 = vadd.f32 %v3833, %v3913
        %v3915 = vpop.f32.mrf.mxu0
        %v3916 = vadd.f32 %v3833, %v3915
        %3917 = vmatmul.bf16.gmra.mxu0 %v3865
        %v3918 = vpop.f32.mrf.mxu0
        %v3919 = vadd.f32 %v3833, %v3918
        %v3920 = vpop.f32.mrf.mxu0
        %v3921 = vadd.f32 %v3833, %v3920
        %3922 = vmatmul.bf16.gmra.mxu0 %v3868
        %v3923 = vpop.f32.mrf.mxu0
        %v3924 = vadd.f32 %v3833, %v3923
        %v3925 = vpop.f32.mrf.mxu0
        %v3926 = vadd.f32 %v3833, %v3925
        %3927 = vmatmul.bf16.gmra.mxu0 %v3871
        %v3928 = vpop.f32.mrf.mxu0
        %v3929 = vadd.f32 %v3833, %v3928
        %v3930 = vpop.f32.mrf.mxu0
        %v3931 = vadd.f32 %v3833, %v3930
        %3932 = vmatmul.bf16.gmra.mxu0 %v3874
        %v3933 = vpop.f32.mrf.mxu0
        %v3934 = vadd.f32 %v3833, %v3933
        %v3935 = vpop.f32.mrf.mxu0
        %v3936 = vadd.f32 %v3833, %v3935
        %3937 = vdwg.mxu0
        %3938 = vmatpush.bf16.msra.mxu0 0
        %3939 = vmatpush.bf16.msra.mxu0 0
        %3940 = vmatpush.bf16.msra.mxu0 0
        %3941 = vmatpush.bf16.msra.mxu0 0
        %3942 = vmatpush.bf16.msra.mxu0 0
        %3943 = vmatpush.bf16.msra.mxu0 0
        %3944 = vmatpush.bf16.msra.mxu0 0
        %3945 = vmatpush.bf16.msra.mxu0 %v3881
        %3946 = vmatmul.bf16.gmra.mxu0 %v3853
        %v3947 = vpop.f32.mrf.mxu0
        %v3948 = vadd.f32 %v3834, %v3947
        %v3949 = vpop.f32.mrf.mxu0
        %v3950 = vadd.f32 %v3834, %v3949
        %3951 = vmatmul.bf16.gmra.mxu0 %v3856
        %v3952 = vpop.f32.mrf.mxu0
        %v3953 = vadd.f32 %v3834, %v3952
        %v3954 = vpop.f32.mrf.mxu0
        %v3955 = vadd.f32 %v3834, %v3954
        %3956 = vmatmul.bf16.gmra.mxu0 %v3859
        %v3957 = vpop.f32.mrf.mxu0
        %v3958 = vadd.f32 %v3834, %v3957
        %v3959 = vpop.f32.mrf.mxu0
        %v3960 = vadd.f32 %v3834, %v3959
        %3961 = vmatmul.bf16.gmra.mxu0 %v3862
        %v3962 = vpop.f32.mrf.mxu0
        %v3963 = vadd.f32 %v3834, %v3962
        %v3964 = vpop.f32.mrf.mxu0
        %v3965 = vadd.f32 %v3834, %v3964
        %3966 = vmatmul.bf16.gmra.mxu0 %v3865
        %v3967 = vpop.f32.mrf.mxu0
        %v3968 = vadd.f32 %v3834, %v3967
        %v3969 = vpop.f32.mrf.mxu0
        %v3970 = vadd.f32 %v3834, %v3969
        %3971 = vmatmul.bf16.gmra.mxu0 %v3868
        %v3972 = vpop.f32.mrf.mxu0
        %v3973 = vadd.f32 %v3834, %v3972
        %v3974 = vpop.f32.mrf.mxu0
        %v3975 = vadd.f32 %v3834, %v3974
        %3976 = vmatmul.bf16.gmra.mxu0 %v3871
        %v3977 = vpop.f32.mrf.mxu0
        %v3978 = vadd.f32 %v3834, %v3977
        %v3979 = vpop.f32.mrf.mxu0
        %v3980 = vadd.f32 %v3834, %v3979
        %3981 = vmatmul.bf16.gmra.mxu0 %v3874
        %v3982 = vpop.f32.mrf.mxu0
        %v3983 = vadd.f32 %v3834, %v3982
        %v3984 = vpop.f32.mrf.mxu0
        %v3985 = vadd.f32 %v3834, %v3984
        %3986 = vdwg.mxu0
        %3987 = vmatpush.bf16.msra.mxu0 0
        %3988 = vmatpush.bf16.msra.mxu0 0
        %3989 = vmatpush.bf16.msra.mxu0 0
        %3990 = vmatpush.bf16.msra.mxu0 0
        %3991 = vmatpush.bf16.msra.mxu0 0
        %3992 = vmatpush.bf16.msra.mxu0 0
        %3993 = vmatpush.bf16.msra.mxu0 0
        %3994 = vmatpush.bf16.msra.mxu0 %v3884
        %3995 = vmatmul.bf16.gmra.mxu0 %v3853
        %v3996 = vpop.f32.mrf.mxu0
        %v3997 = vadd.f32 %v3835, %v3996
        %v3998 = vpop.f32.mrf.mxu0
        %v3999 = vadd.f32 %v3835, %v3998
        %4000 = vmatmul.bf16.gmra.mxu0 %v3856
        %v4001 = vpop.f32.mrf.mxu0
        %v4002 = vadd.f32 %v3835, %v4001
        %v4003 = vpop.f32.mrf.mxu0
        %v4004 = vadd.f32 %v3835, %v4003
        %4005 = vmatmul.bf16.gmra.mxu0 %v3859
        %v4006 = vpop.f32.mrf.mxu0
        %v4007 = vadd.f32 %v3835, %v4006
        %v4008 = vpop.f32.mrf.mxu0
        %v4009 = vadd.f32 %v3835, %v4008
        %4010 = vmatmul.bf16.gmra.mxu0 %v3862
        %v4011 = vpop.f32.mrf.mxu0
        %v4012 = vadd.f32 %v3835, %v4011
        %v4013 = vpop.f32.mrf.mxu0
        %v4014 = vadd.f32 %v3835, %v4013
        %4015 = vmatmul.bf16.gmra.mxu0 %v3865
        %v4016 = vpop.f32.mrf.mxu0
        %v4017 = vadd.f32 %v3835, %v4016
        %v4018 = vpop.f32.mrf.mxu0
        %v4019 = vadd.f32 %v3835, %v4018
        %4020 = vmatmul.bf16.gmra.mxu0 %v3868
        %v4021 = vpop.f32.mrf.mxu0
        %v4022 = vadd.f32 %v3835, %v4021
        %v4023 = vpop.f32.mrf.mxu0
        %v4024 = vadd.f32 %v3835, %v4023
        %4025 = vmatmul.bf16.gmra.mxu0 %v3871
        %v4026 = vpop.f32.mrf.mxu0
        %v4027 = vadd.f32 %v3835, %v4026
        %v4028 = vpop.f32.mrf.mxu0
        %v4029 = vadd.f32 %v3835, %v4028
        %4030 = vmatmul.bf16.gmra.mxu0 %v3874
        %v4031 = vpop.f32.mrf.mxu0
        %v4032 = vadd.f32 %v3835, %v4031
        %v4033 = vpop.f32.mrf.mxu0
        %v4034 = vadd.f32 %v3835, %v4033
        %4035 = vdwg.mxu0
        %4036 = vmatpush.bf16.msra.mxu0 0
        %4037 = vmatpush.bf16.msra.mxu0 0
        %4038 = vmatpush.bf16.msra.mxu0 0
        %4039 = vmatpush.bf16.msra.mxu0 0
        %4040 = vmatpush.bf16.msra.mxu0 0
        %4041 = vmatpush.bf16.msra.mxu0 0
        %4042 = vmatpush.bf16.msra.mxu0 0
        %4043 = vmatpush.bf16.msra.mxu0 %v3887
        %4044 = vmatmul.bf16.gmra.mxu0 %v3853
        %v4045 = vpop.f32.mrf.mxu0
        %v4046 = vadd.f32 %v3836, %v4045
        %v4047 = vpop.f32.mrf.mxu0
        %v4048 = vadd.f32 %v3836, %v4047
        %4049 = vmatmul.bf16.gmra.mxu0 %v3856
        %v4050 = vpop.f32.mrf.mxu0
        %v4051 = vadd.f32 %v3836, %v4050
        %v4052 = vpop.f32.mrf.mxu0
        %v4053 = vadd.f32 %v3836, %v4052
        %4054 = vmatmul.bf16.gmra.mxu0 %v3859
        %v4055 = vpop.f32.mrf.mxu0
        %v4056 = vadd.f32 %v3836, %v4055
        %v4057 = vpop.f32.mrf.mxu0
        %v4058 = vadd.f32 %v3836, %v4057
        %4059 = vmatmul.bf16.gmra.mxu0 %v3862
        %v4060 = vpop.f32.mrf.mxu0
        %v4061 = vadd.f32 %v3836, %v4060
        %v4062 = vpop.f32.mrf.mxu0
        %v4063 = vadd.f32 %v3836, %v4062
        %4064 = vmatmul.bf16.gmra.mxu0 %v3865
        %v4065 = vpop.f32.mrf.mxu0
        %v4066 = vadd.f32 %v3836, %v4065
        %v4067 = vpop.f32.mrf.mxu0
        %v4068 = vadd.f32 %v3836, %v4067
        %4069 = vmatmul.bf16.gmra.mxu0 %v3868
        %v4070 = vpop.f32.mrf.mxu0
        %v4071 = vadd.f32 %v3836, %v4070
        %v4072 = vpop.f32.mrf.mxu0
        %v4073 = vadd.f32 %v3836, %v4072
        %4074 = vmatmul.bf16.gmra.mxu0 %v3871
        %v4075 = vpop.f32.mrf.mxu0
        %v4076 = vadd.f32 %v3836, %v4075
        %v4077 = vpop.f32.mrf.mxu0
        %v4078 = vadd.f32 %v3836, %v4077
        %4079 = vmatmul.bf16.gmra.mxu0 %v3874
        %v4080 = vpop.f32.mrf.mxu0
        %v4081 = vadd.f32 %v3836, %v4080
        %v4082 = vpop.f32.mrf.mxu0
        %v4083 = vadd.f32 %v3836, %v4082
        %4084 = vdwg.mxu0
        %v4085 = vmax.f32 %v3899, 0.0
        %v4086 = vmax.f32 %v3948, 0.0
        %v4087 = vmax.f32 %v3997, 0.0
        %v4088 = vmax.f32 %v4046, 0.0
        %v4089 = vmax.f32 %v3901, 0.0
        %v4090 = vmax.f32 %v3950, 0.0
        %v4091 = vmax.f32 %v3999, 0.0
        %v4092 = vmax.f32 %v4048, 0.0
        %v4093 = vmax.f32 %v3904, 0.0
        %v4094 = vmax.f32 %v3953, 0.0
        %v4095 = vmax.f32 %v4002, 0.0
        %v4096 = vmax.f32 %v4051, 0.0
        %v4097 = vmax.f32 %v3906, 0.0
        %v4098 = vmax.f32 %v3955, 0.0
        %v4099 = vmax.f32 %v4004, 0.0
        %v4100 = vmax.f32 %v4053, 0.0
        %v4101 = vmax.f32 %v3909, 0.0
        %v4102 = vmax.f32 %v3958, 0.0
        %v4103 = vmax.f32 %v4007, 0.0
        %v4104 = vmax.f32 %v4056, 0.0
        %v4105 = vmax.f32 %v3911, 0.0
        %v4106 = vmax.f32 %v3960, 0.0
        %v4107 = vmax.f32 %v4009, 0.0
        %v4108 = vmax.f32 %v4058, 0.0
        %v4109 = vmax.f32 %v3914, 0.0
        %v4110 = vmax.f32 %v3963, 0.0
        %v4111 = vmax.f32 %v4012, 0.0
        %v4112 = vmax.f32 %v4061, 0.0
        %v4113 = vmax.f32 %v3916, 0.0
        %v4114 = vmax.f32 %v3965, 0.0
        %v4115 = vmax.f32 %v4014, 0.0
        %v4116 = vmax.f32 %v4063, 0.0
        %v4117 = vmax.f32 %v3919, 0.0
        %v4118 = vmax.f32 %v3968, 0.0
        %v4119 = vmax.f32 %v4017, 0.0
        %v4120 = vmax.f32 %v4066, 0.0
        %v4121 = vmax.f32 %v3921, 0.0
        %v4122 = vmax.f32 %v3970, 0.0
        %v4123 = vmax.f32 %v4019, 0.0
        %v4124 = vmax.f32 %v4068, 0.0
        %v4125 = vmax.f32 %v3924, 0.0
        %v4126 = vmax.f32 %v3973, 0.0
        %v4127 = vmax.f32 %v4022, 0.0
        %v4128 = vmax.f32 %v4071, 0.0
        %v4129 = vmax.f32 %v3926, 0.0
        %v4130 = vmax.f32 %v3975, 0.0
        %v4131 = vmax.f32 %v4024, 0.0
        %v4132 = vmax.f32 %v4073, 0.0
        %v4133 = vmax.f32 %v3929, 0.0
        %v4134 = vmax.f32 %v3978, 0.0
        %v4135 = vmax.f32 %v4027, 0.0
        %v4136 = vmax.f32 %v4076, 0.0
        %v4137 = vmax.f32 %v3931, 0.0
        %v4138 = vmax.f32 %v3980, 0.0
        %v4139 = vmax.f32 %v4029, 0.0
        %v4140 = vmax.f32 %v4078, 0.0
        %v4141 = vmax.f32 %v3934, 0.0
        %v4142 = vmax.f32 %v3983, 0.0
        %v4143 = vmax.f32 %v4032, 0.0
        %v4144 = vmax.f32 %v4081, 0.0
        %v4145 = vmax.f32 %v3936, 0.0
        %v4146 = vmax.f32 %v3985, 0.0
        %v4147 = vmax.f32 %v4034, 0.0
        %v4148 = vmax.f32 %v4083, 0.0
        %v4149 = vpack.c.bf16 %v4089, %v4085
        %v4150 = vpack.c.bf16 %v4090, %v4086
        %v4151 = vpack.c.bf16 %v4091, %v4087
        %v4152 = vpack.c.bf16 %v4092, %v4088
        %v4153 = vpack.c.bf16 %v4097, %v4093
        %v4154 = vpack.c.bf16 %v4098, %v4094
        %v4155 = vpack.c.bf16 %v4099, %v4095
        %v4156 = vpack.c.bf16 %v4100, %v4096
        %v4157 = vpack.c.bf16 %v4105, %v4101
        %v4158 = vpack.c.bf16 %v4106, %v4102
        %v4159 = vpack.c.bf16 %v4107, %v4103
        %v4160 = vpack.c.bf16 %v4108, %v4104
        %v4161 = vpack.c.bf16 %v4113, %v4109
        %v4162 = vpack.c.bf16 %v4114, %v4110
        %v4163 = vpack.c.bf16 %v4115, %v4111
        %v4164 = vpack.c.bf16 %v4116, %v4112
        %v4165 = vpack.c.bf16 %v4121, %v4117
        %v4166 = vpack.c.bf16 %v4122, %v4118
        %v4167 = vpack.c.bf16 %v4123, %v4119
        %v4168 = vpack.c.bf16 %v4124, %v4120
        %v4169 = vpack.c.bf16 %v4129, %v4125
        %v4170 = vpack.c.bf16 %v4130, %v4126
        %v4171 = vpack.c.bf16 %v4131, %v4127
        %v4172 = vpack.c.bf16 %v4132, %v4128
        %v4173 = vpack.c.bf16 %v4137, %v4133
        %v4174 = vpack.c.bf16 %v4138, %v4134
        %v4175 = vpack.c.bf16 %v4139, %v4135
        %v4176 = vpack.c.bf16 %v4140, %v4136
        %v4177 = vpack.c.bf16 %v4145, %v4141
        %v4178 = vpack.c.bf16 %v4146, %v4142
        %v4179 = vpack.c.bf16 %v4147, %v4143
        %v4180 = vpack.c.bf16 %v4148, %v4144
        %v4181 = vld [vmem:[#allocation2] sm:$0xff]
        %v4182 = vld [vmem:[#allocation2 + $0x8] sm:$0xff]
        %v4183 = vld [vmem:[#allocation2 + $0x10] sm:$0xff]
        %v4184 = vld [vmem:[#allocation2 + $0x18] sm:$0xf]
        %v4185 = vld [vmem:[#allocation2 + $0x1c] sm:$0xff]
        %v4186 = vld [vmem:[#allocation2 + $0x24] sm:$0xff]
        %v4187 = vld [vmem:[#allocation2 + $0x2c] sm:$0xff]
        %v4188 = vld [vmem:[#allocation2 + $0x34] sm:$0xf]
        %v4189 = vld [vmem:[#allocation2 + $0x38] sm:$0xff]
        %v4190 = vld [vmem:[#allocation2 + $0x40] sm:$0xff]
        %v4191 = vld [vmem:[#allocation2 + $0x48] sm:$0xff]
        %v4192 = vld [vmem:[#allocation2 + $0x50] sm:$0xf]
        %v4193 = vld [vmem:[#allocation2 + $0x54] sm:$0xff]
        %v4194 = vld [vmem:[#allocation2 + $0x5c] sm:$0xff]
        %v4195 = vld [vmem:[#allocation2 + $0x64] sm:$0xff]
        %v4196 = vld [vmem:[#allocation2 + $0x6c] sm:$0xf]
        %v4197 = vld [vmem:[#allocation2 + $0x70] sm:$0xff]
        %v4198 = vld [vmem:[#allocation2 + $0x78] sm:$0xff]
        %v4199 = vld [vmem:[#allocation2 + $0x80] sm:$0xff]
        %v4200 = vld [vmem:[#allocation2 + $0x88] sm:$0xf]
        %v4201 = vld [vmem:[#allocation2 + $0x8c] sm:$0xff]
        %v4202 = vld [vmem:[#allocation2 + $0x94] sm:$0xff]
        %v4203 = vld [vmem:[#allocation2 + $0x9c] sm:$0xff]
        %v4204 = vld [vmem:[#allocation2 + $0xa4] sm:$0xf]
        %v4205 = vld [vmem:[#allocation2 + $0xa8] sm:$0xff]
        %v4206 = vld [vmem:[#allocation2 + $0xb0] sm:$0xff]
        %v4207 = vld [vmem:[#allocation2 + $0xb8] sm:$0xff]
        %v4208 = vld [vmem:[#allocation2 + $0xc0] sm:$0xf]
        %v4209 = vld [vmem:[#allocation2 + $0xc4] sm:$0xff]
        %v4210 = vld [vmem:[#allocation2 + $0xcc] sm:$0xff]
        %v4211 = vld [vmem:[#allocation2 + $0xd4] sm:$0xff]
        %v4212 = vld [vmem:[#allocation2 + $0xdc] sm:$0xf]
        %v4213 = vld [vmem:[#allocation2 + $0xe0] sm:$0xff]
        %v4214 = vld [vmem:[#allocation2 + $0xe8] sm:$0xff]
        %v4215 = vld [vmem:[#allocation2 + $0xf0] sm:$0xff]
        %v4216 = vld [vmem:[#allocation2 + $0xf8] sm:$0xf]
        %v4217 = vld [vmem:[#allocation2 + $0xfc] sm:$0xff]
        %v4218 = vld [vmem:[#allocation2 + $0x104] sm:$0xff]
        %v4219 = vld [vmem:[#allocation2 + $0x10c] sm:$0xff]
        %v4220 = vld [vmem:[#allocation2 + $0x114] sm:$0xf]
        %v4221 = vld [vmem:[#allocation2 + $0x118] sm:$0xff]
        %v4222 = vld [vmem:[#allocation2 + $0x120] sm:$0xff]
        %v4223 = vld [vmem:[#allocation2 + $0x128] sm:$0xff]
        %v4224 = vld [vmem:[#allocation2 + $0x130] sm:$0xf]
        %v4225 = vld [vmem:[#allocation2 + $0x134] sm:$0xff]
        %v4226 = vld [vmem:[#allocation2 + $0x13c] sm:$0xff]
        %v4227 = vld [vmem:[#allocation2 + $0x144] sm:$0xff]
        %v4228 = vld [vmem:[#allocation2 + $0x14c] sm:$0xf]
        %v4229 = vld [vmem:[#allocation2 + $0x150] sm:$0xff]
        %v4230 = vld [vmem:[#allocation2 + $0x158] sm:$0xff]
        %v4231 = vld [vmem:[#allocation2 + $0x160] sm:$0xff]
        %v4232 = vld [vmem:[#allocation2 + $0x168] sm:$0xf]
        %v4233 = vld [vmem:[#allocation2 + $0x16c] sm:$0xff]
        %v4234 = vld [vmem:[#allocation2 + $0x174] sm:$0xff]
        %v4235 = vld [vmem:[#allocation2 + $0x17c] sm:$0xff]
        %v4236 = vld [vmem:[#allocation2 + $0x184] sm:$0xf]
        %v4237 = vld [vmem:[#allocation2 + $0x188] sm:$0xff]
        %v4238 = vld [vmem:[#allocation2 + $0x190] sm:$0xff]
        %v4239 = vld [vmem:[#allocation2 + $0x198] sm:$0xff]
        %v4240 = vld [vmem:[#allocation2 + $0x1a0] sm:$0xf]
        %v4241 = vld [vmem:[#allocation2 + $0x1a4] sm:$0xff]
        %v4242 = vld [vmem:[#allocation2 + $0x1ac] sm:$0xff]
        %v4243 = vld [vmem:[#allocation2 + $0x1b4] sm:$0xff]
        %v4244 = vld [vmem:[#allocation2 + $0x1bc] sm:$0xf]
        %v4245 = vld [vmem:[#allocation2 + $0x1c0] sm:$0xff]
        %v4246 = vld [vmem:[#allocation2 + $0x1c8] sm:$0xff]
        %v4247 = vld [vmem:[#allocation2 + $0x1d0] sm:$0xff]
        %v4248 = vld [vmem:[#allocation2 + $0x1d8] sm:$0xf]
        %v4249 = vld [vmem:[#allocation2 + $0x1dc] sm:$0xff]
        %v4250 = vld [vmem:[#allocation2 + $0x1e4] sm:$0xff]
        %v4251 = vld [vmem:[#allocation2 + $0x1ec] sm:$0xff]
        %v4252 = vld [vmem:[#allocation2 + $0x1f4] sm:$0xf]
        %v4253 = vld [vmem:[#allocation2 + $0x1f8] sm:$0xff]
        %v4254 = vld [vmem:[#allocation2 + $0x200] sm:$0xff]
        %v4255 = vld [vmem:[#allocation2 + $0x208] sm:$0xff]
        %v4256 = vld [vmem:[#allocation2 + $0x210] sm:$0xf]
        %v4257 = vld [vmem:[#allocation2 + $0x214] sm:$0xff]
        %v4258 = vld [vmem:[#allocation2 + $0x21c] sm:$0xff]
        %v4259 = vld [vmem:[#allocation2 + $0x224] sm:$0xff]
        %v4260 = vld [vmem:[#allocation2 + $0x22c] sm:$0xf]
        %v4261 = vld [vmem:[#allocation2 + $0x230] sm:$0xff]
        %v4262 = vld [vmem:[#allocation2 + $0x238] sm:$0xff]
        %v4263 = vld [vmem:[#allocation2 + $0x240] sm:$0xff]
        %v4264 = vld [vmem:[#allocation2 + $0x248] sm:$0xf]
        %v4265 = vld [vmem:[#allocation2 + $0x24c] sm:$0xff]
        %v4266 = vld [vmem:[#allocation2 + $0x254] sm:$0xff]
        %v4267 = vld [vmem:[#allocation2 + $0x25c] sm:$0xff]
        %v4268 = vld [vmem:[#allocation2 + $0x264] sm:$0xf]
        %v4269 = vld [vmem:[#allocation2 + $0x268] sm:$0xff]
        %v4270 = vld [vmem:[#allocation2 + $0x270] sm:$0xff]
        %v4271 = vld [vmem:[#allocation2 + $0x278] sm:$0xff]
        %v4272 = vld [vmem:[#allocation2 + $0x280] sm:$0xf]
        %v4273 = vld [vmem:[#allocation2 + $0x284] sm:$0xff]
        %v4274 = vld [vmem:[#allocation2 + $0x28c] sm:$0xff]
        %v4275 = vld [vmem:[#allocation2 + $0x294] sm:$0xff]
        %v4276 = vld [vmem:[#allocation2 + $0x29c] sm:$0xf]
        %v4277 = vld [vmem:[#allocation2 + $0x2a0] sm:$0xff]
        %v4278 = vld [vmem:[#allocation2 + $0x2a8] sm:$0xff]
        %v4279 = vld [vmem:[#allocation2 + $0x2b0] sm:$0xff]
        %v4280 = vld [vmem:[#allocation2 + $0x2b8] sm:$0xf]
        %v4281 = vld [vmem:[#allocation2 + $0x2bc] sm:$0xff]
        %v4282 = vld [vmem:[#allocation2 + $0x2c4] sm:$0xff]
        %v4283 = vld [vmem:[#allocation2 + $0x2cc] sm:$0xff]
        %v4284 = vld [vmem:[#allocation2 + $0x2d4] sm:$0xf]
        %v4285 = vld [vmem:[#allocation2 + $0x2d8] sm:$0xff]
        %v4286 = vld [vmem:[#allocation2 + $0x2e0] sm:$0xff]
        %v4287 = vld [vmem:[#allocation2 + $0x2e8] sm:$0xff]
        %v4288 = vld [vmem:[#allocation2 + $0x2f0] sm:$0xf]
        %v4289 = vld [vmem:[#allocation2 + $0x2f4] sm:$0xff]
        %v4290 = vld [vmem:[#allocation2 + $0x2fc] sm:$0xff]
        %v4291 = vld [vmem:[#allocation2 + $0x304] sm:$0xff]
        %v4292 = vld [vmem:[#allocation2 + $0x30c] sm:$0xf]
        %v4293 = vld [vmem:[#allocation2 + $0x310] sm:$0xff]
        %v4294 = vld [vmem:[#allocation2 + $0x318] sm:$0xff]
        %v4295 = vld [vmem:[#allocation2 + $0x320] sm:$0xff]
        %v4296 = vld [vmem:[#allocation2 + $0x328] sm:$0xf]
        %v4297 = vld [vmem:[#allocation2 + $0x32c] sm:$0xff]
        %v4298 = vld [vmem:[#allocation2 + $0x334] sm:$0xff]
        %v4299 = vld [vmem:[#allocation2 + $0x33c] sm:$0xff]
        %v4300 = vld [vmem:[#allocation2 + $0x344] sm:$0xf]
        %v4301 = vld [vmem:[#allocation2 + $0x348] sm:$0xff]
        %v4302 = vld [vmem:[#allocation2 + $0x350] sm:$0xff]
        %v4303 = vld [vmem:[#allocation2 + $0x358] sm:$0xff]
        %v4304 = vld [vmem:[#allocation2 + $0x360] sm:$0xf]
        %v4305 = vld [vmem:[#allocation2 + $0x364] sm:$0xff]
        %v4306 = vld [vmem:[#allocation2 + $0x36c] sm:$0xff]
        %v4307 = vld [vmem:[#allocation2 + $0x374] sm:$0xff]
        %v4308 = vld [vmem:[#allocation2 + $0x37c] sm:$0xf]
        %v4309 = vld [vmem:[#allocation2 + $0x380] sm:$0xff]
        %v4310 = vld [vmem:[#allocation2 + $0x388] sm:$0xff]
        %v4311 = vld [vmem:[#allocation2 + $0x390] sm:$0xff]
        %v4312 = vld [vmem:[#allocation2 + $0x398] sm:$0xf]
        %v4313 = vld [vmem:[#allocation2 + $0x39c] sm:$0xff]
        %v4314 = vld [vmem:[#allocation2 + $0x3a4] sm:$0xff]
        %v4315 = vld [vmem:[#allocation2 + $0x3ac] sm:$0xff]
        %v4316 = vld [vmem:[#allocation2 + $0x3b4] sm:$0xf]
        %v4317 = vld [vmem:[#allocation2 + $0x3b8] sm:$0xff]
        %v4318 = vld [vmem:[#allocation2 + $0x3c0] sm:$0xff]
        %v4319 = vld [vmem:[#allocation2 + $0x3c8] sm:$0xff]
        %v4320 = vld [vmem:[#allocation2 + $0x3d0] sm:$0xf]
        %v4321 = vld [vmem:[#allocation2 + $0x3d4] sm:$0xff]
        %v4322 = vld [vmem:[#allocation2 + $0x3dc] sm:$0xff]
        %v4323 = vld [vmem:[#allocation2 + $0x3e4] sm:$0xff]
        %v4324 = vld [vmem:[#allocation2 + $0x3ec] sm:$0xf]
        %v4325 = vld [vmem:[#allocation2 + $0x3f0] sm:$0xff]
        %v4326 = vld [vmem:[#allocation2 + $0x3f8] sm:$0xff]
        %v4327 = vld [vmem:[#allocation2 + $0x400] sm:$0xff]
        %v4328 = vld [vmem:[#allocation2 + $0x408] sm:$0xf]
        %v4329 = vld [vmem:[#allocation2 + $0x40c] sm:$0xff]
        %v4330 = vld [vmem:[#allocation2 + $0x414] sm:$0xff]
        %v4331 = vld [vmem:[#allocation2 + $0x41c] sm:$0xff]
        %v4332 = vld [vmem:[#allocation2 + $0x424] sm:$0xf]
        %v4333 = vld [vmem:[#allocation2 + $0x428] sm:$0xff]
        %v4334 = vld [vmem:[#allocation2 + $0x430] sm:$0xff]
        %v4335 = vld [vmem:[#allocation2 + $0x438] sm:$0xff]
        %v4336 = vld [vmem:[#allocation2 + $0x440] sm:$0xf]
        %v4337 = vld [vmem:[#allocation2 + $0x444] sm:$0xff]
        %v4338 = vld [vmem:[#allocation2 + $0x44c] sm:$0xff]
        %v4339 = vld [vmem:[#allocation2 + $0x454] sm:$0xff]
        %v4340 = vld [vmem:[#allocation2 + $0x45c] sm:$0xf]
        %v4341 = vld [vmem:[#allocation2 + $0x460] sm:$0xff]
        %v4342 = vld [vmem:[#allocation2 + $0x468] sm:$0xff]
        %v4343 = vld [vmem:[#allocation2 + $0x470] sm:$0xff]
        %v4344 = vld [vmem:[#allocation2 + $0x478] sm:$0xf]
        %v4345 = vld [vmem:[#allocation2 + $0x47c] sm:$0xff]
        %v4346 = vld [vmem:[#allocation2 + $0x484] sm:$0xff]
        %v4347 = vld [vmem:[#allocation2 + $0x48c] sm:$0xff]
        %v4348 = vld [vmem:[#allocation2 + $0x494] sm:$0xf]
        %v4349 = vld [vmem:[#allocation2 + $0x498] sm:$0xff]
        %v4350 = vld [vmem:[#allocation2 + $0x4a0] sm:$0xff]
        %v4351 = vld [vmem:[#allocation2 + $0x4a8] sm:$0xff]
        %v4352 = vld [vmem:[#allocation2 + $0x4b0] sm:$0xf]
        %v4353 = vld [vmem:[#allocation2 + $0x4b4] sm:$0xff]
        %v4354 = vld [vmem:[#allocation2 + $0x4bc] sm:$0xff]
        %v4355 = vld [vmem:[#allocation2 + $0x4c4] sm:$0xff]
        %v4356 = vld [vmem:[#allocation2 + $0x4cc] sm:$0xf]
        %v4357 = vld [vmem:[#allocation2 + $0x4d0] sm:$0xff]
        %v4358 = vld [vmem:[#allocation2 + $0x4d8] sm:$0xff]
        %v4359 = vld [vmem:[#allocation2 + $0x4e0] sm:$0xff]
        %v4360 = vld [vmem:[#allocation2 + $0x4e8] sm:$0xf]
        %v4361 = vld [vmem:[#allocation2 + $0x4ec] sm:$0xff]
        %v4362 = vld [vmem:[#allocation2 + $0x4f4] sm:$0xff]
        %v4363 = vld [vmem:[#allocation2 + $0x4fc] sm:$0xff]
        %v4364 = vld [vmem:[#allocation2 + $0x504] sm:$0xf]
        %v4365 = vld [vmem:[#allocation2 + $0x508] sm:$0xff]
        %v4366 = vld [vmem:[#allocation2 + $0x510] sm:$0xff]
        %v4367 = vld [vmem:[#allocation2 + $0x518] sm:$0xff]
        %v4368 = vld [vmem:[#allocation2 + $0x520] sm:$0xf]
        %v4369 = vld [vmem:[#allocation2 + $0x524] sm:$0xff]
        %v4370 = vld [vmem:[#allocation2 + $0x52c] sm:$0xff]
        %v4371 = vld [vmem:[#allocation2 + $0x534] sm:$0xff]
        %v4372 = vld [vmem:[#allocation2 + $0x53c] sm:$0xf]
        %v4373 = vld [vmem:[#allocation2 + $0x540] sm:$0xff]
        %v4374 = vld [vmem:[#allocation2 + $0x548] sm:$0xff]
        %v4375 = vld [vmem:[#allocation2 + $0x550] sm:$0xff]
        %v4376 = vld [vmem:[#allocation2 + $0x558] sm:$0xf]
        %v4377 = vld [vmem:[#allocation2 + $0x55c] sm:$0xff]
        %v4378 = vld [vmem:[#allocation2 + $0x564] sm:$0xff]
        %v4379 = vld [vmem:[#allocation2 + $0x56c] sm:$0xff]
        %v4380 = vld [vmem:[#allocation2 + $0x574] sm:$0xf]
        %v4381 = vld [vmem:[#allocation2 + $0x578] sm:$0xff]
        %v4382 = vld [vmem:[#allocation2 + $0x580] sm:$0xff]
        %v4383 = vld [vmem:[#allocation2 + $0x588] sm:$0xff]
        %v4384 = vld [vmem:[#allocation2 + $0x590] sm:$0xf]
        %v4385 = vld [vmem:[#allocation2 + $0x594] sm:$0xff]
        %v4386 = vld [vmem:[#allocation2 + $0x59c] sm:$0xff]
        %v4387 = vld [vmem:[#allocation2 + $0x5a4] sm:$0xff]
        %v4388 = vld [vmem:[#allocation2 + $0x5ac] sm:$0xf]
        %v4389 = vld [vmem:[#allocation2 + $0x5b0] sm:$0xff]
        %v4390 = vld [vmem:[#allocation2 + $0x5b8] sm:$0xff]
        %v4391 = vld [vmem:[#allocation2 + $0x5c0] sm:$0xff]
        %v4392 = vld [vmem:[#allocation2 + $0x5c8] sm:$0xf]
        %v4393 = vld [vmem:[#allocation2 + $0x5cc] sm:$0xff]
        %v4394 = vld [vmem:[#allocation2 + $0x5d4] sm:$0xff]
        %v4395 = vld [vmem:[#allocation2 + $0x5dc] sm:$0xff]
        %v4396 = vld [vmem:[#allocation2 + $0x5e4] sm:$0xf]
        %v4397 = vld [vmem:[#allocation2 + $0x5e8] sm:$0xff]
        %v4398 = vld [vmem:[#allocation2 + $0x5f0] sm:$0xff]
        %v4399 = vld [vmem:[#allocation2 + $0x5f8] sm:$0xff]
        %v4400 = vld [vmem:[#allocation2 + $0x600] sm:$0xf]
        %v4401 = vld [vmem:[#allocation2 + $0x604] sm:$0xff]
        %v4402 = vld [vmem:[#allocation2 + $0x60c] sm:$0xff]
        %v4403 = vld [vmem:[#allocation2 + $0x614] sm:$0xff]
        %v4404 = vld [vmem:[#allocation2 + $0x61c] sm:$0xf]
        %v4405 = vld [vmem:[#allocation2 + $0x620] sm:$0xff]
        %v4406 = vld [vmem:[#allocation2 + $0x628] sm:$0xff]
        %v4407 = vld [vmem:[#allocation2 + $0x630] sm:$0xff]
        %v4408 = vld [vmem:[#allocation2 + $0x638] sm:$0xf]
        %v4409 = vld [vmem:[#allocation2 + $0x63c] sm:$0xff]
        %v4410 = vld [vmem:[#allocation2 + $0x644] sm:$0xff]
        %v4411 = vld [vmem:[#allocation2 + $0x64c] sm:$0xff]
        %v4412 = vld [vmem:[#allocation2 + $0x654] sm:$0xf]
        %v4413 = vld [vmem:[#allocation2 + $0x658] sm:$0xff]
        %v4414 = vld [vmem:[#allocation2 + $0x660] sm:$0xff]
        %v4415 = vld [vmem:[#allocation2 + $0x668] sm:$0xff]
        %v4416 = vld [vmem:[#allocation2 + $0x670] sm:$0xf]
        %v4417 = vld [vmem:[#allocation2 + $0x674] sm:$0xff]
        %v4418 = vld [vmem:[#allocation2 + $0x67c] sm:$0xff]
        %v4419 = vld [vmem:[#allocation2 + $0x684] sm:$0xff]
        %v4420 = vld [vmem:[#allocation2 + $0x68c] sm:$0xf]
        %v4421 = vld [vmem:[#allocation2 + $0x690] sm:$0xff]
        %v4422 = vld [vmem:[#allocation2 + $0x698] sm:$0xff]
        %v4423 = vld [vmem:[#allocation2 + $0x6a0] sm:$0xff]
        %v4424 = vld [vmem:[#allocation2 + $0x6a8] sm:$0xf]
        %v4425 = vld [vmem:[#allocation2 + $0x6ac] sm:$0xff]
        %v4426 = vld [vmem:[#allocation2 + $0x6b4] sm:$0xff]
        %v4427 = vld [vmem:[#allocation2 + $0x6bc] sm:$0xff]
        %v4428 = vld [vmem:[#allocation2 + $0x6c4] sm:$0xf]
        %v4429 = vld [vmem:[#allocation2 + $0x6c8] sm:$0xff]
        %v4430 = vld [vmem:[#allocation2 + $0x6d0] sm:$0xff]
        %v4431 = vld [vmem:[#allocation2 + $0x6d8] sm:$0xff]
        %v4432 = vld [vmem:[#allocation2 + $0x6e0] sm:$0xf]
        %v4433 = vld [vmem:[#allocation2 + $0x6e4] sm:$0xff]
        %v4434 = vld [vmem:[#allocation2 + $0x6ec] sm:$0xff]
        %v4435 = vld [vmem:[#allocation2 + $0x6f4] sm:$0xff]
        %v4436 = vld [vmem:[#allocation2 + $0x6fc] sm:$0xf]
        %v4437 = vld [vmem:[%s8] sm:$0xff]
        %v4439 = vperm.slane %v4437, 0
        %v4440 = vperm.slane %v4437, 1
        %v4441 = vperm.slane %v4437, 2
        %v4442 = vperm.slane %v4437, 3
        %v4443 = vperm.slane %v4437, 4
        %v4444 = vperm.slane %v4437, 5
        %v4445 = vperm.slane %v4437, 6
        %v4709 = vunpack.c.l.b16 %v4181
        %v4710 = vunpack.c.h.b16 %v4181
        %v4711 = vunpack.c.l.b16 %v4182
        %v4712 = vunpack.c.h.b16 %v4182
        %v4713 = vunpack.c.l.b16 %v4183
        %v4714 = vunpack.c.h.b16 %v4183
        %v4715 = vunpack.c.l.b16 %v4184
        %v4716 = vunpack.c.l.b16 %v4185
        %v4717 = vunpack.c.h.b16 %v4185
        %v4718 = vunpack.c.l.b16 %v4186
        %v4719 = vunpack.c.h.b16 %v4186
        %v4720 = vunpack.c.l.b16 %v4187
        %v4721 = vunpack.c.h.b16 %v4187
        %v4722 = vunpack.c.l.b16 %v4188
        %v4723 = vunpack.c.l.b16 %v4189
        %v4724 = vunpack.c.h.b16 %v4189
        %v4725 = vunpack.c.l.b16 %v4190
        %v4726 = vunpack.c.h.b16 %v4190
        %v4727 = vunpack.c.l.b16 %v4191
        %v4728 = vunpack.c.h.b16 %v4191
        %v4729 = vunpack.c.l.b16 %v4192
        %v4730 = vunpack.c.l.b16 %v4193
        %v4731 = vunpack.c.h.b16 %v4193
        %v4732 = vunpack.c.l.b16 %v4194
        %v4733 = vunpack.c.h.b16 %v4194
        %v4734 = vunpack.c.l.b16 %v4195
        %v4735 = vunpack.c.h.b16 %v4195
        %v4736 = vunpack.c.l.b16 %v4196
        %v4737 = vunpack.c.l.b16 %v4197
        %v4738 = vunpack.c.h.b16 %v4197
        %v4739 = vunpack.c.l.b16 %v4198
        %v4740 = vunpack.c.h.b16 %v4198
        %v4741 = vunpack.c.l.b16 %v4199
        %v4742 = vunpack.c.h.b16 %v4199
        %v4743 = vunpack.c.l.b16 %v4200
        %v4744 = vunpack.c.l.b16 %v4201
        %v4745 = vunpack.c.h.b16 %v4201
        %v4746 = vunpack.c.l.b16 %v4202
        %v4747 = vunpack.c.h.b16 %v4202
        %v4748 = vunpack.c.l.b16 %v4203
        %v4749 = vunpack.c.h.b16 %v4203
        %v4750 = vunpack.c.l.b16 %v4204
        %v4751 = vunpack.c.l.b16 %v4205
        %v4752 = vunpack.c.h.b16 %v4205
        %v4753 = vunpack.c.l.b16 %v4206
        %v4754 = vunpack.c.h.b16 %v4206
        %v4755 = vunpack.c.l.b16 %v4207
        %v4756 = vunpack.c.h.b16 %v4207
        %v4757 = vunpack.c.l.b16 %v4208
        %v4758 = vunpack.c.l.b16 %v4209
        %v4759 = vunpack.c.h.b16 %v4209
        %v4760 = vunpack.c.l.b16 %v4210
        %v4761 = vunpack.c.h.b16 %v4210
        %v4762 = vunpack.c.l.b16 %v4211
        %v4763 = vunpack.c.h.b16 %v4211
        %v4764 = vunpack.c.l.b16 %v4212
        %v4765 = vunpack.c.l.b16 %v4213
        %v4766 = vunpack.c.h.b16 %v4213
        %v4767 = vunpack.c.l.b16 %v4214
        %v4768 = vunpack.c.h.b16 %v4214
        %v4769 = vunpack.c.l.b16 %v4215
        %v4770 = vunpack.c.h.b16 %v4215
        %v4771 = vunpack.c.l.b16 %v4216
        %v4772 = vunpack.c.l.b16 %v4217
        %v4773 = vunpack.c.h.b16 %v4217
        %v4774 = vunpack.c.l.b16 %v4218
        %v4775 = vunpack.c.h.b16 %v4218
        %v4776 = vunpack.c.l.b16 %v4219
        %v4777 = vunpack.c.h.b16 %v4219
        %v4778 = vunpack.c.l.b16 %v4220
        %v4779 = vunpack.c.l.b16 %v4221
        %v4780 = vunpack.c.h.b16 %v4221
        %v4781 = vunpack.c.l.b16 %v4222
        %v4782 = vunpack.c.h.b16 %v4222
        %v4783 = vunpack.c.l.b16 %v4223
        %v4784 = vunpack.c.h.b16 %v4223
        %v4785 = vunpack.c.l.b16 %v4224
        %v4786 = vunpack.c.l.b16 %v4225
        %v4787 = vunpack.c.h.b16 %v4225
        %v4788 = vunpack.c.l.b16 %v4226
        %v4789 = vunpack.c.h.b16 %v4226
        %v4790 = vunpack.c.l.b16 %v4227
        %v4791 = vunpack.c.h.b16 %v4227
        %v4792 = vunpack.c.l.b16 %v4228
        %v4793 = vunpack.c.l.b16 %v4229
        %v4794 = vunpack.c.h.b16 %v4229
        %v4795 = vunpack.c.l.b16 %v4230
        %v4796 = vunpack.c.h.b16 %v4230
        %v4797 = vunpack.c.l.b16 %v4231
        %v4798 = vunpack.c.h.b16 %v4231
        %v4799 = vunpack.c.l.b16 %v4232
        %v4800 = vunpack.c.l.b16 %v4233
        %v4801 = vunpack.c.h.b16 %v4233
        %v4802 = vunpack.c.l.b16 %v4234
        %v4803 = vunpack.c.h.b16 %v4234
        %v4804 = vunpack.c.l.b16 %v4235
        %v4805 = vunpack.c.h.b16 %v4235
        %v4806 = vunpack.c.l.b16 %v4236
        %v4807 = vunpack.c.l.b16 %v4237
        %v4808 = vunpack.c.h.b16 %v4237
        %v4809 = vunpack.c.l.b16 %v4238
        %v4810 = vunpack.c.h.b16 %v4238
        %v4811 = vunpack.c.l.b16 %v4239
        %v4812 = vunpack.c.h.b16 %v4239
        %v4813 = vunpack.c.l.b16 %v4240
        %v4814 = vunpack.c.l.b16 %v4241
        %v4815 = vunpack.c.h.b16 %v4241
        %v4816 = vunpack.c.l.b16 %v4242
        %v4817 = vunpack.c.h.b16 %v4242
        %v4818 = vunpack.c.l.b16 %v4243
        %v4819 = vunpack.c.h.b16 %v4243
        %v4820 = vunpack.c.l.b16 %v4244
        %v4821 = vunpack.c.l.b16 %v4245
        %v4822 = vunpack.c.h.b16 %v4245
        %v4823 = vunpack.c.l.b16 %v4246
        %v4824 = vunpack.c.h.b16 %v4246
        %v4825 = vunpack.c.l.b16 %v4247
        %v4826 = vunpack.c.h.b16 %v4247
        %v4827 = vunpack.c.l.b16 %v4248
        %v4828 = vunpack.c.l.b16 %v4249
        %v4829 = vunpack.c.h.b16 %v4249
        %v4830 = vunpack.c.l.b16 %v4250
        %v4831 = vunpack.c.h.b16 %v4250
        %v4832 = vunpack.c.l.b16 %v4251
        %v4833 = vunpack.c.h.b16 %v4251
        %v4834 = vunpack.c.l.b16 %v4252
        %v4835 = vunpack.c.l.b16 %v4253
        %v4836 = vunpack.c.h.b16 %v4253
        %v4837 = vunpack.c.l.b16 %v4254
        %v4838 = vunpack.c.h.b16 %v4254
        %v4839 = vunpack.c.l.b16 %v4255
        %v4840 = vunpack.c.h.b16 %v4255
        %v4841 = vunpack.c.l.b16 %v4256
        %v4842 = vunpack.c.l.b16 %v4257
        %v4843 = vunpack.c.h.b16 %v4257
        %v4844 = vunpack.c.l.b16 %v4258
        %v4845 = vunpack.c.h.b16 %v4258
        %v4846 = vunpack.c.l.b16 %v4259
        %v4847 = vunpack.c.h.b16 %v4259
        %v4848 = vunpack.c.l.b16 %v4260
        %v4849 = vunpack.c.l.b16 %v4261
        %v4850 = vunpack.c.h.b16 %v4261
        %v4851 = vunpack.c.l.b16 %v4262
        %v4852 = vunpack.c.h.b16 %v4262
        %v4853 = vunpack.c.l.b16 %v4263
        %v4854 = vunpack.c.h.b16 %v4263
        %v4855 = vunpack.c.l.b16 %v4264
        %v4856 = vunpack.c.l.b16 %v4265
        %v4857 = vunpack.c.h.b16 %v4265
        %v4858 = vunpack.c.l.b16 %v4266
        %v4859 = vunpack.c.h.b16 %v4266
        %v4860 = vunpack.c.l.b16 %v4267
        %v4861 = vunpack.c.h.b16 %v4267
        %v4862 = vunpack.c.l.b16 %v4268
        %v4863 = vunpack.c.l.b16 %v4269
        %v4864 = vunpack.c.h.b16 %v4269
        %v4865 = vunpack.c.l.b16 %v4270
        %v4866 = vunpack.c.h.b16 %v4270
        %v4867 = vunpack.c.l.b16 %v4271
        %v4868 = vunpack.c.h.b16 %v4271
        %v4869 = vunpack.c.l.b16 %v4272
        %v4870 = vunpack.c.l.b16 %v4273
        %v4871 = vunpack.c.h.b16 %v4273
        %v4872 = vunpack.c.l.b16 %v4274
        %v4873 = vunpack.c.h.b16 %v4274
        %v4874 = vunpack.c.l.b16 %v4275
        %v4875 = vunpack.c.h.b16 %v4275
        %v4876 = vunpack.c.l.b16 %v4276
        %v4877 = vunpack.c.l.b16 %v4277
        %v4878 = vunpack.c.h.b16 %v4277
        %v4879 = vunpack.c.l.b16 %v4278
        %v4880 = vunpack.c.h.b16 %v4278
        %v4881 = vunpack.c.l.b16 %v4279
        %v4882 = vunpack.c.h.b16 %v4279
        %v4883 = vunpack.c.l.b16 %v4280
        %v4884 = vunpack.c.l.b16 %v4281
        %v4885 = vunpack.c.h.b16 %v4281
        %v4886 = vunpack.c.l.b16 %v4282
        %v4887 = vunpack.c.h.b16 %v4282
        %v4888 = vunpack.c.l.b16 %v4283
        %v4889 = vunpack.c.h.b16 %v4283
        %v4890 = vunpack.c.l.b16 %v4284
        %v4891 = vunpack.c.l.b16 %v4285
        %v4892 = vunpack.c.h.b16 %v4285
        %v4893 = vunpack.c.l.b16 %v4286
        %v4894 = vunpack.c.h.b16 %v4286
        %v4895 = vunpack.c.l.b16 %v4287
        %v4896 = vunpack.c.h.b16 %v4287
        %v4897 = vunpack.c.l.b16 %v4288
        %v4898 = vunpack.c.l.b16 %v4289
        %v4899 = vunpack.c.h.b16 %v4289
        %v4900 = vunpack.c.l.b16 %v4290
        %v4901 = vunpack.c.h.b16 %v4290
        %v4902 = vunpack.c.l.b16 %v4291
        %v4903 = vunpack.c.h.b16 %v4291
        %v4904 = vunpack.c.l.b16 %v4292
        %v4905 = vunpack.c.l.b16 %v4293
        %v4906 = vunpack.c.h.b16 %v4293
        %v4907 = vunpack.c.l.b16 %v4294
        %v4908 = vunpack.c.h.b16 %v4294
        %v4909 = vunpack.c.l.b16 %v4295
        %v4910 = vunpack.c.h.b16 %v4295
        %v4911 = vunpack.c.l.b16 %v4296
        %v4912 = vunpack.c.l.b16 %v4297
        %v4913 = vunpack.c.h.b16 %v4297
        %v4914 = vunpack.c.l.b16 %v4298
        %v4915 = vunpack.c.h.b16 %v4298
        %v4916 = vunpack.c.l.b16 %v4299
        %v4917 = vunpack.c.h.b16 %v4299
        %v4918 = vunpack.c.l.b16 %v4300
        %v4919 = vunpack.c.l.b16 %v4301
        %v4920 = vunpack.c.h.b16 %v4301
        %v4921 = vunpack.c.l.b16 %v4302
        %v4922 = vunpack.c.h.b16 %v4302
        %v4923 = vunpack.c.l.b16 %v4303
        %v4924 = vunpack.c.h.b16 %v4303
        %v4925 = vunpack.c.l.b16 %v4304
        %v4926 = vunpack.c.l.b16 %v4305
        %v4927 = vunpack.c.h.b16 %v4305
        %v4928 = vunpack.c.l.b16 %v4306
        %v4929 = vunpack.c.h.b16 %v4306
        %v4930 = vunpack.c.l.b16 %v4307
        %v4931 = vunpack.c.h.b16 %v4307
        %v4932 = vunpack.c.l.b16 %v4308
        %v4933 = vunpack.c.l.b16 %v4309
        %v4934 = vunpack.c.h.b16 %v4309
        %v4935 = vunpack.c.l.b16 %v4310
        %v4936 = vunpack.c.h.b16 %v4310
        %v4937 = vunpack.c.l.b16 %v4311
        %v4938 = vunpack.c.h.b16 %v4311
        %v4939 = vunpack.c.l.b16 %v4312
        %v4940 = vunpack.c.l.b16 %v4313
        %v4941 = vunpack.c.h.b16 %v4313
        %v4942 = vunpack.c.l.b16 %v4314
        %v4943 = vunpack.c.h.b16 %v4314
        %v4944 = vunpack.c.l.b16 %v4315
        %v4945 = vunpack.c.h.b16 %v4315
        %v4946 = vunpack.c.l.b16 %v4316
        %v4947 = vunpack.c.l.b16 %v4317
        %v4948 = vunpack.c.h.b16 %v4317
        %v4949 = vunpack.c.l.b16 %v4318
        %v4950 = vunpack.c.h.b16 %v4318
        %v4951 = vunpack.c.l.b16 %v4319
        %v4952 = vunpack.c.h.b16 %v4319
        %v4953 = vunpack.c.l.b16 %v4320
        %v4954 = vunpack.c.l.b16 %v4321
        %v4955 = vunpack.c.h.b16 %v4321
        %v4956 = vunpack.c.l.b16 %v4322
        %v4957 = vunpack.c.h.b16 %v4322
        %v4958 = vunpack.c.l.b16 %v4323
        %v4959 = vunpack.c.h.b16 %v4323
        %v4960 = vunpack.c.l.b16 %v4324
        %v4961 = vunpack.c.l.b16 %v4325
        %v4962 = vunpack.c.h.b16 %v4325
        %v4963 = vunpack.c.l.b16 %v4326
        %v4964 = vunpack.c.h.b16 %v4326
        %v4965 = vunpack.c.l.b16 %v4327
        %v4966 = vunpack.c.h.b16 %v4327
        %v4967 = vunpack.c.l.b16 %v4328
        %v4968 = vunpack.c.l.b16 %v4329
        %v4969 = vunpack.c.h.b16 %v4329
        %v4970 = vunpack.c.l.b16 %v4330
        %v4971 = vunpack.c.h.b16 %v4330
        %v4972 = vunpack.c.l.b16 %v4331
        %v4973 = vunpack.c.h.b16 %v4331
        %v4974 = vunpack.c.l.b16 %v4332
        %v4975 = vunpack.c.l.b16 %v4333
        %v4976 = vunpack.c.h.b16 %v4333
        %v4977 = vunpack.c.l.b16 %v4334
        %v4978 = vunpack.c.h.b16 %v4334
        %v4979 = vunpack.c.l.b16 %v4335
        %v4980 = vunpack.c.h.b16 %v4335
        %v4981 = vunpack.c.l.b16 %v4336
        %v4982 = vunpack.c.l.b16 %v4337
        %v4983 = vunpack.c.h.b16 %v4337
        %v4984 = vunpack.c.l.b16 %v4338
        %v4985 = vunpack.c.h.b16 %v4338
        %v4986 = vunpack.c.l.b16 %v4339
        %v4987 = vunpack.c.h.b16 %v4339
        %v4988 = vunpack.c.l.b16 %v4340
        %v4989 = vunpack.c.l.b16 %v4341
        %v4990 = vunpack.c.h.b16 %v4341
        %v4991 = vunpack.c.l.b16 %v4342
        %v4992 = vunpack.c.h.b16 %v4342
        %v4993 = vunpack.c.l.b16 %v4343
        %v4994 = vunpack.c.h.b16 %v4343
        %v4995 = vunpack.c.l.b16 %v4344
        %v4996 = vunpack.c.l.b16 %v4345
        %v4997 = vunpack.c.h.b16 %v4345
        %v4998 = vunpack.c.l.b16 %v4346
        %v4999 = vunpack.c.h.b16 %v4346
        %v5000 = vunpack.c.l.b16 %v4347
        %v5001 = vunpack.c.h.b16 %v4347
        %v5002 = vunpack.c.l.b16 %v4348
        %v5003 = vunpack.c.l.b16 %v4349
        %v5004 = vunpack.c.h.b16 %v4349
        %v5005 = vunpack.c.l.b16 %v4350
        %v5006 = vunpack.c.h.b16 %v4350
        %v5007 = vunpack.c.l.b16 %v4351
        %v5008 = vunpack.c.h.b16 %v4351
        %v5009 = vunpack.c.l.b16 %v4352
        %v5010 = vunpack.c.l.b16 %v4353
        %v5011 = vunpack.c.h.b16 %v4353
        %v5012 = vunpack.c.l.b16 %v4354
        %v5013 = vunpack.c.h.b16 %v4354
        %v5014 = vunpack.c.l.b16 %v4355
        %v5015 = vunpack.c.h.b16 %v4355
        %v5016 = vunpack.c.l.b16 %v4356
        %v5017 = vunpack.c.l.b16 %v4357
        %v5018 = vunpack.c.h.b16 %v4357
        %v5019 = vunpack.c.l.b16 %v4358
        %v5020 = vunpack.c.h.b16 %v4358
        %v5021 = vunpack.c.l.b16 %v4359
        %v5022 = vunpack.c.h.b16 %v4359
        %v5023 = vunpack.c.l.b16 %v4360
        %v5024 = vunpack.c.l.b16 %v4361
        %v5025 = vunpack.c.h.b16 %v4361
        %v5026 = vunpack.c.l.b16 %v4362
        %v5027 = vunpack.c.h.b16 %v4362
        %v5028 = vunpack.c.l.b16 %v4363
        %v5029 = vunpack.c.h.b16 %v4363
        %v5030 = vunpack.c.l.b16 %v4364
        %v5031 = vunpack.c.l.b16 %v4365
        %v5032 = vunpack.c.h.b16 %v4365
        %v5033 = vunpack.c.l.b16 %v4366
        %v5034 = vunpack.c.h.b16 %v4366
        %v5035 = vunpack.c.l.b16 %v4367
        %v5036 = vunpack.c.h.b16 %v4367
        %v5037 = vunpack.c.l.b16 %v4368
        %v5038 = vunpack.c.l.b16 %v4369
        %v5039 = vunpack.c.h.b16 %v4369
        %v5040 = vunpack.c.l.b16 %v4370
        %v5041 = vunpack.c.h.b16 %v4370
        %v5042 = vunpack.c.l.b16 %v4371
        %v5043 = vunpack.c.h.b16 %v4371
        %v5044 = vunpack.c.l.b16 %v4372
        %v5045 = vunpack.c.l.b16 %v4373
        %v5046 = vunpack.c.h.b16 %v4373
        %v5047 = vunpack.c.l.b16 %v4374
        %v5048 = vunpack.c.h.b16 %v4374
        %v5049 = vunpack.c.l.b16 %v4375
        %v5050 = vunpack.c.h.b16 %v4375
        %v5051 = vunpack.c.l.b16 %v4376
        %v5052 = vunpack.c.l.b16 %v4377
        %v5053 = vunpack.c.h.b16 %v4377
        %v5054 = vunpack.c.l.b16 %v4378
        %v5055 = vunpack.c.h.b16 %v4378
        %v5056 = vunpack.c.l.b16 %v4379
        %v5057 = vunpack.c.h.b16 %v4379
        %v5058 = vunpack.c.l.b16 %v4380
        %v5059 = vunpack.c.l.b16 %v4381
        %v5060 = vunpack.c.h.b16 %v4381
        %v5061 = vunpack.c.l.b16 %v4382
        %v5062 = vunpack.c.h.b16 %v4382
        %v5063 = vunpack.c.l.b16 %v4383
        %v5064 = vunpack.c.h.b16 %v4383
        %v5065 = vunpack.c.l.b16 %v4384
        %v5066 = vunpack.c.l.b16 %v4385
        %v5067 = vunpack.c.h.b16 %v4385
        %v5068 = vunpack.c.l.b16 %v4386
        %v5069 = vunpack.c.h.b16 %v4386
        %v5070 = vunpack.c.l.b16 %v4387
        %v5071 = vunpack.c.h.b16 %v4387
        %v5072 = vunpack.c.l.b16 %v4388
        %v5073 = vunpack.c.l.b16 %v4389
        %v5074 = vunpack.c.h.b16 %v4389
        %v5075 = vunpack.c.l.b16 %v4390
        %v5076 = vunpack.c.h.b16 %v4390
        %v5077 = vunpack.c.l.b16 %v4391
        %v5078 = vunpack.c.h.b16 %v4391
        %v5079 = vunpack.c.l.b16 %v4392
        %v5080 = vunpack.c.l.b16 %v4393
        %v5081 = vunpack.c.h.b16 %v4393
        %v5082 = vunpack.c.l.b16 %v4394
        %v5083 = vunpack.c.h.b16 %v4394
        %v5084 = vunpack.c.l.b16 %v4395
        %v5085 = vunpack.c.h.b16 %v4395
        %v5086 = vunpack.c.l.b16 %v4396
        %v5087 = vunpack.c.l.b16 %v4397
        %v5088 = vunpack.c.h.b16 %v4397
        %v5089 = vunpack.c.l.b16 %v4398
        %v5090 = vunpack.c.h.b16 %v4398
        %v5091 = vunpack.c.l.b16 %v4399
        %v5092 = vunpack.c.h.b16 %v4399
        %v5093 = vunpack.c.l.b16 %v4400
        %v5094 = vunpack.c.l.b16 %v4401
        %v5095 = vunpack.c.h.b16 %v4401
        %v5096 = vunpack.c.l.b16 %v4402
        %v5097 = vunpack.c.h.b16 %v4402
        %v5098 = vunpack.c.l.b16 %v4403
        %v5099 = vunpack.c.h.b16 %v4403
        %v5100 = vunpack.c.l.b16 %v4404
        %v5101 = vunpack.c.l.b16 %v4405
        %v5102 = vunpack.c.h.b16 %v4405
        %v5103 = vunpack.c.l.b16 %v4406
        %v5104 = vunpack.c.h.b16 %v4406
        %v5105 = vunpack.c.l.b16 %v4407
        %v5106 = vunpack.c.h.b16 %v4407
        %v5107 = vunpack.c.l.b16 %v4408
        %v5108 = vunpack.c.l.b16 %v4409
        %v5109 = vunpack.c.h.b16 %v4409
        %v5110 = vunpack.c.l.b16 %v4410
        %v5111 = vunpack.c.h.b16 %v4410
        %v5112 = vunpack.c.l.b16 %v4411
        %v5113 = vunpack.c.h.b16 %v4411
        %v5114 = vunpack.c.l.b16 %v4412
        %v5115 = vunpack.c.l.b16 %v4413
        %v5116 = vunpack.c.h.b16 %v4413
        %v5117 = vunpack.c.l.b16 %v4414
        %v5118 = vunpack.c.h.b16 %v4414
        %v5119 = vunpack.c.l.b16 %v4415
        %v5120 = vunpack.c.h.b16 %v4415
        %v5121 = vunpack.c.l.b16 %v4416
        %v5122 = vunpack.c.l.b16 %v4417
        %v5123 = vunpack.c.h.b16 %v4417
        %v5124 = vunpack.c.l.b16 %v4418
        %v5125 = vunpack.c.h.b16 %v4418
        %v5126 = vunpack.c.l.b16 %v4419
        %v5127 = vunpack.c.h.b16 %v4419
        %v5128 = vunpack.c.l.b16 %v4420
        %v5129 = vunpack.c.l.b16 %v4421
        %v5130 = vunpack.c.h.b16 %v4421
        %v5131 = vunpack.c.l.b16 %v4422
        %v5132 = vunpack.c.h.b16 %v4422
        %v5133 = vunpack.c.l.b16 %v4423
        %v5134 = vunpack.c.h.b16 %v4423
        %v5135 = vunpack.c.l.b16 %v4424
        %v5136 = vunpack.c.l.b16 %v4425
        %v5137 = vunpack.c.h.b16 %v4425
        %v5138 = vunpack.c.l.b16 %v4426
        %v5139 = vunpack.c.h.b16 %v4426
        %v5140 = vunpack.c.l.b16 %v4427
        %v5141 = vunpack.c.h.b16 %v4427
        %v5142 = vunpack.c.l.b16 %v4428
        %v5143 = vunpack.c.l.b16 %v4429
        %v5144 = vunpack.c.h.b16 %v4429
        %v5145 = vunpack.c.l.b16 %v4430
        %v5146 = vunpack.c.h.b16 %v4430
        %v5147 = vunpack.c.l.b16 %v4431
        %v5148 = vunpack.c.h.b16 %v4431
        %v5149 = vunpack.c.l.b16 %v4432
        %v5150 = vunpack.c.l.b16 %v4433
        %v5151 = vunpack.c.h.b16 %v4433
        %v5152 = vunpack.c.l.b16 %v4434
        %v5153 = vunpack.c.h.b16 %v4434
        %v5154 = vunpack.c.l.b16 %v4435
        %v5155 = vunpack.c.h.b16 %v4435
        %v5156 = vunpack.c.l.b16 %v4436
        %v5157 = vpack.c.b16 %v4716, %v4709
        %v5158 = vpack.c.b16 %v4717, %v4710
        %v5159 = vpack.c.b16 %v4718, %v4711
        %v5160 = vpack.c.b16 %v4719, %v4712
        %v5161 = vpack.c.b16 %v4720, %v4713
        %v5162 = vpack.c.b16 %v4721, %v4714
        %v5163 = vpack.c.b16 %v4722, %v4715
        %v5164 = vpack.c.b16 %v4730, %v4723
        %v5165 = vpack.c.b16 %v4731, %v4724
        %v5166 = vpack.c.b16 %v4732, %v4725
        %v5167 = vpack.c.b16 %v4733, %v4726
        %v5168 = vpack.c.b16 %v4734, %v4727
        %v5169 = vpack.c.b16 %v4735, %v4728
        %v5170 = vpack.c.b16 %v4736, %v4729
        %v5171 = vpack.c.b16 %v4744, %v4737
        %v5172 = vpack.c.b16 %v4745, %v4738
        %v5173 = vpack.c.b16 %v4746, %v4739
        %v5174 = vpack.c.b16 %v4747, %v4740
        %v5175 = vpack.c.b16 %v4748, %v4741
        %v5176 = vpack.c.b16 %v4749, %v4742
        %v5177 = vpack.c.b16 %v4750, %v4743
        %v5178 = vpack.c.b16 %v4758, %v4751
        %v5179 = vpack.c.b16 %v4759, %v4752
        %v5180 = vpack.c.b16 %v4760, %v4753
        %v5181 = vpack.c.b16 %v4761, %v4754
        %v5182 = vpack.c.b16 %v4762, %v4755
        %v5183 = vpack.c.b16 %v4763, %v4756
        %v5184 = vpack.c.b16 %v4764, %v4757
        %v5185 = vpack.c.b16 %v4772, %v4765
        %v5186 = vpack.c.b16 %v4773, %v4766
        %v5187 = vpack.c.b16 %v4774, %v4767
        %v5188 = vpack.c.b16 %v4775, %v4768
        %v5189 = vpack.c.b16 %v4776, %v4769
        %v5190 = vpack.c.b16 %v4777, %v4770
        %v5191 = vpack.c.b16 %v4778, %v4771
        %v5192 = vpack.c.b16 %v4786, %v4779
        %v5193 = vpack.c.b16 %v4787, %v4780
        %v5194 = vpack.c.b16 %v4788, %v4781
        %v5195 = vpack.c.b16 %v4789, %v4782
        %v5196 = vpack.c.b16 %v4790, %v4783
        %v5197 = vpack.c.b16 %v4791, %v4784
        %v5198 = vpack.c.b16 %v4792, %v4785
        %v5199 = vpack.c.b16 %v4800, %v4793
        %v5200 = vpack.c.b16 %v4801, %v4794
        %v5201 = vpack.c.b16 %v4802, %v4795
        %v5202 = vpack.c.b16 %v4803, %v4796
        %v5203 = vpack.c.b16 %v4804, %v4797
        %v5204 = vpack.c.b16 %v4805, %v4798
        %v5205 = vpack.c.b16 %v4806, %v4799
        %v5206 = vpack.c.b16 %v4814, %v4807
        %v5207 = vpack.c.b16 %v4815, %v4808
        %v5208 = vpack.c.b16 %v4816, %v4809
        %v5209 = vpack.c.b16 %v4817, %v4810
        %v5210 = vpack.c.b16 %v4818, %v4811
        %v5211 = vpack.c.b16 %v4819, %v4812
        %v5212 = vpack.c.b16 %v4820, %v4813
        %v5213 = vpack.c.b16 %v4828, %v4821
        %v5214 = vpack.c.b16 %v4829, %v4822
        %v5215 = vpack.c.b16 %v4830, %v4823
        %v5216 = vpack.c.b16 %v4831, %v4824
        %v5217 = vpack.c.b16 %v4832, %v4825
        %v5218 = vpack.c.b16 %v4833, %v4826
        %v5219 = vpack.c.b16 %v4834, %v4827
        %v5220 = vpack.c.b16 %v4842, %v4835
        %v5221 = vpack.c.b16 %v4843, %v4836
        %v5222 = vpack.c.b16 %v4844, %v4837
        %v5223 = vpack.c.b16 %v4845, %v4838
        %v5224 = vpack.c.b16 %v4846, %v4839
        %v5225 = vpack.c.b16 %v4847, %v4840
        %v5226 = vpack.c.b16 %v4848, %v4841
        %v5227 = vpack.c.b16 %v4856, %v4849
        %v5228 = vpack.c.b16 %v4857, %v4850
        %v5229 = vpack.c.b16 %v4858, %v4851
        %v5230 = vpack.c.b16 %v4859, %v4852
        %v5231 = vpack.c.b16 %v4860, %v4853
        %v5232 = vpack.c.b16 %v4861, %v4854
        %v5233 = vpack.c.b16 %v4862, %v4855
        %v5234 = vpack.c.b16 %v4870, %v4863
        %v5235 = vpack.c.b16 %v4871, %v4864
        %v5236 = vpack.c.b16 %v4872, %v4865
        %v5237 = vpack.c.b16 %v4873, %v4866
        %v5238 = vpack.c.b16 %v4874, %v4867
        %v5239 = vpack.c.b16 %v4875, %v4868
        %v5240 = vpack.c.b16 %v4876, %v4869
        %v5241 = vpack.c.b16 %v4884, %v4877
        %v5242 = vpack.c.b16 %v4885, %v4878
        %v5243 = vpack.c.b16 %v4886, %v4879
        %v5244 = vpack.c.b16 %v4887, %v4880
        %v5245 = vpack.c.b16 %v4888, %v4881
        %v5246 = vpack.c.b16 %v4889, %v4882
        %v5247 = vpack.c.b16 %v4890, %v4883
        %v5248 = vpack.c.b16 %v4898, %v4891
        %v5249 = vpack.c.b16 %v4899, %v4892
        %v5250 = vpack.c.b16 %v4900, %v4893
        %v5251 = vpack.c.b16 %v4901, %v4894
        %v5252 = vpack.c.b16 %v4902, %v4895
        %v5253 = vpack.c.b16 %v4903, %v4896
        %v5254 = vpack.c.b16 %v4904, %v4897
        %v5255 = vpack.c.b16 %v4912, %v4905
        %v5256 = vpack.c.b16 %v4913, %v4906
        %v5257 = vpack.c.b16 %v4914, %v4907
        %v5258 = vpack.c.b16 %v4915, %v4908
        %v5259 = vpack.c.b16 %v4916, %v4909
        %v5260 = vpack.c.b16 %v4917, %v4910
        %v5261 = vpack.c.b16 %v4918, %v4911
        %v5262 = vpack.c.b16 %v4926, %v4919
        %v5263 = vpack.c.b16 %v4927, %v4920
        %v5264 = vpack.c.b16 %v4928, %v4921
        %v5265 = vpack.c.b16 %v4929, %v4922
        %v5266 = vpack.c.b16 %v4930, %v4923
        %v5267 = vpack.c.b16 %v4931, %v4924
        %v5268 = vpack.c.b16 %v4932, %v4925
        %v5269 = vpack.c.b16 %v4940, %v4933
        %v5270 = vpack.c.b16 %v4941, %v4934
        %v5271 = vpack.c.b16 %v4942, %v4935
        %v5272 = vpack.c.b16 %v4943, %v4936
        %v5273 = vpack.c.b16 %v4944, %v4937
        %v5274 = vpack.c.b16 %v4945, %v4938
        %v5275 = vpack.c.b16 %v4946, %v4939
        %v5276 = vpack.c.b16 %v4954, %v4947
        %v5277 = vpack.c.b16 %v4955, %v4948
        %v5278 = vpack.c.b16 %v4956, %v4949
        %v5279 = vpack.c.b16 %v4957, %v4950
        %v5280 = vpack.c.b16 %v4958, %v4951
        %v5281 = vpack.c.b16 %v4959, %v4952
        %v5282 = vpack.c.b16 %v4960, %v4953
        %v5283 = vpack.c.b16 %v4968, %v4961
        %v5284 = vpack.c.b16 %v4969, %v4962
        %v5285 = vpack.c.b16 %v4970, %v4963
        %v5286 = vpack.c.b16 %v4971, %v4964
        %v5287 = vpack.c.b16 %v4972, %v4965
        %v5288 = vpack.c.b16 %v4973, %v4966
        %v5289 = vpack.c.b16 %v4974, %v4967
        %v5290 = vpack.c.b16 %v4982, %v4975
        %v5291 = vpack.c.b16 %v4983, %v4976
        %v5292 = vpack.c.b16 %v4984, %v4977
        %v5293 = vpack.c.b16 %v4985, %v4978
        %v5294 = vpack.c.b16 %v4986, %v4979
        %v5295 = vpack.c.b16 %v4987, %v4980
        %v5296 = vpack.c.b16 %v4988, %v4981
        %v5297 = vpack.c.b16 %v4996, %v4989
        %v5298 = vpack.c.b16 %v4997, %v4990
        %v5299 = vpack.c.b16 %v4998, %v4991
        %v5300 = vpack.c.b16 %v4999, %v4992
        %v5301 = vpack.c.b16 %v5000, %v4993
        %v5302 = vpack.c.b16 %v5001, %v4994
        %v5303 = vpack.c.b16 %v5002, %v4995
        %v5304 = vpack.c.b16 %v5010, %v5003
        %v5305 = vpack.c.b16 %v5011, %v5004
        %v5306 = vpack.c.b16 %v5012, %v5005
        %v5307 = vpack.c.b16 %v5013, %v5006
        %v5308 = vpack.c.b16 %v5014, %v5007
        %v5309 = vpack.c.b16 %v5015, %v5008
        %v5310 = vpack.c.b16 %v5016, %v5009
        %v5311 = vpack.c.b16 %v5024, %v5017
        %v5312 = vpack.c.b16 %v5025, %v5018
        %v5313 = vpack.c.b16 %v5026, %v5019
        %v5314 = vpack.c.b16 %v5027, %v5020
        %v5315 = vpack.c.b16 %v5028, %v5021
        %v5316 = vpack.c.b16 %v5029, %v5022
        %v5317 = vpack.c.b16 %v5030, %v5023
        %v5318 = vpack.c.b16 %v5038, %v5031
        %v5319 = vpack.c.b16 %v5039, %v5032
        %v5320 = vpack.c.b16 %v5040, %v5033
        %v5321 = vpack.c.b16 %v5041, %v5034
        %v5322 = vpack.c.b16 %v5042, %v5035
        %v5323 = vpack.c.b16 %v5043, %v5036
        %v5324 = vpack.c.b16 %v5044, %v5037
        %v5325 = vpack.c.b16 %v5052, %v5045
        %v5326 = vpack.c.b16 %v5053, %v5046
        %v5327 = vpack.c.b16 %v5054, %v5047
        %v5328 = vpack.c.b16 %v5055, %v5048
        %v5329 = vpack.c.b16 %v5056, %v5049
        %v5330 = vpack.c.b16 %v5057, %v5050
        %v5331 = vpack.c.b16 %v5058, %v5051
        %v5332 = vpack.c.b16 %v5066, %v5059
        %v5333 = vpack.c.b16 %v5067, %v5060
        %v5334 = vpack.c.b16 %v5068, %v5061
        %v5335 = vpack.c.b16 %v5069, %v5062
        %v5336 = vpack.c.b16 %v5070, %v5063
        %v5337 = vpack.c.b16 %v5071, %v5064
        %v5338 = vpack.c.b16 %v5072, %v5065
        %v5339 = vpack.c.b16 %v5080, %v5073
        %v5340 = vpack.c.b16 %v5081, %v5074
        %v5341 = vpack.c.b16 %v5082, %v5075
        %v5342 = vpack.c.b16 %v5083, %v5076
        %v5343 = vpack.c.b16 %v5084, %v5077
        %v5344 = vpack.c.b16 %v5085, %v5078
        %v5345 = vpack.c.b16 %v5086, %v5079
        %v5346 = vpack.c.b16 %v5094, %v5087
        %v5347 = vpack.c.b16 %v5095, %v5088
        %v5348 = vpack.c.b16 %v5096, %v5089
        %v5349 = vpack.c.b16 %v5097, %v5090
        %v5350 = vpack.c.b16 %v5098, %v5091
        %v5351 = vpack.c.b16 %v5099, %v5092
        %v5352 = vpack.c.b16 %v5100, %v5093
        %v5353 = vpack.c.b16 %v5108, %v5101
        %v5354 = vpack.c.b16 %v5109, %v5102
        %v5355 = vpack.c.b16 %v5110, %v5103
        %v5356 = vpack.c.b16 %v5111, %v5104
        %v5357 = vpack.c.b16 %v5112, %v5105
        %v5358 = vpack.c.b16 %v5113, %v5106
        %v5359 = vpack.c.b16 %v5114, %v5107
        %v5360 = vpack.c.b16 %v5122, %v5115
        %v5361 = vpack.c.b16 %v5123, %v5116
        %v5362 = vpack.c.b16 %v5124, %v5117
        %v5363 = vpack.c.b16 %v5125, %v5118
        %v5364 = vpack.c.b16 %v5126, %v5119
        %v5365 = vpack.c.b16 %v5127, %v5120
        %v5366 = vpack.c.b16 %v5128, %v5121
        %v5367 = vpack.c.b16 %v5136, %v5129
        %v5368 = vpack.c.b16 %v5137, %v5130
        %v5369 = vpack.c.b16 %v5138, %v5131
        %v5370 = vpack.c.b16 %v5139, %v5132
        %v5371 = vpack.c.b16 %v5140, %v5133
        %v5372 = vpack.c.b16 %v5141, %v5134
        %v5373 = vpack.c.b16 %v5142, %v5135
        %v5374 = vpack.c.b16 %v5150, %v5143
        %v5375 = vpack.c.b16 %v5151, %v5144
        %v5376 = vpack.c.b16 %v5152, %v5145
        %v5377 = vpack.c.b16 %v5153, %v5146
        %v5378 = vpack.c.b16 %v5154, %v5147
        %v5379 = vpack.c.b16 %v5155, %v5148
        %v5380 = vpack.c.b16 %v5156, %v5149
        %5605 = vmatpush.bf16.msra.mxu0 %v5206
        %5606 = vmatpush.bf16.msra.mxu0 %v5199
        %5607 = vmatpush.bf16.msra.mxu0 %v5192
        %5608 = vmatpush.bf16.msra.mxu0 %v5185
        %5609 = vmatpush.bf16.msra.mxu0 %v5178
        %5610 = vmatpush.bf16.msra.mxu0 %v5171
        %5611 = vmatpush.bf16.msra.mxu0 %v5164
        %5612 = vmatpush.bf16.msra.mxu0 %v5157
        %5613 = vmatmul.bf16.gmra.mxu0 %v4149
        %v5614 = vpop.f32.mrf.mxu0
        %v5615 = vadd.f32 %v4439, %v5614
        %v5616 = vpop.f32.mrf.mxu0
        %v5617 = vadd.f32 %v4439, %v5616
        %5618 = vmatmul.bf16.gmra.mxu0 %v4153
        %v5619 = vpop.f32.mrf.mxu0
        %v5620 = vadd.f32 %v4439, %v5619
        %v5621 = vpop.f32.mrf.mxu0
        %v5622 = vadd.f32 %v4439, %v5621
        %5623 = vmatmul.bf16.gmra.mxu0 %v4157
        %v5624 = vpop.f32.mrf.mxu0
        %v5625 = vadd.f32 %v4439, %v5624
        %v5626 = vpop.f32.mrf.mxu0
        %v5627 = vadd.f32 %v4439, %v5626
        %5628 = vmatmul.bf16.gmra.mxu0 %v4161
        %v5629 = vpop.f32.mrf.mxu0
        %v5630 = vadd.f32 %v4439, %v5629
        %v5631 = vpop.f32.mrf.mxu0
        %v5632 = vadd.f32 %v4439, %v5631
        %5633 = vmatmul.bf16.gmra.mxu0 %v4165
        %v5634 = vpop.f32.mrf.mxu0
        %v5635 = vadd.f32 %v4439, %v5634
        %v5636 = vpop.f32.mrf.mxu0
        %v5637 = vadd.f32 %v4439, %v5636
        %5638 = vmatmul.bf16.gmra.mxu0 %v4169
        %v5639 = vpop.f32.mrf.mxu0
        %v5640 = vadd.f32 %v4439, %v5639
        %v5641 = vpop.f32.mrf.mxu0
        %v5642 = vadd.f32 %v4439, %v5641
        %5643 = vmatmul.bf16.gmra.mxu0 %v4173
        %v5644 = vpop.f32.mrf.mxu0
        %v5645 = vadd.f32 %v4439, %v5644
        %v5646 = vpop.f32.mrf.mxu0
        %v5647 = vadd.f32 %v4439, %v5646
        %5648 = vmatmul.bf16.gmra.mxu0 %v4177
        %v5649 = vpop.f32.mrf.mxu0
        %v5650 = vadd.f32 %v4439, %v5649
        %v5651 = vpop.f32.mrf.mxu0
        %v5652 = vadd.f32 %v4439, %v5651
        %5653 = vdwg.mxu0
        %5654 = vmatpush.bf16.msra.mxu0 %v5262
        %5655 = vmatpush.bf16.msra.mxu0 %v5255
        %5656 = vmatpush.bf16.msra.mxu0 %v5248
        %5657 = vmatpush.bf16.msra.mxu0 %v5241
        %5658 = vmatpush.bf16.msra.mxu0 %v5234
        %5659 = vmatpush.bf16.msra.mxu0 %v5227
        %5660 = vmatpush.bf16.msra.mxu0 %v5220
        %5661 = vmatpush.bf16.msra.mxu0 %v5213
        %5662 = vmatmul.bf16.gmra.mxu0 %v4150
        %v5663 = vpop.f32.mrf.mxu0
        %v5664 = vadd.f32 %v5615, %v5663
        %v5665 = vpop.f32.mrf.mxu0
        %v5666 = vadd.f32 %v5617, %v5665
        %5667 = vmatmul.bf16.gmra.mxu0 %v4154
        %v5668 = vpop.f32.mrf.mxu0
        %v5669 = vadd.f32 %v5620, %v5668
        %v5670 = vpop.f32.mrf.mxu0
        %v5671 = vadd.f32 %v5622, %v5670
        %5672 = vmatmul.bf16.gmra.mxu0 %v4158
        %v5673 = vpop.f32.mrf.mxu0
        %v5674 = vadd.f32 %v5625, %v5673
        %v5675 = vpop.f32.mrf.mxu0
        %v5676 = vadd.f32 %v5627, %v5675
        %5677 = vmatmul.bf16.gmra.mxu0 %v4162
        %v5678 = vpop.f32.mrf.mxu0
        %v5679 = vadd.f32 %v5630, %v5678
        %v5680 = vpop.f32.mrf.mxu0
        %v5681 = vadd.f32 %v5632, %v5680
        %5682 = vmatmul.bf16.gmra.mxu0 %v4166
        %v5683 = vpop.f32.mrf.mxu0
        %v5684 = vadd.f32 %v5635, %v5683
        %v5685 = vpop.f32.mrf.mxu0
        %v5686 = vadd.f32 %v5637, %v5685
        %5687 = vmatmul.bf16.gmra.mxu0 %v4170
        %v5688 = vpop.f32.mrf.mxu0
        %v5689 = vadd.f32 %v5640, %v5688
        %v5690 = vpop.f32.mrf.mxu0
        %v5691 = vadd.f32 %v5642, %v5690
        %5692 = vmatmul.bf16.gmra.mxu0 %v4174
        %v5693 = vpop.f32.mrf.mxu0
        %v5694 = vadd.f32 %v5645, %v5693
        %v5695 = vpop.f32.mrf.mxu0
        %v5696 = vadd.f32 %v5647, %v5695
        %5697 = vmatmul.bf16.gmra.mxu0 %v4178
        %v5698 = vpop.f32.mrf.mxu0
        %v5699 = vadd.f32 %v5650, %v5698
        %v5700 = vpop.f32.mrf.mxu0
        %v5701 = vadd.f32 %v5652, %v5700
        %5702 = vdwg.mxu0
        %5703 = vmatpush.bf16.msra.mxu0 %v5318
        %5704 = vmatpush.bf16.msra.mxu0 %v5311
        %5705 = vmatpush.bf16.msra.mxu0 %v5304
        %5706 = vmatpush.bf16.msra.mxu0 %v5297
        %5707 = vmatpush.bf16.msra.mxu0 %v5290
        %5708 = vmatpush.bf16.msra.mxu0 %v5283
        %5709 = vmatpush.bf16.msra.mxu0 %v5276
        %5710 = vmatpush.bf16.msra.mxu0 %v5269
        %5711 = vmatmul.bf16.gmra.mxu0 %v4151
        %v5712 = vpop.f32.mrf.mxu0
        %v5713 = vadd.f32 %v5664, %v5712
        %v5714 = vpop.f32.mrf.mxu0
        %v5715 = vadd.f32 %v5666, %v5714
        %5716 = vmatmul.bf16.gmra.mxu0 %v4155
        %v5717 = vpop.f32.mrf.mxu0
        %v5718 = vadd.f32 %v5669, %v5717
        %v5719 = vpop.f32.mrf.mxu0
        %v5720 = vadd.f32 %v5671, %v5719
        %5721 = vmatmul.bf16.gmra.mxu0 %v4159
        %v5722 = vpop.f32.mrf.mxu0
        %v5723 = vadd.f32 %v5674, %v5722
        %v5724 = vpop.f32.mrf.mxu0
        %v5725 = vadd.f32 %v5676, %v5724
        %5726 = vmatmul.bf16.gmra.mxu0 %v4163
        %v5727 = vpop.f32.mrf.mxu0
        %v5728 = vadd.f32 %v5679, %v5727
        %v5729 = vpop.f32.mrf.mxu0
        %v5730 = vadd.f32 %v5681, %v5729
        %5731 = vmatmul.bf16.gmra.mxu0 %v4167
        %v5732 = vpop.f32.mrf.mxu0
        %v5733 = vadd.f32 %v5684, %v5732
        %v5734 = vpop.f32.mrf.mxu0
        %v5735 = vadd.f32 %v5686, %v5734
        %5736 = vmatmul.bf16.gmra.mxu0 %v4171
        %v5737 = vpop.f32.mrf.mxu0
        %v5738 = vadd.f32 %v5689, %v5737
        %v5739 = vpop.f32.mrf.mxu0
        %v5740 = vadd.f32 %v5691, %v5739
        %5741 = vmatmul.bf16.gmra.mxu0 %v4175
        %v5742 = vpop.f32.mrf.mxu0
        %v5743 = vadd.f32 %v5694, %v5742
        %v5744 = vpop.f32.mrf.mxu0
        %v5745 = vadd.f32 %v5696, %v5744
        %5746 = vmatmul.bf16.gmra.mxu0 %v4179
        %v5747 = vpop.f32.mrf.mxu0
        %v5748 = vadd.f32 %v5699, %v5747
        %v5749 = vpop.f32.mrf.mxu0
        %v5750 = vadd.f32 %v5701, %v5749
        %5751 = vdwg.mxu0
        %5752 = vmatpush.bf16.msra.mxu0 %v5374
        %5753 = vmatpush.bf16.msra.mxu0 %v5367
        %5754 = vmatpush.bf16.msra.mxu0 %v5360
        %5755 = vmatpush.bf16.msra.mxu0 %v5353
        %5756 = vmatpush.bf16.msra.mxu0 %v5346
        %5757 = vmatpush.bf16.msra.mxu0 %v5339
        %5758 = vmatpush.bf16.msra.mxu0 %v5332
        %5759 = vmatpush.bf16.msra.mxu0 %v5325
        %5760 = vmatmul.bf16.gmra.mxu0 %v4152
        %v5761 = vpop.f32.mrf.mxu0
        %v5762 = vadd.f32 %v5713, %v5761
        %v5763 = vpop.f32.mrf.mxu0
        %v5764 = vadd.f32 %v5715, %v5763
        %5765 = vmatmul.bf16.gmra.mxu0 %v4156
        %v5766 = vpop.f32.mrf.mxu0
        %v5767 = vadd.f32 %v5718, %v5766
        %v5768 = vpop.f32.mrf.mxu0
        %v5769 = vadd.f32 %v5720, %v5768
        %5770 = vmatmul.bf16.gmra.mxu0 %v4160
        %v5771 = vpop.f32.mrf.mxu0
        %v5772 = vadd.f32 %v5723, %v5771
        %v5773 = vpop.f32.mrf.mxu0
        %v5774 = vadd.f32 %v5725, %v5773
        %5775 = vmatmul.bf16.gmra.mxu0 %v4164
        %v5776 = vpop.f32.mrf.mxu0
        %v5777 = vadd.f32 %v5728, %v5776
        %v5778 = vpop.f32.mrf.mxu0
        %v5779 = vadd.f32 %v5730, %v5778
        %5780 = vmatmul.bf16.gmra.mxu0 %v4168
        %v5781 = vpop.f32.mrf.mxu0
        %v5782 = vadd.f32 %v5733, %v5781
        %v5783 = vpop.f32.mrf.mxu0
        %v5784 = vadd.f32 %v5735, %v5783
        %5785 = vmatmul.bf16.gmra.mxu0 %v4172
        %v5786 = vpop.f32.mrf.mxu0
        %v5787 = vadd.f32 %v5738, %v5786
        %v5788 = vpop.f32.mrf.mxu0
        %v5789 = vadd.f32 %v5740, %v5788
        %5790 = vmatmul.bf16.gmra.mxu0 %v4176
        %v5791 = vpop.f32.mrf.mxu0
        %v5792 = vadd.f32 %v5743, %v5791
        %v5793 = vpop.f32.mrf.mxu0
        %v5794 = vadd.f32 %v5745, %v5793
        %5795 = vmatmul.bf16.gmra.mxu0 %v4180
        %v5796 = vpop.f32.mrf.mxu0
        %v5797 = vadd.f32 %v5748, %v5796
        %v5798 = vpop.f32.mrf.mxu0
        %v5799 = vadd.f32 %v5750, %v5798
        %5800 = vdwg.mxu0
        %5801 = vmatpush.bf16.msra.mxu0 %v5207
        %5802 = vmatpush.bf16.msra.mxu0 %v5200
        %5803 = vmatpush.bf16.msra.mxu0 %v5193
        %5804 = vmatpush.bf16.msra.mxu0 %v5186
        %5805 = vmatpush.bf16.msra.mxu0 %v5179
        %5806 = vmatpush.bf16.msra.mxu0 %v5172
        %5807 = vmatpush.bf16.msra.mxu0 %v5165
        %5808 = vmatpush.bf16.msra.mxu0 %v5158
        %5809 = vmatmul.bf16.gmra.mxu0 %v4149
        %v5810 = vpop.f32.mrf.mxu0
        %v5811 = vadd.f32 %v4440, %v5810
        %v5812 = vpop.f32.mrf.mxu0
        %v5813 = vadd.f32 %v4440, %v5812
        %5814 = vmatmul.bf16.gmra.mxu0 %v4153
        %v5815 = vpop.f32.mrf.mxu0
        %v5816 = vadd.f32 %v4440, %v5815
        %v5817 = vpop.f32.mrf.mxu0
        %v5818 = vadd.f32 %v4440, %v5817
        %5819 = vmatmul.bf16.gmra.mxu0 %v4157
        %v5820 = vpop.f32.mrf.mxu0
        %v5821 = vadd.f32 %v4440, %v5820
        %v5822 = vpop.f32.mrf.mxu0
        %v5823 = vadd.f32 %v4440, %v5822
        %5824 = vmatmul.bf16.gmra.mxu0 %v4161
        %v5825 = vpop.f32.mrf.mxu0
        %v5826 = vadd.f32 %v4440, %v5825
        %v5827 = vpop.f32.mrf.mxu0
        %v5828 = vadd.f32 %v4440, %v5827
        %5829 = vmatmul.bf16.gmra.mxu0 %v4165
        %v5830 = vpop.f32.mrf.mxu0
        %v5831 = vadd.f32 %v4440, %v5830
        %v5832 = vpop.f32.mrf.mxu0
        %v5833 = vadd.f32 %v4440, %v5832
        %5834 = vmatmul.bf16.gmra.mxu0 %v4169
        %v5835 = vpop.f32.mrf.mxu0
        %v5836 = vadd.f32 %v4440, %v5835
        %v5837 = vpop.f32.mrf.mxu0
        %v5838 = vadd.f32 %v4440, %v5837
        %5839 = vmatmul.bf16.gmra.mxu0 %v4173
        %v5840 = vpop.f32.mrf.mxu0
        %v5841 = vadd.f32 %v4440, %v5840
        %v5842 = vpop.f32.mrf.mxu0
        %v5843 = vadd.f32 %v4440, %v5842
        %5844 = vmatmul.bf16.gmra.mxu0 %v4177
        %v5845 = vpop.f32.mrf.mxu0
        %v5846 = vadd.f32 %v4440, %v5845
        %v5847 = vpop.f32.mrf.mxu0
        %v5848 = vadd.f32 %v4440, %v5847
        %5849 = vdwg.mxu0
        %5850 = vmatpush.bf16.msra.mxu0 %v5263
        %5851 = vmatpush.bf16.msra.mxu0 %v5256
        %5852 = vmatpush.bf16.msra.mxu0 %v5249
        %5853 = vmatpush.bf16.msra.mxu0 %v5242
        %5854 = vmatpush.bf16.msra.mxu0 %v5235
        %5855 = vmatpush.bf16.msra.mxu0 %v5228
        %5856 = vmatpush.bf16.msra.mxu0 %v5221
        %5857 = vmatpush.bf16.msra.mxu0 %v5214
        %5858 = vmatmul.bf16.gmra.mxu0 %v4150
        %v5859 = vpop.f32.mrf.mxu0
        %v5860 = vadd.f32 %v5811, %v5859
        %v5861 = vpop.f32.mrf.mxu0
        %v5862 = vadd.f32 %v5813, %v5861
        %5863 = vmatmul.bf16.gmra.mxu0 %v4154
        %v5864 = vpop.f32.mrf.mxu0
        %v5865 = vadd.f32 %v5816, %v5864
        %v5866 = vpop.f32.mrf.mxu0
        %v5867 = vadd.f32 %v5818, %v5866
        %5868 = vmatmul.bf16.gmra.mxu0 %v4158
        %v5869 = vpop.f32.mrf.mxu0
        %v5870 = vadd.f32 %v5821, %v5869
        %v5871 = vpop.f32.mrf.mxu0
        %v5872 = vadd.f32 %v5823, %v5871
        %5873 = vmatmul.bf16.gmra.mxu0 %v4162
        %v5874 = vpop.f32.mrf.mxu0
        %v5875 = vadd.f32 %v5826, %v5874
        %v5876 = vpop.f32.mrf.mxu0
        %v5877 = vadd.f32 %v5828, %v5876
        %5878 = vmatmul.bf16.gmra.mxu0 %v4166
        %v5879 = vpop.f32.mrf.mxu0
        %v5880 = vadd.f32 %v5831, %v5879
        %v5881 = vpop.f32.mrf.mxu0
        %v5882 = vadd.f32 %v5833, %v5881
        %5883 = vmatmul.bf16.gmra.mxu0 %v4170
        %v5884 = vpop.f32.mrf.mxu0
        %v5885 = vadd.f32 %v5836, %v5884
        %v5886 = vpop.f32.mrf.mxu0
        %v5887 = vadd.f32 %v5838, %v5886
        %5888 = vmatmul.bf16.gmra.mxu0 %v4174
        %v5889 = vpop.f32.mrf.mxu0
        %v5890 = vadd.f32 %v5841, %v5889
        %v5891 = vpop.f32.mrf.mxu0
        %v5892 = vadd.f32 %v5843, %v5891
        %5893 = vmatmul.bf16.gmra.mxu0 %v4178
        %v5894 = vpop.f32.mrf.mxu0
        %v5895 = vadd.f32 %v5846, %v5894
        %v5896 = vpop.f32.mrf.mxu0
        %v5897 = vadd.f32 %v5848, %v5896
        %5898 = vdwg.mxu0
        %5899 = vmatpush.bf16.msra.mxu0 %v5319
        %5900 = vmatpush.bf16.msra.mxu0 %v5312
        %5901 = vmatpush.bf16.msra.mxu0 %v5305
        %5902 = vmatpush.bf16.msra.mxu0 %v5298
        %5903 = vmatpush.bf16.msra.mxu0 %v5291
        %5904 = vmatpush.bf16.msra.mxu0 %v5284
        %5905 = vmatpush.bf16.msra.mxu0 %v5277
        %5906 = vmatpush.bf16.msra.mxu0 %v5270
        %5907 = vmatmul.bf16.gmra.mxu0 %v4151
        %v5908 = vpop.f32.mrf.mxu0
        %v5909 = vadd.f32 %v5860, %v5908
        %v5910 = vpop.f32.mrf.mxu0
        %v5911 = vadd.f32 %v5862, %v5910
        %5912 = vmatmul.bf16.gmra.mxu0 %v4155
        %v5913 = vpop.f32.mrf.mxu0
        %v5914 = vadd.f32 %v5865, %v5913
        %v5915 = vpop.f32.mrf.mxu0
        %v5916 = vadd.f32 %v5867, %v5915
        %5917 = vmatmul.bf16.gmra.mxu0 %v4159
        %v5918 = vpop.f32.mrf.mxu0
        %v5919 = vadd.f32 %v5870, %v5918
        %v5920 = vpop.f32.mrf.mxu0
        %v5921 = vadd.f32 %v5872, %v5920
        %5922 = vmatmul.bf16.gmra.mxu0 %v4163
        %v5923 = vpop.f32.mrf.mxu0
        %v5924 = vadd.f32 %v5875, %v5923
        %v5925 = vpop.f32.mrf.mxu0
        %v5926 = vadd.f32 %v5877, %v5925
        %5927 = vmatmul.bf16.gmra.mxu0 %v4167
        %v5928 = vpop.f32.mrf.mxu0
        %v5929 = vadd.f32 %v5880, %v5928
        %v5930 = vpop.f32.mrf.mxu0
        %v5931 = vadd.f32 %v5882, %v5930
        %5932 = vmatmul.bf16.gmra.mxu0 %v4171
        %v5933 = vpop.f32.mrf.mxu0
        %v5934 = vadd.f32 %v5885, %v5933
        %v5935 = vpop.f32.mrf.mxu0
        %v5936 = vadd.f32 %v5887, %v5935
        %5937 = vmatmul.bf16.gmra.mxu0 %v4175
        %v5938 = vpop.f32.mrf.mxu0
        %v5939 = vadd.f32 %v5890, %v5938
        %v5940 = vpop.f32.mrf.mxu0
        %v5941 = vadd.f32 %v5892, %v5940
        %5942 = vmatmul.bf16.gmra.mxu0 %v4179
        %v5943 = vpop.f32.mrf.mxu0
        %v5944 = vadd.f32 %v5895, %v5943
        %v5945 = vpop.f32.mrf.mxu0
        %v5946 = vadd.f32 %v5897, %v5945
        %5947 = vdwg.mxu0
        %5948 = vmatpush.bf16.msra.mxu0 %v5375
        %5949 = vmatpush.bf16.msra.mxu0 %v5368
        %5950 = vmatpush.bf16.msra.mxu0 %v5361
        %5951 = vmatpush.bf16.msra.mxu0 %v5354
        %5952 = vmatpush.bf16.msra.mxu0 %v5347
        %5953 = vmatpush.bf16.msra.mxu0 %v5340
        %5954 = vmatpush.bf16.msra.mxu0 %v5333
        %5955 = vmatpush.bf16.msra.mxu0 %v5326
        %5956 = vmatmul.bf16.gmra.mxu0 %v4152
        %v5957 = vpop.f32.mrf.mxu0
        %v5958 = vadd.f32 %v5909, %v5957
        %v5959 = vpop.f32.mrf.mxu0
        %v5960 = vadd.f32 %v5911, %v5959
        %5961 = vmatmul.bf16.gmra.mxu0 %v4156
        %v5962 = vpop.f32.mrf.mxu0
        %v5963 = vadd.f32 %v5914, %v5962
        %v5964 = vpop.f32.mrf.mxu0
        %v5965 = vadd.f32 %v5916, %v5964
        %5966 = vmatmul.bf16.gmra.mxu0 %v4160
        %v5967 = vpop.f32.mrf.mxu0
        %v5968 = vadd.f32 %v5919, %v5967
        %v5969 = vpop.f32.mrf.mxu0
        %v5970 = vadd.f32 %v5921, %v5969
        %5971 = vmatmul.bf16.gmra.mxu0 %v4164
        %v5972 = vpop.f32.mrf.mxu0
        %v5973 = vadd.f32 %v5924, %v5972
        %v5974 = vpop.f32.mrf.mxu0
        %v5975 = vadd.f32 %v5926, %v5974
        %5976 = vmatmul.bf16.gmra.mxu0 %v4168
        %v5977 = vpop.f32.mrf.mxu0
        %v5978 = vadd.f32 %v5929, %v5977
        %v5979 = vpop.f32.mrf.mxu0
        %v5980 = vadd.f32 %v5931, %v5979
        %5981 = vmatmul.bf16.gmra.mxu0 %v4172
        %v5982 = vpop.f32.mrf.mxu0
        %v5983 = vadd.f32 %v5934, %v5982
        %v5984 = vpop.f32.mrf.mxu0
        %v5985 = vadd.f32 %v5936, %v5984
        %5986 = vmatmul.bf16.gmra.mxu0 %v4176
        %v5987 = vpop.f32.mrf.mxu0
        %v5988 = vadd.f32 %v5939, %v5987
        %v5989 = vpop.f32.mrf.mxu0
        %v5990 = vadd.f32 %v5941, %v5989
        %5991 = vmatmul.bf16.gmra.mxu0 %v4180
        %v5992 = vpop.f32.mrf.mxu0
        %v5993 = vadd.f32 %v5944, %v5992
        %v5994 = vpop.f32.mrf.mxu0
        %v5995 = vadd.f32 %v5946, %v5994
        %5996 = vdwg.mxu0
        %5997 = vmatpush.bf16.msra.mxu0 %v5208
        %5998 = vmatpush.bf16.msra.mxu0 %v5201
        %5999 = vmatpush.bf16.msra.mxu0 %v5194
        %6000 = vmatpush.bf16.msra.mxu0 %v5187
        %6001 = vmatpush.bf16.msra.mxu0 %v5180
        %6002 = vmatpush.bf16.msra.mxu0 %v5173
        %6003 = vmatpush.bf16.msra.mxu0 %v5166
        %6004 = vmatpush.bf16.msra.mxu0 %v5159
        %6005 = vmatmul.bf16.gmra.mxu0 %v4149
        %v6006 = vpop.f32.mrf.mxu0
        %v6007 = vadd.f32 %v4441, %v6006
        %v6008 = vpop.f32.mrf.mxu0
        %v6009 = vadd.f32 %v4441, %v6008
        %6010 = vmatmul.bf16.gmra.mxu0 %v4153
        %v6011 = vpop.f32.mrf.mxu0
        %v6012 = vadd.f32 %v4441, %v6011
        %v6013 = vpop.f32.mrf.mxu0
        %v6014 = vadd.f32 %v4441, %v6013
        %6015 = vmatmul.bf16.gmra.mxu0 %v4157
        %v6016 = vpop.f32.mrf.mxu0
        %v6017 = vadd.f32 %v4441, %v6016
        %v6018 = vpop.f32.mrf.mxu0
        %v6019 = vadd.f32 %v4441, %v6018
        %6020 = vmatmul.bf16.gmra.mxu0 %v4161
        %v6021 = vpop.f32.mrf.mxu0
        %v6022 = vadd.f32 %v4441, %v6021
        %v6023 = vpop.f32.mrf.mxu0
        %v6024 = vadd.f32 %v4441, %v6023
        %6025 = vmatmul.bf16.gmra.mxu0 %v4165
        %v6026 = vpop.f32.mrf.mxu0
        %v6027 = vadd.f32 %v4441, %v6026
        %v6028 = vpop.f32.mrf.mxu0
        %v6029 = vadd.f32 %v4441, %v6028
        %6030 = vmatmul.bf16.gmra.mxu0 %v4169
        %v6031 = vpop.f32.mrf.mxu0
        %v6032 = vadd.f32 %v4441, %v6031
        %v6033 = vpop.f32.mrf.mxu0
        %v6034 = vadd.f32 %v4441, %v6033
        %6035 = vmatmul.bf16.gmra.mxu0 %v4173
        %v6036 = vpop.f32.mrf.mxu0
        %v6037 = vadd.f32 %v4441, %v6036
        %v6038 = vpop.f32.mrf.mxu0
        %v6039 = vadd.f32 %v4441, %v6038
        %6040 = vmatmul.bf16.gmra.mxu0 %v4177
        %v6041 = vpop.f32.mrf.mxu0
        %v6042 = vadd.f32 %v4441, %v6041
        %v6043 = vpop.f32.mrf.mxu0
        %v6044 = vadd.f32 %v4441, %v6043
        %6045 = vdwg.mxu0
        %6046 = vmatpush.bf16.msra.mxu0 %v5264
        %6047 = vmatpush.bf16.msra.mxu0 %v5257
        %6048 = vmatpush.bf16.msra.mxu0 %v5250
        %6049 = vmatpush.bf16.msra.mxu0 %v5243
        %6050 = vmatpush.bf16.msra.mxu0 %v5236
        %6051 = vmatpush.bf16.msra.mxu0 %v5229
        %6052 = vmatpush.bf16.msra.mxu0 %v5222
        %6053 = vmatpush.bf16.msra.mxu0 %v5215
        %6054 = vmatmul.bf16.gmra.mxu0 %v4150
        %v6055 = vpop.f32.mrf.mxu0
        %v6056 = vadd.f32 %v6007, %v6055
        %v6057 = vpop.f32.mrf.mxu0
        %v6058 = vadd.f32 %v6009, %v6057
        %6059 = vmatmul.bf16.gmra.mxu0 %v4154
        %v6060 = vpop.f32.mrf.mxu0
        %v6061 = vadd.f32 %v6012, %v6060
        %v6062 = vpop.f32.mrf.mxu0
        %v6063 = vadd.f32 %v6014, %v6062
        %6064 = vmatmul.bf16.gmra.mxu0 %v4158
        %v6065 = vpop.f32.mrf.mxu0
        %v6066 = vadd.f32 %v6017, %v6065
        %v6067 = vpop.f32.mrf.mxu0
        %v6068 = vadd.f32 %v6019, %v6067
        %6069 = vmatmul.bf16.gmra.mxu0 %v4162
        %v6070 = vpop.f32.mrf.mxu0
        %v6071 = vadd.f32 %v6022, %v6070
        %v6072 = vpop.f32.mrf.mxu0
        %v6073 = vadd.f32 %v6024, %v6072
        %6074 = vmatmul.bf16.gmra.mxu0 %v4166
        %v6075 = vpop.f32.mrf.mxu0
        %v6076 = vadd.f32 %v6027, %v6075
        %v6077 = vpop.f32.mrf.mxu0
        %v6078 = vadd.f32 %v6029, %v6077
        %6079 = vmatmul.bf16.gmra.mxu0 %v4170
        %v6080 = vpop.f32.mrf.mxu0
        %v6081 = vadd.f32 %v6032, %v6080
        %v6082 = vpop.f32.mrf.mxu0
        %v6083 = vadd.f32 %v6034, %v6082
        %6084 = vmatmul.bf16.gmra.mxu0 %v4174
        %v6085 = vpop.f32.mrf.mxu0
        %v6086 = vadd.f32 %v6037, %v6085
        %v6087 = vpop.f32.mrf.mxu0
        %v6088 = vadd.f32 %v6039, %v6087
        %6089 = vmatmul.bf16.gmra.mxu0 %v4178
        %v6090 = vpop.f32.mrf.mxu0
        %v6091 = vadd.f32 %v6042, %v6090
        %v6092 = vpop.f32.mrf.mxu0
        %v6093 = vadd.f32 %v6044, %v6092
        %6094 = vdwg.mxu0
        %6095 = vmatpush.bf16.msra.mxu0 %v5320
        %6096 = vmatpush.bf16.msra.mxu0 %v5313
        %6097 = vmatpush.bf16.msra.mxu0 %v5306
        %6098 = vmatpush.bf16.msra.mxu0 %v5299
        %6099 = vmatpush.bf16.msra.mxu0 %v5292
        %6100 = vmatpush.bf16.msra.mxu0 %v5285
        %6101 = vmatpush.bf16.msra.mxu0 %v5278
        %6102 = vmatpush.bf16.msra.mxu0 %v5271
        %6103 = vmatmul.bf16.gmra.mxu0 %v4151
        %v6104 = vpop.f32.mrf.mxu0
        %v6105 = vadd.f32 %v6056, %v6104
        %v6106 = vpop.f32.mrf.mxu0
        %v6107 = vadd.f32 %v6058, %v6106
        %6108 = vmatmul.bf16.gmra.mxu0 %v4155
        %v6109 = vpop.f32.mrf.mxu0
        %v6110 = vadd.f32 %v6061, %v6109
        %v6111 = vpop.f32.mrf.mxu0
        %v6112 = vadd.f32 %v6063, %v6111
        %6113 = vmatmul.bf16.gmra.mxu0 %v4159
        %v6114 = vpop.f32.mrf.mxu0
        %v6115 = vadd.f32 %v6066, %v6114
        %v6116 = vpop.f32.mrf.mxu0
        %v6117 = vadd.f32 %v6068, %v6116
        %6118 = vmatmul.bf16.gmra.mxu0 %v4163
        %v6119 = vpop.f32.mrf.mxu0
        %v6120 = vadd.f32 %v6071, %v6119
        %v6121 = vpop.f32.mrf.mxu0
        %v6122 = vadd.f32 %v6073, %v6121
        %6123 = vmatmul.bf16.gmra.mxu0 %v4167
        %v6124 = vpop.f32.mrf.mxu0
        %v6125 = vadd.f32 %v6076, %v6124
        %v6126 = vpop.f32.mrf.mxu0
        %v6127 = vadd.f32 %v6078, %v6126
        %6128 = vmatmul.bf16.gmra.mxu0 %v4171
        %v6129 = vpop.f32.mrf.mxu0
        %v6130 = vadd.f32 %v6081, %v6129
        %v6131 = vpop.f32.mrf.mxu0
        %v6132 = vadd.f32 %v6083, %v6131
        %6133 = vmatmul.bf16.gmra.mxu0 %v4175
        %v6134 = vpop.f32.mrf.mxu0
        %v6135 = vadd.f32 %v6086, %v6134
        %v6136 = vpop.f32.mrf.mxu0
        %v6137 = vadd.f32 %v6088, %v6136
        %6138 = vmatmul.bf16.gmra.mxu0 %v4179
        %v6139 = vpop.f32.mrf.mxu0
        %v6140 = vadd.f32 %v6091, %v6139
        %v6141 = vpop.f32.mrf.mxu0
        %v6142 = vadd.f32 %v6093, %v6141
        %6143 = vdwg.mxu0
        %6144 = vmatpush.bf16.msra.mxu0 %v5376
        %6145 = vmatpush.bf16.msra.mxu0 %v5369
        %6146 = vmatpush.bf16.msra.mxu0 %v5362
        %6147 = vmatpush.bf16.msra.mxu0 %v5355
        %6148 = vmatpush.bf16.msra.mxu0 %v5348
        %6149 = vmatpush.bf16.msra.mxu0 %v5341
        %6150 = vmatpush.bf16.msra.mxu0 %v5334
        %6151 = vmatpush.bf16.msra.mxu0 %v5327
        %6152 = vmatmul.bf16.gmra.mxu0 %v4152
        %v6153 = vpop.f32.mrf.mxu0
        %v6154 = vadd.f32 %v6105, %v6153
        %v6155 = vpop.f32.mrf.mxu0
        %v6156 = vadd.f32 %v6107, %v6155
        %6157 = vmatmul.bf16.gmra.mxu0 %v4156
        %v6158 = vpop.f32.mrf.mxu0
        %v6159 = vadd.f32 %v6110, %v6158
        %v6160 = vpop.f32.mrf.mxu0
        %v6161 = vadd.f32 %v6112, %v6160
        %6162 = vmatmul.bf16.gmra.mxu0 %v4160
        %v6163 = vpop.f32.mrf.mxu0
        %v6164 = vadd.f32 %v6115, %v6163
        %v6165 = vpop.f32.mrf.mxu0
        %v6166 = vadd.f32 %v6117, %v6165
        %6167 = vmatmul.bf16.gmra.mxu0 %v4164
        %v6168 = vpop.f32.mrf.mxu0
        %v6169 = vadd.f32 %v6120, %v6168
        %v6170 = vpop.f32.mrf.mxu0
        %v6171 = vadd.f32 %v6122, %v6170
        %6172 = vmatmul.bf16.gmra.mxu0 %v4168
        %v6173 = vpop.f32.mrf.mxu0
        %v6174 = vadd.f32 %v6125, %v6173
        %v6175 = vpop.f32.mrf.mxu0
        %v6176 = vadd.f32 %v6127, %v6175
        %6177 = vmatmul.bf16.gmra.mxu0 %v4172
        %v6178 = vpop.f32.mrf.mxu0
        %v6179 = vadd.f32 %v6130, %v6178
        %v6180 = vpop.f32.mrf.mxu0
        %v6181 = vadd.f32 %v6132, %v6180
        %6182 = vmatmul.bf16.gmra.mxu0 %v4176
        %v6183 = vpop.f32.mrf.mxu0
        %v6184 = vadd.f32 %v6135, %v6183
        %v6185 = vpop.f32.mrf.mxu0
        %v6186 = vadd.f32 %v6137, %v6185
        %6187 = vmatmul.bf16.gmra.mxu0 %v4180
        %v6188 = vpop.f32.mrf.mxu0
        %v6189 = vadd.f32 %v6140, %v6188
        %v6190 = vpop.f32.mrf.mxu0
        %v6191 = vadd.f32 %v6142, %v6190
        %6192 = vdwg.mxu0
        %6193 = vmatpush.bf16.msra.mxu0 %v5209
        %6194 = vmatpush.bf16.msra.mxu0 %v5202
        %6195 = vmatpush.bf16.msra.mxu0 %v5195
        %6196 = vmatpush.bf16.msra.mxu0 %v5188
        %6197 = vmatpush.bf16.msra.mxu0 %v5181
        %6198 = vmatpush.bf16.msra.mxu0 %v5174
        %6199 = vmatpush.bf16.msra.mxu0 %v5167
        %6200 = vmatpush.bf16.msra.mxu0 %v5160
        %6201 = vmatmul.bf16.gmra.mxu0 %v4149
        %v6202 = vpop.f32.mrf.mxu0
        %v6203 = vadd.f32 %v4442, %v6202
        %v6204 = vpop.f32.mrf.mxu0
        %v6205 = vadd.f32 %v4442, %v6204
        %6206 = vmatmul.bf16.gmra.mxu0 %v4153
        %v6207 = vpop.f32.mrf.mxu0
        %v6208 = vadd.f32 %v4442, %v6207
        %v6209 = vpop.f32.mrf.mxu0
        %v6210 = vadd.f32 %v4442, %v6209
        %6211 = vmatmul.bf16.gmra.mxu0 %v4157
        %v6212 = vpop.f32.mrf.mxu0
        %v6213 = vadd.f32 %v4442, %v6212
        %v6214 = vpop.f32.mrf.mxu0
        %v6215 = vadd.f32 %v4442, %v6214
        %6216 = vmatmul.bf16.gmra.mxu0 %v4161
        %v6217 = vpop.f32.mrf.mxu0
        %v6218 = vadd.f32 %v4442, %v6217
        %v6219 = vpop.f32.mrf.mxu0
        %v6220 = vadd.f32 %v4442, %v6219
        %6221 = vmatmul.bf16.gmra.mxu0 %v4165
        %v6222 = vpop.f32.mrf.mxu0
        %v6223 = vadd.f32 %v4442, %v6222
        %v6224 = vpop.f32.mrf.mxu0
        %v6225 = vadd.f32 %v4442, %v6224
        %6226 = vmatmul.bf16.gmra.mxu0 %v4169
        %v6227 = vpop.f32.mrf.mxu0
        %v6228 = vadd.f32 %v4442, %v6227
        %v6229 = vpop.f32.mrf.mxu0
        %v6230 = vadd.f32 %v4442, %v6229
        %6231 = vmatmul.bf16.gmra.mxu0 %v4173
        %v6232 = vpop.f32.mrf.mxu0
        %v6233 = vadd.f32 %v4442, %v6232
        %v6234 = vpop.f32.mrf.mxu0
        %v6235 = vadd.f32 %v4442, %v6234
        %6236 = vmatmul.bf16.gmra.mxu0 %v4177
        %v6237 = vpop.f32.mrf.mxu0
        %v6238 = vadd.f32 %v4442, %v6237
        %v6239 = vpop.f32.mrf.mxu0
        %v6240 = vadd.f32 %v4442, %v6239
        %6241 = vdwg.mxu0
        %6242 = vmatpush.bf16.msra.mxu0 %v5265
        %6243 = vmatpush.bf16.msra.mxu0 %v5258
        %6244 = vmatpush.bf16.msra.mxu0 %v5251
        %6245 = vmatpush.bf16.msra.mxu0 %v5244
        %6246 = vmatpush.bf16.msra.mxu0 %v5237
        %6247 = vmatpush.bf16.msra.mxu0 %v5230
        %6248 = vmatpush.bf16.msra.mxu0 %v5223
        %6249 = vmatpush.bf16.msra.mxu0 %v5216
        %6250 = vmatmul.bf16.gmra.mxu0 %v4150
        %v6251 = vpop.f32.mrf.mxu0
        %v6252 = vadd.f32 %v6203, %v6251
        %v6253 = vpop.f32.mrf.mxu0
        %v6254 = vadd.f32 %v6205, %v6253
        %6255 = vmatmul.bf16.gmra.mxu0 %v4154
        %v6256 = vpop.f32.mrf.mxu0
        %v6257 = vadd.f32 %v6208, %v6256
        %v6258 = vpop.f32.mrf.mxu0
        %v6259 = vadd.f32 %v6210, %v6258
        %6260 = vmatmul.bf16.gmra.mxu0 %v4158
        %v6261 = vpop.f32.mrf.mxu0
        %v6262 = vadd.f32 %v6213, %v6261
        %v6263 = vpop.f32.mrf.mxu0
        %v6264 = vadd.f32 %v6215, %v6263
        %6265 = vmatmul.bf16.gmra.mxu0 %v4162
        %v6266 = vpop.f32.mrf.mxu0
        %v6267 = vadd.f32 %v6218, %v6266
        %v6268 = vpop.f32.mrf.mxu0
        %v6269 = vadd.f32 %v6220, %v6268
        %6270 = vmatmul.bf16.gmra.mxu0 %v4166
        %v6271 = vpop.f32.mrf.mxu0
        %v6272 = vadd.f32 %v6223, %v6271
        %v6273 = vpop.f32.mrf.mxu0
        %v6274 = vadd.f32 %v6225, %v6273
        %6275 = vmatmul.bf16.gmra.mxu0 %v4170
        %v6276 = vpop.f32.mrf.mxu0
        %v6277 = vadd.f32 %v6228, %v6276
        %v6278 = vpop.f32.mrf.mxu0
        %v6279 = vadd.f32 %v6230, %v6278
        %6280 = vmatmul.bf16.gmra.mxu0 %v4174
        %v6281 = vpop.f32.mrf.mxu0
        %v6282 = vadd.f32 %v6233, %v6281
        %v6283 = vpop.f32.mrf.mxu0
        %v6284 = vadd.f32 %v6235, %v6283
        %6285 = vmatmul.bf16.gmra.mxu0 %v4178
        %v6286 = vpop.f32.mrf.mxu0
        %v6287 = vadd.f32 %v6238, %v6286
        %v6288 = vpop.f32.mrf.mxu0
        %v6289 = vadd.f32 %v6240, %v6288
        %6290 = vdwg.mxu0
        %6291 = vmatpush.bf16.msra.mxu0 %v5321
        %6292 = vmatpush.bf16.msra.mxu0 %v5314
        %6293 = vmatpush.bf16.msra.mxu0 %v5307
        %6294 = vmatpush.bf16.msra.mxu0 %v5300
        %6295 = vmatpush.bf16.msra.mxu0 %v5293
        %6296 = vmatpush.bf16.msra.mxu0 %v5286
        %6297 = vmatpush.bf16.msra.mxu0 %v5279
        %6298 = vmatpush.bf16.msra.mxu0 %v5272
        %6299 = vmatmul.bf16.gmra.mxu0 %v4151
        %v6300 = vpop.f32.mrf.mxu0
        %v6301 = vadd.f32 %v6252, %v6300
        %v6302 = vpop.f32.mrf.mxu0
        %v6303 = vadd.f32 %v6254, %v6302
        %6304 = vmatmul.bf16.gmra.mxu0 %v4155
        %v6305 = vpop.f32.mrf.mxu0
        %v6306 = vadd.f32 %v6257, %v6305
        %v6307 = vpop.f32.mrf.mxu0
        %v6308 = vadd.f32 %v6259, %v6307
        %6309 = vmatmul.bf16.gmra.mxu0 %v4159
        %v6310 = vpop.f32.mrf.mxu0
        %v6311 = vadd.f32 %v6262, %v6310
        %v6312 = vpop.f32.mrf.mxu0
        %v6313 = vadd.f32 %v6264, %v6312
        %6314 = vmatmul.bf16.gmra.mxu0 %v4163
        %v6315 = vpop.f32.mrf.mxu0
        %v6316 = vadd.f32 %v6267, %v6315
        %v6317 = vpop.f32.mrf.mxu0
        %v6318 = vadd.f32 %v6269, %v6317
        %6319 = vmatmul.bf16.gmra.mxu0 %v4167
        %v6320 = vpop.f32.mrf.mxu0
        %v6321 = vadd.f32 %v6272, %v6320
        %v6322 = vpop.f32.mrf.mxu0
        %v6323 = vadd.f32 %v6274, %v6322
        %6324 = vmatmul.bf16.gmra.mxu0 %v4171
        %v6325 = vpop.f32.mrf.mxu0
        %v6326 = vadd.f32 %v6277, %v6325
        %v6327 = vpop.f32.mrf.mxu0
        %v6328 = vadd.f32 %v6279, %v6327
        %6329 = vmatmul.bf16.gmra.mxu0 %v4175
        %v6330 = vpop.f32.mrf.mxu0
        %v6331 = vadd.f32 %v6282, %v6330
        %v6332 = vpop.f32.mrf.mxu0
        %v6333 = vadd.f32 %v6284, %v6332
        %6334 = vmatmul.bf16.gmra.mxu0 %v4179
        %v6335 = vpop.f32.mrf.mxu0
        %v6336 = vadd.f32 %v6287, %v6335
        %v6337 = vpop.f32.mrf.mxu0
        %v6338 = vadd.f32 %v6289, %v6337
        %6339 = vdwg.mxu0
        %6340 = vmatpush.bf16.msra.mxu0 %v5377
        %6341 = vmatpush.bf16.msra.mxu0 %v5370
        %6342 = vmatpush.bf16.msra.mxu0 %v5363
        %6343 = vmatpush.bf16.msra.mxu0 %v5356
        %6344 = vmatpush.bf16.msra.mxu0 %v5349
        %6345 = vmatpush.bf16.msra.mxu0 %v5342
        %6346 = vmatpush.bf16.msra.mxu0 %v5335
        %6347 = vmatpush.bf16.msra.mxu0 %v5328
        %6348 = vmatmul.bf16.gmra.mxu0 %v4152
        %v6349 = vpop.f32.mrf.mxu0
        %v6350 = vadd.f32 %v6301, %v6349
        %v6351 = vpop.f32.mrf.mxu0
        %v6352 = vadd.f32 %v6303, %v6351
        %6353 = vmatmul.bf16.gmra.mxu0 %v4156
        %v6354 = vpop.f32.mrf.mxu0
        %v6355 = vadd.f32 %v6306, %v6354
        %v6356 = vpop.f32.mrf.mxu0
        %v6357 = vadd.f32 %v6308, %v6356
        %6358 = vmatmul.bf16.gmra.mxu0 %v4160
        %v6359 = vpop.f32.mrf.mxu0
        %v6360 = vadd.f32 %v6311, %v6359
        %v6361 = vpop.f32.mrf.mxu0
        %v6362 = vadd.f32 %v6313, %v6361
        %6363 = vmatmul.bf16.gmra.mxu0 %v4164
        %v6364 = vpop.f32.mrf.mxu0
        %v6365 = vadd.f32 %v6316, %v6364
        %v6366 = vpop.f32.mrf.mxu0
        %v6367 = vadd.f32 %v6318, %v6366
        %6368 = vmatmul.bf16.gmra.mxu0 %v4168
        %v6369 = vpop.f32.mrf.mxu0
        %v6370 = vadd.f32 %v6321, %v6369
        %v6371 = vpop.f32.mrf.mxu0
        %v6372 = vadd.f32 %v6323, %v6371
        %6373 = vmatmul.bf16.gmra.mxu0 %v4172
        %v6374 = vpop.f32.mrf.mxu0
        %v6375 = vadd.f32 %v6326, %v6374
        %v6376 = vpop.f32.mrf.mxu0
        %v6377 = vadd.f32 %v6328, %v6376
        %6378 = vmatmul.bf16.gmra.mxu0 %v4176
        %v6379 = vpop.f32.mrf.mxu0
        %v6380 = vadd.f32 %v6331, %v6379
        %v6381 = vpop.f32.mrf.mxu0
        %v6382 = vadd.f32 %v6333, %v6381
        %6383 = vmatmul.bf16.gmra.mxu0 %v4180
        %v6384 = vpop.f32.mrf.mxu0
        %v6385 = vadd.f32 %v6336, %v6384
        %v6386 = vpop.f32.mrf.mxu0
        %v6387 = vadd.f32 %v6338, %v6386
        %6388 = vdwg.mxu0
        %6389 = vmatpush.bf16.msra.mxu0 %v5210
        %6390 = vmatpush.bf16.msra.mxu0 %v5203
        %6391 = vmatpush.bf16.msra.mxu0 %v5196
        %6392 = vmatpush.bf16.msra.mxu0 %v5189
        %6393 = vmatpush.bf16.msra.mxu0 %v5182
        %6394 = vmatpush.bf16.msra.mxu0 %v5175
        %6395 = vmatpush.bf16.msra.mxu0 %v5168
        %6396 = vmatpush.bf16.msra.mxu0 %v5161
        %6397 = vmatmul.bf16.gmra.mxu0 %v4149
        %v6398 = vpop.f32.mrf.mxu0
        %v6399 = vadd.f32 %v4443, %v6398
        %v6400 = vpop.f32.mrf.mxu0
        %v6401 = vadd.f32 %v4443, %v6400
        %6402 = vmatmul.bf16.gmra.mxu0 %v4153
        %v6403 = vpop.f32.mrf.mxu0
        %v6404 = vadd.f32 %v4443, %v6403
        %v6405 = vpop.f32.mrf.mxu0
        %v6406 = vadd.f32 %v4443, %v6405
        %6407 = vmatmul.bf16.gmra.mxu0 %v4157
        %v6408 = vpop.f32.mrf.mxu0
        %v6409 = vadd.f32 %v4443, %v6408
        %v6410 = vpop.f32.mrf.mxu0
        %v6411 = vadd.f32 %v4443, %v6410
        %6412 = vmatmul.bf16.gmra.mxu0 %v4161
        %v6413 = vpop.f32.mrf.mxu0
        %v6414 = vadd.f32 %v4443, %v6413
        %v6415 = vpop.f32.mrf.mxu0
        %v6416 = vadd.f32 %v4443, %v6415
        %6417 = vmatmul.bf16.gmra.mxu0 %v4165
        %v6418 = vpop.f32.mrf.mxu0
        %v6419 = vadd.f32 %v4443, %v6418
        %v6420 = vpop.f32.mrf.mxu0
        %v6421 = vadd.f32 %v4443, %v6420
        %6422 = vmatmul.bf16.gmra.mxu0 %v4169
        %v6423 = vpop.f32.mrf.mxu0
        %v6424 = vadd.f32 %v4443, %v6423
        %v6425 = vpop.f32.mrf.mxu0
        %v6426 = vadd.f32 %v4443, %v6425
        %6427 = vmatmul.bf16.gmra.mxu0 %v4173
        %v6428 = vpop.f32.mrf.mxu0
        %v6429 = vadd.f32 %v4443, %v6428
        %v6430 = vpop.f32.mrf.mxu0
        %v6431 = vadd.f32 %v4443, %v6430
        %6432 = vmatmul.bf16.gmra.mxu0 %v4177
        %v6433 = vpop.f32.mrf.mxu0
        %v6434 = vadd.f32 %v4443, %v6433
        %v6435 = vpop.f32.mrf.mxu0
        %v6436 = vadd.f32 %v4443, %v6435
        %6437 = vdwg.mxu0
        %6438 = vmatpush.bf16.msra.mxu0 %v5266
        %6439 = vmatpush.bf16.msra.mxu0 %v5259
        %6440 = vmatpush.bf16.msra.mxu0 %v5252
        %6441 = vmatpush.bf16.msra.mxu0 %v5245
        %6442 = vmatpush.bf16.msra.mxu0 %v5238
        %6443 = vmatpush.bf16.msra.mxu0 %v5231
        %6444 = vmatpush.bf16.msra.mxu0 %v5224
        %6445 = vmatpush.bf16.msra.mxu0 %v5217
        %6446 = vmatmul.bf16.gmra.mxu0 %v4150
        %v6447 = vpop.f32.mrf.mxu0
        %v6448 = vadd.f32 %v6399, %v6447
        %v6449 = vpop.f32.mrf.mxu0
        %v6450 = vadd.f32 %v6401, %v6449
        %6451 = vmatmul.bf16.gmra.mxu0 %v4154
        %v6452 = vpop.f32.mrf.mxu0
        %v6453 = vadd.f32 %v6404, %v6452
        %v6454 = vpop.f32.mrf.mxu0
        %v6455 = vadd.f32 %v6406, %v6454
        %6456 = vmatmul.bf16.gmra.mxu0 %v4158
        %v6457 = vpop.f32.mrf.mxu0
        %v6458 = vadd.f32 %v6409, %v6457
        %v6459 = vpop.f32.mrf.mxu0
        %v6460 = vadd.f32 %v6411, %v6459
        %6461 = vmatmul.bf16.gmra.mxu0 %v4162
        %v6462 = vpop.f32.mrf.mxu0
        %v6463 = vadd.f32 %v6414, %v6462
        %v6464 = vpop.f32.mrf.mxu0
        %v6465 = vadd.f32 %v6416, %v6464
        %6466 = vmatmul.bf16.gmra.mxu0 %v4166
        %v6467 = vpop.f32.mrf.mxu0
        %v6468 = vadd.f32 %v6419, %v6467
        %v6469 = vpop.f32.mrf.mxu0
        %v6470 = vadd.f32 %v6421, %v6469
        %6471 = vmatmul.bf16.gmra.mxu0 %v4170
        %v6472 = vpop.f32.mrf.mxu0
        %v6473 = vadd.f32 %v6424, %v6472
        %v6474 = vpop.f32.mrf.mxu0
        %v6475 = vadd.f32 %v6426, %v6474
        %6476 = vmatmul.bf16.gmra.mxu0 %v4174
        %v6477 = vpop.f32.mrf.mxu0
        %v6478 = vadd.f32 %v6429, %v6477
        %v6479 = vpop.f32.mrf.mxu0
        %v6480 = vadd.f32 %v6431, %v6479
        %6481 = vmatmul.bf16.gmra.mxu0 %v4178
        %v6482 = vpop.f32.mrf.mxu0
        %v6483 = vadd.f32 %v6434, %v6482
        %v6484 = vpop.f32.mrf.mxu0
        %v6485 = vadd.f32 %v6436, %v6484
        %6486 = vdwg.mxu0
        %6487 = vmatpush.bf16.msra.mxu0 %v5322
        %6488 = vmatpush.bf16.msra.mxu0 %v5315
        %6489 = vmatpush.bf16.msra.mxu0 %v5308
        %6490 = vmatpush.bf16.msra.mxu0 %v5301
        %6491 = vmatpush.bf16.msra.mxu0 %v5294
        %6492 = vmatpush.bf16.msra.mxu0 %v5287
        %6493 = vmatpush.bf16.msra.mxu0 %v5280
        %6494 = vmatpush.bf16.msra.mxu0 %v5273
        %6495 = vmatmul.bf16.gmra.mxu0 %v4151
        %v6496 = vpop.f32.mrf.mxu0
        %v6497 = vadd.f32 %v6448, %v6496
        %v6498 = vpop.f32.mrf.mxu0
        %v6499 = vadd.f32 %v6450, %v6498
        %6500 = vmatmul.bf16.gmra.mxu0 %v4155
        %v6501 = vpop.f32.mrf.mxu0
        %v6502 = vadd.f32 %v6453, %v6501
        %v6503 = vpop.f32.mrf.mxu0
        %v6504 = vadd.f32 %v6455, %v6503
        %6505 = vmatmul.bf16.gmra.mxu0 %v4159
        %v6506 = vpop.f32.mrf.mxu0
        %v6507 = vadd.f32 %v6458, %v6506
        %v6508 = vpop.f32.mrf.mxu0
        %v6509 = vadd.f32 %v6460, %v6508
        %6510 = vmatmul.bf16.gmra.mxu0 %v4163
        %v6511 = vpop.f32.mrf.mxu0
        %v6512 = vadd.f32 %v6463, %v6511
        %v6513 = vpop.f32.mrf.mxu0
        %v6514 = vadd.f32 %v6465, %v6513
        %6515 = vmatmul.bf16.gmra.mxu0 %v4167
        %v6516 = vpop.f32.mrf.mxu0
        %v6517 = vadd.f32 %v6468, %v6516
        %v6518 = vpop.f32.mrf.mxu0
        %v6519 = vadd.f32 %v6470, %v6518
        %6520 = vmatmul.bf16.gmra.mxu0 %v4171
        %v6521 = vpop.f32.mrf.mxu0
        %v6522 = vadd.f32 %v6473, %v6521
        %v6523 = vpop.f32.mrf.mxu0
        %v6524 = vadd.f32 %v6475, %v6523
        %6525 = vmatmul.bf16.gmra.mxu0 %v4175
        %v6526 = vpop.f32.mrf.mxu0
        %v6527 = vadd.f32 %v6478, %v6526
        %v6528 = vpop.f32.mrf.mxu0
        %v6529 = vadd.f32 %v6480, %v6528
        %6530 = vmatmul.bf16.gmra.mxu0 %v4179
        %v6531 = vpop.f32.mrf.mxu0
        %v6532 = vadd.f32 %v6483, %v6531
        %v6533 = vpop.f32.mrf.mxu0
        %v6534 = vadd.f32 %v6485, %v6533
        %6535 = vdwg.mxu0
        %6536 = vmatpush.bf16.msra.mxu0 %v5378
        %6537 = vmatpush.bf16.msra.mxu0 %v5371
        %6538 = vmatpush.bf16.msra.mxu0 %v5364
        %6539 = vmatpush.bf16.msra.mxu0 %v5357
        %6540 = vmatpush.bf16.msra.mxu0 %v5350
        %6541 = vmatpush.bf16.msra.mxu0 %v5343
        %6542 = vmatpush.bf16.msra.mxu0 %v5336
        %6543 = vmatpush.bf16.msra.mxu0 %v5329
        %6544 = vmatmul.bf16.gmra.mxu0 %v4152
        %v6545 = vpop.f32.mrf.mxu0
        %v6546 = vadd.f32 %v6497, %v6545
        %v6547 = vpop.f32.mrf.mxu0
        %v6548 = vadd.f32 %v6499, %v6547
        %6549 = vmatmul.bf16.gmra.mxu0 %v4156
        %v6550 = vpop.f32.mrf.mxu0
        %v6551 = vadd.f32 %v6502, %v6550
        %v6552 = vpop.f32.mrf.mxu0
        %v6553 = vadd.f32 %v6504, %v6552
        %6554 = vmatmul.bf16.gmra.mxu0 %v4160
        %v6555 = vpop.f32.mrf.mxu0
        %v6556 = vadd.f32 %v6507, %v6555
        %v6557 = vpop.f32.mrf.mxu0
        %v6558 = vadd.f32 %v6509, %v6557
        %6559 = vmatmul.bf16.gmra.mxu0 %v4164
        %v6560 = vpop.f32.mrf.mxu0
        %v6561 = vadd.f32 %v6512, %v6560
        %v6562 = vpop.f32.mrf.mxu0
        %v6563 = vadd.f32 %v6514, %v6562
        %6564 = vmatmul.bf16.gmra.mxu0 %v4168
        %v6565 = vpop.f32.mrf.mxu0
        %v6566 = vadd.f32 %v6517, %v6565
        %v6567 = vpop.f32.mrf.mxu0
        %v6568 = vadd.f32 %v6519, %v6567
        %6569 = vmatmul.bf16.gmra.mxu0 %v4172
        %v6570 = vpop.f32.mrf.mxu0
        %v6571 = vadd.f32 %v6522, %v6570
        %v6572 = vpop.f32.mrf.mxu0
        %v6573 = vadd.f32 %v6524, %v6572
        %6574 = vmatmul.bf16.gmra.mxu0 %v4176
        %v6575 = vpop.f32.mrf.mxu0
        %v6576 = vadd.f32 %v6527, %v6575
        %v6577 = vpop.f32.mrf.mxu0
        %v6578 = vadd.f32 %v6529, %v6577
        %6579 = vmatmul.bf16.gmra.mxu0 %v4180
        %v6580 = vpop.f32.mrf.mxu0
        %v6581 = vadd.f32 %v6532, %v6580
        %v6582 = vpop.f32.mrf.mxu0
        %v6583 = vadd.f32 %v6534, %v6582
        %6584 = vdwg.mxu0
        %6585 = vmatpush.bf16.msra.mxu0 %v5211
        %6586 = vmatpush.bf16.msra.mxu0 %v5204
        %6587 = vmatpush.bf16.msra.mxu0 %v5197
        %6588 = vmatpush.bf16.msra.mxu0 %v5190
        %6589 = vmatpush.bf16.msra.mxu0 %v5183
        %6590 = vmatpush.bf16.msra.mxu0 %v5176
        %6591 = vmatpush.bf16.msra.mxu0 %v5169
        %6592 = vmatpush.bf16.msra.mxu0 %v5162
        %6593 = vmatmul.bf16.gmra.mxu0 %v4149
        %v6594 = vpop.f32.mrf.mxu0
        %v6595 = vadd.f32 %v4444, %v6594
        %v6596 = vpop.f32.mrf.mxu0
        %v6597 = vadd.f32 %v4444, %v6596
        %6598 = vmatmul.bf16.gmra.mxu0 %v4153
        %v6599 = vpop.f32.mrf.mxu0
        %v6600 = vadd.f32 %v4444, %v6599
        %v6601 = vpop.f32.mrf.mxu0
        %v6602 = vadd.f32 %v4444, %v6601
        %6603 = vmatmul.bf16.gmra.mxu0 %v4157
        %v6604 = vpop.f32.mrf.mxu0
        %v6605 = vadd.f32 %v4444, %v6604
        %v6606 = vpop.f32.mrf.mxu0
        %v6607 = vadd.f32 %v4444, %v6606
        %6608 = vmatmul.bf16.gmra.mxu0 %v4161
        %v6609 = vpop.f32.mrf.mxu0
        %v6610 = vadd.f32 %v4444, %v6609
        %v6611 = vpop.f32.mrf.mxu0
        %v6612 = vadd.f32 %v4444, %v6611
        %6613 = vmatmul.bf16.gmra.mxu0 %v4165
        %v6614 = vpop.f32.mrf.mxu0
        %v6615 = vadd.f32 %v4444, %v6614
        %v6616 = vpop.f32.mrf.mxu0
        %v6617 = vadd.f32 %v4444, %v6616
        %6618 = vmatmul.bf16.gmra.mxu0 %v4169
        %v6619 = vpop.f32.mrf.mxu0
        %v6620 = vadd.f32 %v4444, %v6619
        %v6621 = vpop.f32.mrf.mxu0
        %v6622 = vadd.f32 %v4444, %v6621
        %6623 = vmatmul.bf16.gmra.mxu0 %v4173
        %v6624 = vpop.f32.mrf.mxu0
        %v6625 = vadd.f32 %v4444, %v6624
        %v6626 = vpop.f32.mrf.mxu0
        %v6627 = vadd.f32 %v4444, %v6626
        %6628 = vmatmul.bf16.gmra.mxu0 %v4177
        %v6629 = vpop.f32.mrf.mxu0
        %v6630 = vadd.f32 %v4444, %v6629
        %v6631 = vpop.f32.mrf.mxu0
        %v6632 = vadd.f32 %v4444, %v6631
        %6633 = vdwg.mxu0
        %6634 = vmatpush.bf16.msra.mxu0 %v5267
        %6635 = vmatpush.bf16.msra.mxu0 %v5260
        %6636 = vmatpush.bf16.msra.mxu0 %v5253
        %6637 = vmatpush.bf16.msra.mxu0 %v5246
        %6638 = vmatpush.bf16.msra.mxu0 %v5239
        %6639 = vmatpush.bf16.msra.mxu0 %v5232
        %6640 = vmatpush.bf16.msra.mxu0 %v5225
        %6641 = vmatpush.bf16.msra.mxu0 %v5218
        %6642 = vmatmul.bf16.gmra.mxu0 %v4150
        %v6643 = vpop.f32.mrf.mxu0
        %v6644 = vadd.f32 %v6595, %v6643
        %v6645 = vpop.f32.mrf.mxu0
        %v6646 = vadd.f32 %v6597, %v6645
        %6647 = vmatmul.bf16.gmra.mxu0 %v4154
        %v6648 = vpop.f32.mrf.mxu0
        %v6649 = vadd.f32 %v6600, %v6648
        %v6650 = vpop.f32.mrf.mxu0
        %v6651 = vadd.f32 %v6602, %v6650
        %6652 = vmatmul.bf16.gmra.mxu0 %v4158
        %v6653 = vpop.f32.mrf.mxu0
        %v6654 = vadd.f32 %v6605, %v6653
        %v6655 = vpop.f32.mrf.mxu0
        %v6656 = vadd.f32 %v6607, %v6655
        %6657 = vmatmul.bf16.gmra.mxu0 %v4162
        %v6658 = vpop.f32.mrf.mxu0
        %v6659 = vadd.f32 %v6610, %v6658
        %v6660 = vpop.f32.mrf.mxu0
        %v6661 = vadd.f32 %v6612, %v6660
        %6662 = vmatmul.bf16.gmra.mxu0 %v4166
        %v6663 = vpop.f32.mrf.mxu0
        %v6664 = vadd.f32 %v6615, %v6663
        %v6665 = vpop.f32.mrf.mxu0
        %v6666 = vadd.f32 %v6617, %v6665
        %6667 = vmatmul.bf16.gmra.mxu0 %v4170
        %v6668 = vpop.f32.mrf.mxu0
        %v6669 = vadd.f32 %v6620, %v6668
        %v6670 = vpop.f32.mrf.mxu0
        %v6671 = vadd.f32 %v6622, %v6670
        %6672 = vmatmul.bf16.gmra.mxu0 %v4174
        %v6673 = vpop.f32.mrf.mxu0
        %v6674 = vadd.f32 %v6625, %v6673
        %v6675 = vpop.f32.mrf.mxu0
        %v6676 = vadd.f32 %v6627, %v6675
        %6677 = vmatmul.bf16.gmra.mxu0 %v4178
        %v6678 = vpop.f32.mrf.mxu0
        %v6679 = vadd.f32 %v6630, %v6678
        %v6680 = vpop.f32.mrf.mxu0
        %v6681 = vadd.f32 %v6632, %v6680
        %6682 = vdwg.mxu0
        %6683 = vmatpush.bf16.msra.mxu0 %v5323
        %6684 = vmatpush.bf16.msra.mxu0 %v5316
        %6685 = vmatpush.bf16.msra.mxu0 %v5309
        %6686 = vmatpush.bf16.msra.mxu0 %v5302
        %6687 = vmatpush.bf16.msra.mxu0 %v5295
        %6688 = vmatpush.bf16.msra.mxu0 %v5288
        %6689 = vmatpush.bf16.msra.mxu0 %v5281
        %6690 = vmatpush.bf16.msra.mxu0 %v5274
        %6691 = vmatmul.bf16.gmra.mxu0 %v4151
        %v6692 = vpop.f32.mrf.mxu0
        %v6693 = vadd.f32 %v6644, %v6692
        %v6694 = vpop.f32.mrf.mxu0
        %v6695 = vadd.f32 %v6646, %v6694
        %6696 = vmatmul.bf16.gmra.mxu0 %v4155
        %v6697 = vpop.f32.mrf.mxu0
        %v6698 = vadd.f32 %v6649, %v6697
        %v6699 = vpop.f32.mrf.mxu0
        %v6700 = vadd.f32 %v6651, %v6699
        %6701 = vmatmul.bf16.gmra.mxu0 %v4159
        %v6702 = vpop.f32.mrf.mxu0
        %v6703 = vadd.f32 %v6654, %v6702
        %v6704 = vpop.f32.mrf.mxu0
        %v6705 = vadd.f32 %v6656, %v6704
        %6706 = vmatmul.bf16.gmra.mxu0 %v4163
        %v6707 = vpop.f32.mrf.mxu0
        %v6708 = vadd.f32 %v6659, %v6707
        %v6709 = vpop.f32.mrf.mxu0
        %v6710 = vadd.f32 %v6661, %v6709
        %6711 = vmatmul.bf16.gmra.mxu0 %v4167
        %v6712 = vpop.f32.mrf.mxu0
        %v6713 = vadd.f32 %v6664, %v6712
        %v6714 = vpop.f32.mrf.mxu0
        %v6715 = vadd.f32 %v6666, %v6714
        %6716 = vmatmul.bf16.gmra.mxu0 %v4171
        %v6717 = vpop.f32.mrf.mxu0
        %v6718 = vadd.f32 %v6669, %v6717
        %v6719 = vpop.f32.mrf.mxu0
        %v6720 = vadd.f32 %v6671, %v6719
        %6721 = vmatmul.bf16.gmra.mxu0 %v4175
        %v6722 = vpop.f32.mrf.mxu0
        %v6723 = vadd.f32 %v6674, %v6722
        %v6724 = vpop.f32.mrf.mxu0
        %v6725 = vadd.f32 %v6676, %v6724
        %6726 = vmatmul.bf16.gmra.mxu0 %v4179
        %v6727 = vpop.f32.mrf.mxu0
        %v6728 = vadd.f32 %v6679, %v6727
        %v6729 = vpop.f32.mrf.mxu0
        %v6730 = vadd.f32 %v6681, %v6729
        %6731 = vdwg.mxu0
        %6732 = vmatpush.bf16.msra.mxu0 %v5379
        %6733 = vmatpush.bf16.msra.mxu0 %v5372
        %6734 = vmatpush.bf16.msra.mxu0 %v5365
        %6735 = vmatpush.bf16.msra.mxu0 %v5358
        %6736 = vmatpush.bf16.msra.mxu0 %v5351
        %6737 = vmatpush.bf16.msra.mxu0 %v5344
        %6738 = vmatpush.bf16.msra.mxu0 %v5337
        %6739 = vmatpush.bf16.msra.mxu0 %v5330
        %6740 = vmatmul.bf16.gmra.mxu0 %v4152
        %v6741 = vpop.f32.mrf.mxu0
        %v6742 = vadd.f32 %v6693, %v6741
        %v6743 = vpop.f32.mrf.mxu0
        %v6744 = vadd.f32 %v6695, %v6743
        %6745 = vmatmul.bf16.gmra.mxu0 %v4156
        %v6746 = vpop.f32.mrf.mxu0
        %v6747 = vadd.f32 %v6698, %v6746
        %v6748 = vpop.f32.mrf.mxu0
        %v6749 = vadd.f32 %v6700, %v6748
        %6750 = vmatmul.bf16.gmra.mxu0 %v4160
        %v6751 = vpop.f32.mrf.mxu0
        %v6752 = vadd.f32 %v6703, %v6751
        %v6753 = vpop.f32.mrf.mxu0
        %v6754 = vadd.f32 %v6705, %v6753
        %6755 = vmatmul.bf16.gmra.mxu0 %v4164
        %v6756 = vpop.f32.mrf.mxu0
        %v6757 = vadd.f32 %v6708, %v6756
        %v6758 = vpop.f32.mrf.mxu0
        %v6759 = vadd.f32 %v6710, %v6758
        %6760 = vmatmul.bf16.gmra.mxu0 %v4168
        %v6761 = vpop.f32.mrf.mxu0
        %v6762 = vadd.f32 %v6713, %v6761
        %v6763 = vpop.f32.mrf.mxu0
        %v6764 = vadd.f32 %v6715, %v6763
        %6765 = vmatmul.bf16.gmra.mxu0 %v4172
        %v6766 = vpop.f32.mrf.mxu0
        %v6767 = vadd.f32 %v6718, %v6766
        %v6768 = vpop.f32.mrf.mxu0
        %v6769 = vadd.f32 %v6720, %v6768
        %6770 = vmatmul.bf16.gmra.mxu0 %v4176
        %v6771 = vpop.f32.mrf.mxu0
        %v6772 = vadd.f32 %v6723, %v6771
        %v6773 = vpop.f32.mrf.mxu0
        %v6774 = vadd.f32 %v6725, %v6773
        %6775 = vmatmul.bf16.gmra.mxu0 %v4180
        %v6776 = vpop.f32.mrf.mxu0
        %v6777 = vadd.f32 %v6728, %v6776
        %v6778 = vpop.f32.mrf.mxu0
        %v6779 = vadd.f32 %v6730, %v6778
        %6780 = vdwg.mxu0
        %6781 = vmatpush.bf16.msra.mxu0 %v5212
        %6782 = vmatpush.bf16.msra.mxu0 %v5205
        %6783 = vmatpush.bf16.msra.mxu0 %v5198
        %6784 = vmatpush.bf16.msra.mxu0 %v5191
        %6785 = vmatpush.bf16.msra.mxu0 %v5184
        %6786 = vmatpush.bf16.msra.mxu0 %v5177
        %6787 = vmatpush.bf16.msra.mxu0 %v5170
        %6788 = vmatpush.bf16.msra.mxu0 %v5163
        %6789 = vmatmul.bf16.gmra.mxu0 %v4149
        %v6790 = vpop.f32.mrf.mxu0
        %v6791 = vadd.f32 %v4445, %v6790
        %v6792 = vpop.f32.mrf.mxu0
        %v6793 = vadd.f32 %v4445, %v6792
        %6794 = vmatmul.bf16.gmra.mxu0 %v4153
        %v6795 = vpop.f32.mrf.mxu0
        %v6796 = vadd.f32 %v4445, %v6795
        %v6797 = vpop.f32.mrf.mxu0
        %v6798 = vadd.f32 %v4445, %v6797
        %6799 = vmatmul.bf16.gmra.mxu0 %v4157
        %v6800 = vpop.f32.mrf.mxu0
        %v6801 = vadd.f32 %v4445, %v6800
        %v6802 = vpop.f32.mrf.mxu0
        %v6803 = vadd.f32 %v4445, %v6802
        %6804 = vmatmul.bf16.gmra.mxu0 %v4161
        %v6805 = vpop.f32.mrf.mxu0
        %v6806 = vadd.f32 %v4445, %v6805
        %v6807 = vpop.f32.mrf.mxu0
        %v6808 = vadd.f32 %v4445, %v6807
        %6809 = vmatmul.bf16.gmra.mxu0 %v4165
        %v6810 = vpop.f32.mrf.mxu0
        %v6811 = vadd.f32 %v4445, %v6810
        %v6812 = vpop.f32.mrf.mxu0
        %v6813 = vadd.f32 %v4445, %v6812
        %6814 = vmatmul.bf16.gmra.mxu0 %v4169
        %v6815 = vpop.f32.mrf.mxu0
        %v6816 = vadd.f32 %v4445, %v6815
        %v6817 = vpop.f32.mrf.mxu0
        %v6818 = vadd.f32 %v4445, %v6817
        %6819 = vmatmul.bf16.gmra.mxu0 %v4173
        %v6820 = vpop.f32.mrf.mxu0
        %v6821 = vadd.f32 %v4445, %v6820
        %v6822 = vpop.f32.mrf.mxu0
        %v6823 = vadd.f32 %v4445, %v6822
        %6824 = vmatmul.bf16.gmra.mxu0 %v4177
        %v6825 = vpop.f32.mrf.mxu0
        %v6826 = vadd.f32 %v4445, %v6825
        %v6827 = vpop.f32.mrf.mxu0
        %v6828 = vadd.f32 %v4445, %v6827
        %6829 = vdwg.mxu0
        %6830 = vmatpush.bf16.msra.mxu0 %v5268
        %6831 = vmatpush.bf16.msra.mxu0 %v5261
        %6832 = vmatpush.bf16.msra.mxu0 %v5254
        %6833 = vmatpush.bf16.msra.mxu0 %v5247
        %6834 = vmatpush.bf16.msra.mxu0 %v5240
        %6835 = vmatpush.bf16.msra.mxu0 %v5233
        %6836 = vmatpush.bf16.msra.mxu0 %v5226
        %6837 = vmatpush.bf16.msra.mxu0 %v5219
        %6838 = vmatmul.bf16.gmra.mxu0 %v4150
        %v6839 = vpop.f32.mrf.mxu0
        %v6840 = vadd.f32 %v6791, %v6839
        %v6841 = vpop.f32.mrf.mxu0
        %v6842 = vadd.f32 %v6793, %v6841
        %6843 = vmatmul.bf16.gmra.mxu0 %v4154
        %v6844 = vpop.f32.mrf.mxu0
        %v6845 = vadd.f32 %v6796, %v6844
        %v6846 = vpop.f32.mrf.mxu0
        %v6847 = vadd.f32 %v6798, %v6846
        %6848 = vmatmul.bf16.gmra.mxu0 %v4158
        %v6849 = vpop.f32.mrf.mxu0
        %v6850 = vadd.f32 %v6801, %v6849
        %v6851 = vpop.f32.mrf.mxu0
        %v6852 = vadd.f32 %v6803, %v6851
        %6853 = vmatmul.bf16.gmra.mxu0 %v4162
        %v6854 = vpop.f32.mrf.mxu0
        %v6855 = vadd.f32 %v6806, %v6854
        %v6856 = vpop.f32.mrf.mxu0
        %v6857 = vadd.f32 %v6808, %v6856
        %6858 = vmatmul.bf16.gmra.mxu0 %v4166
        %v6859 = vpop.f32.mrf.mxu0
        %v6860 = vadd.f32 %v6811, %v6859
        %v6861 = vpop.f32.mrf.mxu0
        %v6862 = vadd.f32 %v6813, %v6861
        %6863 = vmatmul.bf16.gmra.mxu0 %v4170
        %v6864 = vpop.f32.mrf.mxu0
        %v6865 = vadd.f32 %v6816, %v6864
        %v6866 = vpop.f32.mrf.mxu0
        %v6867 = vadd.f32 %v6818, %v6866
        %6868 = vmatmul.bf16.gmra.mxu0 %v4174
        %v6869 = vpop.f32.mrf.mxu0
        %v6870 = vadd.f32 %v6821, %v6869
        %v6871 = vpop.f32.mrf.mxu0
        %v6872 = vadd.f32 %v6823, %v6871
        %6873 = vmatmul.bf16.gmra.mxu0 %v4178
        %v6874 = vpop.f32.mrf.mxu0
        %v6875 = vadd.f32 %v6826, %v6874
        %v6876 = vpop.f32.mrf.mxu0
        %v6877 = vadd.f32 %v6828, %v6876
        %6878 = vdwg.mxu0
        %6879 = vmatpush.bf16.msra.mxu0 %v5324
        %6880 = vmatpush.bf16.msra.mxu0 %v5317
        %6881 = vmatpush.bf16.msra.mxu0 %v5310
        %6882 = vmatpush.bf16.msra.mxu0 %v5303
        %6883 = vmatpush.bf16.msra.mxu0 %v5296
        %6884 = vmatpush.bf16.msra.mxu0 %v5289
        %6885 = vmatpush.bf16.msra.mxu0 %v5282
        %6886 = vmatpush.bf16.msra.mxu0 %v5275
        %6887 = vmatmul.bf16.gmra.mxu0 %v4151
        %v6888 = vpop.f32.mrf.mxu0
        %v6889 = vadd.f32 %v6840, %v6888
        %v6890 = vpop.f32.mrf.mxu0
        %v6891 = vadd.f32 %v6842, %v6890
        %6892 = vmatmul.bf16.gmra.mxu0 %v4155
        %v6893 = vpop.f32.mrf.mxu0
        %v6894 = vadd.f32 %v6845, %v6893
        %v6895 = vpop.f32.mrf.mxu0
        %v6896 = vadd.f32 %v6847, %v6895
        %6897 = vmatmul.bf16.gmra.mxu0 %v4159
        %v6898 = vpop.f32.mrf.mxu0
        %v6899 = vadd.f32 %v6850, %v6898
        %v6900 = vpop.f32.mrf.mxu0
        %v6901 = vadd.f32 %v6852, %v6900
        %6902 = vmatmul.bf16.gmra.mxu0 %v4163
        %v6903 = vpop.f32.mrf.mxu0
        %v6904 = vadd.f32 %v6855, %v6903
        %v6905 = vpop.f32.mrf.mxu0
        %v6906 = vadd.f32 %v6857, %v6905
        %6907 = vmatmul.bf16.gmra.mxu0 %v4167
        %v6908 = vpop.f32.mrf.mxu0
        %v6909 = vadd.f32 %v6860, %v6908
        %v6910 = vpop.f32.mrf.mxu0
        %v6911 = vadd.f32 %v6862, %v6910
        %6912 = vmatmul.bf16.gmra.mxu0 %v4171
        %v6913 = vpop.f32.mrf.mxu0
        %v6914 = vadd.f32 %v6865, %v6913
        %v6915 = vpop.f32.mrf.mxu0
        %v6916 = vadd.f32 %v6867, %v6915
        %6917 = vmatmul.bf16.gmra.mxu0 %v4175
        %v6918 = vpop.f32.mrf.mxu0
        %v6919 = vadd.f32 %v6870, %v6918
        %v6920 = vpop.f32.mrf.mxu0
        %v6921 = vadd.f32 %v6872, %v6920
        %6922 = vmatmul.bf16.gmra.mxu0 %v4179
        %v6923 = vpop.f32.mrf.mxu0
        %v6924 = vadd.f32 %v6875, %v6923
        %v6925 = vpop.f32.mrf.mxu0
        %v6926 = vadd.f32 %v6877, %v6925
        %6927 = vdwg.mxu0
        %6928 = vmatpush.bf16.msra.mxu0 %v5380
        %6929 = vmatpush.bf16.msra.mxu0 %v5373
        %6930 = vmatpush.bf16.msra.mxu0 %v5366
        %6931 = vmatpush.bf16.msra.mxu0 %v5359
        %6932 = vmatpush.bf16.msra.mxu0 %v5352
        %6933 = vmatpush.bf16.msra.mxu0 %v5345
        %6934 = vmatpush.bf16.msra.mxu0 %v5338
        %6935 = vmatpush.bf16.msra.mxu0 %v5331
        %6936 = vmatmul.bf16.gmra.mxu0 %v4152
        %v6937 = vpop.f32.mrf.mxu0
        %v6938 = vadd.f32 %v6889, %v6937
        %v6939 = vpop.f32.mrf.mxu0
        %v6940 = vadd.f32 %v6891, %v6939
        %6941 = vmatmul.bf16.gmra.mxu0 %v4156
        %v6942 = vpop.f32.mrf.mxu0
        %v6943 = vadd.f32 %v6894, %v6942
        %v6944 = vpop.f32.mrf.mxu0
        %v6945 = vadd.f32 %v6896, %v6944
        %6946 = vmatmul.bf16.gmra.mxu0 %v4160
        %v6947 = vpop.f32.mrf.mxu0
        %v6948 = vadd.f32 %v6899, %v6947
        %v6949 = vpop.f32.mrf.mxu0
        %v6950 = vadd.f32 %v6901, %v6949
        %6951 = vmatmul.bf16.gmra.mxu0 %v4164
        %v6952 = vpop.f32.mrf.mxu0
        %v6953 = vadd.f32 %v6904, %v6952
        %v6954 = vpop.f32.mrf.mxu0
        %v6955 = vadd.f32 %v6906, %v6954
        %6956 = vmatmul.bf16.gmra.mxu0 %v4168
        %v6957 = vpop.f32.mrf.mxu0
        %v6958 = vadd.f32 %v6909, %v6957
        %v6959 = vpop.f32.mrf.mxu0
        %v6960 = vadd.f32 %v6911, %v6959
        %6961 = vmatmul.bf16.gmra.mxu0 %v4172
        %v6962 = vpop.f32.mrf.mxu0
        %v6963 = vadd.f32 %v6914, %v6962
        %v6964 = vpop.f32.mrf.mxu0
        %v6965 = vadd.f32 %v6916, %v6964
        %6966 = vmatmul.bf16.gmra.mxu0 %v4176
        %v6967 = vpop.f32.mrf.mxu0
        %v6968 = vadd.f32 %v6919, %v6967
        %v6969 = vpop.f32.mrf.mxu0
        %v6970 = vadd.f32 %v6921, %v6969
        %6971 = vmatmul.bf16.gmra.mxu0 %v4180
        %v6972 = vpop.f32.mrf.mxu0
        %v6973 = vadd.f32 %v6924, %v6972
        %v6974 = vpop.f32.mrf.mxu0
        %v6975 = vadd.f32 %v6926, %v6974
        %6976 = vdwg.mxu0
        %v6977 = vsub.f32 0.0, %v5762
        %v6978 = vsub.f32 0.0, %v5958
        %v6979 = vsub.f32 0.0, %v6154
        %v6980 = vsub.f32 0.0, %v6350
        %v6981 = vsub.f32 0.0, %v6546
        %v6982 = vsub.f32 0.0, %v6742
        %v6983 = vsub.f32 0.0, %v6938
        %v6984 = vsub.f32 0.0, %v5764
        %v6985 = vsub.f32 0.0, %v5960
        %v6986 = vsub.f32 0.0, %v6156
        %v6987 = vsub.f32 0.0, %v6352
        %v6988 = vsub.f32 0.0, %v6548
        %v6989 = vsub.f32 0.0, %v6744
        %v6990 = vsub.f32 0.0, %v6940
        %v6991 = vsub.f32 0.0, %v5767
        %v6992 = vsub.f32 0.0, %v5963
        %v6993 = vsub.f32 0.0, %v6159
        %v6994 = vsub.f32 0.0, %v6355
        %v6995 = vsub.f32 0.0, %v6551
        %v6996 = vsub.f32 0.0, %v6747
        %v6997 = vsub.f32 0.0, %v6943
        %v6998 = vsub.f32 0.0, %v5769
        %v6999 = vsub.f32 0.0, %v5965
        %v7000 = vsub.f32 0.0, %v6161
        %v7001 = vsub.f32 0.0, %v6357
        %v7002 = vsub.f32 0.0, %v6553
        %v7003 = vsub.f32 0.0, %v6749
        %v7004 = vsub.f32 0.0, %v6945
        %v7005 = vsub.f32 0.0, %v5772
        %v7006 = vsub.f32 0.0, %v5968
        %v7007 = vsub.f32 0.0, %v6164
        %v7008 = vsub.f32 0.0, %v6360
        %v7009 = vsub.f32 0.0, %v6556
        %v7010 = vsub.f32 0.0, %v6752
        %v7011 = vsub.f32 0.0, %v6948
        %v7012 = vsub.f32 0.0, %v5774
        %v7013 = vsub.f32 0.0, %v5970
        %v7014 = vsub.f32 0.0, %v6166
        %v7015 = vsub.f32 0.0, %v6362
        %v7016 = vsub.f32 0.0, %v6558
        %v7017 = vsub.f32 0.0, %v6754
        %v7018 = vsub.f32 0.0, %v6950
        %v7019 = vsub.f32 0.0, %v5777
        %v7020 = vsub.f32 0.0, %v5973
        %v7021 = vsub.f32 0.0, %v6169
        %v7022 = vsub.f32 0.0, %v6365
        %v7023 = vsub.f32 0.0, %v6561
        %v7024 = vsub.f32 0.0, %v6757
        %v7025 = vsub.f32 0.0, %v6953
        %v7026 = vsub.f32 0.0, %v5779
        %v7027 = vsub.f32 0.0, %v5975
        %v7028 = vsub.f32 0.0, %v6171
        %v7029 = vsub.f32 0.0, %v6367
        %v7030 = vsub.f32 0.0, %v6563
        %v7031 = vsub.f32 0.0, %v6759
        %v7032 = vsub.f32 0.0, %v6955
        %v7033 = vsub.f32 0.0, %v5782
        %v7034 = vsub.f32 0.0, %v5978
        %v7035 = vsub.f32 0.0, %v6174
        %v7036 = vsub.f32 0.0, %v6370
        %v7037 = vsub.f32 0.0, %v6566
        %v7038 = vsub.f32 0.0, %v6762
        %v7039 = vsub.f32 0.0, %v6958
        %v7040 = vsub.f32 0.0, %v5784
        %v7041 = vsub.f32 0.0, %v5980
        %v7042 = vsub.f32 0.0, %v6176
        %v7043 = vsub.f32 0.0, %v6372
        %v7044 = vsub.f32 0.0, %v6568
        %v7045 = vsub.f32 0.0, %v6764
        %v7046 = vsub.f32 0.0, %v6960
        %v7047 = vsub.f32 0.0, %v5787
        %v7048 = vsub.f32 0.0, %v5983
        %v7049 = vsub.f32 0.0, %v6179
        %v7050 = vsub.f32 0.0, %v6375
        %v7051 = vsub.f32 0.0, %v6571
        %v7052 = vsub.f32 0.0, %v6767
        %v7053 = vsub.f32 0.0, %v6963
        %v7054 = vsub.f32 0.0, %v5789
        %v7055 = vsub.f32 0.0, %v5985
        %v7056 = vsub.f32 0.0, %v6181
        %v7057 = vsub.f32 0.0, %v6377
        %v7058 = vsub.f32 0.0, %v6573
        %v7059 = vsub.f32 0.0, %v6769
        %v7060 = vsub.f32 0.0, %v6965
        %v7061 = vsub.f32 0.0, %v5792
        %v7062 = vsub.f32 0.0, %v5988
        %v7063 = vsub.f32 0.0, %v6184
        %v7064 = vsub.f32 0.0, %v6380
        %v7065 = vsub.f32 0.0, %v6576
        %v7066 = vsub.f32 0.0, %v6772
        %v7067 = vsub.f32 0.0, %v6968
        %v7068 = vsub.f32 0.0, %v5794
        %v7069 = vsub.f32 0.0, %v5990
        %v7070 = vsub.f32 0.0, %v6186
        %v7071 = vsub.f32 0.0, %v6382
        %v7072 = vsub.f32 0.0, %v6578
        %v7073 = vsub.f32 0.0, %v6774
        %v7074 = vsub.f32 0.0, %v6970
        %v7075 = vsub.f32 0.0, %v5797
        %v7076 = vsub.f32 0.0, %v5993
        %v7077 = vsub.f32 0.0, %v6189
        %v7078 = vsub.f32 0.0, %v6385
        %v7079 = vsub.f32 0.0, %v6581
        %v7080 = vsub.f32 0.0, %v6777
        %v7081 = vsub.f32 0.0, %v6973
        %v7082 = vsub.f32 0.0, %v5799
        %v7083 = vsub.f32 0.0, %v5995
        %v7084 = vsub.f32 0.0, %v6191
        %v7085 = vsub.f32 0.0, %v6387
        %v7086 = vsub.f32 0.0, %v6583
        %v7087 = vsub.f32 0.0, %v6779
        %v7088 = vsub.f32 0.0, %v6975
        %v7089 = vmul.f32 %v6977, 1.442695
        %v7090 = vpow.pop %v7089
        %v7091 = vmul.f32 %v6978, 1.442695
        %v7092 = vpow.pop %v7091
        %v7093 = vmul.f32 %v6979, 1.442695
        %v7094 = vpow.pop %v7093
        %v7095 = vmul.f32 %v6980, 1.442695
        %v7096 = vpow.pop %v7095
        %v7097 = vmul.f32 %v6981, 1.442695
        %v7098 = vpow.pop %v7097
        %v7099 = vmul.f32 %v6982, 1.442695
        %v7100 = vpow.pop %v7099
        %v7101 = vmul.f32 %v6983, 1.442695
        %v7102 = vpow.pop %v7101
        %v7103 = vmul.f32 %v6984, 1.442695
        %v7104 = vpow.pop %v7103
        %v7105 = vmul.f32 %v6985, 1.442695
        %v7106 = vpow.pop %v7105
        %v7107 = vmul.f32 %v6986, 1.442695
        %v7108 = vpow.pop %v7107
        %v7109 = vmul.f32 %v6987, 1.442695
        %v7110 = vpow.pop %v7109
        %v7111 = vmul.f32 %v6988, 1.442695
        %v7112 = vpow.pop %v7111
        %v7113 = vmul.f32 %v6989, 1.442695
        %v7114 = vpow.pop %v7113
        %v7115 = vmul.f32 %v6990, 1.442695
        %v7116 = vpow.pop %v7115
        %v7117 = vmul.f32 %v6991, 1.442695
        %v7118 = vpow.pop %v7117
        %v7119 = vmul.f32 %v6992, 1.442695
        %v7120 = vpow.pop %v7119
        %v7121 = vmul.f32 %v6993, 1.442695
        %v7122 = vpow.pop %v7121
        %v7123 = vmul.f32 %v6994, 1.442695
        %v7124 = vpow.pop %v7123
        %v7125 = vmul.f32 %v6995, 1.442695
        %v7126 = vpow.pop %v7125
        %v7127 = vmul.f32 %v6996, 1.442695
        %v7128 = vpow.pop %v7127
        %v7129 = vmul.f32 %v6997, 1.442695
        %v7130 = vpow.pop %v7129
        %v7131 = vmul.f32 %v6998, 1.442695
        %v7132 = vpow.pop %v7131
        %v7133 = vmul.f32 %v6999, 1.442695
        %v7134 = vpow.pop %v7133
        %v7135 = vmul.f32 %v7000, 1.442695
        %v7136 = vpow.pop %v7135
        %v7137 = vmul.f32 %v7001, 1.442695
        %v7138 = vpow.pop %v7137
        %v7139 = vmul.f32 %v7002, 1.442695
        %v7140 = vpow.pop %v7139
        %v7141 = vmul.f32 %v7003, 1.442695
        %v7142 = vpow.pop %v7141
        %v7143 = vmul.f32 %v7004, 1.442695
        %v7144 = vpow.pop %v7143
        %v7145 = vmul.f32 %v7005, 1.442695
        %v7146 = vpow.pop %v7145
        %v7147 = vmul.f32 %v7006, 1.442695
        %v7148 = vpow.pop %v7147
        %v7149 = vmul.f32 %v7007, 1.442695
        %v7150 = vpow.pop %v7149
        %v7151 = vmul.f32 %v7008, 1.442695
        %v7152 = vpow.pop %v7151
        %v7153 = vmul.f32 %v7009, 1.442695
        %v7154 = vpow.pop %v7153
        %v7155 = vmul.f32 %v7010, 1.442695
        %v7156 = vpow.pop %v7155
        %v7157 = vmul.f32 %v7011, 1.442695
        %v7158 = vpow.pop %v7157
        %v7159 = vmul.f32 %v7012, 1.442695
        %v7160 = vpow.pop %v7159
        %v7161 = vmul.f32 %v7013, 1.442695
        %v7162 = vpow.pop %v7161
        %v7163 = vmul.f32 %v7014, 1.442695
        %v7164 = vpow.pop %v7163
        %v7165 = vmul.f32 %v7015, 1.442695
        %v7166 = vpow.pop %v7165
        %v7167 = vmul.f32 %v7016, 1.442695
        %v7168 = vpow.pop %v7167
        %v7169 = vmul.f32 %v7017, 1.442695
        %v7170 = vpow.pop %v7169
        %v7171 = vmul.f32 %v7018, 1.442695
        %v7172 = vpow.pop %v7171
        %v7173 = vmul.f32 %v7019, 1.442695
        %v7174 = vpow.pop %v7173
        %v7175 = vmul.f32 %v7020, 1.442695
        %v7176 = vpow.pop %v7175
        %v7177 = vmul.f32 %v7021, 1.442695
        %v7178 = vpow.pop %v7177
        %v7179 = vmul.f32 %v7022, 1.442695
        %v7180 = vpow.pop %v7179
        %v7181 = vmul.f32 %v7023, 1.442695
        %v7182 = vpow.pop %v7181
        %v7183 = vmul.f32 %v7024, 1.442695
        %v7184 = vpow.pop %v7183
        %v7185 = vmul.f32 %v7025, 1.442695
        %v7186 = vpow.pop %v7185
        %v7187 = vmul.f32 %v7026, 1.442695
        %v7188 = vpow.pop %v7187
        %v7189 = vmul.f32 %v7027, 1.442695
        %v7190 = vpow.pop %v7189
        %v7191 = vmul.f32 %v7028, 1.442695
        %v7192 = vpow.pop %v7191
        %v7193 = vmul.f32 %v7029, 1.442695
        %v7194 = vpow.pop %v7193
        %v7195 = vmul.f32 %v7030, 1.442695
        %v7196 = vpow.pop %v7195
        %v7197 = vmul.f32 %v7031, 1.442695
        %v7198 = vpow.pop %v7197
        %v7199 = vmul.f32 %v7032, 1.442695
        %v7200 = vpow.pop %v7199
        %v7201 = vmul.f32 %v7033, 1.442695
        %v7202 = vpow.pop %v7201
        %v7203 = vmul.f32 %v7034, 1.442695
        %v7204 = vpow.pop %v7203
        %v7205 = vmul.f32 %v7035, 1.442695
        %v7206 = vpow.pop %v7205
        %v7207 = vmul.f32 %v7036, 1.442695
        %v7208 = vpow.pop %v7207
        %v7209 = vmul.f32 %v7037, 1.442695
        %v7210 = vpow.pop %v7209
        %v7211 = vmul.f32 %v7038, 1.442695
        %v7212 = vpow.pop %v7211
        %v7213 = vmul.f32 %v7039, 1.442695
        %v7214 = vpow.pop %v7213
        %v7215 = vmul.f32 %v7040, 1.442695
        %v7216 = vpow.pop %v7215
        %v7217 = vmul.f32 %v7041, 1.442695
        %v7218 = vpow.pop %v7217
        %v7219 = vmul.f32 %v7042, 1.442695
        %v7220 = vpow.pop %v7219
        %v7221 = vmul.f32 %v7043, 1.442695
        %v7222 = vpow.pop %v7221
        %v7223 = vmul.f32 %v7044, 1.442695
        %v7224 = vpow.pop %v7223
        %v7225 = vmul.f32 %v7045, 1.442695
        %v7226 = vpow.pop %v7225
        %v7227 = vmul.f32 %v7046, 1.442695
        %v7228 = vpow.pop %v7227
        %v7229 = vmul.f32 %v7047, 1.442695
        %v7230 = vpow.pop %v7229
        %v7231 = vmul.f32 %v7048, 1.442695
        %v7232 = vpow.pop %v7231
        %v7233 = vmul.f32 %v7049, 1.442695
        %v7234 = vpow.pop %v7233
        %v7235 = vmul.f32 %v7050, 1.442695
        %v7236 = vpow.pop %v7235
        %v7237 = vmul.f32 %v7051, 1.442695
        %v7238 = vpow.pop %v7237
        %v7239 = vmul.f32 %v7052, 1.442695
        %v7240 = vpow.pop %v7239
        %v7241 = vmul.f32 %v7053, 1.442695
        %v7242 = vpow.pop %v7241
        %v7243 = vmul.f32 %v7054, 1.442695
        %v7244 = vpow.pop %v7243
        %v7245 = vmul.f32 %v7055, 1.442695
        %v7246 = vpow.pop %v7245
        %v7247 = vmul.f32 %v7056, 1.442695
        %v7248 = vpow.pop %v7247
        %v7249 = vmul.f32 %v7057, 1.442695
        %v7250 = vpow.pop %v7249
        %v7251 = vmul.f32 %v7058, 1.442695
        %v7252 = vpow.pop %v7251
        %v7253 = vmul.f32 %v7059, 1.442695
        %v7254 = vpow.pop %v7253
        %v7255 = vmul.f32 %v7060, 1.442695
        %v7256 = vpow.pop %v7255
        %v7257 = vmul.f32 %v7061, 1.442695
        %v7258 = vpow.pop %v7257
        %v7259 = vmul.f32 %v7062, 1.442695
        %v7260 = vpow.pop %v7259
        %v7261 = vmul.f32 %v7063, 1.442695
        %v7262 = vpow.pop %v7261
        %v7263 = vmul.f32 %v7064, 1.442695
        %v7264 = vpow.pop %v7263
        %v7265 = vmul.f32 %v7065, 1.442695
        %v7266 = vpow.pop %v7265
        %v7267 = vmul.f32 %v7066, 1.442695
        %v7268 = vpow.pop %v7267
        %v7269 = vmul.f32 %v7067, 1.442695
        %v7270 = vpow.pop %v7269
        %v7271 = vmul.f32 %v7068, 1.442695
        %v7272 = vpow.pop %v7271
        %v7273 = vmul.f32 %v7069, 1.442695
        %v7274 = vpow.pop %v7273
        %v7275 = vmul.f32 %v7070, 1.442695
        %v7276 = vpow.pop %v7275
        %v7277 = vmul.f32 %v7071, 1.442695
        %v7278 = vpow.pop %v7277
        %v7279 = vmul.f32 %v7072, 1.442695
        %v7280 = vpow.pop %v7279
        %v7281 = vmul.f32 %v7073, 1.442695
        %v7282 = vpow.pop %v7281
        %v7283 = vmul.f32 %v7074, 1.442695
        %v7284 = vpow.pop %v7283
        %v7285 = vmul.f32 %v7075, 1.442695
        %v7286 = vpow.pop %v7285
        %v7287 = vmul.f32 %v7076, 1.442695
        %v7288 = vpow.pop %v7287
        %v7289 = vmul.f32 %v7077, 1.442695
        %v7290 = vpow.pop %v7289
        %v7291 = vmul.f32 %v7078, 1.442695
        %v7292 = vpow.pop %v7291
        %v7293 = vmul.f32 %v7079, 1.442695
        %v7294 = vpow.pop %v7293
        %v7295 = vmul.f32 %v7080, 1.442695
        %v7296 = vpow.pop %v7295
        %v7297 = vmul.f32 %v7081, 1.442695
        %v7298 = vpow.pop %v7297
        %v7299 = vmul.f32 %v7082, 1.442695
        %v7300 = vpow.pop %v7299
        %v7301 = vmul.f32 %v7083, 1.442695
        %v7302 = vpow.pop %v7301
        %v7303 = vmul.f32 %v7084, 1.442695
        %v7304 = vpow.pop %v7303
        %v7305 = vmul.f32 %v7085, 1.442695
        %v7306 = vpow.pop %v7305
        %v7307 = vmul.f32 %v7086, 1.442695
        %v7308 = vpow.pop %v7307
        %v7309 = vmul.f32 %v7087, 1.442695
        %v7310 = vpow.pop %v7309
        %v7311 = vmul.f32 %v7088, 1.442695
        %v7312 = vpow.pop %v7311
        %v7313 = vadd.f32 %v7090, 1.0
        %v7314 = vadd.f32 %v7092, 1.0
        %v7315 = vadd.f32 %v7094, 1.0
        %v7316 = vadd.f32 %v7096, 1.0
        %v7317 = vadd.f32 %v7098, 1.0
        %v7318 = vadd.f32 %v7100, 1.0
        %v7319 = vadd.f32 %v7102, 1.0
        %v7320 = vadd.f32 %v7104, 1.0
        %v7321 = vadd.f32 %v7106, 1.0
        %v7322 = vadd.f32 %v7108, 1.0
        %v7323 = vadd.f32 %v7110, 1.0
        %v7324 = vadd.f32 %v7112, 1.0
        %v7325 = vadd.f32 %v7114, 1.0
        %v7326 = vadd.f32 %v7116, 1.0
        %v7327 = vadd.f32 %v7118, 1.0
        %v7328 = vadd.f32 %v7120, 1.0
        %v7329 = vadd.f32 %v7122, 1.0
        %v7330 = vadd.f32 %v7124, 1.0
        %v7331 = vadd.f32 %v7126, 1.0
        %v7332 = vadd.f32 %v7128, 1.0
        %v7333 = vadd.f32 %v7130, 1.0
        %v7334 = vadd.f32 %v7132, 1.0
        %v7335 = vadd.f32 %v7134, 1.0
        %v7336 = vadd.f32 %v7136, 1.0
        %v7337 = vadd.f32 %v7138, 1.0
        %v7338 = vadd.f32 %v7140, 1.0
        %v7339 = vadd.f32 %v7142, 1.0
        %v7340 = vadd.f32 %v7144, 1.0
        %v7341 = vadd.f32 %v7146, 1.0
        %v7342 = vadd.f32 %v7148, 1.0
        %v7343 = vadd.f32 %v7150, 1.0
        %v7344 = vadd.f32 %v7152, 1.0
        %v7345 = vadd.f32 %v7154, 1.0
        %v7346 = vadd.f32 %v7156, 1.0
        %v7347 = vadd.f32 %v7158, 1.0
        %v7348 = vadd.f32 %v7160, 1.0
        %v7349 = vadd.f32 %v7162, 1.0
        %v7350 = vadd.f32 %v7164, 1.0
        %v7351 = vadd.f32 %v7166, 1.0
        %v7352 = vadd.f32 %v7168, 1.0
        %v7353 = vadd.f32 %v7170, 1.0
        %v7354 = vadd.f32 %v7172, 1.0
        %v7355 = vadd.f32 %v7174, 1.0
        %v7356 = vadd.f32 %v7176, 1.0
        %v7357 = vadd.f32 %v7178, 1.0
        %v7358 = vadd.f32 %v7180, 1.0
        %v7359 = vadd.f32 %v7182, 1.0
        %v7360 = vadd.f32 %v7184, 1.0
        %v7361 = vadd.f32 %v7186, 1.0
        %v7362 = vadd.f32 %v7188, 1.0
        %v7363 = vadd.f32 %v7190, 1.0
        %v7364 = vadd.f32 %v7192, 1.0
        %v7365 = vadd.f32 %v7194, 1.0
        %v7366 = vadd.f32 %v7196, 1.0
        %v7367 = vadd.f32 %v7198, 1.0
        %v7368 = vadd.f32 %v7200, 1.0
        %v7369 = vadd.f32 %v7202, 1.0
        %v7370 = vadd.f32 %v7204, 1.0
        %v7371 = vadd.f32 %v7206, 1.0
        %v7372 = vadd.f32 %v7208, 1.0
        %v7373 = vadd.f32 %v7210, 1.0
        %v7374 = vadd.f32 %v7212, 1.0
        %v7375 = vadd.f32 %v7214, 1.0
        %v7376 = vadd.f32 %v7216, 1.0
        %v7377 = vadd.f32 %v7218, 1.0
        %v7378 = vadd.f32 %v7220, 1.0
        %v7379 = vadd.f32 %v7222, 1.0
        %v7380 = vadd.f32 %v7224, 1.0
        %v7381 = vadd.f32 %v7226, 1.0
        %v7382 = vadd.f32 %v7228, 1.0
        %v7383 = vadd.f32 %v7230, 1.0
        %v7384 = vadd.f32 %v7232, 1.0
        %v7385 = vadd.f32 %v7234, 1.0
        %v7386 = vadd.f32 %v7236, 1.0
        %v7387 = vadd.f32 %v7238, 1.0
        %v7388 = vadd.f32 %v7240, 1.0
        %v7389 = vadd.f32 %v7242, 1.0
        %v7390 = vadd.f32 %v7244, 1.0
        %v7391 = vadd.f32 %v7246, 1.0
        %v7392 = vadd.f32 %v7248, 1.0
        %v7393 = vadd.f32 %v7250, 1.0
        %v7394 = vadd.f32 %v7252, 1.0
        %v7395 = vadd.f32 %v7254, 1.0
        %v7396 = vadd.f32 %v7256, 1.0
        %v7397 = vadd.f32 %v7258, 1.0
        %v7398 = vadd.f32 %v7260, 1.0
        %v7399 = vadd.f32 %v7262, 1.0
        %v7400 = vadd.f32 %v7264, 1.0
        %v7401 = vadd.f32 %v7266, 1.0
        %v7402 = vadd.f32 %v7268, 1.0
        %v7403 = vadd.f32 %v7270, 1.0
        %v7404 = vadd.f32 %v7272, 1.0
        %v7405 = vadd.f32 %v7274, 1.0
        %v7406 = vadd.f32 %v7276, 1.0
        %v7407 = vadd.f32 %v7278, 1.0
        %v7408 = vadd.f32 %v7280, 1.0
        %v7409 = vadd.f32 %v7282, 1.0
        %v7410 = vadd.f32 %v7284, 1.0
        %v7411 = vadd.f32 %v7286, 1.0
        %v7412 = vadd.f32 %v7288, 1.0
        %v7413 = vadd.f32 %v7290, 1.0
        %v7414 = vadd.f32 %v7292, 1.0
        %v7415 = vadd.f32 %v7294, 1.0
        %v7416 = vadd.f32 %v7296, 1.0
        %v7417 = vadd.f32 %v7298, 1.0
        %v7418 = vadd.f32 %v7300, 1.0
        %v7419 = vadd.f32 %v7302, 1.0
        %v7420 = vadd.f32 %v7304, 1.0
        %v7421 = vadd.f32 %v7306, 1.0
        %v7422 = vadd.f32 %v7308, 1.0
        %v7423 = vadd.f32 %v7310, 1.0
        %v7424 = vadd.f32 %v7312, 1.0
        %v7425 = vrcp.pop %v7313
        %v7426 = vrcp.pop %v7314
        %v7427 = vrcp.pop %v7315
        %v7428 = vrcp.pop %v7316
        %v7429 = vrcp.pop %v7317
        %v7430 = vrcp.pop %v7318
        %v7431 = vrcp.pop %v7319
        %v7432 = vrcp.pop %v7320
        %v7433 = vrcp.pop %v7321
        %v7434 = vrcp.pop %v7322
        %v7435 = vrcp.pop %v7323
        %v7436 = vrcp.pop %v7324
        %v7437 = vrcp.pop %v7325
        %v7438 = vrcp.pop %v7326
        %v7439 = vrcp.pop %v7327
        %v7440 = vrcp.pop %v7328
        %v7441 = vrcp.pop %v7329
        %v7442 = vrcp.pop %v7330
        %v7443 = vrcp.pop %v7331
        %v7444 = vrcp.pop %v7332
        %v7445 = vrcp.pop %v7333
        %v7446 = vrcp.pop %v7334
        %v7447 = vrcp.pop %v7335
        %v7448 = vrcp.pop %v7336
        %v7449 = vrcp.pop %v7337
        %v7450 = vrcp.pop %v7338
        %v7451 = vrcp.pop %v7339
        %v7452 = vrcp.pop %v7340
        %v7453 = vrcp.pop %v7341
        %v7454 = vrcp.pop %v7342
        %v7455 = vrcp.pop %v7343
        %v7456 = vrcp.pop %v7344
        %v7457 = vrcp.pop %v7345
        %v7458 = vrcp.pop %v7346
        %v7459 = vrcp.pop %v7347
        %v7460 = vrcp.pop %v7348
        %v7461 = vrcp.pop %v7349
        %v7462 = vrcp.pop %v7350
        %v7463 = vrcp.pop %v7351
        %v7464 = vrcp.pop %v7352
        %v7465 = vrcp.pop %v7353
        %v7466 = vrcp.pop %v7354
        %v7467 = vrcp.pop %v7355
        %v7468 = vrcp.pop %v7356
        %v7469 = vrcp.pop %v7357
        %v7470 = vrcp.pop %v7358
        %v7471 = vrcp.pop %v7359
        %v7472 = vrcp.pop %v7360
        %v7473 = vrcp.pop %v7361
        %v7474 = vrcp.pop %v7362
        %v7475 = vrcp.pop %v7363
        %v7476 = vrcp.pop %v7364
        %v7477 = vrcp.pop %v7365
        %v7478 = vrcp.pop %v7366
        %v7479 = vrcp.pop %v7367
        %v7480 = vrcp.pop %v7368
        %v7481 = vrcp.pop %v7369
        %v7482 = vrcp.pop %v7370
        %v7483 = vrcp.pop %v7371
        %v7484 = vrcp.pop %v7372
        %v7485 = vrcp.pop %v7373
        %v7486 = vrcp.pop %v7374
        %v7487 = vrcp.pop %v7375
        %v7488 = vrcp.pop %v7376
        %v7489 = vrcp.pop %v7377
        %v7490 = vrcp.pop %v7378
        %v7491 = vrcp.pop %v7379
        %v7492 = vrcp.pop %v7380
        %v7493 = vrcp.pop %v7381
        %v7494 = vrcp.pop %v7382
        %v7495 = vrcp.pop %v7383
        %v7496 = vrcp.pop %v7384
        %v7497 = vrcp.pop %v7385
        %v7498 = vrcp.pop %v7386
        %v7499 = vrcp.pop %v7387
        %v7500 = vrcp.pop %v7388
        %v7501 = vrcp.pop %v7389
        %v7502 = vrcp.pop %v7390
        %v7503 = vrcp.pop %v7391
        %v7504 = vrcp.pop %v7392
        %v7505 = vrcp.pop %v7393
        %v7506 = vrcp.pop %v7394
        %v7507 = vrcp.pop %v7395
        %v7508 = vrcp.pop %v7396
        %v7509 = vrcp.pop %v7397
        %v7510 = vrcp.pop %v7398
        %v7511 = vrcp.pop %v7399
        %v7512 = vrcp.pop %v7400
        %v7513 = vrcp.pop %v7401
        %v7514 = vrcp.pop %v7402
        %v7515 = vrcp.pop %v7403
        %v7516 = vrcp.pop %v7404
        %v7517 = vrcp.pop %v7405
        %v7518 = vrcp.pop %v7406
        %v7519 = vrcp.pop %v7407
        %v7520 = vrcp.pop %v7408
        %v7521 = vrcp.pop %v7409
        %v7522 = vrcp.pop %v7410
        %v7523 = vrcp.pop %v7411
        %v7524 = vrcp.pop %v7412
        %v7525 = vrcp.pop %v7413
        %v7526 = vrcp.pop %v7414
        %v7527 = vrcp.pop %v7415
        %v7528 = vrcp.pop %v7416
        %v7529 = vrcp.pop %v7417
        %v7530 = vrcp.pop %v7418
        %v7531 = vrcp.pop %v7419
        %v7532 = vrcp.pop %v7420
        %v7533 = vrcp.pop %v7421
        %v7534 = vrcp.pop %v7422
        %v7535 = vrcp.pop %v7423
        %v7536 = vrcp.pop %v7424
        %7537 = vst [vmem:[%s356] sm:$0xff] %v7425
        %7538 = vst [vmem:[%s356 + $0x8] sm:$0xff] %v7426
        %7539 = vst [vmem:[%s356 + $0x10] sm:$0xff] %v7427
        %7540 = vst [vmem:[%s356 + $0x18] sm:$0xff] %v7428
        %7541 = vst [vmem:[%s356 + $0x20] sm:$0xff] %v7429
        %7542 = vst [vmem:[%s356 + $0x28] sm:$0xff] %v7430
        %7543 = vst [vmem:[%s356 + $0x30] sm:$0xff] %v7431
        %7544 = vst [vmem:[%s356 + $0x38] sm:$0xff] %v7432
        %7545 = vst [vmem:[%s356 + $0x40] sm:$0xff] %v7433
        %7546 = vst [vmem:[%s356 + $0x48] sm:$0xff] %v7434
        %7547 = vst [vmem:[%s356 + $0x50] sm:$0xff] %v7435
        %7548 = vst [vmem:[%s356 + $0x58] sm:$0xff] %v7436
        %7549 = vst [vmem:[%s356 + $0x60] sm:$0xff] %v7437
        %7550 = vst [vmem:[%s356 + $0x68] sm:$0xff] %v7438
        %7551 = vst [vmem:[%s356 + $0x70] sm:$0xff] %v7439
        %7552 = vst [vmem:[%s356 + $0x78] sm:$0xff] %v7440
        %7553 = vst [vmem:[%s356 + $0x80] sm:$0xff] %v7441
        %7554 = vst [vmem:[%s356 + $0x88] sm:$0xff] %v7442
        %7555 = vst [vmem:[%s356 + $0x90] sm:$0xff] %v7443
        %7556 = vst [vmem:[%s356 + $0x98] sm:$0xff] %v7444
        %7557 = vst [vmem:[%s356 + $0xa0] sm:$0xff] %v7445
        %7558 = vst [vmem:[%s356 + $0xa8] sm:$0xff] %v7446
        %7559 = vst [vmem:[%s356 + $0xb0] sm:$0xff] %v7447
        %7560 = vst [vmem:[%s356 + $0xb8] sm:$0xff] %v7448
        %7561 = vst [vmem:[%s356 + $0xc0] sm:$0xff] %v7449
        %7562 = vst [vmem:[%s356 + $0xc8] sm:$0xff] %v7450
        %7563 = vst [vmem:[%s356 + $0xd0] sm:$0xff] %v7451
        %7564 = vst [vmem:[%s356 + $0xd8] sm:$0xff] %v7452
        %7565 = vst [vmem:[%s356 + $0xe0] sm:$0xff] %v7453
        %7566 = vst [vmem:[%s356 + $0xe8] sm:$0xff] %v7454
        %7567 = vst [vmem:[%s356 + $0xf0] sm:$0xff] %v7455
        %7568 = vst [vmem:[%s356 + $0xf8] sm:$0xff] %v7456
        %7569 = vst [vmem:[%s356 + $0x100] sm:$0xff] %v7457
        %7570 = vst [vmem:[%s356 + $0x108] sm:$0xff] %v7458
        %7571 = vst [vmem:[%s356 + $0x110] sm:$0xff] %v7459
        %7572 = vst [vmem:[%s356 + $0x118] sm:$0xff] %v7460
        %7573 = vst [vmem:[%s356 + $0x120] sm:$0xff] %v7461
        %7574 = vst [vmem:[%s356 + $0x128] sm:$0xff] %v7462
        %7575 = vst [vmem:[%s356 + $0x130] sm:$0xff] %v7463
        %7576 = vst [vmem:[%s356 + $0x138] sm:$0xff] %v7464
        %7577 = vst [vmem:[%s356 + $0x140] sm:$0xff] %v7465
        %7578 = vst [vmem:[%s356 + $0x148] sm:$0xff] %v7466
        %7579 = vst [vmem:[%s356 + $0x150] sm:$0xff] %v7467
        %7580 = vst [vmem:[%s356 + $0x158] sm:$0xff] %v7468
        %7581 = vst [vmem:[%s356 + $0x160] sm:$0xff] %v7469
        %7582 = vst [vmem:[%s356 + $0x168] sm:$0xff] %v7470
        %7583 = vst [vmem:[%s356 + $0x170] sm:$0xff] %v7471
        %7584 = vst [vmem:[%s356 + $0x178] sm:$0xff] %v7472
        %7585 = vst [vmem:[%s356 + $0x180] sm:$0xff] %v7473
        %7586 = vst [vmem:[%s356 + $0x188] sm:$0xff] %v7474
        %7587 = vst [vmem:[%s356 + $0x190] sm:$0xff] %v7475
        %7588 = vst [vmem:[%s356 + $0x198] sm:$0xff] %v7476
        %7589 = vst [vmem:[%s356 + $0x1a0] sm:$0xff] %v7477
        %7590 = vst [vmem:[%s356 + $0x1a8] sm:$0xff] %v7478
        %7591 = vst [vmem:[%s356 + $0x1b0] sm:$0xff] %v7479
        %7592 = vst [vmem:[%s356 + $0x1b8] sm:$0xff] %v7480
        %7593 = vst [vmem:[%s356 + $0x1c0] sm:$0xff] %v7481
        %7594 = vst [vmem:[%s356 + $0x1c8] sm:$0xff] %v7482
        %7595 = vst [vmem:[%s356 + $0x1d0] sm:$0xff] %v7483
        %7596 = vst [vmem:[%s356 + $0x1d8] sm:$0xff] %v7484
        %7597 = vst [vmem:[%s356 + $0x1e0] sm:$0xff] %v7485
        %7598 = vst [vmem:[%s356 + $0x1e8] sm:$0xff] %v7486
        %7599 = vst [vmem:[%s356 + $0x1f0] sm:$0xff] %v7487
        %7600 = vst [vmem:[%s356 + $0x1f8] sm:$0xff] %v7488
        %7601 = vst [vmem:[%s356 + $0x200] sm:$0xff] %v7489
        %7602 = vst [vmem:[%s356 + $0x208] sm:$0xff] %v7490
        %7603 = vst [vmem:[%s356 + $0x210] sm:$0xff] %v7491
        %7604 = vst [vmem:[%s356 + $0x218] sm:$0xff] %v7492
        %7605 = vst [vmem:[%s356 + $0x220] sm:$0xff] %v7493
        %7606 = vst [vmem:[%s356 + $0x228] sm:$0xff] %v7494
        %7607 = vst [vmem:[%s356 + $0x230] sm:$0xff] %v7495
        %7608 = vst [vmem:[%s356 + $0x238] sm:$0xff] %v7496
        %7609 = vst [vmem:[%s356 + $0x240] sm:$0xff] %v7497
        %7610 = vst [vmem:[%s356 + $0x248] sm:$0xff] %v7498
        %7611 = vst [vmem:[%s356 + $0x250] sm:$0xff] %v7499
        %7612 = vst [vmem:[%s356 + $0x258] sm:$0xff] %v7500
        %7613 = vst [vmem:[%s356 + $0x260] sm:$0xff] %v7501
        %7614 = vst [vmem:[%s356 + $0x268] sm:$0xff] %v7502
        %7615 = vst [vmem:[%s356 + $0x270] sm:$0xff] %v7503
        %7616 = vst [vmem:[%s356 + $0x278] sm:$0xff] %v7504
        %7617 = vst [vmem:[%s356 + $0x280] sm:$0xff] %v7505
        %7618 = vst [vmem:[%s356 + $0x288] sm:$0xff] %v7506
        %7619 = vst [vmem:[%s356 + $0x290] sm:$0xff] %v7507
        %7620 = vst [vmem:[%s356 + $0x298] sm:$0xff] %v7508
        %7621 = vst [vmem:[%s356 + $0x2a0] sm:$0xff] %v7509
        %7622 = vst [vmem:[%s356 + $0x2a8] sm:$0xff] %v7510
        %7623 = vst [vmem:[%s356 + $0x2b0] sm:$0xff] %v7511
        %7624 = vst [vmem:[%s356 + $0x2b8] sm:$0xff] %v7512
        %7625 = vst [vmem:[%s356 + $0x2c0] sm:$0xff] %v7513
        %7626 = vst [vmem:[%s356 + $0x2c8] sm:$0xff] %v7514
        %7627 = vst [vmem:[%s356 + $0x2d0] sm:$0xff] %v7515
        %7628 = vst [vmem:[%s356 + $0x2d8] sm:$0xff] %v7516
        %7629 = vst [vmem:[%s356 + $0x2e0] sm:$0xff] %v7517
        %7630 = vst [vmem:[%s356 + $0x2e8] sm:$0xff] %v7518
        %7631 = vst [vmem:[%s356 + $0x2f0] sm:$0xff] %v7519
        %7632 = vst [vmem:[%s356 + $0x2f8] sm:$0xff] %v7520
        %7633 = vst [vmem:[%s356 + $0x300] sm:$0xff] %v7521
        %7634 = vst [vmem:[%s356 + $0x308] sm:$0xff] %v7522
        %7635 = vst [vmem:[%s356 + $0x310] sm:$0xff] %v7523
        %7636 = vst [vmem:[%s356 + $0x318] sm:$0xff] %v7524
        %7637 = vst [vmem:[%s356 + $0x320] sm:$0xff] %v7525
        %7638 = vst [vmem:[%s356 + $0x328] sm:$0xff] %v7526
        %7639 = vst [vmem:[%s356 + $0x330] sm:$0xff] %v7527
        %7640 = vst [vmem:[%s356 + $0x338] sm:$0xff] %v7528
        %7641 = vst [vmem:[%s356 + $0x340] sm:$0xff] %v7529
        %7642 = vst [vmem:[%s356 + $0x348] sm:$0xff] %v7530
        %7643 = vst [vmem:[%s356 + $0x350] sm:$0xff] %v7531
        %7644 = vst [vmem:[%s356 + $0x358] sm:$0xff] %v7532
        %7645 = vst [vmem:[%s356 + $0x360] sm:$0xff] %v7533
        %7646 = vst [vmem:[%s356 + $0x368] sm:$0xff] %v7534
        %7647 = vst [vmem:[%s356 + $0x370] sm:$0xff] %v7535
        %7648 = vst [vmem:[%s356 + $0x378] sm:$0xff] %v7536
        %s7649 = smul.u32 16, %s21
        %p7650 = scmp.lt.s32.totalorder %s7649, 31
        %s7651 = scalar_select %p7650, %s7649, 31
        %s7652 = smul.addr %s7651, 7
        %s7653 = smul.addr %s7652, 8
        %s7654 = scalar_lea.vmem %s9, %s7653
        // Predicated region
        $region61: #{autoencoder_mlp4_forward.1} parent=55 // pred_check
          %p7655 = pneg %p233
        $region62: #{autoencoder_mlp4_forward.1} parent=55 // pred_check_branch
          %7657 = sbr.rel (%p7655) target = $region64
        $region63: #{autoencoder_mlp4_forward.1} parent=55 // pred_region
          %s7658 = smul.u32 16, %s21
        $region64: #{autoencoder_mlp4_forward.1} parent=55 // pred_fallthru
          _
      $region56: #{autoencoder_mlp4_forward.1} parent=5 // pred_fallthru
        _
      %p7659 = scmp.le.s32.totalorder 2, %s16
      // Predicated region
      $region65: #{autoencoder_mlp4_forward.1} parent=5 // pred_check
        %p7660 = pneg %p7659
      $region66: #{autoencoder_mlp4_forward.1} parent=5 // pred_check_branch
        %7662 = sbr.rel (%p7660) target = $region68
      $region67: #{autoencoder_mlp4_forward.1} parent=5 // pred_region
        %s7663 = ssub.s32 %s16, 2
        // Predicated region
        $region69: #{autoencoder_mlp4_forward.1} parent=67 // pred_check
          %p7664 = pneg %p239
        $region70: #{autoencoder_mlp4_forward.1} parent=67 // pred_check_branch
          %7666 = sbr.rel (%p7664) target = $region72
        $region71: #{autoencoder_mlp4_forward.1} parent=67 // pred_region
          %s7667 = smul.u32 16, %s22
          %p7668 = scmp.lt.s32.totalorder %s7667, 31
          %s7669 = scalar_select %p7668, %s7667, 31
          %s7670 = smul.addr %s7669, 7
          %s7671 = smul.addr %s7670, 8
          %s7672 = scalar_lea.vmem %s9, %s7671
        $region72: #{autoencoder_mlp4_forward.1} parent=67 // pred_fallthru
          _
      $region68: #{autoencoder_mlp4_forward.1} parent=5 // pred_fallthru
        _
    $region6: #{autoencoder_mlp4_forward.1} parent=1 // loop_footer
      %s20 = sadd.s32 1, %s16
    $region7: #{autoencoder_mlp4_forward.1} parent=1 // loop_footer_branch
      %15 = sbr.rel target = $region3
    $region8: #{autoencoder_mlp4_forward.1} parent=1 // loop_exit
      _
    %7673 = vsyncpa [#allocation3], 1
    %s7674 = scalar_lea.sflag [#allocation3], 1
    %7675 = vsyncpa %s7674, 1

</llo_original>
